<compile_context>
chip_gen: v6e
topology: v6e:2x2x1
jax: 0.10.0
libtpu: 0.0.40
codegen_flags: <defaults>
</compile_context>

<pallas_src>
import functools

import jax
import jax.numpy as jnp
from jax.experimental import pallas as pl
from jax.experimental.pallas import tpu as pltpu


# ----------------------------------------------------------------------------
# Fused Pallas kernel: conv trunk + flatten + dueling heads
# ----------------------------------------------------------------------------
def _dueling_fused_kernel(
    p1_ref,                 # (4*S2*B, 16*C) bf16  conv1 patches at conv2 taps
    w1c_ref, b1c_ref,       # (16*C, 32) bf16, (1, 32) f32
    w2c_ref, b2c_ref,       # (4, 32, 64) bf16 (split by tap), (1, 64) f32
    w3c_ref, b3c_ref,       # (64, 64) bf16, (1, 64) f32
    w1h_hbm,                # (S2*64, 512) bf16, stays in HBM (pl.ANY)
    b1h_ref,                # (1, 512) f32
    w2h_ref, b2h_ref,       # (512, A+1) bf16 block-diag, (1, A+1) f32
    o_ref,                  # (B, A) f32
    y3_ref,                 # scratch (S2*B, 64) f32       conv3 output
    feat_ref,               # scratch (B, S2*64) f32       NHWC-flattened features
    hacc_ref,               # scratch (B, 512) f32         head-1 accumulator
    w1h_vmem,               # scratch (S2*64, 512) bf16    head-1 weights in VMEM
    dma_sem,                # scratch DMA semaphores (n_chunks,)
    *, s2, bsz, chunks):
    f32, bf16 = jnp.float32, jnp.bfloat16
    n_taps = w2c_ref.shape[0]
    nch = w3c_ref.shape[1]                      # 64 conv channels
    rows = s2 * bsz
    n_act = o_ref.shape[1]

    # ---- kick off the (weight-bound) head-1 weight DMA, chunked -------------
    # Chunks are waited on individually right before the matmul slice that
    # consumes them, so the transfer overlaps trunk compute AND head matmuls.
    copies = []
    for i, (r0, rn) in enumerate(chunks):
        cp = pltpu.make_async_copy(w1h_hbm.at[r0:r0 + rn, :],
                                   w1h_vmem.at[r0:r0 + rn, :],
                                   dma_sem.at[i])
        cp.start()
        copies.append(cp)

    # ---- conv1, evaluated at all 4 conv2 taps with ONE bf16 matmul ----------
    y1 = jnp.maximum(
        jnp.dot(p1_ref[...], w1c_ref[...], preferred_element_type=f32)
        + b1c_ref[...], 0.0)                                 # (4*S2*B, 32) f32

    # ---- conv2: accumulate the 4 tap contributions (f32 accumulation) -------
    # conv2(relu(conv1(x))) == relu(sum_k relu(P1_k @ W1c + b1c) @ W2c_k + b2c)
    z2 = jnp.zeros((rows, nch), f32)
    for k in range(n_taps):
        y1k = y1[k * rows:(k + 1) * rows, :].astype(bf16)    # 8-aligned slice
        z2 = z2 + jnp.dot(y1k, w2c_ref[k], preferred_element_type=f32)
    y2 = jnp.maximum(z2 + b2c_ref[...], 0.0)                 # (S2*B, 64)

    # ---- conv3 (1x1 conv == plain matmul) ------------------------------------
    y3_ref[...] = jnp.maximum(
        jnp.dot(y2.astype(bf16), w3c_ref[...], preferred_element_type=f32)
        + b3c_ref[...], 0.0)                                 # (S2*B, 64)

    # ---- NHWC flatten: feat[b, s*64 + c] = y3[s*B + b, c] --------------------
    # Pure layout plumbing, paid once (~18 KiB), runs on the VPU/XLU while the
    # w1h DMA is still arriving; replaces 36 tiny head matmuls.
    for s in range(s2):
        feat_ref[:, s * nch:(s + 1) * nch] = y3_ref[s * bsz:(s + 1) * bsz, :]

    # ---- dueling heads, layer 1 (adv || val fused into one 512-wide output) --
    hacc_ref[...] = jnp.zeros_like(hacc_ref) + b1h_ref[...]
    for i, (r0, rn) in enumerate(chunks):
        copies[i].wait()                                      # only this chunk
        hacc_ref[...] += jnp.dot(feat_ref[:, r0:r0 + rn].astype(bf16),
                                 w1h_vmem[r0:r0 + rn, :],
                                 preferred_element_type=f32)
    h = jnp.maximum(hacc_ref[...], 0.0)                       # (B, 512)

    # ---- layer 2 (block-diagonal fused) + dueling combine --------------------
    oc = jnp.dot(h.astype(bf16), w2h_ref[...],
                 preferred_element_type=f32) + b2h_ref[...]   # (B, A+1)
    adv = oc[:, :n_act]
    val = oc[:, n_act:n_act + 1]
    # PyTorch: val + adv - adv.mean()   (scalar mean over ALL elements of adv)
    adv_mean = jnp.sum(adv) / float(bsz * n_act)
    o_ref[...] = val + adv - adv_mean


def dueling_forward(params, x_nchw):
    """Fused Pallas forward.  x_nchw: (B, C, H, W), like the PyTorch module."""
    x = jnp.transpose(x_nchw.astype(jnp.float32), (0, 2, 3, 1))   # NCHW -> NHWC
    B, H, W, C = x.shape
    oh1, ow1 = (H - 4) // 2 + 1, (W - 4) // 2 + 1                 # conv1 (k4, s2)
    oh2, ow2 = oh1 - 1, ow1 - 1                                   # conv2 (k2, s1)
    S2, KF = oh2 * ow2, 4 * 4 * C
    A = params["h2_w"].shape[1] - 1
    CONV_OUT, HID2 = params["h1_w"].shape                         # (S2*64, 512)

    # Host glue (only remaining JAX glue): conv1 im2col patches, gathered at
    # the 4 conv2 tap offsets, rows spatial-major / batch-minor, taps stacked
    # along rows.  Shipped bf16 (~36 KiB).
    cols = [x[:, ki:ki + 2 * oh1:2, kj:kj + 2 * ow1:2, :]
            for ki in range(4) for kj in range(4)]
    p1full = jnp.concatenate(cols, axis=-1)                       # (B, oh1, ow1, KF)
    taps = []
    for di in range(2):
        for dj in range(2):
            t = p1full[:, di:di + oh2, dj:dj + ow2, :]            # (B, oh2, ow2, KF)
            taps.append(jnp.transpose(t, (1, 2, 0, 3)).reshape(S2 * B, KF))
    p1 = jnp.concatenate(taps, axis=0).astype(jnp.bfloat16)       # (4*S2*B, KF)

    # Head-1 weight DMA / matmul chunking.  An even number of spatial positions
    # per chunk keeps feat lane offsets 128-aligned (chunk = 6 spatial = 384
    # rows / lanes).
    cs = 6
    n_chunks = pl.cdiv(S2, cs)
    chunks = tuple((i * cs * 64, min(cs, S2 - i * cs) * 64)
                   for i in range(n_chunks))

    flops = (2 * 4 * S2 * B * KF * 32 + 2 * 4 * S2 * B * 32 * 64
             + 2 * S2 * B * 64 * 64 + 2 * B * CONV_OUT * HID2
             + 2 * B * HID2 * (A + 1))
    bytes_accessed = (int(p1.size) * 2 + B * A * 4
                      + sum(int(v.size) * v.dtype.itemsize
                            for v in params.values()))

    vmem = pl.BlockSpec(memory_space=pltpu.MemorySpace.VMEM)
    in_specs = [vmem] * 7 + [pl.BlockSpec(memory_space=pl.ANY)] + [vmem] * 3

    kernel = functools.partial(_dueling_fused_kernel,
                               s2=S2, bsz=B, chunks=chunks)

    # TODO(synk): for RL-inference throughput, batch 128-256 states per call
    # and add a "parallel" batch grid axis so both v7x TensorCores are used
    # (the global adv.mean() then needs a two-pass / cross-core reduction).
    return pl.pallas_call(
        kernel,
        out_shape=jax.ShapeDtypeStruct((B, A), jnp.float32),
        in_specs=in_specs,
        out_specs=vmem,
        scratch_shapes=[
            pltpu.VMEM((S2 * B, 64), jnp.float32),                  # conv3 output
            pltpu.VMEM((B, CONV_OUT), jnp.float32),                 # flattened feat
            pltpu.VMEM((B, HID2), jnp.float32),                     # head-1 acc
            pltpu.VMEM((CONV_OUT, HID2), params["h1_w"].dtype),     # head-1 weights
            pltpu.SemaphoreType.DMA((n_chunks,)),
        ],
        cost_estimate=pl.CostEstimate(flops=flops, transcendentals=0,
                                      bytes_accessed=bytes_accessed),
    )(p1, params["c1_w"], params["c1_b"], params["c2_w"], params["c2_b"],
      params["c3_w"], params["c3_b"], params["h1_w"], params["h1_b"],
      params["h2_w"], params["h2_b"])


# ----------------------------------------------------------------------------
# Parameter init (kernel layouts) and a pure-JAX reference for self-checking
# ----------------------------------------------------------------------------
def init_params(key, in_c, in_h, in_w, n_actions):
    """Deterministic random params, stored directly in the kernel's layouts.

    Mapping if loading real PyTorch weights instead:
      c1_w[(ki*4+kj)*C + c, o] = conv1.weight[o, c, ki, kj]
      c2_w[di*2+dj, o, m]      = conv2.weight[m, o, di, dj]
      c3_w[c, m]               = conv3.weight[m, c, 0, 0]
      h1_w[s*64+c, :256|256:]  = adv_fc1.weight.T | val_fc1.weight.T with rows
                                 permuted NCHW-flat (c*S2+s) -> NHWC-flat (s*64+c)
      h2_w[:256, :A] = adv_fc2.weight.T ; h2_w[256:, A] = val_fc2.weight[:, 0]
    (Bias init here is fan_in-scaled normal, not PyTorch's uniform; numerics
    only match PyTorch if real weights are loaded via the mapping above.)
    """
    oh1, ow1 = (in_h - 4) // 2 + 1, (in_w - 4) // 2 + 1
    oh2, ow2 = oh1 - 1, ow1 - 1
    S2 = oh2 * ow2
    KF = 4 * 4 * in_c
    HID = 256
    conv_out = 64 * S2
    bf16 = jnp.bfloat16

    ks = jax.random.split(key, 14)

    def w(k, shape, fan_in):
        return jax.random.normal(k, shape, jnp.float32) / jnp.sqrt(float(fan_in))

    a1 = w(ks[6], (conv_out, HID), conv_out)
    v1 = w(ks[10], (conv_out, HID), conv_out)
    h1_w = jnp.concatenate([a1, v1], axis=1)                 # (S2*64, 512)

    a2 = w(ks[8], (HID, n_actions), HID)
    v2 = w(ks[12], (HID, 1), HID)
    h2_w = jnp.zeros((2 * HID, n_actions + 1), jnp.float32)
    h2_w = h2_w.at[:HID, :n_actions].set(a2).at[HID:, n_actions].set(v2[:, 0])

    return {
        # Conv trunk + head weights stored bf16 (MXU-friendly, halves weight
        # DMA); accumulation and bias/ReLU math stay f32 in the kernel.
        "c1_w": w(ks[0], (KF, 32), KF).astype(bf16),
        "c1_b": w(ks[1], (1, 32), KF),
        "c2_w": w(ks[2], (4 * 32, 64), 4 * 32).reshape(4, 32, 64).astype(bf16),
        "c2_b": w(ks[3], (1, 64), 4 * 32),
        "c3_w": w(ks[4], (64, 64), 64).astype(bf16),
        "c3_b": w(ks[5], (1, 64), 64),
        "h1_w": h1_w.astype(bf16),
        "h1_b": jnp.concatenate([w(ks[7], (HID,), conv_out),
                                 w(ks[11], (HID,), conv_out)]).reshape(1, 2 * HID),
        "h2_w": h2_w.astype(bf16),
        "h2_b": jnp.concatenate([w(ks[9], (n_actions,), HID),
                                 w(ks[13], (1,), HID)]).reshape(1, n_actions + 1),
    }


def reference_forward(params, x_nchw):
    """Pure-JAX reference (mirrors the kernel's bf16 operand rounding)."""
    hp = jax.lax.Precision.HIGHEST
    relu = jax.nn.relu
    f32 = jnp.float32
    bf = lambda a: a.astype(jnp.bfloat16).astype(f32)

    x = jnp.transpose(x_nchw.astype(f32), (0, 2, 3, 1))
    B, H, W, C = x.shape
    oh1, ow1 = (H - 4) // 2 + 1, (W - 4) // 2 + 1
    oh2, ow2 = oh1 - 1, ow1 - 1

    cols = [x[:, ki:ki + 2 * oh1:2, kj:kj + 2 * ow1:2, :]
            for ki in range(4) for kj in range(4)]
    p1 = bf(jnp.concatenate(cols, axis=-1))
    y1 = relu(jnp.einsum("bhwf,fo->bhwo", p1, params["c1_w"].astype(f32),
                         precision=hp) + params["c1_b"][0])
    cols2 = [y1[:, di:di + oh2, dj:dj + ow2, :]
             for di in range(2) for dj in range(2)]
    p2 = bf(jnp.concatenate(cols2, axis=-1))
    y2 = relu(jnp.einsum("bhwf,fo->bhwo", p2,
                         params["c2_w"].reshape(-1, 64).astype(f32),
                         precision=hp) + params["c2_b"][0])
    y3 = relu(jnp.einsum("bhwf,fo->bhwo", bf(y2), params["c3_w"].astype(f32),
                         precision=hp) + params["c3_b"][0])
    feat = bf(y3.reshape(B, -1))                              # NHWC flatten

    h = relu(jnp.dot(feat, params["h1_w"].astype(f32), precision=hp)
             + params["h1_b"][0])
    oc = jnp.dot(bf(h), params["h2_w"].astype(f32), precision=hp) \
        + params["h2_b"][0]
    A = params["h2_w"].shape[1] - 1
    adv, val = oc[:, :A], oc[:, A:]
    return val + adv - jnp.mean(adv)


if __name__ == "__main__":
    B, C, H, W = 2, 4, 16, 16
    n_actions = 6

    key = jax.random.PRNGKey(0)
    k_params, k_x = jax.random.split(key)
    params = init_params(k_params, C, H, W, n_actions)
    x = jax.random.normal(k_x, (B, C, H, W), jnp.float32)

    out = jax.block_until_ready(jax.jit(dueling_forward)(params, x))
    assert out.shape == (B, n_actions) and out.dtype == jnp.float32, out.shape

    ref = jax.block_until_ready(jax.jit(reference_forward)(params, x))
    err = float(jnp.max(jnp.abs(out - ref)))
    tol = 1e-2 + 1e-2 * float(jnp.max(jnp.abs(ref)))
    assert err < tol, f"kernel vs reference mismatch: {err:.3e} (tol {tol:.3e})"

    print("KERNEL_OK")
</pallas_src>

<mosaic_0001>
module attributes {stable_mosaic.version = 11 : i64} {
  func.func @_dueling_fused_kernel(%arg0: memref<288x64xbf16, #tpu.memory_space<vmem>>, %arg1: memref<64x32xbf16, #tpu.memory_space<vmem>>, %arg2: memref<1x32xf32, #tpu.memory_space<vmem>>, %arg3: memref<4x32x64xbf16, #tpu.memory_space<vmem>>, %arg4: memref<1x64xf32, #tpu.memory_space<vmem>>, %arg5: memref<64x64xbf16, #tpu.memory_space<vmem>>, %arg6: memref<1x64xf32, #tpu.memory_space<vmem>>, %arg7: memref<2304x512xbf16, #tpu.memory_space<any>>, %arg8: memref<1x512xf32, #tpu.memory_space<vmem>>, %arg9: memref<512x7xbf16, #tpu.memory_space<vmem>>, %arg10: memref<1x7xf32, #tpu.memory_space<vmem>>, %arg11: memref<2x6xf32, #tpu.memory_space<vmem>>, %arg12: memref<72x64xf32, #tpu.memory_space<vmem>>, %arg13: memref<2x2304xf32, #tpu.memory_space<vmem>>, %arg14: memref<2x512xf32, #tpu.memory_space<vmem>>, %arg15: memref<2304x512xbf16, #tpu.memory_space<vmem>>, %arg16: memref<6x!tpu.dma_semaphore, #tpu.memory_space<semaphore_mem>>) attributes {dimension_semantics = [], scalar_prefetch = 0 : i64, scratch_operands = 5 : i64, tpu.core_type = #tpu.core_type<tc>} {
    %c0_i32 = arith.constant 0 : i32
    %c0_i32_0 = arith.constant 0 : i32
    %c0_i32_1 = arith.constant 0 : i32
    %0 = tpu.memref_slice %arg7[%c0_i32_0, %c0_i32_1] : memref<2304x512xbf16, #tpu.memory_space<any>> -> memref<384x512xbf16, #tpu.memory_space<any>>
    %c0_i32_2 = arith.constant 0 : i32
    %c0_i32_3 = arith.constant 0 : i32
    %1 = tpu.memref_slice %arg15[%c0_i32_2, %c0_i32_3] : memref<2304x512xbf16, #tpu.memory_space<vmem>> -> memref<384x512xbf16, #tpu.memory_space<vmem>>
    %2 = tpu.memref_slice %arg16[%c0_i32] : memref<6x!tpu.dma_semaphore, #tpu.memory_space<semaphore_mem>> -> memref<1x!tpu.dma_semaphore, #tpu.memory_space<semaphore_mem>>
    %3 = tpu.memref_squeeze %2 : memref<1x!tpu.dma_semaphore, #tpu.memory_space<semaphore_mem>> -> memref<!tpu.dma_semaphore, #tpu.memory_space<semaphore_mem>>
    tpu.enqueue_dma source(%0 : memref<384x512xbf16, #tpu.memory_space<any>>) target(%1 : memref<384x512xbf16, #tpu.memory_space<vmem>>) target_semaphore(%3 : memref<!tpu.dma_semaphore, #tpu.memory_space<semaphore_mem>>)
    %c1_i32 = arith.constant 1 : i32
    %c384_i32 = arith.constant 384 : i32
    %c0_i32_4 = arith.constant 0 : i32
    %4 = tpu.memref_slice %arg7[%c384_i32, %c0_i32_4] : memref<2304x512xbf16, #tpu.memory_space<any>> -> memref<384x512xbf16, #tpu.memory_space<any>>
    %c384_i32_5 = arith.constant 384 : i32
    %c0_i32_6 = arith.constant 0 : i32
    %5 = tpu.memref_slice %arg15[%c384_i32_5, %c0_i32_6] : memref<2304x512xbf16, #tpu.memory_space<vmem>> -> memref<384x512xbf16, #tpu.memory_space<vmem>>
    %6 = tpu.memref_slice %arg16[%c1_i32] : memref<6x!tpu.dma_semaphore, #tpu.memory_space<semaphore_mem>> -> memref<1x!tpu.dma_semaphore, #tpu.memory_space<semaphore_mem>>
    %7 = tpu.memref_squeeze %6 : memref<1x!tpu.dma_semaphore, #tpu.memory_space<semaphore_mem>> -> memref<!tpu.dma_semaphore, #tpu.memory_space<semaphore_mem>>
    tpu.enqueue_dma source(%4 : memref<384x512xbf16, #tpu.memory_space<any>>) target(%5 : memref<384x512xbf16, #tpu.memory_space<vmem>>) target_semaphore(%7 : memref<!tpu.dma_semaphore, #tpu.memory_space<semaphore_mem>>)
    %c2_i32 = arith.constant 2 : i32
    %c768_i32 = arith.constant 768 : i32
    %c0_i32_7 = arith.constant 0 : i32
    %8 = tpu.memref_slice %arg7[%c768_i32, %c0_i32_7] : memref<2304x512xbf16, #tpu.memory_space<any>> -> memref<384x512xbf16, #tpu.memory_space<any>>
    %c768_i32_8 = arith.constant 768 : i32
    %c0_i32_9 = arith.constant 0 : i32
    %9 = tpu.memref_slice %arg15[%c768_i32_8, %c0_i32_9] : memref<2304x512xbf16, #tpu.memory_space<vmem>> -> memref<384x512xbf16, #tpu.memory_space<vmem>>
    %10 = tpu.memref_slice %arg16[%c2_i32] : memref<6x!tpu.dma_semaphore, #tpu.memory_space<semaphore_mem>> -> memref<1x!tpu.dma_semaphore, #tpu.memory_space<semaphore_mem>>
    %11 = tpu.memref_squeeze %10 : memref<1x!tpu.dma_semaphore, #tpu.memory_space<semaphore_mem>> -> memref<!tpu.dma_semaphore, #tpu.memory_space<semaphore_mem>>
    tpu.enqueue_dma source(%8 : memref<384x512xbf16, #tpu.memory_space<any>>) target(%9 : memref<384x512xbf16, #tpu.memory_space<vmem>>) target_semaphore(%11 : memref<!tpu.dma_semaphore, #tpu.memory_space<semaphore_mem>>)
    %c3_i32 = arith.constant 3 : i32
    %c1152_i32 = arith.constant 1152 : i32
    %c0_i32_10 = arith.constant 0 : i32
    %12 = tpu.memref_slice %arg7[%c1152_i32, %c0_i32_10] : memref<2304x512xbf16, #tpu.memory_space<any>> -> memref<384x512xbf16, #tpu.memory_space<any>>
    %c1152_i32_11 = arith.constant 1152 : i32
    %c0_i32_12 = arith.constant 0 : i32
    %13 = tpu.memref_slice %arg15[%c1152_i32_11, %c0_i32_12] : memref<2304x512xbf16, #tpu.memory_space<vmem>> -> memref<384x512xbf16, #tpu.memory_space<vmem>>
    %14 = tpu.memref_slice %arg16[%c3_i32] : memref<6x!tpu.dma_semaphore, #tpu.memory_space<semaphore_mem>> -> memref<1x!tpu.dma_semaphore, #tpu.memory_space<semaphore_mem>>
    %15 = tpu.memref_squeeze %14 : memref<1x!tpu.dma_semaphore, #tpu.memory_space<semaphore_mem>> -> memref<!tpu.dma_semaphore, #tpu.memory_space<semaphore_mem>>
    tpu.enqueue_dma source(%12 : memref<384x512xbf16, #tpu.memory_space<any>>) target(%13 : memref<384x512xbf16, #tpu.memory_space<vmem>>) target_semaphore(%15 : memref<!tpu.dma_semaphore, #tpu.memory_space<semaphore_mem>>)
    %c4_i32 = arith.constant 4 : i32
    %c1536_i32 = arith.constant 1536 : i32
    %c0_i32_13 = arith.constant 0 : i32
    %16 = tpu.memref_slice %arg7[%c1536_i32, %c0_i32_13] : memref<2304x512xbf16, #tpu.memory_space<any>> -> memref<384x512xbf16, #tpu.memory_space<any>>
    %c1536_i32_14 = arith.constant 1536 : i32
    %c0_i32_15 = arith.constant 0 : i32
    %17 = tpu.memref_slice %arg15[%c1536_i32_14, %c0_i32_15] : memref<2304x512xbf16, #tpu.memory_space<vmem>> -> memref<384x512xbf16, #tpu.memory_space<vmem>>
    %18 = tpu.memref_slice %arg16[%c4_i32] : memref<6x!tpu.dma_semaphore, #tpu.memory_space<semaphore_mem>> -> memref<1x!tpu.dma_semaphore, #tpu.memory_space<semaphore_mem>>
    %19 = tpu.memref_squeeze %18 : memref<1x!tpu.dma_semaphore, #tpu.memory_space<semaphore_mem>> -> memref<!tpu.dma_semaphore, #tpu.memory_space<semaphore_mem>>
    tpu.enqueue_dma source(%16 : memref<384x512xbf16, #tpu.memory_space<any>>) target(%17 : memref<384x512xbf16, #tpu.memory_space<vmem>>) target_semaphore(%19 : memref<!tpu.dma_semaphore, #tpu.memory_space<semaphore_mem>>)
    %c5_i32 = arith.constant 5 : i32
    %c1920_i32 = arith.constant 1920 : i32
    %c0_i32_16 = arith.constant 0 : i32
    %20 = tpu.memref_slice %arg7[%c1920_i32, %c0_i32_16] : memref<2304x512xbf16, #tpu.memory_space<any>> -> memref<384x512xbf16, #tpu.memory_space<any>>
    %c1920_i32_17 = arith.constant 1920 : i32
    %c0_i32_18 = arith.constant 0 : i32
    %21 = tpu.memref_slice %arg15[%c1920_i32_17, %c0_i32_18] : memref<2304x512xbf16, #tpu.memory_space<vmem>> -> memref<384x512xbf16, #tpu.memory_space<vmem>>
    %22 = tpu.memref_slice %arg16[%c5_i32] : memref<6x!tpu.dma_semaphore, #tpu.memory_space<semaphore_mem>> -> memref<1x!tpu.dma_semaphore, #tpu.memory_space<semaphore_mem>>
    %23 = tpu.memref_squeeze %22 : memref<1x!tpu.dma_semaphore, #tpu.memory_space<semaphore_mem>> -> memref<!tpu.dma_semaphore, #tpu.memory_space<semaphore_mem>>
    tpu.enqueue_dma source(%20 : memref<384x512xbf16, #tpu.memory_space<any>>) target(%21 : memref<384x512xbf16, #tpu.memory_space<vmem>>) target_semaphore(%23 : memref<!tpu.dma_semaphore, #tpu.memory_space<semaphore_mem>>)
    %c0 = arith.constant 0 : index
    %c0_19 = arith.constant 0 : index
    %24 = vector.load %arg0[%c0, %c0_19] : memref<288x64xbf16, #tpu.memory_space<vmem>>, vector<288x64xbf16>
    %c0_20 = arith.constant 0 : index
    %c0_21 = arith.constant 0 : index
    %25 = vector.load %arg1[%c0_20, %c0_21] : memref<64x32xbf16, #tpu.memory_space<vmem>>, vector<64x32xbf16>
    %cst = arith.constant dense<0.000000e+00> : vector<288x32xf32>
    %26 = tpu.matmul %24, %25, %cst {dimension_numbers = #tpu.dot_dimension_numbers<[1], [0], [0], [1], [0, 0, 1, 1], [], []>} : vector<288x64xbf16>, vector<64x32xbf16>, vector<288x32xf32> -> vector<288x32xf32>
    %c0_22 = arith.constant 0 : index
    %c0_23 = arith.constant 0 : index
    %27 = vector.load %arg2[%c0_22, %c0_23] : memref<1x32xf32, #tpu.memory_space<vmem>>, vector<1x32xf32>
    %28 = vector.broadcast %27 : vector<1x32xf32> to vector<288x32xf32>
    %29 = arith.addf %26, %28 : vector<288x32xf32>
    %cst_24 = arith.constant 0.000000e+00 : f32
    %30 = vector.broadcast %cst_24 : f32 to vector<288x32xf32>
    %31 = arith.maximumf %29, %30 : vector<288x32xf32>
    %cst_25 = arith.constant 0.000000e+00 : f32
    %32 = vector.broadcast %cst_25 : f32 to vector<72x64xf32>
    %33 = vector.extract_strided_slice %31 {offsets = [0, 0], sizes = [72, 32], strides = [1, 1]} : vector<288x32xf32> to vector<72x32xf32>
    %34 = arith.truncf %33 : vector<72x32xf32> to vector<72x32xbf16>
    %c0_26 = arith.constant 0 : index
    %c0_27 = arith.constant 0 : index
    %c0_28 = arith.constant 0 : index
    %35 = vector.load %arg3[%c0_26, %c0_27, %c0_28] : memref<4x32x64xbf16, #tpu.memory_space<vmem>>, vector<1x32x64xbf16>
    %36 = vector.shape_cast %35 : vector<1x32x64xbf16> to vector<32x64xbf16>
    %cst_29 = arith.constant dense<0.000000e+00> : vector<72x64xf32>
    %37 = tpu.matmul %34, %36, %cst_29 {dimension_numbers = #tpu.dot_dimension_numbers<[1], [0], [0], [1], [0, 0, 1, 1], [], []>} : vector<72x32xbf16>, vector<32x64xbf16>, vector<72x64xf32> -> vector<72x64xf32>
    %38 = arith.addf %32, %37 : vector<72x64xf32>
    %39 = vector.extract_strided_slice %31 {offsets = [72, 0], sizes = [72, 32], strides = [1, 1]} : vector<288x32xf32> to vector<72x32xf32>
    %40 = arith.truncf %39 : vector<72x32xf32> to vector<72x32xbf16>
    %c1 = arith.constant 1 : index
    %c0_30 = arith.constant 0 : index
    %c0_31 = arith.constant 0 : index
    %41 = vector.load %arg3[%c1, %c0_30, %c0_31] : memref<4x32x64xbf16, #tpu.memory_space<vmem>>, vector<1x32x64xbf16>
    %42 = vector.shape_cast %41 : vector<1x32x64xbf16> to vector<32x64xbf16>
    %cst_32 = arith.constant dense<0.000000e+00> : vector<72x64xf32>
    %43 = tpu.matmul %40, %42, %cst_32 {dimension_numbers = #tpu.dot_dimension_numbers<[1], [0], [0], [1], [0, 0, 1, 1], [], []>} : vector<72x32xbf16>, vector<32x64xbf16>, vector<72x64xf32> -> vector<72x64xf32>
    %44 = arith.addf %38, %43 : vector<72x64xf32>
    %45 = vector.extract_strided_slice %31 {offsets = [144, 0], sizes = [72, 32], strides = [1, 1]} : vector<288x32xf32> to vector<72x32xf32>
    %46 = arith.truncf %45 : vector<72x32xf32> to vector<72x32xbf16>
    %c2 = arith.constant 2 : index
    %c0_33 = arith.constant 0 : index
    %c0_34 = arith.constant 0 : index
    %47 = vector.load %arg3[%c2, %c0_33, %c0_34] : memref<4x32x64xbf16, #tpu.memory_space<vmem>>, vector<1x32x64xbf16>
    %48 = vector.shape_cast %47 : vector<1x32x64xbf16> to vector<32x64xbf16>
    %cst_35 = arith.constant dense<0.000000e+00> : vector<72x64xf32>
    %49 = tpu.matmul %46, %48, %cst_35 {dimension_numbers = #tpu.dot_dimension_numbers<[1], [0], [0], [1], [0, 0, 1, 1], [], []>} : vector<72x32xbf16>, vector<32x64xbf16>, vector<72x64xf32> -> vector<72x64xf32>
    %50 = arith.addf %44, %49 : vector<72x64xf32>
    %51 = vector.extract_strided_slice %31 {offsets = [216, 0], sizes = [72, 32], strides = [1, 1]} : vector<288x32xf32> to vector<72x32xf32>
    %52 = arith.truncf %51 : vector<72x32xf32> to vector<72x32xbf16>
    %c3 = arith.constant 3 : index
    %c0_36 = arith.constant 0 : index
    %c0_37 = arith.constant 0 : index
    %53 = vector.load %arg3[%c3, %c0_36, %c0_37] : memref<4x32x64xbf16, #tpu.memory_space<vmem>>, vector<1x32x64xbf16>
    %54 = vector.shape_cast %53 : vector<1x32x64xbf16> to vector<32x64xbf16>
    %cst_38 = arith.constant dense<0.000000e+00> : vector<72x64xf32>
    %55 = tpu.matmul %52, %54, %cst_38 {dimension_numbers = #tpu.dot_dimension_numbers<[1], [0], [0], [1], [0, 0, 1, 1], [], []>} : vector<72x32xbf16>, vector<32x64xbf16>, vector<72x64xf32> -> vector<72x64xf32>
    %56 = arith.addf %50, %55 : vector<72x64xf32>
    %c0_39 = arith.constant 0 : index
    %c0_40 = arith.constant 0 : index
    %57 = vector.load %arg4[%c0_39, %c0_40] : memref<1x64xf32, #tpu.memory_space<vmem>>, vector<1x64xf32>
    %58 = vector.broadcast %57 : vector<1x64xf32> to vector<72x64xf32>
    %59 = arith.addf %56, %58 : vector<72x64xf32>
    %cst_41 = arith.constant 0.000000e+00 : f32
    %60 = vector.broadcast %cst_41 : f32 to vector<72x64xf32>
    %61 = arith.maximumf %59, %60 : vector<72x64xf32>
    %62 = arith.truncf %61 : vector<72x64xf32> to vector<72x64xbf16>
    %c0_42 = arith.constant 0 : index
    %c0_43 = arith.constant 0 : index
    %63 = vector.load %arg5[%c0_42, %c0_43] : memref<64x64xbf16, #tpu.memory_space<vmem>>, vector<64x64xbf16>
    %cst_44 = arith.constant dense<0.000000e+00> : vector<72x64xf32>
    %64 = tpu.matmul %62, %63, %cst_44 {dimension_numbers = #tpu.dot_dimension_numbers<[1], [0], [0], [1], [0, 0, 1, 1], [], []>} : vector<72x64xbf16>, vector<64x64xbf16>, vector<72x64xf32> -> vector<72x64xf32>
    %c0_45 = arith.constant 0 : index
    %c0_46 = arith.constant 0 : index
    %65 = vector.load %arg6[%c0_45, %c0_46] : memref<1x64xf32, #tpu.memory_space<vmem>>, vector<1x64xf32>
    %66 = vector.broadcast %65 : vector<1x64xf32> to vector<72x64xf32>
    %67 = arith.addf %64, %66 : vector<72x64xf32>
    %cst_47 = arith.constant 0.000000e+00 : f32
    %68 = vector.broadcast %cst_47 : f32 to vector<72x64xf32>
    %69 = arith.maximumf %67, %68 : vector<72x64xf32>
    %c0_48 = arith.constant 0 : index
    %c0_49 = arith.constant 0 : index
    %70 = vector.load %arg12[%c0_48, %c0_49] : memref<72x64xf32, #tpu.memory_space<vmem>>, vector<72x64xf32>
    tpu.vector_store %arg12[%c0_48, %c0_49], %69 {strides = array<i32>} : memref<72x64xf32, #tpu.memory_space<vmem>>, vector<72x64xf32>,
    %c0_50 = arith.constant 0 : index
    %c0_51 = arith.constant 0 : index
    %71 = vector.load %arg12[%c0_50, %c0_51] : memref<72x64xf32, #tpu.memory_space<vmem>>, vector<2x64xf32>
    %c0_52 = arith.constant 0 : index
    %c0_53 = arith.constant 0 : index
    %72 = vector.load %arg13[%c0_52, %c0_53] : memref<2x2304xf32, #tpu.memory_space<vmem>>, vector<2x64xf32>
    tpu.vector_store %arg13[%c0_52, %c0_53], %71 {strides = array<i32>} : memref<2x2304xf32, #tpu.memory_space<vmem>>, vector<2x64xf32>,
    %c2_54 = arith.constant 2 : index
    %c0_55 = arith.constant 0 : index
    %73 = vector.load %arg12[%c2_54, %c0_55] : memref<72x64xf32, #tpu.memory_space<vmem>>, vector<2x64xf32>
    %c0_56 = arith.constant 0 : index
    %c64 = arith.constant 64 : index
    %74 = vector.load %arg13[%c0_56, %c64] : memref<2x2304xf32, #tpu.memory_space<vmem>>, vector<2x64xf32>
    tpu.vector_store %arg13[%c0_56, %c64], %73 {strides = array<i32>} : memref<2x2304xf32, #tpu.memory_space<vmem>>, vector<2x64xf32>,
    %c4 = arith.constant 4 : index
    %c0_57 = arith.constant 0 : index
    %75 = vector.load %arg12[%c4, %c0_57] : memref<72x64xf32, #tpu.memory_space<vmem>>, vector<2x64xf32>
    %c0_58 = arith.constant 0 : index
    %c128 = arith.constant 128 : index
    %76 = vector.load %arg13[%c0_58, %c128] : memref<2x2304xf32, #tpu.memory_space<vmem>>, vector<2x64xf32>
    tpu.vector_store %arg13[%c0_58, %c128], %75 {strides = array<i32>} : memref<2x2304xf32, #tpu.memory_space<vmem>>, vector<2x64xf32>,
    %c6 = arith.constant 6 : index
    %c0_59 = arith.constant 0 : index
    %77 = vector.load %arg12[%c6, %c0_59] : memref<72x64xf32, #tpu.memory_space<vmem>>, vector<2x64xf32>
    %c0_60 = arith.constant 0 : index
    %c192 = arith.constant 192 : index
    %78 = vector.load %arg13[%c0_60, %c192] : memref<2x2304xf32, #tpu.memory_space<vmem>>, vector<2x64xf32>
    tpu.vector_store %arg13[%c0_60, %c192], %77 {strides = array<i32>} : memref<2x2304xf32, #tpu.memory_space<vmem>>, vector<2x64xf32>,
    %c8 = arith.constant 8 : index
    %c0_61 = arith.constant 0 : index
    %79 = vector.load %arg12[%c8, %c0_61] : memref<72x64xf32, #tpu.memory_space<vmem>>, vector<2x64xf32>
    %c0_62 = arith.constant 0 : index
    %c256 = arith.constant 256 : index
    %80 = vector.load %arg13[%c0_62, %c256] : memref<2x2304xf32, #tpu.memory_space<vmem>>, vector<2x64xf32>
    tpu.vector_store %arg13[%c0_62, %c256], %79 {strides = array<i32>} : memref<2x2304xf32, #tpu.memory_space<vmem>>, vector<2x64xf32>,
    %c10 = arith.constant 10 : index
    %c0_63 = arith.constant 0 : index
    %81 = vector.load %arg12[%c10, %c0_63] : memref<72x64xf32, #tpu.memory_space<vmem>>, vector<2x64xf32>
    %c0_64 = arith.constant 0 : index
    %c320 = arith.constant 320 : index
    %82 = vector.load %arg13[%c0_64, %c320] : memref<2x2304xf32, #tpu.memory_space<vmem>>, vector<2x64xf32>
    tpu.vector_store %arg13[%c0_64, %c320], %81 {strides = array<i32>} : memref<2x2304xf32, #tpu.memory_space<vmem>>, vector<2x64xf32>,
    %c12 = arith.constant 12 : index
    %c0_65 = arith.constant 0 : index
    %83 = vector.load %arg12[%c12, %c0_65] : memref<72x64xf32, #tpu.memory_space<vmem>>, vector<2x64xf32>
    %c0_66 = arith.constant 0 : index
    %c384 = arith.constant 384 : index
    %84 = vector.load %arg13[%c0_66, %c384] : memref<2x2304xf32, #tpu.memory_space<vmem>>, vector<2x64xf32>
    tpu.vector_store %arg13[%c0_66, %c384], %83 {strides = array<i32>} : memref<2x2304xf32, #tpu.memory_space<vmem>>, vector<2x64xf32>,
    %c14 = arith.constant 14 : index
    %c0_67 = arith.constant 0 : index
    %85 = vector.load %arg12[%c14, %c0_67] : memref<72x64xf32, #tpu.memory_space<vmem>>, vector<2x64xf32>
    %c0_68 = arith.constant 0 : index
    %c448 = arith.constant 448 : index
    %86 = vector.load %arg13[%c0_68, %c448] : memref<2x2304xf32, #tpu.memory_space<vmem>>, vector<2x64xf32>
    tpu.vector_store %arg13[%c0_68, %c448], %85 {strides = array<i32>} : memref<2x2304xf32, #tpu.memory_space<vmem>>, vector<2x64xf32>,
    %c16 = arith.constant 16 : index
    %c0_69 = arith.constant 0 : index
    %87 = vector.load %arg12[%c16, %c0_69] : memref<72x64xf32, #tpu.memory_space<vmem>>, vector<2x64xf32>
    %c0_70 = arith.constant 0 : index
    %c512 = arith.constant 512 : index
    %88 = vector.load %arg13[%c0_70, %c512] : memref<2x2304xf32, #tpu.memory_space<vmem>>, vector<2x64xf32>
    tpu.vector_store %arg13[%c0_70, %c512], %87 {strides = array<i32>} : memref<2x2304xf32, #tpu.memory_space<vmem>>, vector<2x64xf32>,
    %c18 = arith.constant 18 : index
    %c0_71 = arith.constant 0 : index
    %89 = vector.load %arg12[%c18, %c0_71] : memref<72x64xf32, #tpu.memory_space<vmem>>, vector<2x64xf32>
    %c0_72 = arith.constant 0 : index
    %c576 = arith.constant 576 : index
    %90 = vector.load %arg13[%c0_72, %c576] : memref<2x2304xf32, #tpu.memory_space<vmem>>, vector<2x64xf32>
    tpu.vector_store %arg13[%c0_72, %c576], %89 {strides = array<i32>} : memref<2x2304xf32, #tpu.memory_space<vmem>>, vector<2x64xf32>,
    %c20 = arith.constant 20 : index
    %c0_73 = arith.constant 0 : index
    %91 = vector.load %arg12[%c20, %c0_73] : memref<72x64xf32, #tpu.memory_space<vmem>>, vector<2x64xf32>
    %c0_74 = arith.constant 0 : index
    %c640 = arith.constant 640 : index
    %92 = vector.load %arg13[%c0_74, %c640] : memref<2x2304xf32, #tpu.memory_space<vmem>>, vector<2x64xf32>
    tpu.vector_store %arg13[%c0_74, %c640], %91 {strides = array<i32>} : memref<2x2304xf32, #tpu.memory_space<vmem>>, vector<2x64xf32>,
    %c22 = arith.constant 22 : index
    %c0_75 = arith.constant 0 : index
    %93 = vector.load %arg12[%c22, %c0_75] : memref<72x64xf32, #tpu.memory_space<vmem>>, vector<2x64xf32>
    %c0_76 = arith.constant 0 : index
    %c704 = arith.constant 704 : index
    %94 = vector.load %arg13[%c0_76, %c704] : memref<2x2304xf32, #tpu.memory_space<vmem>>, vector<2x64xf32>
    tpu.vector_store %arg13[%c0_76, %c704], %93 {strides = array<i32>} : memref<2x2304xf32, #tpu.memory_space<vmem>>, vector<2x64xf32>,
    %c24 = arith.constant 24 : index
    %c0_77 = arith.constant 0 : index
    %95 = vector.load %arg12[%c24, %c0_77] : memref<72x64xf32, #tpu.memory_space<vmem>>, vector<2x64xf32>
    %c0_78 = arith.constant 0 : index
    %c768 = arith.constant 768 : index
    %96 = vector.load %arg13[%c0_78, %c768] : memref<2x2304xf32, #tpu.memory_space<vmem>>, vector<2x64xf32>
    tpu.vector_store %arg13[%c0_78, %c768], %95 {strides = array<i32>} : memref<2x2304xf32, #tpu.memory_space<vmem>>, vector<2x64xf32>,
    %c26 = arith.constant 26 : index
    %c0_79 = arith.constant 0 : index
    %97 = vector.load %arg12[%c26, %c0_79] : memref<72x64xf32, #tpu.memory_space<vmem>>, vector<2x64xf32>
    %c0_80 = arith.constant 0 : index
    %c832 = arith.constant 832 : index
    %98 = vector.load %arg13[%c0_80, %c832] : memref<2x2304xf32, #tpu.memory_space<vmem>>, vector<2x64xf32>
    tpu.vector_store %arg13[%c0_80, %c832], %97 {strides = array<i32>} : memref<2x2304xf32, #tpu.memory_space<vmem>>, vector<2x64xf32>,
    %c28 = arith.constant 28 : index
    %c0_81 = arith.constant 0 : index
    %99 = vector.load %arg12[%c28, %c0_81] : memref<72x64xf32, #tpu.memory_space<vmem>>, vector<2x64xf32>
    %c0_82 = arith.constant 0 : index
    %c896 = arith.constant 896 : index
    %100 = vector.load %arg13[%c0_82, %c896] : memref<2x2304xf32, #tpu.memory_space<vmem>>, vector<2x64xf32>
    tpu.vector_store %arg13[%c0_82, %c896], %99 {strides = array<i32>} : memref<2x2304xf32, #tpu.memory_space<vmem>>, vector<2x64xf32>,
    %c30 = arith.constant 30 : index
    %c0_83 = arith.constant 0 : index
    %101 = vector.load %arg12[%c30, %c0_83] : memref<72x64xf32, #tpu.memory_space<vmem>>, vector<2x64xf32>
    %c0_84 = arith.constant 0 : index
    %c960 = arith.constant 960 : index
    %102 = vector.load %arg13[%c0_84, %c960] : memref<2x2304xf32, #tpu.memory_space<vmem>>, vector<2x64xf32>
    tpu.vector_store %arg13[%c0_84, %c960], %101 {strides = array<i32>} : memref<2x2304xf32, #tpu.memory_space<vmem>>, vector<2x64xf32>,
    %c32 = arith.constant 32 : index
    %c0_85 = arith.constant 0 : index
    %103 = vector.load %arg12[%c32, %c0_85] : memref<72x64xf32, #tpu.memory_space<vmem>>, vector<2x64xf32>
    %c0_86 = arith.constant 0 : index
    %c1024 = arith.constant 1024 : index
    %104 = vector.load %arg13[%c0_86, %c1024] : memref<2x2304xf32, #tpu.memory_space<vmem>>, vector<2x64xf32>
    tpu.vector_store %arg13[%c0_86, %c1024], %103 {strides = array<i32>} : memref<2x2304xf32, #tpu.memory_space<vmem>>, vector<2x64xf32>,
    %c34 = arith.constant 34 : index
    %c0_87 = arith.constant 0 : index
    %105 = vector.load %arg12[%c34, %c0_87] : memref<72x64xf32, #tpu.memory_space<vmem>>, vector<2x64xf32>
    %c0_88 = arith.constant 0 : index
    %c1088 = arith.constant 1088 : index
    %106 = vector.load %arg13[%c0_88, %c1088] : memref<2x2304xf32, #tpu.memory_space<vmem>>, vector<2x64xf32>
    tpu.vector_store %arg13[%c0_88, %c1088], %105 {strides = array<i32>} : memref<2x2304xf32, #tpu.memory_space<vmem>>, vector<2x64xf32>,
    %c36 = arith.constant 36 : index
    %c0_89 = arith.constant 0 : index
    %107 = vector.load %arg12[%c36, %c0_89] : memref<72x64xf32, #tpu.memory_space<vmem>>, vector<2x64xf32>
    %c0_90 = arith.constant 0 : index
    %c1152 = arith.constant 1152 : index
    %108 = vector.load %arg13[%c0_90, %c1152] : memref<2x2304xf32, #tpu.memory_space<vmem>>, vector<2x64xf32>
    tpu.vector_store %arg13[%c0_90, %c1152], %107 {strides = array<i32>} : memref<2x2304xf32, #tpu.memory_space<vmem>>, vector<2x64xf32>,
    %c38 = arith.constant 38 : index
    %c0_91 = arith.constant 0 : index
    %109 = vector.load %arg12[%c38, %c0_91] : memref<72x64xf32, #tpu.memory_space<vmem>>, vector<2x64xf32>
    %c0_92 = arith.constant 0 : index
    %c1216 = arith.constant 1216 : index
    %110 = vector.load %arg13[%c0_92, %c1216] : memref<2x2304xf32, #tpu.memory_space<vmem>>, vector<2x64xf32>
    tpu.vector_store %arg13[%c0_92, %c1216], %109 {strides = array<i32>} : memref<2x2304xf32, #tpu.memory_space<vmem>>, vector<2x64xf32>,
    %c40 = arith.constant 40 : index
    %c0_93 = arith.constant 0 : index
    %111 = vector.load %arg12[%c40, %c0_93] : memref<72x64xf32, #tpu.memory_space<vmem>>, vector<2x64xf32>
    %c0_94 = arith.constant 0 : index
    %c1280 = arith.constant 1280 : index
    %112 = vector.load %arg13[%c0_94, %c1280] : memref<2x2304xf32, #tpu.memory_space<vmem>>, vector<2x64xf32>
    tpu.vector_store %arg13[%c0_94, %c1280], %111 {strides = array<i32>} : memref<2x2304xf32, #tpu.memory_space<vmem>>, vector<2x64xf32>,
    %c42 = arith.constant 42 : index
    %c0_95 = arith.constant 0 : index
    %113 = vector.load %arg12[%c42, %c0_95] : memref<72x64xf32, #tpu.memory_space<vmem>>, vector<2x64xf32>
    %c0_96 = arith.constant 0 : index
    %c1344 = arith.constant 1344 : index
    %114 = vector.load %arg13[%c0_96, %c1344] : memref<2x2304xf32, #tpu.memory_space<vmem>>, vector<2x64xf32>
    tpu.vector_store %arg13[%c0_96, %c1344], %113 {strides = array<i32>} : memref<2x2304xf32, #tpu.memory_space<vmem>>, vector<2x64xf32>,
    %c44 = arith.constant 44 : index
    %c0_97 = arith.constant 0 : index
    %115 = vector.load %arg12[%c44, %c0_97] : memref<72x64xf32, #tpu.memory_space<vmem>>, vector<2x64xf32>
    %c0_98 = arith.constant 0 : index
    %c1408 = arith.constant 1408 : index
    %116 = vector.load %arg13[%c0_98, %c1408] : memref<2x2304xf32, #tpu.memory_space<vmem>>, vector<2x64xf32>
    tpu.vector_store %arg13[%c0_98, %c1408], %115 {strides = array<i32>} : memref<2x2304xf32, #tpu.memory_space<vmem>>, vector<2x64xf32>,
    %c46 = arith.constant 46 : index
    %c0_99 = arith.constant 0 : index
    %117 = vector.load %arg12[%c46, %c0_99] : memref<72x64xf32, #tpu.memory_space<vmem>>, vector<2x64xf32>
    %c0_100 = arith.constant 0 : index
    %c1472 = arith.constant 1472 : index
    %118 = vector.load %arg13[%c0_100, %c1472] : memref<2x2304xf32, #tpu.memory_space<vmem>>, vector<2x64xf32>
    tpu.vector_store %arg13[%c0_100, %c1472], %117 {strides = array<i32>} : memref<2x2304xf32, #tpu.memory_space<vmem>>, vector<2x64xf32>,
    %c48 = arith.constant 48 : index
    %c0_101 = arith.constant 0 : index
    %119 = vector.load %arg12[%c48, %c0_101] : memref<72x64xf32, #tpu.memory_space<vmem>>, vector<2x64xf32>
    %c0_102 = arith.constant 0 : index
    %c1536 = arith.constant 1536 : index
    %120 = vector.load %arg13[%c0_102, %c1536] : memref<2x2304xf32, #tpu.memory_space<vmem>>, vector<2x64xf32>
    tpu.vector_store %arg13[%c0_102, %c1536], %119 {strides = array<i32>} : memref<2x2304xf32, #tpu.memory_space<vmem>>, vector<2x64xf32>,
    %c50 = arith.constant 50 : index
    %c0_103 = arith.constant 0 : index
    %121 = vector.load %arg12[%c50, %c0_103] : memref<72x64xf32, #tpu.memory_space<vmem>>, vector<2x64xf32>
    %c0_104 = arith.constant 0 : index
    %c1600 = arith.constant 1600 : index
    %122 = vector.load %arg13[%c0_104, %c1600] : memref<2x2304xf32, #tpu.memory_space<vmem>>, vector<2x64xf32>
    tpu.vector_store %arg13[%c0_104, %c1600], %121 {strides = array<i32>} : memref<2x2304xf32, #tpu.memory_space<vmem>>, vector<2x64xf32>,
    %c52 = arith.constant 52 : index
    %c0_105 = arith.constant 0 : index
    %123 = vector.load %arg12[%c52, %c0_105] : memref<72x64xf32, #tpu.memory_space<vmem>>, vector<2x64xf32>
    %c0_106 = arith.constant 0 : index
    %c1664 = arith.constant 1664 : index
    %124 = vector.load %arg13[%c0_106, %c1664] : memref<2x2304xf32, #tpu.memory_space<vmem>>, vector<2x64xf32>
    tpu.vector_store %arg13[%c0_106, %c1664], %123 {strides = array<i32>} : memref<2x2304xf32, #tpu.memory_space<vmem>>, vector<2x64xf32>,
    %c54 = arith.constant 54 : index
    %c0_107 = arith.constant 0 : index
    %125 = vector.load %arg12[%c54, %c0_107] : memref<72x64xf32, #tpu.memory_space<vmem>>, vector<2x64xf32>
    %c0_108 = arith.constant 0 : index
    %c1728 = arith.constant 1728 : index
    %126 = vector.load %arg13[%c0_108, %c1728] : memref<2x2304xf32, #tpu.memory_space<vmem>>, vector<2x64xf32>
    tpu.vector_store %arg13[%c0_108, %c1728], %125 {strides = array<i32>} : memref<2x2304xf32, #tpu.memory_space<vmem>>, vector<2x64xf32>,
    %c56 = arith.constant 56 : index
    %c0_109 = arith.constant 0 : index
    %127 = vector.load %arg12[%c56, %c0_109] : memref<72x64xf32, #tpu.memory_space<vmem>>, vector<2x64xf32>
    %c0_110 = arith.constant 0 : index
    %c1792 = arith.constant 1792 : index
    %128 = vector.load %arg13[%c0_110, %c1792] : memref<2x2304xf32, #tpu.memory_space<vmem>>, vector<2x64xf32>
    tpu.vector_store %arg13[%c0_110, %c1792], %127 {strides = array<i32>} : memref<2x2304xf32, #tpu.memory_space<vmem>>, vector<2x64xf32>,
    %c58 = arith.constant 58 : index
    %c0_111 = arith.constant 0 : index
    %129 = vector.load %arg12[%c58, %c0_111] : memref<72x64xf32, #tpu.memory_space<vmem>>, vector<2x64xf32>
    %c0_112 = arith.constant 0 : index
    %c1856 = arith.constant 1856 : index
    %130 = vector.load %arg13[%c0_112, %c1856] : memref<2x2304xf32, #tpu.memory_space<vmem>>, vector<2x64xf32>
    tpu.vector_store %arg13[%c0_112, %c1856], %129 {strides = array<i32>} : memref<2x2304xf32, #tpu.memory_space<vmem>>, vector<2x64xf32>,
    %c60 = arith.constant 60 : index
    %c0_113 = arith.constant 0 : index
    %131 = vector.load %arg12[%c60, %c0_113] : memref<72x64xf32, #tpu.memory_space<vmem>>, vector<2x64xf32>
    %c0_114 = arith.constant 0 : index
    %c1920 = arith.constant 1920 : index
    %132 = vector.load %arg13[%c0_114, %c1920] : memref<2x2304xf32, #tpu.memory_space<vmem>>, vector<2x64xf32>
    tpu.vector_store %arg13[%c0_114, %c1920], %131 {strides = array<i32>} : memref<2x2304xf32, #tpu.memory_space<vmem>>, vector<2x64xf32>,
    %c62 = arith.constant 62 : index
    %c0_115 = arith.constant 0 : index
    %133 = vector.load %arg12[%c62, %c0_115] : memref<72x64xf32, #tpu.memory_space<vmem>>, vector<2x64xf32>
    %c0_116 = arith.constant 0 : index
    %c1984 = arith.constant 1984 : index
    %134 = vector.load %arg13[%c0_116, %c1984] : memref<2x2304xf32, #tpu.memory_space<vmem>>, vector<2x64xf32>
    tpu.vector_store %arg13[%c0_116, %c1984], %133 {strides = array<i32>} : memref<2x2304xf32, #tpu.memory_space<vmem>>, vector<2x64xf32>,
    %c64_117 = arith.constant 64 : index
    %c0_118 = arith.constant 0 : index
    %135 = vector.load %arg12[%c64_117, %c0_118] : memref<72x64xf32, #tpu.memory_space<vmem>>, vector<2x64xf32>
    %c0_119 = arith.constant 0 : index
    %c2048 = arith.constant 2048 : index
    %136 = vector.load %arg13[%c0_119, %c2048] : memref<2x2304xf32, #tpu.memory_space<vmem>>, vector<2x64xf32>
    tpu.vector_store %arg13[%c0_119, %c2048], %135 {strides = array<i32>} : memref<2x2304xf32, #tpu.memory_space<vmem>>, vector<2x64xf32>,
    %c66 = arith.constant 66 : index
    %c0_120 = arith.constant 0 : index
    %137 = vector.load %arg12[%c66, %c0_120] : memref<72x64xf32, #tpu.memory_space<vmem>>, vector<2x64xf32>
    %c0_121 = arith.constant 0 : index
    %c2112 = arith.constant 2112 : index
    %138 = vector.load %arg13[%c0_121, %c2112] : memref<2x2304xf32, #tpu.memory_space<vmem>>, vector<2x64xf32>
    tpu.vector_store %arg13[%c0_121, %c2112], %137 {strides = array<i32>} : memref<2x2304xf32, #tpu.memory_space<vmem>>, vector<2x64xf32>,
    %c68 = arith.constant 68 : index
    %c0_122 = arith.constant 0 : index
    %139 = vector.load %arg12[%c68, %c0_122] : memref<72x64xf32, #tpu.memory_space<vmem>>, vector<2x64xf32>
    %c0_123 = arith.constant 0 : index
    %c2176 = arith.constant 2176 : index
    %140 = vector.load %arg13[%c0_123, %c2176] : memref<2x2304xf32, #tpu.memory_space<vmem>>, vector<2x64xf32>
    tpu.vector_store %arg13[%c0_123, %c2176], %139 {strides = array<i32>} : memref<2x2304xf32, #tpu.memory_space<vmem>>, vector<2x64xf32>,
    %c70 = arith.constant 70 : index
    %c0_124 = arith.constant 0 : index
    %141 = vector.load %arg12[%c70, %c0_124] : memref<72x64xf32, #tpu.memory_space<vmem>>, vector<2x64xf32>
    %c0_125 = arith.constant 0 : index
    %c2240 = arith.constant 2240 : index
    %142 = vector.load %arg13[%c0_125, %c2240] : memref<2x2304xf32, #tpu.memory_space<vmem>>, vector<2x64xf32>
    tpu.vector_store %arg13[%c0_125, %c2240], %141 {strides = array<i32>} : memref<2x2304xf32, #tpu.memory_space<vmem>>, vector<2x64xf32>,
    %cst_126 = arith.constant 0.000000e+00 : f32
    %143 = vector.broadcast %cst_126 : f32 to vector<2x512xf32>
    %c0_127 = arith.constant 0 : index
    %c0_128 = arith.constant 0 : index
    %144 = vector.load %arg8[%c0_127, %c0_128] : memref<1x512xf32, #tpu.memory_space<vmem>>, vector<1x512xf32>
    %145 = vector.broadcast %144 : vector<1x512xf32> to vector<2x512xf32>
    %146 = arith.addf %143, %145 : vector<2x512xf32>
    %c0_129 = arith.constant 0 : index
    %c0_130 = arith.constant 0 : index
    %147 = vector.load %arg14[%c0_129, %c0_130] : memref<2x512xf32, #tpu.memory_space<vmem>>, vector<2x512xf32>
    tpu.vector_store %arg14[%c0_129, %c0_130], %146 {strides = array<i32>} : memref<2x512xf32, #tpu.memory_space<vmem>>, vector<2x512xf32>,
    %c0_i32_131 = arith.constant 0 : i32
    %c0_i32_132 = arith.constant 0 : i32
    %c0_i32_133 = arith.constant 0 : i32
    %148 = tpu.memref_slice %arg7[%c0_i32_132, %c0_i32_133] : memref<2304x512xbf16, #tpu.memory_space<any>> -> memref<384x512xbf16, #tpu.memory_space<any>>
    %c0_i32_134 = arith.constant 0 : i32
    %c0_i32_135 = arith.constant 0 : i32
    %149 = tpu.memref_slice %arg15[%c0_i32_134, %c0_i32_135] : memref<2304x512xbf16, #tpu.memory_space<vmem>> -> memref<384x512xbf16, #tpu.memory_space<vmem>>
    %150 = tpu.memref_slice %arg16[%c0_i32_131] : memref<6x!tpu.dma_semaphore, #tpu.memory_space<semaphore_mem>> -> memref<1x!tpu.dma_semaphore, #tpu.memory_space<semaphore_mem>>
    %151 = tpu.memref_squeeze %150 : memref<1x!tpu.dma_semaphore, #tpu.memory_space<semaphore_mem>> -> memref<!tpu.dma_semaphore, #tpu.memory_space<semaphore_mem>>
    tpu.wait_dma2 semaphore(%151 : memref<!tpu.dma_semaphore, #tpu.memory_space<semaphore_mem>>) src(%148 : memref<384x512xbf16, #tpu.memory_space<any>>) dst(%149 : memref<384x512xbf16, #tpu.memory_space<vmem>>)
    %c0_136 = arith.constant 0 : index
    %c0_137 = arith.constant 0 : index
    %152 = vector.load %arg14[%c0_136, %c0_137] : memref<2x512xf32, #tpu.memory_space<vmem>>, vector<2x512xf32>
    %c0_138 = arith.constant 0 : index
    %c0_139 = arith.constant 0 : index
    %153 = vector.load %arg13[%c0_138, %c0_139] : memref<2x2304xf32, #tpu.memory_space<vmem>>, vector<2x384xf32>
    %154 = arith.truncf %153 : vector<2x384xf32> to vector<2x384xbf16>
    %c0_140 = arith.constant 0 : index
    %c0_141 = arith.constant 0 : index
    %155 = vector.load %arg15[%c0_140, %c0_141] : memref<2304x512xbf16, #tpu.memory_space<vmem>>, vector<384x512xbf16>
    %cst_142 = arith.constant dense<0.000000e+00> : vector<2x512xf32>
    %156 = tpu.matmul %154, %155, %cst_142 {dimension_numbers = #tpu.dot_dimension_numbers<[1], [0], [0], [1], [0, 0, 1, 1], [], []>} : vector<2x384xbf16>, vector<384x512xbf16>, vector<2x512xf32> -> vector<2x512xf32>
    %157 = arith.addf %152, %156 : vector<2x512xf32>
    %c0_143 = arith.constant 0 : index
    %c0_144 = arith.constant 0 : index
    %158 = vector.load %arg14[%c0_143, %c0_144] : memref<2x512xf32, #tpu.memory_space<vmem>>, vector<2x512xf32>
    tpu.vector_store %arg14[%c0_143, %c0_144], %157 {strides = array<i32>} : memref<2x512xf32, #tpu.memory_space<vmem>>, vector<2x512xf32>,
    %c1_i32_145 = arith.constant 1 : i32
    %c384_i32_146 = arith.constant 384 : i32
    %c0_i32_147 = arith.constant 0 : i32
    %159 = tpu.memref_slice %arg7[%c384_i32_146, %c0_i32_147] : memref<2304x512xbf16, #tpu.memory_space<any>> -> memref<384x512xbf16, #tpu.memory_space<any>>
    %c384_i32_148 = arith.constant 384 : i32
    %c0_i32_149 = arith.constant 0 : i32
    %160 = tpu.memref_slice %arg15[%c384_i32_148, %c0_i32_149] : memref<2304x512xbf16, #tpu.memory_space<vmem>> -> memref<384x512xbf16, #tpu.memory_space<vmem>>
    %161 = tpu.memref_slice %arg16[%c1_i32_145] : memref<6x!tpu.dma_semaphore, #tpu.memory_space<semaphore_mem>> -> memref<1x!tpu.dma_semaphore, #tpu.memory_space<semaphore_mem>>
    %162 = tpu.memref_squeeze %161 : memref<1x!tpu.dma_semaphore, #tpu.memory_space<semaphore_mem>> -> memref<!tpu.dma_semaphore, #tpu.memory_space<semaphore_mem>>
    tpu.wait_dma2 semaphore(%162 : memref<!tpu.dma_semaphore, #tpu.memory_space<semaphore_mem>>) src(%159 : memref<384x512xbf16, #tpu.memory_space<any>>) dst(%160 : memref<384x512xbf16, #tpu.memory_space<vmem>>)
    %c0_150 = arith.constant 0 : index
    %c0_151 = arith.constant 0 : index
    %163 = vector.load %arg14[%c0_150, %c0_151] : memref<2x512xf32, #tpu.memory_space<vmem>>, vector<2x512xf32>
    %c0_152 = arith.constant 0 : index
    %c384_153 = arith.constant 384 : index
    %164 = vector.load %arg13[%c0_152, %c384_153] : memref<2x2304xf32, #tpu.memory_space<vmem>>, vector<2x384xf32>
    %165 = arith.truncf %164 : vector<2x384xf32> to vector<2x384xbf16>
    %c384_154 = arith.constant 384 : index
    %c0_155 = arith.constant 0 : index
    %166 = vector.load %arg15[%c384_154, %c0_155] : memref<2304x512xbf16, #tpu.memory_space<vmem>>, vector<384x512xbf16>
    %cst_156 = arith.constant dense<0.000000e+00> : vector<2x512xf32>
    %167 = tpu.matmul %165, %166, %cst_156 {dimension_numbers = #tpu.dot_dimension_numbers<[1], [0], [0], [1], [0, 0, 1, 1], [], []>} : vector<2x384xbf16>, vector<384x512xbf16>, vector<2x512xf32> -> vector<2x512xf32>
    %168 = arith.addf %163, %167 : vector<2x512xf32>
    %c0_157 = arith.constant 0 : index
    %c0_158 = arith.constant 0 : index
    %169 = vector.load %arg14[%c0_157, %c0_158] : memref<2x512xf32, #tpu.memory_space<vmem>>, vector<2x512xf32>
    tpu.vector_store %arg14[%c0_157, %c0_158], %168 {strides = array<i32>} : memref<2x512xf32, #tpu.memory_space<vmem>>, vector<2x512xf32>,
    %c2_i32_159 = arith.constant 2 : i32
    %c768_i32_160 = arith.constant 768 : i32
    %c0_i32_161 = arith.constant 0 : i32
    %170 = tpu.memref_slice %arg7[%c768_i32_160, %c0_i32_161] : memref<2304x512xbf16, #tpu.memory_space<any>> -> memref<384x512xbf16, #tpu.memory_space<any>>
    %c768_i32_162 = arith.constant 768 : i32
    %c0_i32_163 = arith.constant 0 : i32
    %171 = tpu.memref_slice %arg15[%c768_i32_162, %c0_i32_163] : memref<2304x512xbf16, #tpu.memory_space<vmem>> -> memref<384x512xbf16, #tpu.memory_space<vmem>>
    %172 = tpu.memref_slice %arg16[%c2_i32_159] : memref<6x!tpu.dma_semaphore, #tpu.memory_space<semaphore_mem>> -> memref<1x!tpu.dma_semaphore, #tpu.memory_space<semaphore_mem>>
    %173 = tpu.memref_squeeze %172 : memref<1x!tpu.dma_semaphore, #tpu.memory_space<semaphore_mem>> -> memref<!tpu.dma_semaphore, #tpu.memory_space<semaphore_mem>>
    tpu.wait_dma2 semaphore(%173 : memref<!tpu.dma_semaphore, #tpu.memory_space<semaphore_mem>>) src(%170 : memref<384x512xbf16, #tpu.memory_space<any>>) dst(%171 : memref<384x512xbf16, #tpu.memory_space<vmem>>)
    %c0_164 = arith.constant 0 : index
    %c0_165 = arith.constant 0 : index
    %174 = vector.load %arg14[%c0_164, %c0_165] : memref<2x512xf32, #tpu.memory_space<vmem>>, vector<2x512xf32>
    %c0_166 = arith.constant 0 : index
    %c768_167 = arith.constant 768 : index
    %175 = vector.load %arg13[%c0_166, %c768_167] : memref<2x2304xf32, #tpu.memory_space<vmem>>, vector<2x384xf32>
    %176 = arith.truncf %175 : vector<2x384xf32> to vector<2x384xbf16>
    %c768_168 = arith.constant 768 : index
    %c0_169 = arith.constant 0 : index
    %177 = vector.load %arg15[%c768_168, %c0_169] : memref<2304x512xbf16, #tpu.memory_space<vmem>>, vector<384x512xbf16>
    %cst_170 = arith.constant dense<0.000000e+00> : vector<2x512xf32>
    %178 = tpu.matmul %176, %177, %cst_170 {dimension_numbers = #tpu.dot_dimension_numbers<[1], [0], [0], [1], [0, 0, 1, 1], [], []>} : vector<2x384xbf16>, vector<384x512xbf16>, vector<2x512xf32> -> vector<2x512xf32>
    %179 = arith.addf %174, %178 : vector<2x512xf32>
    %c0_171 = arith.constant 0 : index
    %c0_172 = arith.constant 0 : index
    %180 = vector.load %arg14[%c0_171, %c0_172] : memref<2x512xf32, #tpu.memory_space<vmem>>, vector<2x512xf32>
    tpu.vector_store %arg14[%c0_171, %c0_172], %179 {strides = array<i32>} : memref<2x512xf32, #tpu.memory_space<vmem>>, vector<2x512xf32>,
    %c3_i32_173 = arith.constant 3 : i32
    %c1152_i32_174 = arith.constant 1152 : i32
    %c0_i32_175 = arith.constant 0 : i32
    %181 = tpu.memref_slice %arg7[%c1152_i32_174, %c0_i32_175] : memref<2304x512xbf16, #tpu.memory_space<any>> -> memref<384x512xbf16, #tpu.memory_space<any>>
    %c1152_i32_176 = arith.constant 1152 : i32
    %c0_i32_177 = arith.constant 0 : i32
    %182 = tpu.memref_slice %arg15[%c1152_i32_176, %c0_i32_177] : memref<2304x512xbf16, #tpu.memory_space<vmem>> -> memref<384x512xbf16, #tpu.memory_space<vmem>>
    %183 = tpu.memref_slice %arg16[%c3_i32_173] : memref<6x!tpu.dma_semaphore, #tpu.memory_space<semaphore_mem>> -> memref<1x!tpu.dma_semaphore, #tpu.memory_space<semaphore_mem>>
    %184 = tpu.memref_squeeze %183 : memref<1x!tpu.dma_semaphore, #tpu.memory_space<semaphore_mem>> -> memref<!tpu.dma_semaphore, #tpu.memory_space<semaphore_mem>>
    tpu.wait_dma2 semaphore(%184 : memref<!tpu.dma_semaphore, #tpu.memory_space<semaphore_mem>>) src(%181 : memref<384x512xbf16, #tpu.memory_space<any>>) dst(%182 : memref<384x512xbf16, #tpu.memory_space<vmem>>)
    %c0_178 = arith.constant 0 : index
    %c0_179 = arith.constant 0 : index
    %185 = vector.load %arg14[%c0_178, %c0_179] : memref<2x512xf32, #tpu.memory_space<vmem>>, vector<2x512xf32>
    %c0_180 = arith.constant 0 : index
    %c1152_181 = arith.constant 1152 : index
    %186 = vector.load %arg13[%c0_180, %c1152_181] : memref<2x2304xf32, #tpu.memory_space<vmem>>, vector<2x384xf32>
    %187 = arith.truncf %186 : vector<2x384xf32> to vector<2x384xbf16>
    %c1152_182 = arith.constant 1152 : index
    %c0_183 = arith.constant 0 : index
    %188 = vector.load %arg15[%c1152_182, %c0_183] : memref<2304x512xbf16, #tpu.memory_space<vmem>>, vector<384x512xbf16>
    %cst_184 = arith.constant dense<0.000000e+00> : vector<2x512xf32>
    %189 = tpu.matmul %187, %188, %cst_184 {dimension_numbers = #tpu.dot_dimension_numbers<[1], [0], [0], [1], [0, 0, 1, 1], [], []>} : vector<2x384xbf16>, vector<384x512xbf16>, vector<2x512xf32> -> vector<2x512xf32>
    %190 = arith.addf %185, %189 : vector<2x512xf32>
    %c0_185 = arith.constant 0 : index
    %c0_186 = arith.constant 0 : index
    %191 = vector.load %arg14[%c0_185, %c0_186] : memref<2x512xf32, #tpu.memory_space<vmem>>, vector<2x512xf32>
    tpu.vector_store %arg14[%c0_185, %c0_186], %190 {strides = array<i32>} : memref<2x512xf32, #tpu.memory_space<vmem>>, vector<2x512xf32>,
    %c4_i32_187 = arith.constant 4 : i32
    %c1536_i32_188 = arith.constant 1536 : i32
    %c0_i32_189 = arith.constant 0 : i32
    %192 = tpu.memref_slice %arg7[%c1536_i32_188, %c0_i32_189] : memref<2304x512xbf16, #tpu.memory_space<any>> -> memref<384x512xbf16, #tpu.memory_space<any>>
    %c1536_i32_190 = arith.constant 1536 : i32
    %c0_i32_191 = arith.constant 0 : i32
    %193 = tpu.memref_slice %arg15[%c1536_i32_190, %c0_i32_191] : memref<2304x512xbf16, #tpu.memory_space<vmem>> -> memref<384x512xbf16, #tpu.memory_space<vmem>>
    %194 = tpu.memref_slice %arg16[%c4_i32_187] : memref<6x!tpu.dma_semaphore, #tpu.memory_space<semaphore_mem>> -> memref<1x!tpu.dma_semaphore, #tpu.memory_space<semaphore_mem>>
    %195 = tpu.memref_squeeze %194 : memref<1x!tpu.dma_semaphore, #tpu.memory_space<semaphore_mem>> -> memref<!tpu.dma_semaphore, #tpu.memory_space<semaphore_mem>>
    tpu.wait_dma2 semaphore(%195 : memref<!tpu.dma_semaphore, #tpu.memory_space<semaphore_mem>>) src(%192 : memref<384x512xbf16, #tpu.memory_space<any>>) dst(%193 : memref<384x512xbf16, #tpu.memory_space<vmem>>)
    %c0_192 = arith.constant 0 : index
    %c0_193 = arith.constant 0 : index
    %196 = vector.load %arg14[%c0_192, %c0_193] : memref<2x512xf32, #tpu.memory_space<vmem>>, vector<2x512xf32>
    %c0_194 = arith.constant 0 : index
    %c1536_195 = arith.constant 1536 : index
    %197 = vector.load %arg13[%c0_194, %c1536_195] : memref<2x2304xf32, #tpu.memory_space<vmem>>, vector<2x384xf32>
    %198 = arith.truncf %197 : vector<2x384xf32> to vector<2x384xbf16>
    %c1536_196 = arith.constant 1536 : index
    %c0_197 = arith.constant 0 : index
    %199 = vector.load %arg15[%c1536_196, %c0_197] : memref<2304x512xbf16, #tpu.memory_space<vmem>>, vector<384x512xbf16>
    %cst_198 = arith.constant dense<0.000000e+00> : vector<2x512xf32>
    %200 = tpu.matmul %198, %199, %cst_198 {dimension_numbers = #tpu.dot_dimension_numbers<[1], [0], [0], [1], [0, 0, 1, 1], [], []>} : vector<2x384xbf16>, vector<384x512xbf16>, vector<2x512xf32> -> vector<2x512xf32>
    %201 = arith.addf %196, %200 : vector<2x512xf32>
    %c0_199 = arith.constant 0 : index
    %c0_200 = arith.constant 0 : index
    %202 = vector.load %arg14[%c0_199, %c0_200] : memref<2x512xf32, #tpu.memory_space<vmem>>, vector<2x512xf32>
    tpu.vector_store %arg14[%c0_199, %c0_200], %201 {strides = array<i32>} : memref<2x512xf32, #tpu.memory_space<vmem>>, vector<2x512xf32>,
    %c5_i32_201 = arith.constant 5 : i32
    %c1920_i32_202 = arith.constant 1920 : i32
    %c0_i32_203 = arith.constant 0 : i32
    %203 = tpu.memref_slice %arg7[%c1920_i32_202, %c0_i32_203] : memref<2304x512xbf16, #tpu.memory_space<any>> -> memref<384x512xbf16, #tpu.memory_space<any>>
    %c1920_i32_204 = arith.constant 1920 : i32
    %c0_i32_205 = arith.constant 0 : i32
    %204 = tpu.memref_slice %arg15[%c1920_i32_204, %c0_i32_205] : memref<2304x512xbf16, #tpu.memory_space<vmem>> -> memref<384x512xbf16, #tpu.memory_space<vmem>>
    %205 = tpu.memref_slice %arg16[%c5_i32_201] : memref<6x!tpu.dma_semaphore, #tpu.memory_space<semaphore_mem>> -> memref<1x!tpu.dma_semaphore, #tpu.memory_space<semaphore_mem>>
    %206 = tpu.memref_squeeze %205 : memref<1x!tpu.dma_semaphore, #tpu.memory_space<semaphore_mem>> -> memref<!tpu.dma_semaphore, #tpu.memory_space<semaphore_mem>>
    tpu.wait_dma2 semaphore(%206 : memref<!tpu.dma_semaphore, #tpu.memory_space<semaphore_mem>>) src(%203 : memref<384x512xbf16, #tpu.memory_space<any>>) dst(%204 : memref<384x512xbf16, #tpu.memory_space<vmem>>)
    %c0_206 = arith.constant 0 : index
    %c0_207 = arith.constant 0 : index
    %207 = vector.load %arg14[%c0_206, %c0_207] : memref<2x512xf32, #tpu.memory_space<vmem>>, vector<2x512xf32>
    %c0_208 = arith.constant 0 : index
    %c1920_209 = arith.constant 1920 : index
    %208 = vector.load %arg13[%c0_208, %c1920_209] : memref<2x2304xf32, #tpu.memory_space<vmem>>, vector<2x384xf32>
    %209 = arith.truncf %208 : vector<2x384xf32> to vector<2x384xbf16>
    %c1920_210 = arith.constant 1920 : index
    %c0_211 = arith.constant 0 : index
    %210 = vector.load %arg15[%c1920_210, %c0_211] : memref<2304x512xbf16, #tpu.memory_space<vmem>>, vector<384x512xbf16>
    %cst_212 = arith.constant dense<0.000000e+00> : vector<2x512xf32>
    %211 = tpu.matmul %209, %210, %cst_212 {dimension_numbers = #tpu.dot_dimension_numbers<[1], [0], [0], [1], [0, 0, 1, 1], [], []>} : vector<2x384xbf16>, vector<384x512xbf16>, vector<2x512xf32> -> vector<2x512xf32>
    %212 = arith.addf %207, %211 : vector<2x512xf32>
    %c0_213 = arith.constant 0 : index
    %c0_214 = arith.constant 0 : index
    %213 = vector.load %arg14[%c0_213, %c0_214] : memref<2x512xf32, #tpu.memory_space<vmem>>, vector<2x512xf32>
    tpu.vector_store %arg14[%c0_213, %c0_214], %212 {strides = array<i32>} : memref<2x512xf32, #tpu.memory_space<vmem>>, vector<2x512xf32>,
    %c0_215 = arith.constant 0 : index
    %c0_216 = arith.constant 0 : index
    %214 = vector.load %arg14[%c0_215, %c0_216] : memref<2x512xf32, #tpu.memory_space<vmem>>, vector<2x512xf32>
    %cst_217 = arith.constant 0.000000e+00 : f32
    %215 = vector.broadcast %cst_217 : f32 to vector<2x512xf32>
    %216 = arith.maximumf %214, %215 : vector<2x512xf32>
    %217 = arith.truncf %216 : vector<2x512xf32> to vector<2x512xbf16>
    %c0_218 = arith.constant 0 : index
    %c0_219 = arith.constant 0 : index
    %218 = vector.load %arg9[%c0_218, %c0_219] : memref<512x7xbf16, #tpu.memory_space<vmem>>, vector<512x7xbf16>
    %cst_220 = arith.constant dense<0.000000e+00> : vector<2x7xf32>
    %219 = tpu.matmul %217, %218, %cst_220 {dimension_numbers = #tpu.dot_dimension_numbers<[1], [0], [0], [1], [0, 0, 1, 1], [], []>} : vector<2x512xbf16>, vector<512x7xbf16>, vector<2x7xf32> -> vector<2x7xf32>
    %c0_221 = arith.constant 0 : index
    %c0_222 = arith.constant 0 : index
    %220 = vector.load %arg10[%c0_221, %c0_222] : memref<1x7xf32, #tpu.memory_space<vmem>>, vector<1x7xf32>
    %221 = vector.broadcast %220 : vector<1x7xf32> to vector<2x7xf32>
    %222 = arith.addf %219, %221 : vector<2x7xf32>
    %223 = vector.extract_strided_slice %222 {offsets = [0, 0], sizes = [2, 6], strides = [1, 1]} : vector<2x7xf32> to vector<2x6xf32>
    %224 = vector.extract_strided_slice %222 {offsets = [0, 6], sizes = [2, 1], strides = [1, 1]} : vector<2x7xf32> to vector<2x1xf32>
    %225 = vector.shape_cast %223 : vector<2x6xf32> to vector<1x2x6xf32>
    %cst_223 = arith.constant dense<0.000000e+00> : vector<1xf32>
    %226 = vector.multi_reduction <add>, %225, %cst_223 [1, 2] : vector<1x2x6xf32> to vector<1xf32>
    %227 = vector.shape_cast %226 : vector<1xf32> to vector<1x1x1xf32>
    %228 = vector.extract %227[0, 0, 0] : f32 from vector<1x1x1xf32>
    %cst_224 = arith.constant 1.200000e+01 : f32
    %229 = arith.divf %228, %cst_224 : f32
    %230 = vector.broadcast %224 : vector<2x1xf32> to vector<2x6xf32>
    %231 = arith.addf %230, %223 : vector<2x6xf32>
    %232 = vector.broadcast %229 : f32 to vector<2x6xf32>
    %233 = arith.subf %231, %232 : vector<2x6xf32>
    %c0_225 = arith.constant 0 : index
    %c0_226 = arith.constant 0 : index
    %234 = vector.load %arg11[%c0_225, %c0_226] : memref<2x6xf32, #tpu.memory_space<vmem>>, vector<2x6xf32>
    tpu.vector_store %arg11[%c0_225, %c0_226], %233 {strides = array<i32>} : memref<2x6xf32, #tpu.memory_space<vmem>>, vector<2x6xf32>,
    return
  }
}

</mosaic_0001>

<llo_original>
// kernel: dueling_forward.1
$region0: #{dueling_forward.1}
  #allocation0 [shape = 'u32[]', space=smem, size = 0x4, offset = 0x4, fixed_abs, tag = 'smem constant byte address 0x4 - core index']
  #allocation1 [shape = 'u32[144,128]{1,0:T(1,128)}', space=vmem, size = 0x12000, scoped, tag = 'internal scratch']
  #allocation2 [shape = 'f32[72,64]{1,0:T(8,128)}', space=vmem, size = 0x9000, scoped, tag = 'scratch operand']
  #allocation3 [shape = 'f32[2,2304]{1,0:T(2,128)}', space=vmem, size = 0x4800, scoped, tag = 'scratch operand']
  #allocation4 [shape = 'f32[2,512]{1,0:T(2,128)}', space=vmem, size = 0x1000, scoped, tag = 'scratch operand']
  #allocation5 [shape = 'bf16[2304,512]{1,0:T(8,128)(2,1)}', space=vmem, size = 0x240000, scoped, tag = 'scratch operand']
  #allocation6 [shape = 's32[6]{0}', space=sflag, size = 0x18, scoped, tag = 'scratch operand']
  #allocation20 [shape = 's32[]', space=sflag, size = 0x4, offset = 0, fixed_abs, tag = 'sflag constant byte address 0x0 - dummy sync flag']
  #allocation21 [shape = 's32[]', space=sflag, size = 0x4, offset = 0, fixed_abs, tag = 'sflag constant byte address 0x0 - dummy sync flag']
  #allocation22 [shape = 'u32[]', space=smem, size = 0x4, offset = 0x44, fixed_abs, tag = 'smem constant byte address 0x44 - assertion arg 0']
  #allocation23 [shape = 'u32[]', space=smem, size = 0x4, offset = 0x48, fixed_abs, tag = 'smem constant byte address 0x48 - assertion arg 1']
  #allocation24 [shape = 's32[]', space=sflag, size = 0x4, offset = 0, fixed_abs, tag = 'sflag constant byte address 0x0 - dummy sync flag']
  #allocation25 [shape = 's32[]', space=sflag, size = 0x4, offset = 0, fixed_abs, tag = 'sflag constant byte address 0x0 - dummy sync flag']
  #allocation26 [shape = 's32[]', space=sflag, size = 0x4, offset = 0, fixed_abs, tag = 'sflag constant byte address 0x0 - dummy sync flag']
  #allocation27 [shape = 's32[]', space=sflag, size = 0x4, offset = 0, fixed_abs, tag = 'sflag constant byte address 0x0 - dummy sync flag']
  #allocation28 [shape = 's32[]', space=sflag, size = 0x4, offset = 0, fixed_abs, tag = 'sflag constant byte address 0x0 - dummy sync flag']
  #allocation29 [shape = 's32[]', space=sflag, size = 0x4, offset = 0, fixed_abs, tag = 'sflag constant byte address 0x0 - dummy sync flag']
  #allocation30 [shape = 's32[]', space=sflag, size = 0x4, offset = 0, fixed_abs, tag = 'sflag constant byte address 0x0 - dummy sync flag']
  #allocation31 [shape = 's32[]', space=sflag, size = 0x4, offset = 0, fixed_abs, tag = 'sflag constant byte address 0x0 - dummy sync flag']
  #allocation32 [shape = 's32[]', space=sflag, size = 0x4, offset = 0, fixed_abs, tag = 'sflag constant byte address 0x0 - dummy sync flag']
  #allocation33 [shape = 's32[]', space=sflag, size = 0x4, offset = 0, fixed_abs, tag = 'sflag constant byte address 0x0 - dummy sync flag']
  %s0 = inlined_call_operand.vmem [shape: bf16[288,64], index: 0, kind: input, shape index: {}]
  %s1 = inlined_call_operand.vmem [shape: bf16[64,32], index: 1, kind: input, shape index: {}]
  %s2 = inlined_call_operand.hbm [shape: f32[1,32], index: 2, kind: input, shape index: {}]
  %s3 = inlined_call_operand.hbm [shape: bf16[4,32,64], index: 3, kind: input, shape index: {}]
  %s4 = inlined_call_operand.hbm [shape: f32[1,64], index: 4, kind: input, shape index: {}]
  %s5 = inlined_call_operand.hbm [shape: bf16[64,64], index: 5, kind: input, shape index: {}]
  %s6 = inlined_call_operand.hbm [shape: f32[1,64], index: 6, kind: input, shape index: {}]
  %s7 = inlined_call_operand.hbm [shape: bf16[2304,512], index: 7, kind: input, shape index: {}]
  %s8 = inlined_call_operand.hbm [shape: f32[1,512], index: 8, kind: input, shape index: {}]
  %s9 = inlined_call_operand.vmem [shape: bf16[512,7], index: 9, kind: input, shape index: {}]
  %s10 = inlined_call_operand.hbm [shape: f32[1,7], index: 10, kind: input, shape index: {}]
  %s11 = inlined_call_operand.hbm [shape: f32[2,6], index: 11, kind: output, shape index: {}]
  %s12 = sld [smem:[#allocation0]]
  $region102: #{dueling_forward.1} parent=0
    _
  %s14 = ssub.s32 1, %s12
  %s15 = scalar_select 0, %s14, %s12
  $region1: #{dueling_forward.1} parent=0
    #allocation7 [shape = 'u8[512]{0}', space=vmem, size = 0x400, scoped, tag = 'input window, operand 2, single buffered']
    #allocation8 [shape = 's32[1]{0}', space=sflag, size = 0x4, scoped, tag = 'scoped memory for dueling_forward.1']
    #allocation9 [shape = 's32[1]{0}', space=sflag, size = 0x4, scoped, tag = 'scoped memory for dueling_forward.1']
    #allocation10 [shape = 'u8[32768]{0}', space=vmem, size = 0x8000, scoped, tag = 'input window, operand 3, single buffered']
    #allocation11 [shape = 's32[1]{0}', space=sflag, size = 0x4, scoped, tag = 'scoped memory for dueling_forward.1']
    #allocation12 [shape = 'u8[512]{0}', space=vmem, size = 0x400, scoped, tag = 'input window, operand 4, single buffered']
    #allocation13 [shape = 'u8[16384]{0}', space=vmem, size = 0x4000, scoped, tag = 'input window, operand 5, single buffered']
    #allocation14 [shape = 's32[1]{0}', space=sflag, size = 0x4, scoped, tag = 'scoped memory for dueling_forward.1']
    #allocation15 [shape = 'u8[512]{0}', space=vmem, size = 0x400, scoped, tag = 'input window, operand 6, single buffered']
    #allocation16 [shape = 'u8[2048]{0}', space=vmem, size = 0x800, scoped, tag = 'input window, operand 8, single buffered']
    #allocation17 [shape = 's32[1]{0}', space=sflag, size = 0x4, scoped, tag = 'scoped memory for dueling_forward.1']
    #allocation18 [shape = 'u8[512]{0}', space=vmem, size = 0x400, scoped, tag = 'input window, operand 10, single buffered']
    #allocation19 [shape = 'u8[1024]{0}', space=vmem, size = 0x400, scoped, tag = 'output window, operand 0, single buffered']
    %16 = vsyncpa [#allocation8], 0
    %17 = vsyncpa [#allocation11], 0
    %18 = vsyncpa [#allocation14], 0
    %19 = vsyncpa [#allocation17], 0
    %20 = vsyncpa [#allocation9], 0
    // Predicated region
    $region2: #{dueling_forward.1} parent=1 // pred_check
      _
    $region3: #{dueling_forward.1} parent=1 // pred_check_branch
      %22 = sbr.rel (0) target = $region5
    $region4: #{dueling_forward.1} parent=1 // pred_region
      _
    $region5: #{dueling_forward.1} parent=1 // pred_fallthru
      _
    // Predicated region
    $region6: #{dueling_forward.1} parent=1 // pred_check
      _
    $region7: #{dueling_forward.1} parent=1 // pred_check_branch
      %24 = sbr.rel (0) target = $region9
    $region8: #{dueling_forward.1} parent=1 // pred_region
      _
    $region9: #{dueling_forward.1} parent=1 // pred_fallthru
      _
    // Predicated region
    $region10: #{dueling_forward.1} parent=1 // pred_check
      _
    $region11: #{dueling_forward.1} parent=1 // pred_check_branch
      %26 = sbr.rel (0) target = $region13
    $region12: #{dueling_forward.1} parent=1 // pred_region
      %s28 = ssub.s32 16, 16
      %29 = vsyncadd [#allocation8], %s28
      %s31 = sshll.u32 [#allocation7], 4
      %s32 = int_to_ptr.vmem [resolvable:$true] %s31
      %34 = dma.hbm_to_vmem [thread:$0]  %s2, 16, %s32, [#allocation8]
    $region13: #{dueling_forward.1} parent=1 // pred_fallthru
      _
    // Predicated region
    $region14: #{dueling_forward.1} parent=1 // pred_check
      _
    $region15: #{dueling_forward.1} parent=1 // pred_check_branch
      %36 = sbr.rel (0) target = $region17
    $region16: #{dueling_forward.1} parent=1 // pred_region
      %s38 = ssub.s32 1024, 1024
      %39 = vsyncadd [#allocation11], %s38
      %s40 = sshll.u32 [#allocation10], 4
      %s41 = int_to_ptr.vmem [resolvable:$true] %s40
      %46 = dma.hbm_to_vmem [thread:$0]  %s3, 1024, %s41, [#allocation11], 64, 64, 4
    $region17: #{dueling_forward.1} parent=1 // pred_fallthru
      _
    // Predicated region
    $region18: #{dueling_forward.1} parent=1 // pred_check
      _
    $region19: #{dueling_forward.1} parent=1 // pred_check_branch
      %48 = sbr.rel (0) target = $region21
    $region20: #{dueling_forward.1} parent=1 // pred_region
      %s50 = ssub.s32 16, 16
      %51 = vsyncadd [#allocation11], %s50
      %s53 = sshll.u32 [#allocation12], 4
      %s54 = int_to_ptr.vmem [resolvable:$true] %s53
      %56 = dma.hbm_to_vmem [thread:$0]  %s4, 16, %s54, [#allocation11]
    $region21: #{dueling_forward.1} parent=1 // pred_fallthru
      _
    // Predicated region
    $region22: #{dueling_forward.1} parent=1 // pred_check
      _
    $region23: #{dueling_forward.1} parent=1 // pred_check_branch
      %58 = sbr.rel (0) target = $region25
    $region24: #{dueling_forward.1} parent=1 // pred_region
      %s60 = ssub.s32 512, 512
      %61 = vsyncadd [#allocation14], %s60
      %s62 = sshll.u32 [#allocation13], 4
      %s63 = int_to_ptr.vmem [resolvable:$true] %s62
      %68 = dma.hbm_to_vmem [thread:$0]  %s5, 512, %s63, [#allocation14], 64, 64, 4
    $region25: #{dueling_forward.1} parent=1 // pred_fallthru
      _
    // Predicated region
    $region26: #{dueling_forward.1} parent=1 // pred_check
      _
    $region27: #{dueling_forward.1} parent=1 // pred_check_branch
      %70 = sbr.rel (0) target = $region29
    $region28: #{dueling_forward.1} parent=1 // pred_region
      %s72 = ssub.s32 16, 16
      %73 = vsyncadd [#allocation14], %s72
      %s75 = sshll.u32 [#allocation15], 4
      %s76 = int_to_ptr.vmem [resolvable:$true] %s75
      %78 = dma.hbm_to_vmem [thread:$0]  %s6, 16, %s76, [#allocation14]
    $region29: #{dueling_forward.1} parent=1 // pred_fallthru
      _
    // Predicated region
    $region30: #{dueling_forward.1} parent=1 // pred_check
      _
    $region31: #{dueling_forward.1} parent=1 // pred_check_branch
      %80 = sbr.rel (0) target = $region33
    $region32: #{dueling_forward.1} parent=1 // pred_region
      %s82 = ssub.s32 64, 64
      %83 = vsyncadd [#allocation17], %s82
      %s85 = sshll.u32 [#allocation16], 4
      %s86 = int_to_ptr.vmem [resolvable:$true] %s85
      %88 = dma.hbm_to_vmem [thread:$0]  %s8, 64, %s86, [#allocation17]
    $region33: #{dueling_forward.1} parent=1 // pred_fallthru
      _
    // Predicated region
    $region34: #{dueling_forward.1} parent=1 // pred_check
      _
    $region35: #{dueling_forward.1} parent=1 // pred_check_branch
      %90 = sbr.rel (0) target = $region37
    $region36: #{dueling_forward.1} parent=1 // pred_region
      _
    $region37: #{dueling_forward.1} parent=1 // pred_fallthru
      _
    // Predicated region
    $region38: #{dueling_forward.1} parent=1 // pred_check
      _
    $region39: #{dueling_forward.1} parent=1 // pred_check_branch
      %92 = sbr.rel (0) target = $region41
    $region40: #{dueling_forward.1} parent=1 // pred_region
      %s94 = ssub.s32 16, 16
      %95 = vsyncadd [#allocation17], %s94
      %s97 = sshll.u32 [#allocation18], 4
      %s98 = int_to_ptr.vmem [resolvable:$true] %s97
      %100 = dma.hbm_to_vmem [thread:$0]  %s10, 16, %s98, [#allocation17]
    $region41: #{dueling_forward.1} parent=1 // pred_fallthru
      _
    // Predicated region
    $region42: #{dueling_forward.1} parent=1 // pred_check
      _
    $region43: #{dueling_forward.1} parent=1 // pred_check_branch
      %102 = sbr.rel (0) target = $region45
    $region44: #{dueling_forward.1} parent=1 // pred_region
      %103 = dma.done [#allocation8], 16
    $region45: #{dueling_forward.1} parent=1 // pred_fallthru
      _
    // Predicated region
    $region46: #{dueling_forward.1} parent=1 // pred_check
      _
    $region47: #{dueling_forward.1} parent=1 // pred_check_branch
      %105 = sbr.rel (0) target = $region49
    $region48: #{dueling_forward.1} parent=1 // pred_region
      %106 = dma.done [#allocation11], 1024
    $region49: #{dueling_forward.1} parent=1 // pred_fallthru
      _
    // Predicated region
    $region50: #{dueling_forward.1} parent=1 // pred_check
      _
    $region51: #{dueling_forward.1} parent=1 // pred_check_branch
      %108 = sbr.rel (0) target = $region53
    $region52: #{dueling_forward.1} parent=1 // pred_region
      %109 = dma.done [#allocation11], 16
    $region53: #{dueling_forward.1} parent=1 // pred_fallthru
      _
    // Predicated region
    $region54: #{dueling_forward.1} parent=1 // pred_check
      _
    $region55: #{dueling_forward.1} parent=1 // pred_check_branch
      %111 = sbr.rel (0) target = $region57
    $region56: #{dueling_forward.1} parent=1 // pred_region
      %112 = dma.done [#allocation14], 512
    $region57: #{dueling_forward.1} parent=1 // pred_fallthru
      _
    // Predicated region
    $region58: #{dueling_forward.1} parent=1 // pred_check
      _
    $region59: #{dueling_forward.1} parent=1 // pred_check_branch
      %114 = sbr.rel (0) target = $region61
    $region60: #{dueling_forward.1} parent=1 // pred_region
      %115 = dma.done [#allocation14], 16
    $region61: #{dueling_forward.1} parent=1 // pred_fallthru
      _
    // Predicated region
    $region62: #{dueling_forward.1} parent=1 // pred_check
      _
    $region63: #{dueling_forward.1} parent=1 // pred_check_branch
      %117 = sbr.rel (0) target = $region65
    $region64: #{dueling_forward.1} parent=1 // pred_region
      %118 = dma.done [#allocation17], 64
    $region65: #{dueling_forward.1} parent=1 // pred_fallthru
      _
    // Predicated region
    $region66: #{dueling_forward.1} parent=1 // pred_check
      _
    $region67: #{dueling_forward.1} parent=1 // pred_check_branch
      %120 = sbr.rel (0) target = $region69
    $region68: #{dueling_forward.1} parent=1 // pred_region
      %121 = dma.done [#allocation17], 16
    $region69: #{dueling_forward.1} parent=1 // pred_fallthru
      _
    // Predicated region
    $region70: #{dueling_forward.1} parent=1 // pred_check
      _
    $region71: #{dueling_forward.1} parent=1 // pred_check_branch
      %124 = sbr.rel target = $region73
    $region72: #{dueling_forward.1} parent=1 // pred_region
      %125 = sst [smem:[#allocation22]] [#allocation21]
      %126 = sst [smem:[#allocation23]] [#allocation20]
    $region73: #{dueling_forward.1} parent=1 // pred_fallthru
      _
    %128 = shalt.err (0)
    %s130 = sshll.u32 [#allocation5], 4
    %s131 = int_to_ptr.vmem [resolvable:$true] %s130
    %133 = dma.hbm_to_vmem [thread:$0]  %s7, 12288, %s131, [#allocation6]
    %s134 = scalar_lea.hbm %s7, 12288
    %s135 = scalar_lea.vmem [#allocation5], 768
    %s136 = scalar_lea.sflag [#allocation6], 1
    // Predicated region
    $region74: #{dueling_forward.1} parent=1 // pred_check
      _
    $region75: #{dueling_forward.1} parent=1 // pred_check_branch
      %138 = sbr.rel target = $region77
    $region76: #{dueling_forward.1} parent=1 // pred_region
      %139 = sst [smem:[#allocation22]] [#allocation25]
      %140 = sst [smem:[#allocation23]] [#allocation24]
    $region77: #{dueling_forward.1} parent=1 // pred_fallthru
      _
    %142 = shalt.err (0)
    %s144 = sshll.u32 %s135, 4
    %s145 = int_to_ptr.vmem [resolvable:$true] %s144
    %147 = dma.hbm_to_vmem [thread:$0]  %s134, 12288, %s145, %s136
    %s148 = scalar_lea.hbm %s7, 24576
    %s149 = scalar_lea.vmem [#allocation5], 1536
    %s150 = scalar_lea.sflag [#allocation6], 2
    // Predicated region
    $region78: #{dueling_forward.1} parent=1 // pred_check
      _
    $region79: #{dueling_forward.1} parent=1 // pred_check_branch
      %152 = sbr.rel target = $region81
    $region80: #{dueling_forward.1} parent=1 // pred_region
      %153 = sst [smem:[#allocation22]] [#allocation27]
      %154 = sst [smem:[#allocation23]] [#allocation26]
    $region81: #{dueling_forward.1} parent=1 // pred_fallthru
      _
    %156 = shalt.err (0)
    %s158 = sshll.u32 %s149, 4
    %s159 = int_to_ptr.vmem [resolvable:$true] %s158
    %161 = dma.hbm_to_vmem [thread:$0]  %s148, 12288, %s159, %s150
    %s162 = scalar_lea.hbm %s7, 36864
    %s163 = scalar_lea.vmem [#allocation5], 2304
    %s164 = scalar_lea.sflag [#allocation6], 3
    // Predicated region
    $region82: #{dueling_forward.1} parent=1 // pred_check
      _
    $region83: #{dueling_forward.1} parent=1 // pred_check_branch
      %166 = sbr.rel target = $region85
    $region84: #{dueling_forward.1} parent=1 // pred_region
      %167 = sst [smem:[#allocation22]] [#allocation29]
      %168 = sst [smem:[#allocation23]] [#allocation28]
    $region85: #{dueling_forward.1} parent=1 // pred_fallthru
      _
    %170 = shalt.err (0)
    %s172 = sshll.u32 %s163, 4
    %s173 = int_to_ptr.vmem [resolvable:$true] %s172
    %175 = dma.hbm_to_vmem [thread:$0]  %s162, 12288, %s173, %s164
    %s176 = scalar_lea.hbm %s7, 49152
    %s177 = scalar_lea.vmem [#allocation5], 3072
    %s178 = scalar_lea.sflag [#allocation6], 4
    // Predicated region
    $region86: #{dueling_forward.1} parent=1 // pred_check
      _
    $region87: #{dueling_forward.1} parent=1 // pred_check_branch
      %180 = sbr.rel target = $region89
    $region88: #{dueling_forward.1} parent=1 // pred_region
      %181 = sst [smem:[#allocation22]] [#allocation31]
      %182 = sst [smem:[#allocation23]] [#allocation30]
    $region89: #{dueling_forward.1} parent=1 // pred_fallthru
      _
    %184 = shalt.err (0)
    %s186 = sshll.u32 %s177, 4
    %s187 = int_to_ptr.vmem [resolvable:$true] %s186
    %189 = dma.hbm_to_vmem [thread:$0]  %s176, 12288, %s187, %s178
    %s190 = scalar_lea.hbm %s7, 61440
    %s191 = scalar_lea.vmem [#allocation5], 3840
    %s192 = scalar_lea.sflag [#allocation6], 5
    // Predicated region
    $region90: #{dueling_forward.1} parent=1 // pred_check
      _
    $region91: #{dueling_forward.1} parent=1 // pred_check_branch
      %194 = sbr.rel target = $region93
    $region92: #{dueling_forward.1} parent=1 // pred_region
      %195 = sst [smem:[#allocation22]] [#allocation33]
      %196 = sst [smem:[#allocation23]] [#allocation32]
    $region93: #{dueling_forward.1} parent=1 // pred_fallthru
      _
    %198 = shalt.err (0)
    %s200 = sshll.u32 %s191, 4
    %s201 = int_to_ptr.vmem [resolvable:$true] %s200
    %203 = dma.hbm_to_vmem [thread:$0]  %s190, 12288, %s201, %s192
    %v204 = vld [vmem:[%s0] sm:$0xf]
    %v205 = vld [vmem:[%s0 + $0x4] sm:$0xf]
    %v206 = vld [vmem:[%s0 + $0x8] sm:$0xf]
    %v207 = vld [vmem:[%s0 + $0xc] sm:$0xf]
    %v208 = vld [vmem:[%s0 + $0x10] sm:$0xf]
    %v209 = vld [vmem:[%s0 + $0x14] sm:$0xf]
    %v210 = vld [vmem:[%s0 + $0x18] sm:$0xf]
    %v211 = vld [vmem:[%s0 + $0x1c] sm:$0xf]
    %v212 = vld [vmem:[%s0 + $0x20] sm:$0xf]
    %v213 = vld [vmem:[%s0 + $0x24] sm:$0xf]
    %v214 = vld [vmem:[%s0 + $0x28] sm:$0xf]
    %v215 = vld [vmem:[%s0 + $0x2c] sm:$0xf]
    %v216 = vld [vmem:[%s0 + $0x30] sm:$0xf]
    %v217 = vld [vmem:[%s0 + $0x34] sm:$0xf]
    %v218 = vld [vmem:[%s0 + $0x38] sm:$0xf]
    %v219 = vld [vmem:[%s0 + $0x3c] sm:$0xf]
    %v220 = vld [vmem:[%s0 + $0x40] sm:$0xf]
    %v221 = vld [vmem:[%s0 + $0x44] sm:$0xf]
    %v222 = vld [vmem:[%s0 + $0x48] sm:$0xf]
    %v223 = vld [vmem:[%s0 + $0x4c] sm:$0xf]
    %v224 = vld [vmem:[%s0 + $0x50] sm:$0xf]
    %v225 = vld [vmem:[%s0 + $0x54] sm:$0xf]
    %v226 = vld [vmem:[%s0 + $0x58] sm:$0xf]
    %v227 = vld [vmem:[%s0 + $0x5c] sm:$0xf]
    %v228 = vld [vmem:[%s0 + $0x60] sm:$0xf]
    %v229 = vld [vmem:[%s0 + $0x64] sm:$0xf]
    %v230 = vld [vmem:[%s0 + $0x68] sm:$0xf]
    %v231 = vld [vmem:[%s0 + $0x6c] sm:$0xf]
    %v232 = vld [vmem:[%s0 + $0x70] sm:$0xf]
    %v233 = vld [vmem:[%s0 + $0x74] sm:$0xf]
    %v234 = vld [vmem:[%s0 + $0x78] sm:$0xf]
    %v235 = vld [vmem:[%s0 + $0x7c] sm:$0xf]
    %v236 = vld [vmem:[%s0 + $0x80] sm:$0xf]
    %v237 = vld [vmem:[%s0 + $0x84] sm:$0xf]
    %v238 = vld [vmem:[%s0 + $0x88] sm:$0xf]
    %v239 = vld [vmem:[%s0 + $0x8c] sm:$0xf]
    %v240 = vld [vmem:[%s1] sm:$0xf]
    %v241 = vld [vmem:[%s1 + $0x4] sm:$0xf]
    %v242 = vld [vmem:[%s1 + $0x8] sm:$0xf]
    %v243 = vld [vmem:[%s1 + $0xc] sm:$0xf]
    %v244 = vld [vmem:[%s1 + $0x10] sm:$0xf]
    %v245 = vld [vmem:[%s1 + $0x14] sm:$0xf]
    %v246 = vld [vmem:[%s1 + $0x18] sm:$0xf]
    %v247 = vld [vmem:[%s1 + $0x1c] sm:$0xf]
    %v248 = vld [vmem:[#allocation7] sm:$0x1]
    %v250 = vlaneseq
    %v251 = vshrl.u32 %v250, 7
    %v252 = vsub.s32 0, %v251
    %v253 = vrot.slane %v248, %v252
    %v291 = vunpack.c.l.b16 %v204
    %v292 = vunpack.c.l.b16 %v205
    %v293 = vunpack.c.l.b16 %v206
    %v294 = vunpack.c.l.b16 %v207
    %v295 = vunpack.c.l.b16 %v208
    %v296 = vunpack.c.l.b16 %v209
    %v297 = vunpack.c.l.b16 %v210
    %v298 = vunpack.c.l.b16 %v211
    %v299 = vunpack.c.l.b16 %v212
    %v300 = vunpack.c.l.b16 %v213
    %v301 = vunpack.c.l.b16 %v214
    %v302 = vunpack.c.l.b16 %v215
    %v303 = vunpack.c.l.b16 %v216
    %v304 = vunpack.c.l.b16 %v217
    %v305 = vunpack.c.l.b16 %v218
    %v306 = vunpack.c.l.b16 %v219
    %v307 = vunpack.c.l.b16 %v220
    %v308 = vunpack.c.l.b16 %v221
    %v309 = vunpack.c.l.b16 %v222
    %v310 = vunpack.c.l.b16 %v223
    %v311 = vunpack.c.l.b16 %v224
    %v312 = vunpack.c.l.b16 %v225
    %v313 = vunpack.c.l.b16 %v226
    %v314 = vunpack.c.l.b16 %v227
    %v315 = vunpack.c.l.b16 %v228
    %v316 = vunpack.c.l.b16 %v229
    %v317 = vunpack.c.l.b16 %v230
    %v318 = vunpack.c.l.b16 %v231
    %v319 = vunpack.c.l.b16 %v232
    %v320 = vunpack.c.l.b16 %v233
    %v321 = vunpack.c.l.b16 %v234
    %v322 = vunpack.c.l.b16 %v235
    %v323 = vunpack.c.l.b16 %v236
    %v324 = vunpack.c.l.b16 %v237
    %v325 = vunpack.c.l.b16 %v238
    %v326 = vunpack.c.l.b16 %v239
    %v327 = vpack.c.b16 %v292, %v291
    %v328 = vpack.c.b16 %v294, %v293
    %v329 = vpack.c.b16 %v296, %v295
    %v330 = vpack.c.b16 %v298, %v297
    %v331 = vpack.c.b16 %v300, %v299
    %v332 = vpack.c.b16 %v302, %v301
    %v333 = vpack.c.b16 %v304, %v303
    %v334 = vpack.c.b16 %v306, %v305
    %v335 = vpack.c.b16 %v308, %v307
    %v336 = vpack.c.b16 %v310, %v309
    %v337 = vpack.c.b16 %v312, %v311
    %v338 = vpack.c.b16 %v314, %v313
    %v339 = vpack.c.b16 %v316, %v315
    %v340 = vpack.c.b16 %v318, %v317
    %v341 = vpack.c.b16 %v320, %v319
    %v342 = vpack.c.b16 %v322, %v321
    %v343 = vpack.c.b16 %v324, %v323
    %v344 = vpack.c.b16 %v326, %v325
    %v353 = vunpack.c.l.b16 %v240
    %v354 = vunpack.c.l.b16 %v241
    %v355 = vunpack.c.l.b16 %v242
    %v356 = vunpack.c.l.b16 %v243
    %v357 = vunpack.c.l.b16 %v244
    %v358 = vunpack.c.l.b16 %v245
    %v359 = vunpack.c.l.b16 %v246
    %v360 = vunpack.c.l.b16 %v247
    %v361 = vpack.c.b16 %v354, %v353
    %v362 = vpack.c.b16 %v356, %v355
    %v363 = vpack.c.b16 %v358, %v357
    %v364 = vpack.c.b16 %v360, %v359
    %vm369 = vcmask 523264
    %v371 = vsel %vm369, %v327, 0
    %v374 = vsel %vm369, %v328, 0
    %v377 = vsel %vm369, %v329, 0
    %v380 = vsel %vm369, %v330, 0
    %v383 = vsel %vm369, %v331, 0
    %v386 = vsel %vm369, %v332, 0
    %v389 = vsel %vm369, %v333, 0
    %v392 = vsel %vm369, %v334, 0
    %v395 = vsel %vm369, %v335, 0
    %v398 = vsel %vm369, %v336, 0
    %v401 = vsel %vm369, %v337, 0
    %v404 = vsel %vm369, %v338, 0
    %v407 = vsel %vm369, %v339, 0
    %v410 = vsel %vm369, %v340, 0
    %v413 = vsel %vm369, %v341, 0
    %v416 = vsel %vm369, %v342, 0
    %v419 = vsel %vm369, %v343, 0
    %v422 = vsel %vm369, %v344, 0
    %424 = vmatprep.subr.bf16.mxu0 0
    %425 = vmatpush1.bf16.msra.mxu0 0
    %426 = vmatprep.subr.bf16.mxu0 0
    %427 = vmatpush1.bf16.msra.mxu0 0
    %428 = vmatprep.subr.bf16.mxu0 0
    %429 = vmatpush1.bf16.msra.mxu0 0
    %430 = vmatprep.subr.bf16.mxu0 0
    %431 = vmatpush1.bf16.msra.mxu0 0
    %432 = vmatprep.subr.bf16.mxu0 0
    %433 = vmatpush1.bf16.msra.mxu0 %v364
    %434 = vmatprep.subr.bf16.mxu0 0
    %435 = vmatpush1.bf16.msra.mxu0 %v363
    %436 = vmatprep.subr.bf16.mxu0 0
    %437 = vmatpush1.bf16.msra.mxu0 %v362
    %438 = vmatprep.subr.bf16.mxu0 0
    %439 = vmatpush1.bf16.msra.mxu0 %v361
    %440 = vmatprep.subr.bf16.mxu0 0
    %441 = vmatpush2.bf16.msra.mxu0 0
    %442 = vmatprep.subr.bf16.mxu0 0
    %443 = vmatpush2.bf16.msra.mxu0 0
    %444 = vmatprep.subr.bf16.mxu0 0
    %445 = vmatpush2.bf16.msra.mxu0 0
    %446 = vmatprep.subr.bf16.mxu0 0
    %447 = vmatpush2.bf16.msra.mxu0 0
    %448 = vmatprep.subr.bf16.mxu0 0
    %449 = vmatpush2.bf16.msra.mxu0 0
    %450 = vmatprep.subr.bf16.mxu0 0
    %451 = vmatpush2.bf16.msra.mxu0 0
    %452 = vmatprep.subr.bf16.mxu0 0
    %453 = vmatpush2.bf16.msra.mxu0 0
    %454 = vmatprep.subr.bf16.mxu0 0
    %455 = vmatpush2.bf16.msra.mxu0 0
    %456 = vmatprep.mubr.bf16.mxu0 0
    %457 = vmatmul.mubr.bf16.gmra.mxu0 %v371
    %v458 = vpop.f32.mrf.mxu0
    %v459 = vadd.f32 %v253, %v458
    %v460 = vpop.f32.mrf.mxu0
    %v461 = vpop.f32.mrf.mxu0
    %v462 = vadd.f32 %v253, %v461
    %v463 = vpop.f32.mrf.mxu0
    %464 = vmatprep.mubr.bf16.mxu0 0
    %465 = vmatmul.mubr.bf16.gmra.mxu0 %v374
    %v466 = vpop.f32.mrf.mxu0
    %v467 = vadd.f32 %v253, %v466
    %v468 = vpop.f32.mrf.mxu0
    %v469 = vpop.f32.mrf.mxu0
    %v470 = vadd.f32 %v253, %v469
    %v471 = vpop.f32.mrf.mxu0
    %472 = vmatprep.mubr.bf16.mxu0 0
    %473 = vmatmul.mubr.bf16.gmra.mxu0 %v377
    %v474 = vpop.f32.mrf.mxu0
    %v475 = vadd.f32 %v253, %v474
    %v476 = vpop.f32.mrf.mxu0
    %v477 = vpop.f32.mrf.mxu0
    %v478 = vadd.f32 %v253, %v477
    %v479 = vpop.f32.mrf.mxu0
    %480 = vmatprep.mubr.bf16.mxu0 0
    %481 = vmatmul.mubr.bf16.gmra.mxu0 %v380
    %v482 = vpop.f32.mrf.mxu0
    %v483 = vadd.f32 %v253, %v482
    %v484 = vpop.f32.mrf.mxu0
    %v485 = vpop.f32.mrf.mxu0
    %v486 = vadd.f32 %v253, %v485
    %v487 = vpop.f32.mrf.mxu0
    %488 = vmatprep.mubr.bf16.mxu0 0
    %489 = vmatmul.mubr.bf16.gmra.mxu0 %v383
    %v490 = vpop.f32.mrf.mxu0
    %v491 = vadd.f32 %v253, %v490
    %v492 = vpop.f32.mrf.mxu0
    %v493 = vpop.f32.mrf.mxu0
    %v494 = vadd.f32 %v253, %v493
    %v495 = vpop.f32.mrf.mxu0
    %496 = vmatprep.mubr.bf16.mxu0 0
    %497 = vmatmul.mubr.bf16.gmra.mxu0 %v386
    %v498 = vpop.f32.mrf.mxu0
    %v499 = vadd.f32 %v253, %v498
    %v500 = vpop.f32.mrf.mxu0
    %v501 = vpop.f32.mrf.mxu0
    %v502 = vadd.f32 %v253, %v501
    %v503 = vpop.f32.mrf.mxu0
    %504 = vmatprep.mubr.bf16.mxu0 0
    %505 = vmatmul.mubr.bf16.gmra.mxu0 %v389
    %v506 = vpop.f32.mrf.mxu0
    %v507 = vadd.f32 %v253, %v506
    %v508 = vpop.f32.mrf.mxu0
    %v509 = vpop.f32.mrf.mxu0
    %v510 = vadd.f32 %v253, %v509
    %v511 = vpop.f32.mrf.mxu0
    %512 = vmatprep.mubr.bf16.mxu0 0
    %513 = vmatmul.mubr.bf16.gmra.mxu0 %v392
    %v514 = vpop.f32.mrf.mxu0
    %v515 = vadd.f32 %v253, %v514
    %v516 = vpop.f32.mrf.mxu0
    %v517 = vpop.f32.mrf.mxu0
    %v518 = vadd.f32 %v253, %v517
    %v519 = vpop.f32.mrf.mxu0
    %520 = vmatprep.mubr.bf16.mxu0 0
    %521 = vmatmul.mubr.bf16.gmra.mxu0 %v395
    %v522 = vpop.f32.mrf.mxu0
    %v523 = vadd.f32 %v253, %v522
    %v524 = vpop.f32.mrf.mxu0
    %v525 = vpop.f32.mrf.mxu0
    %v526 = vadd.f32 %v253, %v525
    %v527 = vpop.f32.mrf.mxu0
    %528 = vmatprep.mubr.bf16.mxu0 0
    %529 = vmatmul.mubr.bf16.gmra.mxu0 %v398
    %v530 = vpop.f32.mrf.mxu0
    %v531 = vadd.f32 %v253, %v530
    %v532 = vpop.f32.mrf.mxu0
    %v533 = vpop.f32.mrf.mxu0
    %v534 = vadd.f32 %v253, %v533
    %v535 = vpop.f32.mrf.mxu0
    %536 = vmatprep.mubr.bf16.mxu0 0
    %537 = vmatmul.mubr.bf16.gmra.mxu0 %v401
    %v538 = vpop.f32.mrf.mxu0
    %v539 = vadd.f32 %v253, %v538
    %v540 = vpop.f32.mrf.mxu0
    %v541 = vpop.f32.mrf.mxu0
    %v542 = vadd.f32 %v253, %v541
    %v543 = vpop.f32.mrf.mxu0
    %544 = vmatprep.mubr.bf16.mxu0 0
    %545 = vmatmul.mubr.bf16.gmra.mxu0 %v404
    %v546 = vpop.f32.mrf.mxu0
    %v547 = vadd.f32 %v253, %v546
    %v548 = vpop.f32.mrf.mxu0
    %v549 = vpop.f32.mrf.mxu0
    %v550 = vadd.f32 %v253, %v549
    %v551 = vpop.f32.mrf.mxu0
    %552 = vmatprep.mubr.bf16.mxu0 0
    %553 = vmatmul.mubr.bf16.gmra.mxu0 %v407
    %v554 = vpop.f32.mrf.mxu0
    %v555 = vadd.f32 %v253, %v554
    %v556 = vpop.f32.mrf.mxu0
    %v557 = vpop.f32.mrf.mxu0
    %v558 = vadd.f32 %v253, %v557
    %v559 = vpop.f32.mrf.mxu0
    %560 = vmatprep.mubr.bf16.mxu0 0
    %561 = vmatmul.mubr.bf16.gmra.mxu0 %v410
    %v562 = vpop.f32.mrf.mxu0
    %v563 = vadd.f32 %v253, %v562
    %v564 = vpop.f32.mrf.mxu0
    %v565 = vpop.f32.mrf.mxu0
    %v566 = vadd.f32 %v253, %v565
    %v567 = vpop.f32.mrf.mxu0
    %568 = vmatprep.mubr.bf16.mxu0 0
    %569 = vmatmul.mubr.bf16.gmra.mxu0 %v413
    %v570 = vpop.f32.mrf.mxu0
    %v571 = vadd.f32 %v253, %v570
    %v572 = vpop.f32.mrf.mxu0
    %v573 = vpop.f32.mrf.mxu0
    %v574 = vadd.f32 %v253, %v573
    %v575 = vpop.f32.mrf.mxu0
    %576 = vmatprep.mubr.bf16.mxu0 0
    %577 = vmatmul.mubr.bf16.gmra.mxu0 %v416
    %v578 = vpop.f32.mrf.mxu0
    %v579 = vadd.f32 %v253, %v578
    %v580 = vpop.f32.mrf.mxu0
    %v581 = vpop.f32.mrf.mxu0
    %v582 = vadd.f32 %v253, %v581
    %v583 = vpop.f32.mrf.mxu0
    %584 = vmatprep.mubr.bf16.mxu0 0
    %585 = vmatmul.mubr.bf16.gmra.mxu0 %v419
    %v586 = vpop.f32.mrf.mxu0
    %v587 = vadd.f32 %v253, %v586
    %v588 = vpop.f32.mrf.mxu0
    %v589 = vpop.f32.mrf.mxu0
    %v590 = vadd.f32 %v253, %v589
    %v591 = vpop.f32.mrf.mxu0
    %592 = vmatprep.mubr.bf16.mxu0 0
    %593 = vmatmul.mubr.bf16.gmra.mxu0 %v422
    %v594 = vpop.f32.mrf.mxu0
    %v595 = vadd.f32 %v253, %v594
    %v596 = vpop.f32.mrf.mxu0
    %v597 = vpop.f32.mrf.mxu0
    %v598 = vadd.f32 %v253, %v597
    %v599 = vpop.f32.mrf.mxu0
    %600 = vdwg.mxu0
    %v601 = vmax.f32 %v459, 0.0
    %v602 = vmax.f32 %v462, 0.0
    %v603 = vmax.f32 %v467, 0.0
    %v604 = vmax.f32 %v470, 0.0
    %v605 = vmax.f32 %v475, 0.0
    %v606 = vmax.f32 %v478, 0.0
    %v607 = vmax.f32 %v483, 0.0
    %v608 = vmax.f32 %v486, 0.0
    %v609 = vmax.f32 %v491, 0.0
    %v610 = vmax.f32 %v494, 0.0
    %v611 = vmax.f32 %v499, 0.0
    %v612 = vmax.f32 %v502, 0.0
    %v613 = vmax.f32 %v507, 0.0
    %v614 = vmax.f32 %v510, 0.0
    %v615 = vmax.f32 %v515, 0.0
    %v616 = vmax.f32 %v518, 0.0
    %v617 = vmax.f32 %v523, 0.0
    %v618 = vmax.f32 %v526, 0.0
    %v619 = vmax.f32 %v531, 0.0
    %v620 = vmax.f32 %v534, 0.0
    %v621 = vmax.f32 %v539, 0.0
    %v622 = vmax.f32 %v542, 0.0
    %v623 = vmax.f32 %v547, 0.0
    %v624 = vmax.f32 %v550, 0.0
    %v625 = vmax.f32 %v555, 0.0
    %v626 = vmax.f32 %v558, 0.0
    %v627 = vmax.f32 %v563, 0.0
    %v628 = vmax.f32 %v566, 0.0
    %v629 = vmax.f32 %v571, 0.0
    %v630 = vmax.f32 %v574, 0.0
    %v631 = vmax.f32 %v579, 0.0
    %v632 = vmax.f32 %v582, 0.0
    %v633 = vmax.f32 %v587, 0.0
    %v634 = vmax.f32 %v590, 0.0
    %v635 = vmax.f32 %v595, 0.0
    %v636 = vmax.f32 %v598, 0.0
    %v637 = vpack.c.bf16 %v602, %v601
    %v638 = vpack.c.bf16 %v604, %v603
    %v639 = vpack.c.bf16 %v606, %v605
    %v640 = vpack.c.bf16 %v608, %v607
    %v641 = vpack.c.bf16 %v609, %v609
    %v642 = vld [vmem:[#allocation10] sm:$0xf]
    %v643 = vld [vmem:[#allocation10 + $0x4] sm:$0xf]
    %v644 = vld [vmem:[#allocation10 + $0x8] sm:$0xf]
    %v645 = vld [vmem:[#allocation10 + $0xc] sm:$0xf]
    %v646 = vpack.c.bf16 %v611, %v610
    %v647 = vpack.c.bf16 %v613, %v612
    %v648 = vpack.c.bf16 %v615, %v614
    %v649 = vpack.c.bf16 %v617, %v616
    %v650 = vpack.c.bf16 %v618, %v618
    %s651 = scalar_lea.vmem [#allocation10], 16
    %v652 = vld [vmem:[%s651] sm:$0xf]
    %v653 = vld [vmem:[%s651 + $0x4] sm:$0xf]
    %v654 = vld [vmem:[%s651 + $0x8] sm:$0xf]
    %v655 = vld [vmem:[%s651 + $0xc] sm:$0xf]
    %v660 = vunpack.c.l.b16 %v652
    %v661 = vunpack.c.l.b16 %v653
    %v662 = vunpack.c.l.b16 %v654
    %v663 = vunpack.c.l.b16 %v655
    %v664 = vpack.c.b16 %v661, %v660
    %v665 = vpack.c.b16 %v663, %v662
    %vm668 = vcmask 261120
    %v670 = vsel %vm668, %v646, 0
    %v673 = vsel %vm668, %v647, 0
    %v676 = vsel %vm668, %v648, 0
    %v679 = vsel %vm668, %v649, 0
    %v682 = vsel %vm668, %v650, 0
    %684 = vmatprep.subr.bf16.mxu0 0
    %685 = vmatpush1.bf16.msra.mxu0 0
    %686 = vmatprep.subr.bf16.mxu0 0
    %687 = vmatpush1.bf16.msra.mxu0 0
    %688 = vmatprep.subr.bf16.mxu0 0
    %689 = vmatpush1.bf16.msra.mxu0 0
    %690 = vmatprep.subr.bf16.mxu0 0
    %691 = vmatpush1.bf16.msra.mxu0 0
    %692 = vmatprep.subr.bf16.mxu0 0
    %693 = vmatpush1.bf16.msra.mxu0 0
    %694 = vmatprep.subr.bf16.mxu0 0
    %695 = vmatpush1.bf16.msra.mxu0 0
    %696 = vmatprep.subr.bf16.mxu0 0
    %697 = vmatpush1.bf16.msra.mxu0 %v665
    %698 = vmatprep.subr.bf16.mxu0 0
    %699 = vmatpush1.bf16.msra.mxu0 %v664
    %700 = vmatprep.subr.bf16.mxu0 0
    %701 = vmatpush2.bf16.msra.mxu0 0
    %702 = vmatprep.subr.bf16.mxu0 0
    %703 = vmatpush2.bf16.msra.mxu0 0
    %704 = vmatprep.subr.bf16.mxu0 0
    %705 = vmatpush2.bf16.msra.mxu0 0
    %706 = vmatprep.subr.bf16.mxu0 0
    %707 = vmatpush2.bf16.msra.mxu0 0
    %708 = vmatprep.subr.bf16.mxu0 0
    %709 = vmatpush2.bf16.msra.mxu0 0
    %710 = vmatprep.subr.bf16.mxu0 0
    %711 = vmatpush2.bf16.msra.mxu0 0
    %712 = vmatprep.subr.bf16.mxu0 0
    %713 = vmatpush2.bf16.msra.mxu0 0
    %714 = vmatprep.subr.bf16.mxu0 0
    %715 = vmatpush2.bf16.msra.mxu0 0
    %716 = vmatprep.mubr.bf16.mxu0 0
    %717 = vmatmul.mubr.bf16.gmra.mxu0 %v670
    %v718 = vpop.f32.mrf.mxu0
    %v719 = vadd.f32 0.0, %v718
    %v720 = vpop.f32.mrf.mxu0
    %v721 = vpop.f32.mrf.mxu0
    %v722 = vadd.f32 0.0, %v721
    %v723 = vpop.f32.mrf.mxu0
    %724 = vmatprep.mubr.bf16.mxu0 0
    %725 = vmatmul.mubr.bf16.gmra.mxu0 %v673
    %v726 = vpop.f32.mrf.mxu0
    %v727 = vadd.f32 0.0, %v726
    %v728 = vpop.f32.mrf.mxu0
    %v729 = vpop.f32.mrf.mxu0
    %v730 = vadd.f32 0.0, %v729
    %v731 = vpop.f32.mrf.mxu0
    %732 = vmatprep.mubr.bf16.mxu0 0
    %733 = vmatmul.mubr.bf16.gmra.mxu0 %v676
    %v734 = vpop.f32.mrf.mxu0
    %v735 = vadd.f32 0.0, %v734
    %v736 = vpop.f32.mrf.mxu0
    %v737 = vpop.f32.mrf.mxu0
    %v738 = vadd.f32 0.0, %v737
    %v739 = vpop.f32.mrf.mxu0
    %740 = vmatprep.mubr.bf16.mxu0 0
    %741 = vmatmul.mubr.bf16.gmra.mxu0 %v679
    %v742 = vpop.f32.mrf.mxu0
    %v743 = vadd.f32 0.0, %v742
    %v744 = vpop.f32.mrf.mxu0
    %v745 = vpop.f32.mrf.mxu0
    %v746 = vadd.f32 0.0, %v745
    %v747 = vpop.f32.mrf.mxu0
    %748 = vmatprep.mubr.bf16.mxu0 0
    %749 = vmatmul.mubr.bf16.gmra.mxu0 %v682
    %v750 = vpop.f32.mrf.mxu0
    %v751 = vadd.f32 0.0, %v750
    %v752 = vpop.f32.mrf.mxu0
    %v753 = vpop.f32.mrf.mxu0
    %v754 = vpop.f32.mrf.mxu0
    %755 = vdwg.mxu0
    %v760 = vunpack.c.l.b16 %v642
    %v761 = vunpack.c.l.b16 %v643
    %v762 = vunpack.c.l.b16 %v644
    %v763 = vunpack.c.l.b16 %v645
    %v764 = vpack.c.b16 %v761, %v760
    %v765 = vpack.c.b16 %v763, %v762
    %v769 = vsel %vm668, %v637, 0
    %v772 = vsel %vm668, %v638, 0
    %v775 = vsel %vm668, %v639, 0
    %v778 = vsel %vm668, %v640, 0
    %v781 = vsel %vm668, %v641, 0
    %783 = vmatprep.subr.bf16.mxu0 0
    %784 = vmatpush1.bf16.msra.mxu0 0
    %785 = vmatprep.subr.bf16.mxu0 0
    %786 = vmatpush1.bf16.msra.mxu0 0
    %787 = vmatprep.subr.bf16.mxu0 0
    %788 = vmatpush1.bf16.msra.mxu0 0
    %789 = vmatprep.subr.bf16.mxu0 0
    %790 = vmatpush1.bf16.msra.mxu0 0
    %791 = vmatprep.subr.bf16.mxu0 0
    %792 = vmatpush1.bf16.msra.mxu0 0
    %793 = vmatprep.subr.bf16.mxu0 0
    %794 = vmatpush1.bf16.msra.mxu0 0
    %795 = vmatprep.subr.bf16.mxu0 0
    %796 = vmatpush1.bf16.msra.mxu0 %v765
    %797 = vmatprep.subr.bf16.mxu0 0
    %798 = vmatpush1.bf16.msra.mxu0 %v764
    %799 = vmatprep.subr.bf16.mxu0 0
    %800 = vmatpush2.bf16.msra.mxu0 0
    %801 = vmatprep.subr.bf16.mxu0 0
    %802 = vmatpush2.bf16.msra.mxu0 0
    %803 = vmatprep.subr.bf16.mxu0 0
    %804 = vmatpush2.bf16.msra.mxu0 0
    %805 = vmatprep.subr.bf16.mxu0 0
    %806 = vmatpush2.bf16.msra.mxu0 0
    %807 = vmatprep.subr.bf16.mxu0 0
    %808 = vmatpush2.bf16.msra.mxu0 0
    %809 = vmatprep.subr.bf16.mxu0 0
    %810 = vmatpush2.bf16.msra.mxu0 0
    %811 = vmatprep.subr.bf16.mxu0 0
    %812 = vmatpush2.bf16.msra.mxu0 0
    %813 = vmatprep.subr.bf16.mxu0 0
    %814 = vmatpush2.bf16.msra.mxu0 0
    %815 = vmatprep.mubr.bf16.mxu0 0
    %816 = vmatmul.mubr.bf16.gmra.mxu0 %v769
    %v817 = vpop.f32.mrf.mxu0
    %v818 = vadd.f32 %v719, %v817
    %v819 = vpop.f32.mrf.mxu0
    %v820 = vpop.f32.mrf.mxu0
    %v821 = vadd.f32 %v722, %v820
    %v822 = vpop.f32.mrf.mxu0
    %823 = vmatprep.mubr.bf16.mxu0 0
    %824 = vmatmul.mubr.bf16.gmra.mxu0 %v772
    %v825 = vpop.f32.mrf.mxu0
    %v826 = vadd.f32 %v727, %v825
    %v827 = vpop.f32.mrf.mxu0
    %v828 = vpop.f32.mrf.mxu0
    %v829 = vadd.f32 %v730, %v828
    %v830 = vpop.f32.mrf.mxu0
    %831 = vmatprep.mubr.bf16.mxu0 0
    %832 = vmatmul.mubr.bf16.gmra.mxu0 %v775
    %v833 = vpop.f32.mrf.mxu0
    %v834 = vadd.f32 %v735, %v833
    %v835 = vpop.f32.mrf.mxu0
    %v836 = vpop.f32.mrf.mxu0
    %v837 = vadd.f32 %v738, %v836
    %v838 = vpop.f32.mrf.mxu0
    %839 = vmatprep.mubr.bf16.mxu0 0
    %840 = vmatmul.mubr.bf16.gmra.mxu0 %v778
    %v841 = vpop.f32.mrf.mxu0
    %v842 = vadd.f32 %v743, %v841
    %v843 = vpop.f32.mrf.mxu0
    %v844 = vpop.f32.mrf.mxu0
    %v845 = vadd.f32 %v746, %v844
    %v846 = vpop.f32.mrf.mxu0
    %847 = vmatprep.mubr.bf16.mxu0 0
    %848 = vmatmul.mubr.bf16.gmra.mxu0 %v781
    %v849 = vpop.f32.mrf.mxu0
    %v850 = vadd.f32 %v751, %v849
    %v851 = vpop.f32.mrf.mxu0
    %v852 = vpop.f32.mrf.mxu0
    %v853 = vpop.f32.mrf.mxu0
    %854 = vdwg.mxu0
    %v855 = vpack.c.bf16 %v620, %v619
    %v856 = vpack.c.bf16 %v622, %v621
    %v857 = vpack.c.bf16 %v624, %v623
    %v858 = vpack.c.bf16 %v626, %v625
    %v859 = vpack.c.bf16 %v627, %v627
    %s860 = scalar_lea.vmem [#allocation10], 32
    %v861 = vld [vmem:[%s860] sm:$0xf]
    %v862 = vld [vmem:[%s860 + $0x4] sm:$0xf]
    %v863 = vld [vmem:[%s860 + $0x8] sm:$0xf]
    %v864 = vld [vmem:[%s860 + $0xc] sm:$0xf]
    %v869 = vunpack.c.l.b16 %v861
    %v870 = vunpack.c.l.b16 %v862
    %v871 = vunpack.c.l.b16 %v863
    %v872 = vunpack.c.l.b16 %v864
    %v873 = vpack.c.b16 %v870, %v869
    %v874 = vpack.c.b16 %v872, %v871
    %v878 = vsel %vm668, %v855, 0
    %v881 = vsel %vm668, %v856, 0
    %v884 = vsel %vm668, %v857, 0
    %v887 = vsel %vm668, %v858, 0
    %v890 = vsel %vm668, %v859, 0
    %892 = vmatprep.subr.bf16.mxu0 0
    %893 = vmatpush1.bf16.msra.mxu0 0
    %894 = vmatprep.subr.bf16.mxu0 0
    %895 = vmatpush1.bf16.msra.mxu0 0
    %896 = vmatprep.subr.bf16.mxu0 0
    %897 = vmatpush1.bf16.msra.mxu0 0
    %898 = vmatprep.subr.bf16.mxu0 0
    %899 = vmatpush1.bf16.msra.mxu0 0
    %900 = vmatprep.subr.bf16.mxu0 0
    %901 = vmatpush1.bf16.msra.mxu0 0
    %902 = vmatprep.subr.bf16.mxu0 0
    %903 = vmatpush1.bf16.msra.mxu0 0
    %904 = vmatprep.subr.bf16.mxu0 0
    %905 = vmatpush1.bf16.msra.mxu0 %v874
    %906 = vmatprep.subr.bf16.mxu0 0
    %907 = vmatpush1.bf16.msra.mxu0 %v873
    %908 = vmatprep.subr.bf16.mxu0 0
    %909 = vmatpush2.bf16.msra.mxu0 0
    %910 = vmatprep.subr.bf16.mxu0 0
    %911 = vmatpush2.bf16.msra.mxu0 0
    %912 = vmatprep.subr.bf16.mxu0 0
    %913 = vmatpush2.bf16.msra.mxu0 0
    %914 = vmatprep.subr.bf16.mxu0 0
    %915 = vmatpush2.bf16.msra.mxu0 0
    %916 = vmatprep.subr.bf16.mxu0 0
    %917 = vmatpush2.bf16.msra.mxu0 0
    %918 = vmatprep.subr.bf16.mxu0 0
    %919 = vmatpush2.bf16.msra.mxu0 0
    %920 = vmatprep.subr.bf16.mxu0 0
    %921 = vmatpush2.bf16.msra.mxu0 0
    %922 = vmatprep.subr.bf16.mxu0 0
    %923 = vmatpush2.bf16.msra.mxu0 0
    %924 = vmatprep.mubr.bf16.mxu0 0
    %925 = vmatmul.mubr.bf16.gmra.mxu0 %v878
    %v926 = vpop.f32.mrf.mxu0
    %v927 = vadd.f32 0.0, %v926
    %v928 = vpop.f32.mrf.mxu0
    %v929 = vpop.f32.mrf.mxu0
    %v930 = vadd.f32 0.0, %v929
    %v931 = vpop.f32.mrf.mxu0
    %932 = vmatprep.mubr.bf16.mxu0 0
    %933 = vmatmul.mubr.bf16.gmra.mxu0 %v881
    %v934 = vpop.f32.mrf.mxu0
    %v935 = vadd.f32 0.0, %v934
    %v936 = vpop.f32.mrf.mxu0
    %v937 = vpop.f32.mrf.mxu0
    %v938 = vadd.f32 0.0, %v937
    %v939 = vpop.f32.mrf.mxu0
    %940 = vmatprep.mubr.bf16.mxu0 0
    %941 = vmatmul.mubr.bf16.gmra.mxu0 %v884
    %v942 = vpop.f32.mrf.mxu0
    %v943 = vadd.f32 0.0, %v942
    %v944 = vpop.f32.mrf.mxu0
    %v945 = vpop.f32.mrf.mxu0
    %v946 = vadd.f32 0.0, %v945
    %v947 = vpop.f32.mrf.mxu0
    %948 = vmatprep.mubr.bf16.mxu0 0
    %949 = vmatmul.mubr.bf16.gmra.mxu0 %v887
    %v950 = vpop.f32.mrf.mxu0
    %v951 = vadd.f32 0.0, %v950
    %v952 = vpop.f32.mrf.mxu0
    %v953 = vpop.f32.mrf.mxu0
    %v954 = vadd.f32 0.0, %v953
    %v955 = vpop.f32.mrf.mxu0
    %956 = vmatprep.mubr.bf16.mxu0 0
    %957 = vmatmul.mubr.bf16.gmra.mxu0 %v890
    %v958 = vpop.f32.mrf.mxu0
    %v959 = vadd.f32 0.0, %v958
    %v960 = vpop.f32.mrf.mxu0
    %v961 = vpop.f32.mrf.mxu0
    %v962 = vpop.f32.mrf.mxu0
    %963 = vdwg.mxu0
    %v964 = vadd.f32 %v818, %v927
    %v965 = vadd.f32 %v821, %v930
    %v966 = vadd.f32 %v826, %v935
    %v967 = vadd.f32 %v829, %v938
    %v968 = vadd.f32 %v834, %v943
    %v969 = vadd.f32 %v837, %v946
    %v970 = vadd.f32 %v842, %v951
    %v971 = vadd.f32 %v845, %v954
    %v972 = vadd.f32 %v850, %v959
    %v973 = vpack.c.bf16 %v629, %v628
    %v974 = vpack.c.bf16 %v631, %v630
    %v975 = vpack.c.bf16 %v633, %v632
    %v976 = vpack.c.bf16 %v635, %v634
    %v977 = vpack.c.bf16 %v636, %v636
    %s978 = scalar_lea.vmem [#allocation10], 48
    %v979 = vld [vmem:[%s978] sm:$0xf]
    %v980 = vld [vmem:[%s978 + $0x4] sm:$0xf]
    %v981 = vld [vmem:[%s978 + $0x8] sm:$0xf]
    %v982 = vld [vmem:[%s978 + $0xc] sm:$0xf]
    %v987 = vunpack.c.l.b16 %v979
    %v988 = vunpack.c.l.b16 %v980
    %v989 = vunpack.c.l.b16 %v981
    %v990 = vunpack.c.l.b16 %v982
    %v991 = vpack.c.b16 %v988, %v987
    %v992 = vpack.c.b16 %v990, %v989
    %v996 = vsel %vm668, %v973, 0
    %v999 = vsel %vm668, %v974, 0
    %v1002 = vsel %vm668, %v975, 0
    %v1005 = vsel %vm668, %v976, 0
    %v1008 = vsel %vm668, %v977, 0
    %1010 = vmatprep.subr.bf16.mxu0 0
    %1011 = vmatpush1.bf16.msra.mxu0 0
    %1012 = vmatprep.subr.bf16.mxu0 0
    %1013 = vmatpush1.bf16.msra.mxu0 0
    %1014 = vmatprep.subr.bf16.mxu0 0
    %1015 = vmatpush1.bf16.msra.mxu0 0
    %1016 = vmatprep.subr.bf16.mxu0 0
    %1017 = vmatpush1.bf16.msra.mxu0 0
    %1018 = vmatprep.subr.bf16.mxu0 0
    %1019 = vmatpush1.bf16.msra.mxu0 0
    %1020 = vmatprep.subr.bf16.mxu0 0
    %1021 = vmatpush1.bf16.msra.mxu0 0
    %1022 = vmatprep.subr.bf16.mxu0 0
    %1023 = vmatpush1.bf16.msra.mxu0 %v992
    %1024 = vmatprep.subr.bf16.mxu0 0
    %1025 = vmatpush1.bf16.msra.mxu0 %v991
    %1026 = vmatprep.subr.bf16.mxu0 0
    %1027 = vmatpush2.bf16.msra.mxu0 0
    %1028 = vmatprep.subr.bf16.mxu0 0
    %1029 = vmatpush2.bf16.msra.mxu0 0
    %1030 = vmatprep.subr.bf16.mxu0 0
    %1031 = vmatpush2.bf16.msra.mxu0 0
    %1032 = vmatprep.subr.bf16.mxu0 0
    %1033 = vmatpush2.bf16.msra.mxu0 0
    %1034 = vmatprep.subr.bf16.mxu0 0
    %1035 = vmatpush2.bf16.msra.mxu0 0
    %1036 = vmatprep.subr.bf16.mxu0 0
    %1037 = vmatpush2.bf16.msra.mxu0 0
    %1038 = vmatprep.subr.bf16.mxu0 0
    %1039 = vmatpush2.bf16.msra.mxu0 0
    %1040 = vmatprep.subr.bf16.mxu0 0
    %1041 = vmatpush2.bf16.msra.mxu0 0
    %1042 = vmatprep.mubr.bf16.mxu0 0
    %1043 = vmatmul.mubr.bf16.gmra.mxu0 %v996
    %v1044 = vpop.f32.mrf.mxu0
    %v1045 = vadd.f32 0.0, %v1044
    %v1046 = vpop.f32.mrf.mxu0
    %v1047 = vpop.f32.mrf.mxu0
    %v1048 = vadd.f32 0.0, %v1047
    %v1049 = vpop.f32.mrf.mxu0
    %1050 = vmatprep.mubr.bf16.mxu0 0
    %1051 = vmatmul.mubr.bf16.gmra.mxu0 %v999
    %v1052 = vpop.f32.mrf.mxu0
    %v1053 = vadd.f32 0.0, %v1052
    %v1054 = vpop.f32.mrf.mxu0
    %v1055 = vpop.f32.mrf.mxu0
    %v1056 = vadd.f32 0.0, %v1055
    %v1057 = vpop.f32.mrf.mxu0
    %1058 = vmatprep.mubr.bf16.mxu0 0
    %1059 = vmatmul.mubr.bf16.gmra.mxu0 %v1002
    %v1060 = vpop.f32.mrf.mxu0
    %v1061 = vadd.f32 0.0, %v1060
    %v1062 = vpop.f32.mrf.mxu0
    %v1063 = vpop.f32.mrf.mxu0
    %v1064 = vadd.f32 0.0, %v1063
    %v1065 = vpop.f32.mrf.mxu0
    %1066 = vmatprep.mubr.bf16.mxu0 0
    %1067 = vmatmul.mubr.bf16.gmra.mxu0 %v1005
    %v1068 = vpop.f32.mrf.mxu0
    %v1069 = vadd.f32 0.0, %v1068
    %v1070 = vpop.f32.mrf.mxu0
    %v1071 = vpop.f32.mrf.mxu0
    %v1072 = vadd.f32 0.0, %v1071
    %v1073 = vpop.f32.mrf.mxu0
    %1074 = vmatprep.mubr.bf16.mxu0 0
    %1075 = vmatmul.mubr.bf16.gmra.mxu0 %v1008
    %v1076 = vpop.f32.mrf.mxu0
    %v1077 = vadd.f32 0.0, %v1076
    %v1078 = vpop.f32.mrf.mxu0
    %v1079 = vpop.f32.mrf.mxu0
    %v1080 = vpop.f32.mrf.mxu0
    %1081 = vdwg.mxu0
    %v1082 = vadd.f32 %v964, %v1045
    %v1083 = vadd.f32 %v965, %v1048
    %v1084 = vadd.f32 %v966, %v1053
    %v1085 = vadd.f32 %v967, %v1056
    %v1086 = vadd.f32 %v968, %v1061
    %v1087 = vadd.f32 %v969, %v1064
    %v1088 = vadd.f32 %v970, %v1069
    %v1089 = vadd.f32 %v971, %v1072
    %v1090 = vadd.f32 %v972, %v1077
    %v1091 = vld [vmem:[#allocation12] sm:$0x1]
    %v1093 = vlaneseq
    %v1094 = vshrl.u32 %v1093, 7
    %v1095 = vsub.s32 0, %v1094
    %v1096 = vrot.slane %v1091, %v1095
    %v1098 = vadd.f32 %v1082, %v1096
    %v1099 = vadd.f32 %v1083, %v1096
    %v1100 = vadd.f32 %v1084, %v1096
    %v1101 = vadd.f32 %v1085, %v1096
    %v1102 = vadd.f32 %v1086, %v1096
    %v1103 = vadd.f32 %v1087, %v1096
    %v1104 = vadd.f32 %v1088, %v1096
    %v1105 = vadd.f32 %v1089, %v1096
    %v1106 = vadd.f32 %v1090, %v1096
    %v1107 = vmax.f32 %v1098, 0.0
    %v1108 = vmax.f32 %v1099, 0.0
    %v1109 = vmax.f32 %v1100, 0.0
    %v1110 = vmax.f32 %v1101, 0.0
    %v1111 = vmax.f32 %v1102, 0.0
    %v1112 = vmax.f32 %v1103, 0.0
    %v1113 = vmax.f32 %v1104, 0.0
    %v1114 = vmax.f32 %v1105, 0.0
    %v1115 = vmax.f32 %v1106, 0.0
    %v1116 = vpack.c.bf16 %v1108, %v1107
    %v1117 = vpack.c.bf16 %v1110, %v1109
    %v1118 = vpack.c.bf16 %v1112, %v1111
    %v1119 = vpack.c.bf16 %v1114, %v1113
    %v1120 = vpack.c.bf16 %v1115, %v1115
    %v1121 = vld [vmem:[#allocation13] sm:$0xf]
    %v1122 = vld [vmem:[#allocation13 + $0x4] sm:$0xf]
    %v1123 = vld [vmem:[#allocation13 + $0x8] sm:$0xf]
    %v1124 = vld [vmem:[#allocation13 + $0xc] sm:$0xf]
    %v1125 = vld [vmem:[#allocation13 + $0x10] sm:$0xf]
    %v1126 = vld [vmem:[#allocation13 + $0x14] sm:$0xf]
    %v1127 = vld [vmem:[#allocation13 + $0x18] sm:$0xf]
    %v1128 = vld [vmem:[#allocation13 + $0x1c] sm:$0xf]
    %v1129 = vld [vmem:[#allocation15] sm:$0x1]
    %v1131 = vlaneseq
    %v1132 = vshrl.u32 %v1131, 7
    %v1133 = vsub.s32 0, %v1132
    %v1134 = vrot.slane %v1129, %v1133
    %v1144 = vunpack.c.l.b16 %v1121
    %v1145 = vunpack.c.l.b16 %v1122
    %v1146 = vunpack.c.l.b16 %v1123
    %v1147 = vunpack.c.l.b16 %v1124
    %v1148 = vunpack.c.l.b16 %v1125
    %v1149 = vunpack.c.l.b16 %v1126
    %v1150 = vunpack.c.l.b16 %v1127
    %v1151 = vunpack.c.l.b16 %v1128
    %v1152 = vpack.c.b16 %v1145, %v1144
    %v1153 = vpack.c.b16 %v1147, %v1146
    %v1154 = vpack.c.b16 %v1149, %v1148
    %v1155 = vpack.c.b16 %v1151, %v1150
    %v1161 = vsel %vm369, %v1116, 0
    %v1164 = vsel %vm369, %v1117, 0
    %v1167 = vsel %vm369, %v1118, 0
    %v1170 = vsel %vm369, %v1119, 0
    %v1173 = vsel %vm369, %v1120, 0
    %1175 = vmatprep.subr.bf16.mxu0 0
    %1176 = vmatpush1.bf16.msra.mxu0 0
    %1177 = vmatprep.subr.bf16.mxu0 0
    %1178 = vmatpush1.bf16.msra.mxu0 0
    %1179 = vmatprep.subr.bf16.mxu0 0
    %1180 = vmatpush1.bf16.msra.mxu0 0
    %1181 = vmatprep.subr.bf16.mxu0 0
    %1182 = vmatpush1.bf16.msra.mxu0 0
    %1183 = vmatprep.subr.bf16.mxu0 0
    %1184 = vmatpush1.bf16.msra.mxu0 %v1155
    %1185 = vmatprep.subr.bf16.mxu0 0
    %1186 = vmatpush1.bf16.msra.mxu0 %v1154
    %1187 = vmatprep.subr.bf16.mxu0 0
    %1188 = vmatpush1.bf16.msra.mxu0 %v1153
    %1189 = vmatprep.subr.bf16.mxu0 0
    %1190 = vmatpush1.bf16.msra.mxu0 %v1152
    %1191 = vmatprep.subr.bf16.mxu0 0
    %1192 = vmatpush2.bf16.msra.mxu0 0
    %1193 = vmatprep.subr.bf16.mxu0 0
    %1194 = vmatpush2.bf16.msra.mxu0 0
    %1195 = vmatprep.subr.bf16.mxu0 0
    %1196 = vmatpush2.bf16.msra.mxu0 0
    %1197 = vmatprep.subr.bf16.mxu0 0
    %1198 = vmatpush2.bf16.msra.mxu0 0
    %1199 = vmatprep.subr.bf16.mxu0 0
    %1200 = vmatpush2.bf16.msra.mxu0 0
    %1201 = vmatprep.subr.bf16.mxu0 0
    %1202 = vmatpush2.bf16.msra.mxu0 0
    %1203 = vmatprep.subr.bf16.mxu0 0
    %1204 = vmatpush2.bf16.msra.mxu0 0
    %1205 = vmatprep.subr.bf16.mxu0 0
    %1206 = vmatpush2.bf16.msra.mxu0 0
    %1207 = vmatprep.mubr.bf16.mxu0 0
    %1208 = vmatmul.mubr.bf16.gmra.mxu0 %v1161
    %v1209 = vpop.f32.mrf.mxu0
    %v1210 = vadd.f32 %v1134, %v1209
    %v1211 = vpop.f32.mrf.mxu0
    %v1212 = vpop.f32.mrf.mxu0
    %v1213 = vadd.f32 %v1134, %v1212
    %v1214 = vpop.f32.mrf.mxu0
    %1215 = vmatprep.mubr.bf16.mxu0 0
    %1216 = vmatmul.mubr.bf16.gmra.mxu0 %v1164
    %v1217 = vpop.f32.mrf.mxu0
    %v1218 = vadd.f32 %v1134, %v1217
    %v1219 = vpop.f32.mrf.mxu0
    %v1220 = vpop.f32.mrf.mxu0
    %v1221 = vadd.f32 %v1134, %v1220
    %v1222 = vpop.f32.mrf.mxu0
    %1223 = vmatprep.mubr.bf16.mxu0 0
    %1224 = vmatmul.mubr.bf16.gmra.mxu0 %v1167
    %v1225 = vpop.f32.mrf.mxu0
    %v1226 = vadd.f32 %v1134, %v1225
    %v1227 = vpop.f32.mrf.mxu0
    %v1228 = vpop.f32.mrf.mxu0
    %v1229 = vadd.f32 %v1134, %v1228
    %v1230 = vpop.f32.mrf.mxu0
    %1231 = vmatprep.mubr.bf16.mxu0 0
    %1232 = vmatmul.mubr.bf16.gmra.mxu0 %v1170
    %v1233 = vpop.f32.mrf.mxu0
    %v1234 = vadd.f32 %v1134, %v1233
    %v1235 = vpop.f32.mrf.mxu0
    %v1236 = vpop.f32.mrf.mxu0
    %v1237 = vadd.f32 %v1134, %v1236
    %v1238 = vpop.f32.mrf.mxu0
    %1239 = vmatprep.mubr.bf16.mxu0 0
    %1240 = vmatmul.mubr.bf16.gmra.mxu0 %v1173
    %v1241 = vpop.f32.mrf.mxu0
    %v1242 = vadd.f32 %v1134, %v1241
    %v1243 = vpop.f32.mrf.mxu0
    %v1244 = vpop.f32.mrf.mxu0
    %v1245 = vpop.f32.mrf.mxu0
    %1246 = vdwg.mxu0
    %v1247 = vmax.f32 %v1210, 0.0
    %v1248 = vmax.f32 %v1213, 0.0
    %v1249 = vmax.f32 %v1218, 0.0
    %v1250 = vmax.f32 %v1221, 0.0
    %v1251 = vmax.f32 %v1226, 0.0
    %v1252 = vmax.f32 %v1229, 0.0
    %v1253 = vmax.f32 %v1234, 0.0
    %v1254 = vmax.f32 %v1237, 0.0
    %v1255 = vmax.f32 %v1242, 0.0
    %1256 = vst.msk [vmem:[#allocation2] sm:$0xff] %vm369, %v1247
    %1257 = vst.msk [vmem:[#allocation2 + $0x8] sm:$0xff] %vm369, %v1248
    %1258 = vst.msk [vmem:[#allocation2 + $0x10] sm:$0xff] %vm369, %v1249
    %1259 = vst.msk [vmem:[#allocation2 + $0x18] sm:$0xff] %vm369, %v1250
    %1260 = vst.msk [vmem:[#allocation2 + $0x20] sm:$0xff] %vm369, %v1251
    %1261 = vst.msk [vmem:[#allocation2 + $0x28] sm:$0xff] %vm369, %v1252
    %1262 = vst.msk [vmem:[#allocation2 + $0x30] sm:$0xff] %vm369, %v1253
    %1263 = vst.msk [vmem:[#allocation2 + $0x38] sm:$0xff] %vm369, %v1254
    %1264 = vst.msk [vmem:[#allocation2 + $0x40] sm:$0xff] %vm369, %v1255
    %v1265 = vld [vmem:[#allocation2] sm:$0x3]
    %vm1266 = vcmask 517120
    %1267 = vst.msk [vmem:[#allocation3] sm:$0x3] %vm1266, %v1265
    %v1268 = vld [vmem:[#allocation2 + $0x2] sm:$0x3]
    %v1271 = vunpack.c.l.s4 1983009808
    %v1272 = vunpack.c.0.s8 %v1271
    %v1273 = vlaneseq
    %v1274 = vshrl.u32 %v1273, 7
    %v1275 = vsub.s32 %v1272, %v1274
    %v1276 = vrot.slane %v1268, %v1275
    %1277 = vrot.lane.b32.xlu0 %v1276, 64
    %v1278 = vpop.permute.xlu0 %1277
    %vm1280 = vcmask 1041920
    %1281 = vst.msk [vmem:[#allocation3] sm:$0x3] %vm1280, %v1278
    %v1282 = vld [vmem:[#allocation2 + $0x4] sm:$0x3]
    %1283 = vst.msk [vmem:[#allocation3 + $0x2] sm:$0x3] %vm1266, %v1282
    %v1284 = vld [vmem:[#allocation2 + $0x6] sm:$0x3]
    %v1287 = vunpack.c.l.s4 1983009808
    %v1288 = vunpack.c.0.s8 %v1287
    %v1289 = vlaneseq
    %v1290 = vshrl.u32 %v1289, 7
    %v1291 = vsub.s32 %v1288, %v1290
    %v1292 = vrot.slane %v1284, %v1291
    %1293 = vrot.lane.b32.xlu0 %v1292, 64
    %v1294 = vpop.permute.xlu0 %1293
    %1296 = vst.msk [vmem:[#allocation3 + $0x2] sm:$0x3] %vm1280, %v1294
    %v1297 = vld [vmem:[#allocation2 + $0x8] sm:$0x3]
    %1298 = vst.msk [vmem:[#allocation3 + $0x4] sm:$0x3] %vm1266, %v1297
    %v1299 = vld [vmem:[#allocation2 + $0xa] sm:$0x3]
    %v1302 = vunpack.c.l.s4 1983009808
    %v1303 = vunpack.c.0.s8 %v1302
    %v1304 = vlaneseq
    %v1305 = vshrl.u32 %v1304, 7
    %v1306 = vsub.s32 %v1303, %v1305
    %v1307 = vrot.slane %v1299, %v1306
    %1308 = vrot.lane.b32.xlu0 %v1307, 64
    %v1309 = vpop.permute.xlu0 %1308
    %1311 = vst.msk [vmem:[#allocation3 + $0x4] sm:$0x3] %vm1280, %v1309
    %v1312 = vld [vmem:[#allocation2 + $0xc] sm:$0x3]
    %1313 = vst.msk [vmem:[#allocation3 + $0x6] sm:$0x3] %vm1266, %v1312
    %v1314 = vld [vmem:[#allocation2 + $0xe] sm:$0x3]
    %v1317 = vunpack.c.l.s4 1983009808
    %v1318 = vunpack.c.0.s8 %v1317
    %v1319 = vlaneseq
    %v1320 = vshrl.u32 %v1319, 7
    %v1321 = vsub.s32 %v1318, %v1320
    %v1322 = vrot.slane %v1314, %v1321
    %1323 = vrot.lane.b32.xlu0 %v1322, 64
    %v1324 = vpop.permute.xlu0 %1323
    %1326 = vst.msk [vmem:[#allocation3 + $0x6] sm:$0x3] %vm1280, %v1324
    %v1327 = vld [vmem:[#allocation2 + $0x10] sm:$0x3]
    %1328 = vst.msk [vmem:[#allocation3 + $0x8] sm:$0x3] %vm1266, %v1327
    %v1329 = vld [vmem:[#allocation2 + $0x12] sm:$0x3]
    %v1332 = vunpack.c.l.s4 1983009808
    %v1333 = vunpack.c.0.s8 %v1332
    %v1334 = vlaneseq
    %v1335 = vshrl.u32 %v1334, 7
    %v1336 = vsub.s32 %v1333, %v1335
    %v1337 = vrot.slane %v1329, %v1336
    %1338 = vrot.lane.b32.xlu0 %v1337, 64
    %v1339 = vpop.permute.xlu0 %1338
    %1341 = vst.msk [vmem:[#allocation3 + $0x8] sm:$0x3] %vm1280, %v1339
    %v1342 = vld [vmem:[#allocation2 + $0x14] sm:$0x3]
    %1343 = vst.msk [vmem:[#allocation3 + $0xa] sm:$0x3] %vm1266, %v1342
    %v1344 = vld [vmem:[#allocation2 + $0x16] sm:$0x3]
    %v1347 = vunpack.c.l.s4 1983009808
    %v1348 = vunpack.c.0.s8 %v1347
    %v1349 = vlaneseq
    %v1350 = vshrl.u32 %v1349, 7
    %v1351 = vsub.s32 %v1348, %v1350
    %v1352 = vrot.slane %v1344, %v1351
    %1353 = vrot.lane.b32.xlu0 %v1352, 64
    %v1354 = vpop.permute.xlu0 %1353
    %1356 = vst.msk [vmem:[#allocation3 + $0xa] sm:$0x3] %vm1280, %v1354
    %v1357 = vld [vmem:[#allocation2 + $0x18] sm:$0x3]
    %1358 = vst.msk [vmem:[#allocation3 + $0xc] sm:$0x3] %vm1266, %v1357
    %v1359 = vld [vmem:[#allocation2 + $0x1a] sm:$0x3]
    %v1362 = vunpack.c.l.s4 1983009808
    %v1363 = vunpack.c.0.s8 %v1362
    %v1364 = vlaneseq
    %v1365 = vshrl.u32 %v1364, 7
    %v1366 = vsub.s32 %v1363, %v1365
    %v1367 = vrot.slane %v1359, %v1366
    %1368 = vrot.lane.b32.xlu0 %v1367, 64
    %v1369 = vpop.permute.xlu0 %1368
    %1371 = vst.msk [vmem:[#allocation3 + $0xc] sm:$0x3] %vm1280, %v1369
    %v1372 = vld [vmem:[#allocation2 + $0x1c] sm:$0x3]
    %1373 = vst.msk [vmem:[#allocation3 + $0xe] sm:$0x3] %vm1266, %v1372
    %v1374 = vld [vmem:[#allocation2 + $0x1e] sm:$0x3]
    %v1377 = vunpack.c.l.s4 1983009808
    %v1378 = vunpack.c.0.s8 %v1377
    %v1379 = vlaneseq
    %v1380 = vshrl.u32 %v1379, 7
    %v1381 = vsub.s32 %v1378, %v1380
    %v1382 = vrot.slane %v1374, %v1381
    %1383 = vrot.lane.b32.xlu0 %v1382, 64
    %v1384 = vpop.permute.xlu0 %1383
    %1386 = vst.msk [vmem:[#allocation3 + $0xe] sm:$0x3] %vm1280, %v1384
    %v1387 = vld [vmem:[#allocation2 + $0x20] sm:$0x3]
    %1388 = vst.msk [vmem:[#allocation3 + $0x10] sm:$0x3] %vm1266, %v1387
    %v1389 = vld [vmem:[#allocation2 + $0x22] sm:$0x3]
    %v1392 = vunpack.c.l.s4 1983009808
    %v1393 = vunpack.c.0.s8 %v1392
    %v1394 = vlaneseq
    %v1395 = vshrl.u32 %v1394, 7
    %v1396 = vsub.s32 %v1393, %v1395
    %v1397 = vrot.slane %v1389, %v1396
    %1398 = vrot.lane.b32.xlu0 %v1397, 64
    %v1399 = vpop.permute.xlu0 %1398
    %1401 = vst.msk [vmem:[#allocation3 + $0x10] sm:$0x3] %vm1280, %v1399
    %v1402 = vld [vmem:[#allocation2 + $0x24] sm:$0x3]
    %1403 = vst.msk [vmem:[#allocation3 + $0x12] sm:$0x3] %vm1266, %v1402
    %v1404 = vld [vmem:[#allocation2 + $0x26] sm:$0x3]
    %v1407 = vunpack.c.l.s4 1983009808
    %v1408 = vunpack.c.0.s8 %v1407
    %v1409 = vlaneseq
    %v1410 = vshrl.u32 %v1409, 7
    %v1411 = vsub.s32 %v1408, %v1410
    %v1412 = vrot.slane %v1404, %v1411
    %1413 = vrot.lane.b32.xlu0 %v1412, 64
    %v1414 = vpop.permute.xlu0 %1413
    %1416 = vst.msk [vmem:[#allocation3 + $0x12] sm:$0x3] %vm1280, %v1414
    %v1417 = vld [vmem:[#allocation2 + $0x28] sm:$0x3]
    %1418 = vst.msk [vmem:[#allocation3 + $0x14] sm:$0x3] %vm1266, %v1417
    %v1419 = vld [vmem:[#allocation2 + $0x2a] sm:$0x3]
    %v1422 = vunpack.c.l.s4 1983009808
    %v1423 = vunpack.c.0.s8 %v1422
    %v1424 = vlaneseq
    %v1425 = vshrl.u32 %v1424, 7
    %v1426 = vsub.s32 %v1423, %v1425
    %v1427 = vrot.slane %v1419, %v1426
    %1428 = vrot.lane.b32.xlu0 %v1427, 64
    %v1429 = vpop.permute.xlu0 %1428
    %1431 = vst.msk [vmem:[#allocation3 + $0x14] sm:$0x3] %vm1280, %v1429
    %v1432 = vld [vmem:[#allocation2 + $0x2c] sm:$0x3]
    %1433 = vst.msk [vmem:[#allocation3 + $0x16] sm:$0x3] %vm1266, %v1432
    %v1434 = vld [vmem:[#allocation2 + $0x2e] sm:$0x3]
    %v1437 = vunpack.c.l.s4 1983009808
    %v1438 = vunpack.c.0.s8 %v1437
    %v1439 = vlaneseq
    %v1440 = vshrl.u32 %v1439, 7
    %v1441 = vsub.s32 %v1438, %v1440
    %v1442 = vrot.slane %v1434, %v1441
    %1443 = vrot.lane.b32.xlu0 %v1442, 64
    %v1444 = vpop.permute.xlu0 %1443
    %1446 = vst.msk [vmem:[#allocation3 + $0x16] sm:$0x3] %vm1280, %v1444
    %v1447 = vld [vmem:[#allocation2 + $0x30] sm:$0x3]
    %1448 = vst.msk [vmem:[#allocation3 + $0x18] sm:$0x3] %vm1266, %v1447
    %v1449 = vld [vmem:[#allocation2 + $0x32] sm:$0x3]
    %v1452 = vunpack.c.l.s4 1983009808
    %v1453 = vunpack.c.0.s8 %v1452
    %v1454 = vlaneseq
    %v1455 = vshrl.u32 %v1454, 7
    %v1456 = vsub.s32 %v1453, %v1455
    %v1457 = vrot.slane %v1449, %v1456
    %1458 = vrot.lane.b32.xlu0 %v1457, 64
    %v1459 = vpop.permute.xlu0 %1458
    %1461 = vst.msk [vmem:[#allocation3 + $0x18] sm:$0x3] %vm1280, %v1459
    %v1462 = vld [vmem:[#allocation2 + $0x34] sm:$0x3]
    %1463 = vst.msk [vmem:[#allocation3 + $0x1a] sm:$0x3] %vm1266, %v1462
    %v1464 = vld [vmem:[#allocation2 + $0x36] sm:$0x3]
    %v1467 = vunpack.c.l.s4 1983009808
    %v1468 = vunpack.c.0.s8 %v1467
    %v1469 = vlaneseq
    %v1470 = vshrl.u32 %v1469, 7
    %v1471 = vsub.s32 %v1468, %v1470
    %v1472 = vrot.slane %v1464, %v1471
    %1473 = vrot.lane.b32.xlu0 %v1472, 64
    %v1474 = vpop.permute.xlu0 %1473
    %1476 = vst.msk [vmem:[#allocation3 + $0x1a] sm:$0x3] %vm1280, %v1474
    %v1477 = vld [vmem:[#allocation2 + $0x38] sm:$0x3]
    %1478 = vst.msk [vmem:[#allocation3 + $0x1c] sm:$0x3] %vm1266, %v1477
    %v1479 = vld [vmem:[#allocation2 + $0x3a] sm:$0x3]
    %v1482 = vunpack.c.l.s4 1983009808
    %v1483 = vunpack.c.0.s8 %v1482
    %v1484 = vlaneseq
    %v1485 = vshrl.u32 %v1484, 7
    %v1486 = vsub.s32 %v1483, %v1485
    %v1487 = vrot.slane %v1479, %v1486
    %1488 = vrot.lane.b32.xlu0 %v1487, 64
    %v1489 = vpop.permute.xlu0 %1488
    %1491 = vst.msk [vmem:[#allocation3 + $0x1c] sm:$0x3] %vm1280, %v1489
    %v1492 = vld [vmem:[#allocation2 + $0x3c] sm:$0x3]
    %1493 = vst.msk [vmem:[#allocation3 + $0x1e] sm:$0x3] %vm1266, %v1492
    %v1494 = vld [vmem:[#allocation2 + $0x3e] sm:$0x3]
    %v1497 = vunpack.c.l.s4 1983009808
    %v1498 = vunpack.c.0.s8 %v1497
    %v1499 = vlaneseq
    %v1500 = vshrl.u32 %v1499, 7
    %v1501 = vsub.s32 %v1498, %v1500
    %v1502 = vrot.slane %v1494, %v1501
    %1503 = vrot.lane.b32.xlu0 %v1502, 64
    %v1504 = vpop.permute.xlu0 %1503
    %1506 = vst.msk [vmem:[#allocation3 + $0x1e] sm:$0x3] %vm1280, %v1504
    %v1507 = vld [vmem:[#allocation2 + $0x40] sm:$0x3]
    %1508 = vst.msk [vmem:[#allocation3 + $0x20] sm:$0x3] %vm1266, %v1507
    %v1509 = vld [vmem:[#allocation2 + $0x42] sm:$0x3]
    %v1512 = vunpack.c.l.s4 1983009808
    %v1513 = vunpack.c.0.s8 %v1512
    %v1514 = vlaneseq
    %v1515 = vshrl.u32 %v1514, 7
    %v1516 = vsub.s32 %v1513, %v1515
    %v1517 = vrot.slane %v1509, %v1516
    %1518 = vrot.lane.b32.xlu0 %v1517, 64
    %v1519 = vpop.permute.xlu0 %1518
    %1521 = vst.msk [vmem:[#allocation3 + $0x20] sm:$0x3] %vm1280, %v1519
    %v1522 = vld [vmem:[#allocation2 + $0x44] sm:$0x3]
    %1523 = vst.msk [vmem:[#allocation3 + $0x22] sm:$0x3] %vm1266, %v1522
    %v1524 = vld [vmem:[#allocation2 + $0x46] sm:$0x3]
    %v1527 = vunpack.c.l.s4 1983009808
    %v1528 = vunpack.c.0.s8 %v1527
    %v1529 = vlaneseq
    %v1530 = vshrl.u32 %v1529, 7
    %v1531 = vsub.s32 %v1528, %v1530
    %v1532 = vrot.slane %v1524, %v1531
    %1533 = vrot.lane.b32.xlu0 %v1532, 64
    %v1534 = vpop.permute.xlu0 %1533
    %1536 = vst.msk [vmem:[#allocation3 + $0x22] sm:$0x3] %vm1280, %v1534
    %v1537 = vld [vmem:[#allocation16] sm:$0xf]
    %v1539 = vlaneseq
    %v1540 = vshrl.u32 %v1539, 7
    %v1541 = vsub.s32 0, %v1540
    %v1542 = vrot.slane %v1537, %v1541
    %v1543 = vlaneseq
    %v1544 = vshrl.u32 %v1543, 7
    %v1545 = vsub.s32 1, %v1544
    %v1546 = vrot.slane %v1537, %v1545
    %v1547 = vlaneseq
    %v1548 = vshrl.u32 %v1547, 7
    %v1549 = vsub.s32 2, %v1548
    %v1550 = vrot.slane %v1537, %v1549
    %v1551 = vlaneseq
    %v1552 = vshrl.u32 %v1551, 7
    %v1553 = vsub.s32 3, %v1552
    %v1554 = vrot.slane %v1537, %v1553
    %v1559 = vadd.f32 %v1542, 0.0
    %v1560 = vadd.f32 %v1546, 0.0
    %v1561 = vadd.f32 %v1550, 0.0
    %v1562 = vadd.f32 %v1554, 0.0
    %v1567 = vcombine.low %v1559, %v1560
    %v1568 = vcombine.low %v1561, %v1562
    %v1570 = vunpack.c.l.s4 1983009808
    %v1571 = vunpack.c.0.s8 %v1570
    %v1572 = vlaneseq
    %v1573 = vshrl.u32 %v1572, 7
    %v1574 = vsub.s32 %v1571, %v1573
    %v1575 = vrot.slane %v1567, %v1574
    %v1577 = vunpack.c.l.s4 1983009808
    %v1578 = vunpack.c.0.s8 %v1577
    %v1579 = vlaneseq
    %v1580 = vshrl.u32 %v1579, 7
    %v1581 = vsub.s32 %v1578, %v1580
    %v1582 = vrot.slane %v1568, %v1581
    %v1583 = vcombine.low %v1575, %v1582
    %1585 = vst [vmem:[#allocation4] sm:$0xff] %v1583
    %s1586 = smul.u32 4, 48
    %s1587 = smul.u32 %s1586, 4
    %s1588 = sshll.u32 %s1587, 4
    %1589 = dma.done [#allocation6], %s1588
    %v1590 = vld [vmem:[#allocation4] sm:$0xff]
    %v1591 = vld [vmem:[#allocation3] sm:$0x3f]
    %v1593 = vcombine.high %v1591, %v1591
    %v1595 = vunpack.c.l.s4 1983009808
    %v1596 = vunpack.c.0.s8 %v1595
    %v1597 = vlaneseq
    %v1598 = vshrl.u32 %v1597, 7
    %v1599 = vsub.s32 %v1596, %v1598
    %v1600 = vrot.slane %v1591, %v1599
    %v1602 = vunpack.c.l.s4 1983009808
    %v1603 = vunpack.c.0.s8 %v1602
    %v1604 = vlaneseq
    %v1605 = vshrl.u32 %v1604, 7
    %v1606 = vsub.s32 %v1603, %v1605
    %v1607 = vrot.slane %v1593, %v1606
    %v1608 = vcombine.high %v1600, %v1600
    %v1612 = vpack.c.bf16 %v1600, %v1600
    %v1613 = vpack.c.bf16 %v1608, %v1608
    %v1614 = vpack.c.bf16 %v1607, %v1607
    %v1615 = vld [vmem:[#allocation5] sm:$0xff]
    %v1616 = vld [vmem:[#allocation5 + $0x8] sm:$0xff]
    %v1617 = vld [vmem:[#allocation5 + $0x10] sm:$0xff]
    %v1618 = vld [vmem:[#allocation5 + $0x18] sm:$0xff]
    %v1619 = vld [vmem:[#allocation5 + $0x20] sm:$0xff]
    %v1620 = vld [vmem:[#allocation5 + $0x28] sm:$0xff]
    %v1621 = vld [vmem:[#allocation5 + $0x30] sm:$0xff]
    %v1622 = vld [vmem:[#allocation5 + $0x38] sm:$0xff]
    %v1623 = vld [vmem:[#allocation5 + $0x40] sm:$0xff]
    %v1624 = vld [vmem:[#allocation5 + $0x48] sm:$0xff]
    %v1625 = vld [vmem:[#allocation5 + $0x50] sm:$0xff]
    %v1626 = vld [vmem:[#allocation5 + $0x58] sm:$0xff]
    %v1627 = vld [vmem:[#allocation5 + $0x60] sm:$0xff]
    %v1628 = vld [vmem:[#allocation5 + $0x68] sm:$0xff]
    %v1629 = vld [vmem:[#allocation5 + $0x70] sm:$0xff]
    %v1630 = vld [vmem:[#allocation5 + $0x78] sm:$0xff]
    %v1631 = vld [vmem:[#allocation5 + $0x80] sm:$0xff]
    %v1632 = vld [vmem:[#allocation5 + $0x88] sm:$0xff]
    %v1633 = vld [vmem:[#allocation5 + $0x90] sm:$0xff]
    %v1634 = vld [vmem:[#allocation5 + $0x98] sm:$0xff]
    %v1635 = vld [vmem:[#allocation5 + $0xa0] sm:$0xff]
    %v1636 = vld [vmem:[#allocation5 + $0xa8] sm:$0xff]
    %v1637 = vld [vmem:[#allocation5 + $0xb0] sm:$0xff]
    %v1638 = vld [vmem:[#allocation5 + $0xb8] sm:$0xff]
    %v1639 = vld [vmem:[#allocation5 + $0xc0] sm:$0xff]
    %v1640 = vld [vmem:[#allocation5 + $0xc8] sm:$0xff]
    %v1641 = vld [vmem:[#allocation5 + $0xd0] sm:$0xff]
    %v1642 = vld [vmem:[#allocation5 + $0xd8] sm:$0xff]
    %v1643 = vld [vmem:[#allocation5 + $0xe0] sm:$0xff]
    %v1644 = vld [vmem:[#allocation5 + $0xe8] sm:$0xff]
    %v1645 = vld [vmem:[#allocation5 + $0xf0] sm:$0xff]
    %v1646 = vld [vmem:[#allocation5 + $0xf8] sm:$0xff]
    %v1647 = vld [vmem:[#allocation5 + $0x100] sm:$0xff]
    %v1648 = vld [vmem:[#allocation5 + $0x108] sm:$0xff]
    %v1649 = vld [vmem:[#allocation5 + $0x110] sm:$0xff]
    %v1650 = vld [vmem:[#allocation5 + $0x118] sm:$0xff]
    %v1651 = vld [vmem:[#allocation5 + $0x120] sm:$0xff]
    %v1652 = vld [vmem:[#allocation5 + $0x128] sm:$0xff]
    %v1653 = vld [vmem:[#allocation5 + $0x130] sm:$0xff]
    %v1654 = vld [vmem:[#allocation5 + $0x138] sm:$0xff]
    %v1655 = vld [vmem:[#allocation5 + $0x140] sm:$0xff]
    %v1656 = vld [vmem:[#allocation5 + $0x148] sm:$0xff]
    %v1657 = vld [vmem:[#allocation5 + $0x150] sm:$0xff]
    %v1658 = vld [vmem:[#allocation5 + $0x158] sm:$0xff]
    %v1659 = vld [vmem:[#allocation5 + $0x160] sm:$0xff]
    %v1660 = vld [vmem:[#allocation5 + $0x168] sm:$0xff]
    %v1661 = vld [vmem:[#allocation5 + $0x170] sm:$0xff]
    %v1662 = vld [vmem:[#allocation5 + $0x178] sm:$0xff]
    %v1663 = vld [vmem:[#allocation5 + $0x180] sm:$0xff]
    %v1664 = vld [vmem:[#allocation5 + $0x188] sm:$0xff]
    %v1665 = vld [vmem:[#allocation5 + $0x190] sm:$0xff]
    %v1666 = vld [vmem:[#allocation5 + $0x198] sm:$0xff]
    %v1667 = vld [vmem:[#allocation5 + $0x1a0] sm:$0xff]
    %v1668 = vld [vmem:[#allocation5 + $0x1a8] sm:$0xff]
    %v1669 = vld [vmem:[#allocation5 + $0x1b0] sm:$0xff]
    %v1670 = vld [vmem:[#allocation5 + $0x1b8] sm:$0xff]
    %v1671 = vld [vmem:[#allocation5 + $0x1c0] sm:$0xff]
    %v1672 = vld [vmem:[#allocation5 + $0x1c8] sm:$0xff]
    %v1673 = vld [vmem:[#allocation5 + $0x1d0] sm:$0xff]
    %v1674 = vld [vmem:[#allocation5 + $0x1d8] sm:$0xff]
    %v1675 = vld [vmem:[#allocation5 + $0x1e0] sm:$0xff]
    %v1676 = vld [vmem:[#allocation5 + $0x1e8] sm:$0xff]
    %v1677 = vld [vmem:[#allocation5 + $0x1f0] sm:$0xff]
    %v1678 = vld [vmem:[#allocation5 + $0x1f8] sm:$0xff]
    %v1679 = vld [vmem:[#allocation5 + $0x200] sm:$0xff]
    %v1680 = vld [vmem:[#allocation5 + $0x208] sm:$0xff]
    %v1681 = vld [vmem:[#allocation5 + $0x210] sm:$0xff]
    %v1682 = vld [vmem:[#allocation5 + $0x218] sm:$0xff]
    %v1683 = vld [vmem:[#allocation5 + $0x220] sm:$0xff]
    %v1684 = vld [vmem:[#allocation5 + $0x228] sm:$0xff]
    %v1685 = vld [vmem:[#allocation5 + $0x230] sm:$0xff]
    %v1686 = vld [vmem:[#allocation5 + $0x238] sm:$0xff]
    %v1687 = vld [vmem:[#allocation5 + $0x240] sm:$0xff]
    %v1688 = vld [vmem:[#allocation5 + $0x248] sm:$0xff]
    %v1689 = vld [vmem:[#allocation5 + $0x250] sm:$0xff]
    %v1690 = vld [vmem:[#allocation5 + $0x258] sm:$0xff]
    %v1691 = vld [vmem:[#allocation5 + $0x260] sm:$0xff]
    %v1692 = vld [vmem:[#allocation5 + $0x268] sm:$0xff]
    %v1693 = vld [vmem:[#allocation5 + $0x270] sm:$0xff]
    %v1694 = vld [vmem:[#allocation5 + $0x278] sm:$0xff]
    %v1695 = vld [vmem:[#allocation5 + $0x280] sm:$0xff]
    %v1696 = vld [vmem:[#allocation5 + $0x288] sm:$0xff]
    %v1697 = vld [vmem:[#allocation5 + $0x290] sm:$0xff]
    %v1698 = vld [vmem:[#allocation5 + $0x298] sm:$0xff]
    %v1699 = vld [vmem:[#allocation5 + $0x2a0] sm:$0xff]
    %v1700 = vld [vmem:[#allocation5 + $0x2a8] sm:$0xff]
    %v1701 = vld [vmem:[#allocation5 + $0x2b0] sm:$0xff]
    %v1702 = vld [vmem:[#allocation5 + $0x2b8] sm:$0xff]
    %v1703 = vld [vmem:[#allocation5 + $0x2c0] sm:$0xff]
    %v1704 = vld [vmem:[#allocation5 + $0x2c8] sm:$0xff]
    %v1705 = vld [vmem:[#allocation5 + $0x2d0] sm:$0xff]
    %v1706 = vld [vmem:[#allocation5 + $0x2d8] sm:$0xff]
    %v1707 = vld [vmem:[#allocation5 + $0x2e0] sm:$0xff]
    %v1708 = vld [vmem:[#allocation5 + $0x2e8] sm:$0xff]
    %v1709 = vld [vmem:[#allocation5 + $0x2f0] sm:$0xff]
    %v1710 = vld [vmem:[#allocation5 + $0x2f8] sm:$0xff]
    %v1807 = vunpack.c.l.b16 %v1615
    %v1808 = vunpack.c.h.b16 %v1615
    %v1809 = vunpack.c.l.b16 %v1616
    %v1810 = vunpack.c.h.b16 %v1616
    %v1811 = vunpack.c.l.b16 %v1617
    %v1812 = vunpack.c.h.b16 %v1617
    %v1813 = vunpack.c.l.b16 %v1618
    %v1814 = vunpack.c.h.b16 %v1618
    %v1815 = vunpack.c.l.b16 %v1619
    %v1816 = vunpack.c.h.b16 %v1619
    %v1817 = vunpack.c.l.b16 %v1620
    %v1818 = vunpack.c.h.b16 %v1620
    %v1819 = vunpack.c.l.b16 %v1621
    %v1820 = vunpack.c.h.b16 %v1621
    %v1821 = vunpack.c.l.b16 %v1622
    %v1822 = vunpack.c.h.b16 %v1622
    %v1823 = vunpack.c.l.b16 %v1623
    %v1824 = vunpack.c.h.b16 %v1623
    %v1825 = vunpack.c.l.b16 %v1624
    %v1826 = vunpack.c.h.b16 %v1624
    %v1827 = vunpack.c.l.b16 %v1625
    %v1828 = vunpack.c.h.b16 %v1625
    %v1829 = vunpack.c.l.b16 %v1626
    %v1830 = vunpack.c.h.b16 %v1626
    %v1831 = vunpack.c.l.b16 %v1627
    %v1832 = vunpack.c.h.b16 %v1627
    %v1833 = vunpack.c.l.b16 %v1628
    %v1834 = vunpack.c.h.b16 %v1628
    %v1835 = vunpack.c.l.b16 %v1629
    %v1836 = vunpack.c.h.b16 %v1629
    %v1837 = vunpack.c.l.b16 %v1630
    %v1838 = vunpack.c.h.b16 %v1630
    %v1839 = vunpack.c.l.b16 %v1631
    %v1840 = vunpack.c.h.b16 %v1631
    %v1841 = vunpack.c.l.b16 %v1632
    %v1842 = vunpack.c.h.b16 %v1632
    %v1843 = vunpack.c.l.b16 %v1633
    %v1844 = vunpack.c.h.b16 %v1633
    %v1845 = vunpack.c.l.b16 %v1634
    %v1846 = vunpack.c.h.b16 %v1634
    %v1847 = vunpack.c.l.b16 %v1635
    %v1848 = vunpack.c.h.b16 %v1635
    %v1849 = vunpack.c.l.b16 %v1636
    %v1850 = vunpack.c.h.b16 %v1636
    %v1851 = vunpack.c.l.b16 %v1637
    %v1852 = vunpack.c.h.b16 %v1637
    %v1853 = vunpack.c.l.b16 %v1638
    %v1854 = vunpack.c.h.b16 %v1638
    %v1855 = vunpack.c.l.b16 %v1639
    %v1856 = vunpack.c.h.b16 %v1639
    %v1857 = vunpack.c.l.b16 %v1640
    %v1858 = vunpack.c.h.b16 %v1640
    %v1859 = vunpack.c.l.b16 %v1641
    %v1860 = vunpack.c.h.b16 %v1641
    %v1861 = vunpack.c.l.b16 %v1642
    %v1862 = vunpack.c.h.b16 %v1642
    %v1863 = vunpack.c.l.b16 %v1643
    %v1864 = vunpack.c.h.b16 %v1643
    %v1865 = vunpack.c.l.b16 %v1644
    %v1866 = vunpack.c.h.b16 %v1644
    %v1867 = vunpack.c.l.b16 %v1645
    %v1868 = vunpack.c.h.b16 %v1645
    %v1869 = vunpack.c.l.b16 %v1646
    %v1870 = vunpack.c.h.b16 %v1646
    %v1871 = vunpack.c.l.b16 %v1647
    %v1872 = vunpack.c.h.b16 %v1647
    %v1873 = vunpack.c.l.b16 %v1648
    %v1874 = vunpack.c.h.b16 %v1648
    %v1875 = vunpack.c.l.b16 %v1649
    %v1876 = vunpack.c.h.b16 %v1649
    %v1877 = vunpack.c.l.b16 %v1650
    %v1878 = vunpack.c.h.b16 %v1650
    %v1879 = vunpack.c.l.b16 %v1651
    %v1880 = vunpack.c.h.b16 %v1651
    %v1881 = vunpack.c.l.b16 %v1652
    %v1882 = vunpack.c.h.b16 %v1652
    %v1883 = vunpack.c.l.b16 %v1653
    %v1884 = vunpack.c.h.b16 %v1653
    %v1885 = vunpack.c.l.b16 %v1654
    %v1886 = vunpack.c.h.b16 %v1654
    %v1887 = vunpack.c.l.b16 %v1655
    %v1888 = vunpack.c.h.b16 %v1655
    %v1889 = vunpack.c.l.b16 %v1656
    %v1890 = vunpack.c.h.b16 %v1656
    %v1891 = vunpack.c.l.b16 %v1657
    %v1892 = vunpack.c.h.b16 %v1657
    %v1893 = vunpack.c.l.b16 %v1658
    %v1894 = vunpack.c.h.b16 %v1658
    %v1895 = vunpack.c.l.b16 %v1659
    %v1896 = vunpack.c.h.b16 %v1659
    %v1897 = vunpack.c.l.b16 %v1660
    %v1898 = vunpack.c.h.b16 %v1660
    %v1899 = vunpack.c.l.b16 %v1661
    %v1900 = vunpack.c.h.b16 %v1661
    %v1901 = vunpack.c.l.b16 %v1662
    %v1902 = vunpack.c.h.b16 %v1662
    %v1903 = vunpack.c.l.b16 %v1663
    %v1904 = vunpack.c.h.b16 %v1663
    %v1905 = vunpack.c.l.b16 %v1664
    %v1906 = vunpack.c.h.b16 %v1664
    %v1907 = vunpack.c.l.b16 %v1665
    %v1908 = vunpack.c.h.b16 %v1665
    %v1909 = vunpack.c.l.b16 %v1666
    %v1910 = vunpack.c.h.b16 %v1666
    %v1911 = vunpack.c.l.b16 %v1667
    %v1912 = vunpack.c.h.b16 %v1667
    %v1913 = vunpack.c.l.b16 %v1668
    %v1914 = vunpack.c.h.b16 %v1668
    %v1915 = vunpack.c.l.b16 %v1669
    %v1916 = vunpack.c.h.b16 %v1669
    %v1917 = vunpack.c.l.b16 %v1670
    %v1918 = vunpack.c.h.b16 %v1670
    %v1919 = vunpack.c.l.b16 %v1671
    %v1920 = vunpack.c.h.b16 %v1671
    %v1921 = vunpack.c.l.b16 %v1672
    %v1922 = vunpack.c.h.b16 %v1672
    %v1923 = vunpack.c.l.b16 %v1673
    %v1924 = vunpack.c.h.b16 %v1673
    %v1925 = vunpack.c.l.b16 %v1674
    %v1926 = vunpack.c.h.b16 %v1674
    %v1927 = vunpack.c.l.b16 %v1675
    %v1928 = vunpack.c.h.b16 %v1675
    %v1929 = vunpack.c.l.b16 %v1676
    %v1930 = vunpack.c.h.b16 %v1676
    %v1931 = vunpack.c.l.b16 %v1677
    %v1932 = vunpack.c.h.b16 %v1677
    %v1933 = vunpack.c.l.b16 %v1678
    %v1934 = vunpack.c.h.b16 %v1678
    %v1935 = vunpack.c.l.b16 %v1679
    %v1936 = vunpack.c.h.b16 %v1679
    %v1937 = vunpack.c.l.b16 %v1680
    %v1938 = vunpack.c.h.b16 %v1680
    %v1939 = vunpack.c.l.b16 %v1681
    %v1940 = vunpack.c.h.b16 %v1681
    %v1941 = vunpack.c.l.b16 %v1682
    %v1942 = vunpack.c.h.b16 %v1682
    %v1943 = vunpack.c.l.b16 %v1683
    %v1944 = vunpack.c.h.b16 %v1683
    %v1945 = vunpack.c.l.b16 %v1684
    %v1946 = vunpack.c.h.b16 %v1684
    %v1947 = vunpack.c.l.b16 %v1685
    %v1948 = vunpack.c.h.b16 %v1685
    %v1949 = vunpack.c.l.b16 %v1686
    %v1950 = vunpack.c.h.b16 %v1686
    %v1951 = vunpack.c.l.b16 %v1687
    %v1952 = vunpack.c.h.b16 %v1687
    %v1953 = vunpack.c.l.b16 %v1688
    %v1954 = vunpack.c.h.b16 %v1688
    %v1955 = vunpack.c.l.b16 %v1689
    %v1956 = vunpack.c.h.b16 %v1689
    %v1957 = vunpack.c.l.b16 %v1690
    %v1958 = vunpack.c.h.b16 %v1690
    %v1959 = vunpack.c.l.b16 %v1691
    %v1960 = vunpack.c.h.b16 %v1691
    %v1961 = vunpack.c.l.b16 %v1692
    %v1962 = vunpack.c.h.b16 %v1692
    %v1963 = vunpack.c.l.b16 %v1693
    %v1964 = vunpack.c.h.b16 %v1693
    %v1965 = vunpack.c.l.b16 %v1694
    %v1966 = vunpack.c.h.b16 %v1694
    %v1967 = vunpack.c.l.b16 %v1695
    %v1968 = vunpack.c.h.b16 %v1695
    %v1969 = vunpack.c.l.b16 %v1696
    %v1970 = vunpack.c.h.b16 %v1696
    %v1971 = vunpack.c.l.b16 %v1697
    %v1972 = vunpack.c.h.b16 %v1697
    %v1973 = vunpack.c.l.b16 %v1698
    %v1974 = vunpack.c.h.b16 %v1698
    %v1975 = vunpack.c.l.b16 %v1699
    %v1976 = vunpack.c.h.b16 %v1699
    %v1977 = vunpack.c.l.b16 %v1700
    %v1978 = vunpack.c.h.b16 %v1700
    %v1979 = vunpack.c.l.b16 %v1701
    %v1980 = vunpack.c.h.b16 %v1701
    %v1981 = vunpack.c.l.b16 %v1702
    %v1982 = vunpack.c.h.b16 %v1702
    %v1983 = vunpack.c.l.b16 %v1703
    %v1984 = vunpack.c.h.b16 %v1703
    %v1985 = vunpack.c.l.b16 %v1704
    %v1986 = vunpack.c.h.b16 %v1704
    %v1987 = vunpack.c.l.b16 %v1705
    %v1988 = vunpack.c.h.b16 %v1705
    %v1989 = vunpack.c.l.b16 %v1706
    %v1990 = vunpack.c.h.b16 %v1706
    %v1991 = vunpack.c.l.b16 %v1707
    %v1992 = vunpack.c.h.b16 %v1707
    %v1993 = vunpack.c.l.b16 %v1708
    %v1994 = vunpack.c.h.b16 %v1708
    %v1995 = vunpack.c.l.b16 %v1709
    %v1996 = vunpack.c.h.b16 %v1709
    %v1997 = vunpack.c.l.b16 %v1710
    %v1998 = vunpack.c.h.b16 %v1710
    %v1999 = vpack.c.b16 %v1811, %v1807
    %v2000 = vpack.c.b16 %v1812, %v1808
    %v2001 = vpack.c.b16 %v1813, %v1809
    %v2002 = vpack.c.b16 %v1814, %v1810
    %v2003 = vpack.c.b16 %v1819, %v1815
    %v2004 = vpack.c.b16 %v1820, %v1816
    %v2005 = vpack.c.b16 %v1821, %v1817
    %v2006 = vpack.c.b16 %v1822, %v1818
    %v2007 = vpack.c.b16 %v1827, %v1823
    %v2008 = vpack.c.b16 %v1828, %v1824
    %v2009 = vpack.c.b16 %v1829, %v1825
    %v2010 = vpack.c.b16 %v1830, %v1826
    %v2011 = vpack.c.b16 %v1835, %v1831
    %v2012 = vpack.c.b16 %v1836, %v1832
    %v2013 = vpack.c.b16 %v1837, %v1833
    %v2014 = vpack.c.b16 %v1838, %v1834
    %v2015 = vpack.c.b16 %v1843, %v1839
    %v2016 = vpack.c.b16 %v1844, %v1840
    %v2017 = vpack.c.b16 %v1845, %v1841
    %v2018 = vpack.c.b16 %v1846, %v1842
    %v2019 = vpack.c.b16 %v1851, %v1847
    %v2020 = vpack.c.b16 %v1852, %v1848
    %v2021 = vpack.c.b16 %v1853, %v1849
    %v2022 = vpack.c.b16 %v1854, %v1850
    %v2023 = vpack.c.b16 %v1859, %v1855
    %v2024 = vpack.c.b16 %v1860, %v1856
    %v2025 = vpack.c.b16 %v1861, %v1857
    %v2026 = vpack.c.b16 %v1862, %v1858
    %v2027 = vpack.c.b16 %v1867, %v1863
    %v2028 = vpack.c.b16 %v1868, %v1864
    %v2029 = vpack.c.b16 %v1869, %v1865
    %v2030 = vpack.c.b16 %v1870, %v1866
    %v2031 = vpack.c.b16 %v1875, %v1871
    %v2032 = vpack.c.b16 %v1876, %v1872
    %v2033 = vpack.c.b16 %v1877, %v1873
    %v2034 = vpack.c.b16 %v1878, %v1874
    %v2035 = vpack.c.b16 %v1883, %v1879
    %v2036 = vpack.c.b16 %v1884, %v1880
    %v2037 = vpack.c.b16 %v1885, %v1881
    %v2038 = vpack.c.b16 %v1886, %v1882
    %v2039 = vpack.c.b16 %v1891, %v1887
    %v2040 = vpack.c.b16 %v1892, %v1888
    %v2041 = vpack.c.b16 %v1893, %v1889
    %v2042 = vpack.c.b16 %v1894, %v1890
    %v2043 = vpack.c.b16 %v1899, %v1895
    %v2044 = vpack.c.b16 %v1900, %v1896
    %v2045 = vpack.c.b16 %v1901, %v1897
    %v2046 = vpack.c.b16 %v1902, %v1898
    %v2047 = vpack.c.b16 %v1907, %v1903
    %v2048 = vpack.c.b16 %v1908, %v1904
    %v2049 = vpack.c.b16 %v1909, %v1905
    %v2050 = vpack.c.b16 %v1910, %v1906
    %v2051 = vpack.c.b16 %v1915, %v1911
    %v2052 = vpack.c.b16 %v1916, %v1912
    %v2053 = vpack.c.b16 %v1917, %v1913
    %v2054 = vpack.c.b16 %v1918, %v1914
    %v2055 = vpack.c.b16 %v1923, %v1919
    %v2056 = vpack.c.b16 %v1924, %v1920
    %v2057 = vpack.c.b16 %v1925, %v1921
    %v2058 = vpack.c.b16 %v1926, %v1922
    %v2059 = vpack.c.b16 %v1931, %v1927
    %v2060 = vpack.c.b16 %v1932, %v1928
    %v2061 = vpack.c.b16 %v1933, %v1929
    %v2062 = vpack.c.b16 %v1934, %v1930
    %v2063 = vpack.c.b16 %v1939, %v1935
    %v2064 = vpack.c.b16 %v1940, %v1936
    %v2065 = vpack.c.b16 %v1941, %v1937
    %v2066 = vpack.c.b16 %v1942, %v1938
    %v2067 = vpack.c.b16 %v1947, %v1943
    %v2068 = vpack.c.b16 %v1948, %v1944
    %v2069 = vpack.c.b16 %v1949, %v1945
    %v2070 = vpack.c.b16 %v1950, %v1946
    %v2071 = vpack.c.b16 %v1955, %v1951
    %v2072 = vpack.c.b16 %v1956, %v1952
    %v2073 = vpack.c.b16 %v1957, %v1953
    %v2074 = vpack.c.b16 %v1958, %v1954
    %v2075 = vpack.c.b16 %v1963, %v1959
    %v2076 = vpack.c.b16 %v1964, %v1960
    %v2077 = vpack.c.b16 %v1965, %v1961
    %v2078 = vpack.c.b16 %v1966, %v1962
    %v2079 = vpack.c.b16 %v1971, %v1967
    %v2080 = vpack.c.b16 %v1972, %v1968
    %v2081 = vpack.c.b16 %v1973, %v1969
    %v2082 = vpack.c.b16 %v1974, %v1970
    %v2083 = vpack.c.b16 %v1979, %v1975
    %v2084 = vpack.c.b16 %v1980, %v1976
    %v2085 = vpack.c.b16 %v1981, %v1977
    %v2086 = vpack.c.b16 %v1982, %v1978
    %v2087 = vpack.c.b16 %v1987, %v1983
    %v2088 = vpack.c.b16 %v1988, %v1984
    %v2089 = vpack.c.b16 %v1989, %v1985
    %v2090 = vpack.c.b16 %v1990, %v1986
    %v2091 = vpack.c.b16 %v1995, %v1991
    %v2092 = vpack.c.b16 %v1996, %v1992
    %v2093 = vpack.c.b16 %v1997, %v1993
    %v2094 = vpack.c.b16 %v1998, %v1994
    %2191 = vmatprep.subr.bf16.mxu0 %v2028
    %2192 = vmatpush1.bf16.msra.mxu0 %v2027
    %2193 = vmatprep.subr.bf16.mxu0 %v2024
    %2194 = vmatpush1.bf16.msra.mxu0 %v2023
    %2195 = vmatprep.subr.bf16.mxu0 %v2020
    %2196 = vmatpush1.bf16.msra.mxu0 %v2019
    %2197 = vmatprep.subr.bf16.mxu0 %v2016
    %2198 = vmatpush1.bf16.msra.mxu0 %v2015
    %2199 = vmatprep.subr.bf16.mxu0 %v2012
    %2200 = vmatpush1.bf16.msra.mxu0 %v2011
    %2201 = vmatprep.subr.bf16.mxu0 %v2008
    %2202 = vmatpush1.bf16.msra.mxu0 %v2007
    %2203 = vmatprep.subr.bf16.mxu0 %v2004
    %2204 = vmatpush1.bf16.msra.mxu0 %v2003
    %2205 = vmatprep.subr.bf16.mxu0 %v2000
    %2206 = vmatpush1.bf16.msra.mxu0 %v1999
    %2207 = vmatprep.subr.bf16.mxu0 %v2060
    %2208 = vmatpush2.bf16.msra.mxu0 %v2059
    %2209 = vmatprep.subr.bf16.mxu0 %v2056
    %2210 = vmatpush2.bf16.msra.mxu0 %v2055
    %2211 = vmatprep.subr.bf16.mxu0 %v2052
    %2212 = vmatpush2.bf16.msra.mxu0 %v2051
    %2213 = vmatprep.subr.bf16.mxu0 %v2048
    %2214 = vmatpush2.bf16.msra.mxu0 %v2047
    %2215 = vmatprep.subr.bf16.mxu0 %v2044
    %2216 = vmatpush2.bf16.msra.mxu0 %v2043
    %2217 = vmatprep.subr.bf16.mxu0 %v2040
    %2218 = vmatpush2.bf16.msra.mxu0 %v2039
    %2219 = vmatprep.subr.bf16.mxu0 %v2036
    %2220 = vmatpush2.bf16.msra.mxu0 %v2035
    %2221 = vmatprep.subr.bf16.mxu0 %v2032
    %2222 = vmatpush2.bf16.msra.mxu0 %v2031
    %2223 = vmatprep.mubr.bf16.mxu0 %v1613
    %2224 = vmatmul.mubr.bf16.gmra.mxu0 %v1612
    %v2225 = vpop.f32.mrf.mxu0
    %v2226 = vadd.f32 0.0, %v2225
    %v2227 = vpop.f32.mrf.mxu0
    %v2228 = vadd.f32 0.0, %v2227
    %v2229 = vpop.f32.mrf.mxu0
    %v2230 = vpop.f32.mrf.mxu0
    %2231 = vdwg.mxu0
    %2232 = vmatprep.subr.bf16.mxu0 %v2092
    %2233 = vmatpush1.bf16.msra.mxu0 %v2091
    %2234 = vmatprep.subr.bf16.mxu0 %v2088
    %2235 = vmatpush1.bf16.msra.mxu0 %v2087
    %2236 = vmatprep.subr.bf16.mxu0 %v2084
    %2237 = vmatpush1.bf16.msra.mxu0 %v2083
    %2238 = vmatprep.subr.bf16.mxu0 %v2080
    %2239 = vmatpush1.bf16.msra.mxu0 %v2079
    %2240 = vmatprep.subr.bf16.mxu0 %v2076
    %2241 = vmatpush1.bf16.msra.mxu0 %v2075
    %2242 = vmatprep.subr.bf16.mxu0 %v2072
    %2243 = vmatpush1.bf16.msra.mxu0 %v2071
    %2244 = vmatprep.subr.bf16.mxu0 %v2068
    %2245 = vmatpush1.bf16.msra.mxu0 %v2067
    %2246 = vmatprep.subr.bf16.mxu0 %v2064
    %2247 = vmatpush1.bf16.msra.mxu0 %v2063
    %2248 = vmatprep.subr.bf16.mxu0 0
    %2249 = vmatpush2.bf16.msra.mxu0 0
    %2250 = vmatprep.subr.bf16.mxu0 0
    %2251 = vmatpush2.bf16.msra.mxu0 0
    %2252 = vmatprep.subr.bf16.mxu0 0
    %2253 = vmatpush2.bf16.msra.mxu0 0
    %2254 = vmatprep.subr.bf16.mxu0 0
    %2255 = vmatpush2.bf16.msra.mxu0 0
    %2256 = vmatprep.subr.bf16.mxu0 0
    %2257 = vmatpush2.bf16.msra.mxu0 0
    %2258 = vmatprep.subr.bf16.mxu0 0
    %2259 = vmatpush2.bf16.msra.mxu0 0
    %2260 = vmatprep.subr.bf16.mxu0 0
    %2261 = vmatpush2.bf16.msra.mxu0 0
    %2262 = vmatprep.subr.bf16.mxu0 0
    %2263 = vmatpush2.bf16.msra.mxu0 0
    %2264 = vmatprep.mubr.bf16.mxu0 0
    %2265 = vmatmul.mubr.bf16.gmra.mxu0 %v1614
    %v2266 = vpop.f32.mrf.mxu0
    %v2267 = vadd.f32 %v2226, %v2266
    %v2268 = vpop.f32.mrf.mxu0
    %v2269 = vadd.f32 %v2228, %v2268
    %v2270 = vpop.f32.mrf.mxu0
    %v2271 = vpop.f32.mrf.mxu0
    %2272 = vdwg.mxu0
    %2273 = vmatprep.subr.bf16.mxu0 %v2030
    %2274 = vmatpush1.bf16.msra.mxu0 %v2029
    %2275 = vmatprep.subr.bf16.mxu0 %v2026
    %2276 = vmatpush1.bf16.msra.mxu0 %v2025
    %2277 = vmatprep.subr.bf16.mxu0 %v2022
    %2278 = vmatpush1.bf16.msra.mxu0 %v2021
    %2279 = vmatprep.subr.bf16.mxu0 %v2018
    %2280 = vmatpush1.bf16.msra.mxu0 %v2017
    %2281 = vmatprep.subr.bf16.mxu0 %v2014
    %2282 = vmatpush1.bf16.msra.mxu0 %v2013
    %2283 = vmatprep.subr.bf16.mxu0 %v2010
    %2284 = vmatpush1.bf16.msra.mxu0 %v2009
    %2285 = vmatprep.subr.bf16.mxu0 %v2006
    %2286 = vmatpush1.bf16.msra.mxu0 %v2005
    %2287 = vmatprep.subr.bf16.mxu0 %v2002
    %2288 = vmatpush1.bf16.msra.mxu0 %v2001
    %2289 = vmatprep.subr.bf16.mxu0 %v2062
    %2290 = vmatpush2.bf16.msra.mxu0 %v2061
    %2291 = vmatprep.subr.bf16.mxu0 %v2058
    %2292 = vmatpush2.bf16.msra.mxu0 %v2057
    %2293 = vmatprep.subr.bf16.mxu0 %v2054
    %2294 = vmatpush2.bf16.msra.mxu0 %v2053
    %2295 = vmatprep.subr.bf16.mxu0 %v2050
    %2296 = vmatpush2.bf16.msra.mxu0 %v2049
    %2297 = vmatprep.subr.bf16.mxu0 %v2046
    %2298 = vmatpush2.bf16.msra.mxu0 %v2045
    %2299 = vmatprep.subr.bf16.mxu0 %v2042
    %2300 = vmatpush2.bf16.msra.mxu0 %v2041
    %2301 = vmatprep.subr.bf16.mxu0 %v2038
    %2302 = vmatpush2.bf16.msra.mxu0 %v2037
    %2303 = vmatprep.subr.bf16.mxu0 %v2034
    %2304 = vmatpush2.bf16.msra.mxu0 %v2033
    %2305 = vmatprep.mubr.bf16.mxu0 %v1613
    %2306 = vmatmul.mubr.bf16.gmra.mxu0 %v1612
    %v2307 = vpop.f32.mrf.mxu0
    %v2308 = vadd.f32 0.0, %v2307
    %v2309 = vpop.f32.mrf.mxu0
    %v2310 = vadd.f32 0.0, %v2309
    %v2311 = vpop.f32.mrf.mxu0
    %v2312 = vpop.f32.mrf.mxu0
    %2313 = vdwg.mxu0
    %2314 = vmatprep.subr.bf16.mxu0 %v2094
    %2315 = vmatpush1.bf16.msra.mxu0 %v2093
    %2316 = vmatprep.subr.bf16.mxu0 %v2090
    %2317 = vmatpush1.bf16.msra.mxu0 %v2089
    %2318 = vmatprep.subr.bf16.mxu0 %v2086
    %2319 = vmatpush1.bf16.msra.mxu0 %v2085
    %2320 = vmatprep.subr.bf16.mxu0 %v2082
    %2321 = vmatpush1.bf16.msra.mxu0 %v2081
    %2322 = vmatprep.subr.bf16.mxu0 %v2078
    %2323 = vmatpush1.bf16.msra.mxu0 %v2077
    %2324 = vmatprep.subr.bf16.mxu0 %v2074
    %2325 = vmatpush1.bf16.msra.mxu0 %v2073
    %2326 = vmatprep.subr.bf16.mxu0 %v2070
    %2327 = vmatpush1.bf16.msra.mxu0 %v2069
    %2328 = vmatprep.subr.bf16.mxu0 %v2066
    %2329 = vmatpush1.bf16.msra.mxu0 %v2065
    %2330 = vmatprep.subr.bf16.mxu0 0
    %2331 = vmatpush2.bf16.msra.mxu0 0
    %2332 = vmatprep.subr.bf16.mxu0 0
    %2333 = vmatpush2.bf16.msra.mxu0 0
    %2334 = vmatprep.subr.bf16.mxu0 0
    %2335 = vmatpush2.bf16.msra.mxu0 0
    %2336 = vmatprep.subr.bf16.mxu0 0
    %2337 = vmatpush2.bf16.msra.mxu0 0
    %2338 = vmatprep.subr.bf16.mxu0 0
    %2339 = vmatpush2.bf16.msra.mxu0 0
    %2340 = vmatprep.subr.bf16.mxu0 0
    %2341 = vmatpush2.bf16.msra.mxu0 0
    %2342 = vmatprep.subr.bf16.mxu0 0
    %2343 = vmatpush2.bf16.msra.mxu0 0
    %2344 = vmatprep.subr.bf16.mxu0 0
    %2345 = vmatpush2.bf16.msra.mxu0 0
    %2346 = vmatprep.mubr.bf16.mxu0 0
    %2347 = vmatmul.mubr.bf16.gmra.mxu0 %v1614
    %v2348 = vpop.f32.mrf.mxu0
    %v2349 = vadd.f32 %v2308, %v2348
    %v2350 = vpop.f32.mrf.mxu0
    %v2351 = vadd.f32 %v2310, %v2350
    %v2352 = vpop.f32.mrf.mxu0
    %v2353 = vpop.f32.mrf.mxu0
    %2354 = vdwg.mxu0
    %v2359 = vcombine.low %v2267, %v2269
    %v2360 = vcombine.low %v2349, %v2351
    %v2362 = vunpack.c.l.s4 1983009808
    %v2363 = vunpack.c.0.s8 %v2362
    %v2364 = vlaneseq
    %v2365 = vshrl.u32 %v2364, 7
    %v2366 = vsub.s32 %v2363, %v2365
    %v2367 = vrot.slane %v2359, %v2366
    %v2369 = vunpack.c.l.s4 1983009808
    %v2370 = vunpack.c.0.s8 %v2369
    %v2371 = vlaneseq
    %v2372 = vshrl.u32 %v2371, 7
    %v2373 = vsub.s32 %v2370, %v2372
    %v2374 = vrot.slane %v2360, %v2373
    %v2375 = vcombine.low %v2367, %v2374
    %v2377 = vadd.f32 %v1590, %v2375
    %2378 = vst [vmem:[#allocation4] sm:$0xff] %v2377
    %s2379 = sshll.u32 %s1587, 4
    %2380 = dma.done %s136, %s2379
    %v2381 = vld [vmem:[#allocation4] sm:$0xff]
    %v2382 = vld [vmem:[#allocation3 + $0x6] sm:$0x3f]
    %v2384 = vcombine.high %v2382, %v2382
    %v2386 = vunpack.c.l.s4 1983009808
    %v2387 = vunpack.c.0.s8 %v2386
    %v2388 = vlaneseq
    %v2389 = vshrl.u32 %v2388, 7
    %v2390 = vsub.s32 %v2387, %v2389
    %v2391 = vrot.slane %v2382, %v2390
    %v2393 = vunpack.c.l.s4 1983009808
    %v2394 = vunpack.c.0.s8 %v2393
    %v2395 = vlaneseq
    %v2396 = vshrl.u32 %v2395, 7
    %v2397 = vsub.s32 %v2394, %v2396
    %v2398 = vrot.slane %v2384, %v2397
    %v2399 = vcombine.high %v2391, %v2391
    %v2403 = vpack.c.bf16 %v2391, %v2391
    %v2404 = vpack.c.bf16 %v2399, %v2399
    %v2405 = vpack.c.bf16 %v2398, %v2398
    %v2406 = vld [vmem:[#allocation5 + $0x300] sm:$0xff]
    %v2407 = vld [vmem:[#allocation5 + $0x308] sm:$0xff]
    %v2408 = vld [vmem:[#allocation5 + $0x310] sm:$0xff]
    %v2409 = vld [vmem:[#allocation5 + $0x318] sm:$0xff]
    %v2410 = vld [vmem:[#allocation5 + $0x320] sm:$0xff]
    %v2411 = vld [vmem:[#allocation5 + $0x328] sm:$0xff]
    %v2412 = vld [vmem:[#allocation5 + $0x330] sm:$0xff]
    %v2413 = vld [vmem:[#allocation5 + $0x338] sm:$0xff]
    %v2414 = vld [vmem:[#allocation5 + $0x340] sm:$0xff]
    %v2415 = vld [vmem:[#allocation5 + $0x348] sm:$0xff]
    %v2416 = vld [vmem:[#allocation5 + $0x350] sm:$0xff]
    %v2417 = vld [vmem:[#allocation5 + $0x358] sm:$0xff]
    %v2418 = vld [vmem:[#allocation5 + $0x360] sm:$0xff]
    %v2419 = vld [vmem:[#allocation5 + $0x368] sm:$0xff]
    %v2420 = vld [vmem:[#allocation5 + $0x370] sm:$0xff]
    %v2421 = vld [vmem:[#allocation5 + $0x378] sm:$0xff]
    %v2422 = vld [vmem:[#allocation5 + $0x380] sm:$0xff]
    %v2423 = vld [vmem:[#allocation5 + $0x388] sm:$0xff]
    %v2424 = vld [vmem:[#allocation5 + $0x390] sm:$0xff]
    %v2425 = vld [vmem:[#allocation5 + $0x398] sm:$0xff]
    %v2426 = vld [vmem:[#allocation5 + $0x3a0] sm:$0xff]
    %v2427 = vld [vmem:[#allocation5 + $0x3a8] sm:$0xff]
    %v2428 = vld [vmem:[#allocation5 + $0x3b0] sm:$0xff]
    %v2429 = vld [vmem:[#allocation5 + $0x3b8] sm:$0xff]
    %v2430 = vld [vmem:[#allocation5 + $0x3c0] sm:$0xff]
    %v2431 = vld [vmem:[#allocation5 + $0x3c8] sm:$0xff]
    %v2432 = vld [vmem:[#allocation5 + $0x3d0] sm:$0xff]
    %v2433 = vld [vmem:[#allocation5 + $0x3d8] sm:$0xff]
    %v2434 = vld [vmem:[#allocation5 + $0x3e0] sm:$0xff]
    %v2435 = vld [vmem:[#allocation5 + $0x3e8] sm:$0xff]
    %v2436 = vld [vmem:[#allocation5 + $0x3f0] sm:$0xff]
    %v2437 = vld [vmem:[#allocation5 + $0x3f8] sm:$0xff]
    %v2438 = vld [vmem:[#allocation5 + $0x400] sm:$0xff]
    %v2439 = vld [vmem:[#allocation5 + $0x408] sm:$0xff]
    %v2440 = vld [vmem:[#allocation5 + $0x410] sm:$0xff]
    %v2441 = vld [vmem:[#allocation5 + $0x418] sm:$0xff]
    %v2442 = vld [vmem:[#allocation5 + $0x420] sm:$0xff]
    %v2443 = vld [vmem:[#allocation5 + $0x428] sm:$0xff]
    %v2444 = vld [vmem:[#allocation5 + $0x430] sm:$0xff]
    %v2445 = vld [vmem:[#allocation5 + $0x438] sm:$0xff]
    %v2446 = vld [vmem:[#allocation5 + $0x440] sm:$0xff]
    %v2447 = vld [vmem:[#allocation5 + $0x448] sm:$0xff]
    %v2448 = vld [vmem:[#allocation5 + $0x450] sm:$0xff]
    %v2449 = vld [vmem:[#allocation5 + $0x458] sm:$0xff]
    %v2450 = vld [vmem:[#allocation5 + $0x460] sm:$0xff]
    %v2451 = vld [vmem:[#allocation5 + $0x468] sm:$0xff]
    %v2452 = vld [vmem:[#allocation5 + $0x470] sm:$0xff]
    %v2453 = vld [vmem:[#allocation5 + $0x478] sm:$0xff]
    %v2454 = vld [vmem:[#allocation5 + $0x480] sm:$0xff]
    %v2455 = vld [vmem:[#allocation5 + $0x488] sm:$0xff]
    %v2456 = vld [vmem:[#allocation5 + $0x490] sm:$0xff]
    %v2457 = vld [vmem:[#allocation5 + $0x498] sm:$0xff]
    %v2458 = vld [vmem:[#allocation5 + $0x4a0] sm:$0xff]
    %v2459 = vld [vmem:[#allocation5 + $0x4a8] sm:$0xff]
    %v2460 = vld [vmem:[#allocation5 + $0x4b0] sm:$0xff]
    %v2461 = vld [vmem:[#allocation5 + $0x4b8] sm:$0xff]
    %v2462 = vld [vmem:[#allocation5 + $0x4c0] sm:$0xff]
    %v2463 = vld [vmem:[#allocation5 + $0x4c8] sm:$0xff]
    %v2464 = vld [vmem:[#allocation5 + $0x4d0] sm:$0xff]
    %v2465 = vld [vmem:[#allocation5 + $0x4d8] sm:$0xff]
    %v2466 = vld [vmem:[#allocation5 + $0x4e0] sm:$0xff]
    %v2467 = vld [vmem:[#allocation5 + $0x4e8] sm:$0xff]
    %v2468 = vld [vmem:[#allocation5 + $0x4f0] sm:$0xff]
    %v2469 = vld [vmem:[#allocation5 + $0x4f8] sm:$0xff]
    %v2470 = vld [vmem:[#allocation5 + $0x500] sm:$0xff]
    %v2471 = vld [vmem:[#allocation5 + $0x508] sm:$0xff]
    %v2472 = vld [vmem:[#allocation5 + $0x510] sm:$0xff]
    %v2473 = vld [vmem:[#allocation5 + $0x518] sm:$0xff]
    %v2474 = vld [vmem:[#allocation5 + $0x520] sm:$0xff]
    %v2475 = vld [vmem:[#allocation5 + $0x528] sm:$0xff]
    %v2476 = vld [vmem:[#allocation5 + $0x530] sm:$0xff]
    %v2477 = vld [vmem:[#allocation5 + $0x538] sm:$0xff]
    %v2478 = vld [vmem:[#allocation5 + $0x540] sm:$0xff]
    %v2479 = vld [vmem:[#allocation5 + $0x548] sm:$0xff]
    %v2480 = vld [vmem:[#allocation5 + $0x550] sm:$0xff]
    %v2481 = vld [vmem:[#allocation5 + $0x558] sm:$0xff]
    %v2482 = vld [vmem:[#allocation5 + $0x560] sm:$0xff]
    %v2483 = vld [vmem:[#allocation5 + $0x568] sm:$0xff]
    %v2484 = vld [vmem:[#allocation5 + $0x570] sm:$0xff]
    %v2485 = vld [vmem:[#allocation5 + $0x578] sm:$0xff]
    %v2486 = vld [vmem:[#allocation5 + $0x580] sm:$0xff]
    %v2487 = vld [vmem:[#allocation5 + $0x588] sm:$0xff]
    %v2488 = vld [vmem:[#allocation5 + $0x590] sm:$0xff]
    %v2489 = vld [vmem:[#allocation5 + $0x598] sm:$0xff]
    %v2490 = vld [vmem:[#allocation5 + $0x5a0] sm:$0xff]
    %v2491 = vld [vmem:[#allocation5 + $0x5a8] sm:$0xff]
    %v2492 = vld [vmem:[#allocation5 + $0x5b0] sm:$0xff]
    %v2493 = vld [vmem:[#allocation5 + $0x5b8] sm:$0xff]
    %v2494 = vld [vmem:[#allocation5 + $0x5c0] sm:$0xff]
    %v2495 = vld [vmem:[#allocation5 + $0x5c8] sm:$0xff]
    %v2496 = vld [vmem:[#allocation5 + $0x5d0] sm:$0xff]
    %v2497 = vld [vmem:[#allocation5 + $0x5d8] sm:$0xff]
    %v2498 = vld [vmem:[#allocation5 + $0x5e0] sm:$0xff]
    %v2499 = vld [vmem:[#allocation5 + $0x5e8] sm:$0xff]
    %v2500 = vld [vmem:[#allocation5 + $0x5f0] sm:$0xff]
    %v2501 = vld [vmem:[#allocation5 + $0x5f8] sm:$0xff]
    %v2598 = vunpack.c.l.b16 %v2406
    %v2599 = vunpack.c.h.b16 %v2406
    %v2600 = vunpack.c.l.b16 %v2407
    %v2601 = vunpack.c.h.b16 %v2407
    %v2602 = vunpack.c.l.b16 %v2408
    %v2603 = vunpack.c.h.b16 %v2408
    %v2604 = vunpack.c.l.b16 %v2409
    %v2605 = vunpack.c.h.b16 %v2409
    %v2606 = vunpack.c.l.b16 %v2410
    %v2607 = vunpack.c.h.b16 %v2410
    %v2608 = vunpack.c.l.b16 %v2411
    %v2609 = vunpack.c.h.b16 %v2411
    %v2610 = vunpack.c.l.b16 %v2412
    %v2611 = vunpack.c.h.b16 %v2412
    %v2612 = vunpack.c.l.b16 %v2413
    %v2613 = vunpack.c.h.b16 %v2413
    %v2614 = vunpack.c.l.b16 %v2414
    %v2615 = vunpack.c.h.b16 %v2414
    %v2616 = vunpack.c.l.b16 %v2415
    %v2617 = vunpack.c.h.b16 %v2415
    %v2618 = vunpack.c.l.b16 %v2416
    %v2619 = vunpack.c.h.b16 %v2416
    %v2620 = vunpack.c.l.b16 %v2417
    %v2621 = vunpack.c.h.b16 %v2417
    %v2622 = vunpack.c.l.b16 %v2418
    %v2623 = vunpack.c.h.b16 %v2418
    %v2624 = vunpack.c.l.b16 %v2419
    %v2625 = vunpack.c.h.b16 %v2419
    %v2626 = vunpack.c.l.b16 %v2420
    %v2627 = vunpack.c.h.b16 %v2420
    %v2628 = vunpack.c.l.b16 %v2421
    %v2629 = vunpack.c.h.b16 %v2421
    %v2630 = vunpack.c.l.b16 %v2422
    %v2631 = vunpack.c.h.b16 %v2422
    %v2632 = vunpack.c.l.b16 %v2423
    %v2633 = vunpack.c.h.b16 %v2423
    %v2634 = vunpack.c.l.b16 %v2424
    %v2635 = vunpack.c.h.b16 %v2424
    %v2636 = vunpack.c.l.b16 %v2425
    %v2637 = vunpack.c.h.b16 %v2425
    %v2638 = vunpack.c.l.b16 %v2426
    %v2639 = vunpack.c.h.b16 %v2426
    %v2640 = vunpack.c.l.b16 %v2427
    %v2641 = vunpack.c.h.b16 %v2427
    %v2642 = vunpack.c.l.b16 %v2428
    %v2643 = vunpack.c.h.b16 %v2428
    %v2644 = vunpack.c.l.b16 %v2429
    %v2645 = vunpack.c.h.b16 %v2429
    %v2646 = vunpack.c.l.b16 %v2430
    %v2647 = vunpack.c.h.b16 %v2430
    %v2648 = vunpack.c.l.b16 %v2431
    %v2649 = vunpack.c.h.b16 %v2431
    %v2650 = vunpack.c.l.b16 %v2432
    %v2651 = vunpack.c.h.b16 %v2432
    %v2652 = vunpack.c.l.b16 %v2433
    %v2653 = vunpack.c.h.b16 %v2433
    %v2654 = vunpack.c.l.b16 %v2434
    %v2655 = vunpack.c.h.b16 %v2434
    %v2656 = vunpack.c.l.b16 %v2435
    %v2657 = vunpack.c.h.b16 %v2435
    %v2658 = vunpack.c.l.b16 %v2436
    %v2659 = vunpack.c.h.b16 %v2436
    %v2660 = vunpack.c.l.b16 %v2437
    %v2661 = vunpack.c.h.b16 %v2437
    %v2662 = vunpack.c.l.b16 %v2438
    %v2663 = vunpack.c.h.b16 %v2438
    %v2664 = vunpack.c.l.b16 %v2439
    %v2665 = vunpack.c.h.b16 %v2439
    %v2666 = vunpack.c.l.b16 %v2440
    %v2667 = vunpack.c.h.b16 %v2440
    %v2668 = vunpack.c.l.b16 %v2441
    %v2669 = vunpack.c.h.b16 %v2441
    %v2670 = vunpack.c.l.b16 %v2442
    %v2671 = vunpack.c.h.b16 %v2442
    %v2672 = vunpack.c.l.b16 %v2443
    %v2673 = vunpack.c.h.b16 %v2443
    %v2674 = vunpack.c.l.b16 %v2444
    %v2675 = vunpack.c.h.b16 %v2444
    %v2676 = vunpack.c.l.b16 %v2445
    %v2677 = vunpack.c.h.b16 %v2445
    %v2678 = vunpack.c.l.b16 %v2446
    %v2679 = vunpack.c.h.b16 %v2446
    %v2680 = vunpack.c.l.b16 %v2447
    %v2681 = vunpack.c.h.b16 %v2447
    %v2682 = vunpack.c.l.b16 %v2448
    %v2683 = vunpack.c.h.b16 %v2448
    %v2684 = vunpack.c.l.b16 %v2449
    %v2685 = vunpack.c.h.b16 %v2449
    %v2686 = vunpack.c.l.b16 %v2450
    %v2687 = vunpack.c.h.b16 %v2450
    %v2688 = vunpack.c.l.b16 %v2451
    %v2689 = vunpack.c.h.b16 %v2451
    %v2690 = vunpack.c.l.b16 %v2452
    %v2691 = vunpack.c.h.b16 %v2452
    %v2692 = vunpack.c.l.b16 %v2453
    %v2693 = vunpack.c.h.b16 %v2453
    %v2694 = vunpack.c.l.b16 %v2454
    %v2695 = vunpack.c.h.b16 %v2454
    %v2696 = vunpack.c.l.b16 %v2455
    %v2697 = vunpack.c.h.b16 %v2455
    %v2698 = vunpack.c.l.b16 %v2456
    %v2699 = vunpack.c.h.b16 %v2456
    %v2700 = vunpack.c.l.b16 %v2457
    %v2701 = vunpack.c.h.b16 %v2457
    %v2702 = vunpack.c.l.b16 %v2458
    %v2703 = vunpack.c.h.b16 %v2458
    %v2704 = vunpack.c.l.b16 %v2459
    %v2705 = vunpack.c.h.b16 %v2459
    %v2706 = vunpack.c.l.b16 %v2460
    %v2707 = vunpack.c.h.b16 %v2460
    %v2708 = vunpack.c.l.b16 %v2461
    %v2709 = vunpack.c.h.b16 %v2461
    %v2710 = vunpack.c.l.b16 %v2462
    %v2711 = vunpack.c.h.b16 %v2462
    %v2712 = vunpack.c.l.b16 %v2463
    %v2713 = vunpack.c.h.b16 %v2463
    %v2714 = vunpack.c.l.b16 %v2464
    %v2715 = vunpack.c.h.b16 %v2464
    %v2716 = vunpack.c.l.b16 %v2465
    %v2717 = vunpack.c.h.b16 %v2465
    %v2718 = vunpack.c.l.b16 %v2466
    %v2719 = vunpack.c.h.b16 %v2466
    %v2720 = vunpack.c.l.b16 %v2467
    %v2721 = vunpack.c.h.b16 %v2467
    %v2722 = vunpack.c.l.b16 %v2468
    %v2723 = vunpack.c.h.b16 %v2468
    %v2724 = vunpack.c.l.b16 %v2469
    %v2725 = vunpack.c.h.b16 %v2469
    %v2726 = vunpack.c.l.b16 %v2470
    %v2727 = vunpack.c.h.b16 %v2470
    %v2728 = vunpack.c.l.b16 %v2471
    %v2729 = vunpack.c.h.b16 %v2471
    %v2730 = vunpack.c.l.b16 %v2472
    %v2731 = vunpack.c.h.b16 %v2472
    %v2732 = vunpack.c.l.b16 %v2473
    %v2733 = vunpack.c.h.b16 %v2473
    %v2734 = vunpack.c.l.b16 %v2474
    %v2735 = vunpack.c.h.b16 %v2474
    %v2736 = vunpack.c.l.b16 %v2475
    %v2737 = vunpack.c.h.b16 %v2475
    %v2738 = vunpack.c.l.b16 %v2476
    %v2739 = vunpack.c.h.b16 %v2476
    %v2740 = vunpack.c.l.b16 %v2477
    %v2741 = vunpack.c.h.b16 %v2477
    %v2742 = vunpack.c.l.b16 %v2478
    %v2743 = vunpack.c.h.b16 %v2478
    %v2744 = vunpack.c.l.b16 %v2479
    %v2745 = vunpack.c.h.b16 %v2479
    %v2746 = vunpack.c.l.b16 %v2480
    %v2747 = vunpack.c.h.b16 %v2480
    %v2748 = vunpack.c.l.b16 %v2481
    %v2749 = vunpack.c.h.b16 %v2481
    %v2750 = vunpack.c.l.b16 %v2482
    %v2751 = vunpack.c.h.b16 %v2482
    %v2752 = vunpack.c.l.b16 %v2483
    %v2753 = vunpack.c.h.b16 %v2483
    %v2754 = vunpack.c.l.b16 %v2484
    %v2755 = vunpack.c.h.b16 %v2484
    %v2756 = vunpack.c.l.b16 %v2485
    %v2757 = vunpack.c.h.b16 %v2485
    %v2758 = vunpack.c.l.b16 %v2486
    %v2759 = vunpack.c.h.b16 %v2486
    %v2760 = vunpack.c.l.b16 %v2487
    %v2761 = vunpack.c.h.b16 %v2487
    %v2762 = vunpack.c.l.b16 %v2488
    %v2763 = vunpack.c.h.b16 %v2488
    %v2764 = vunpack.c.l.b16 %v2489
    %v2765 = vunpack.c.h.b16 %v2489
    %v2766 = vunpack.c.l.b16 %v2490
    %v2767 = vunpack.c.h.b16 %v2490
    %v2768 = vunpack.c.l.b16 %v2491
    %v2769 = vunpack.c.h.b16 %v2491
    %v2770 = vunpack.c.l.b16 %v2492
    %v2771 = vunpack.c.h.b16 %v2492
    %v2772 = vunpack.c.l.b16 %v2493
    %v2773 = vunpack.c.h.b16 %v2493
    %v2774 = vunpack.c.l.b16 %v2494
    %v2775 = vunpack.c.h.b16 %v2494
    %v2776 = vunpack.c.l.b16 %v2495
    %v2777 = vunpack.c.h.b16 %v2495
    %v2778 = vunpack.c.l.b16 %v2496
    %v2779 = vunpack.c.h.b16 %v2496
    %v2780 = vunpack.c.l.b16 %v2497
    %v2781 = vunpack.c.h.b16 %v2497
    %v2782 = vunpack.c.l.b16 %v2498
    %v2783 = vunpack.c.h.b16 %v2498
    %v2784 = vunpack.c.l.b16 %v2499
    %v2785 = vunpack.c.h.b16 %v2499
    %v2786 = vunpack.c.l.b16 %v2500
    %v2787 = vunpack.c.h.b16 %v2500
    %v2788 = vunpack.c.l.b16 %v2501
    %v2789 = vunpack.c.h.b16 %v2501
    %v2790 = vpack.c.b16 %v2602, %v2598
    %v2791 = vpack.c.b16 %v2603, %v2599
    %v2792 = vpack.c.b16 %v2604, %v2600
    %v2793 = vpack.c.b16 %v2605, %v2601
    %v2794 = vpack.c.b16 %v2610, %v2606
    %v2795 = vpack.c.b16 %v2611, %v2607
    %v2796 = vpack.c.b16 %v2612, %v2608
    %v2797 = vpack.c.b16 %v2613, %v2609
    %v2798 = vpack.c.b16 %v2618, %v2614
    %v2799 = vpack.c.b16 %v2619, %v2615
    %v2800 = vpack.c.b16 %v2620, %v2616
    %v2801 = vpack.c.b16 %v2621, %v2617
    %v2802 = vpack.c.b16 %v2626, %v2622
    %v2803 = vpack.c.b16 %v2627, %v2623
    %v2804 = vpack.c.b16 %v2628, %v2624
    %v2805 = vpack.c.b16 %v2629, %v2625
    %v2806 = vpack.c.b16 %v2634, %v2630
    %v2807 = vpack.c.b16 %v2635, %v2631
    %v2808 = vpack.c.b16 %v2636, %v2632
    %v2809 = vpack.c.b16 %v2637, %v2633
    %v2810 = vpack.c.b16 %v2642, %v2638
    %v2811 = vpack.c.b16 %v2643, %v2639
    %v2812 = vpack.c.b16 %v2644, %v2640
    %v2813 = vpack.c.b16 %v2645, %v2641
    %v2814 = vpack.c.b16 %v2650, %v2646
    %v2815 = vpack.c.b16 %v2651, %v2647
    %v2816 = vpack.c.b16 %v2652, %v2648
    %v2817 = vpack.c.b16 %v2653, %v2649
    %v2818 = vpack.c.b16 %v2658, %v2654
    %v2819 = vpack.c.b16 %v2659, %v2655
    %v2820 = vpack.c.b16 %v2660, %v2656
    %v2821 = vpack.c.b16 %v2661, %v2657
    %v2822 = vpack.c.b16 %v2666, %v2662
    %v2823 = vpack.c.b16 %v2667, %v2663
    %v2824 = vpack.c.b16 %v2668, %v2664
    %v2825 = vpack.c.b16 %v2669, %v2665
    %v2826 = vpack.c.b16 %v2674, %v2670
    %v2827 = vpack.c.b16 %v2675, %v2671
    %v2828 = vpack.c.b16 %v2676, %v2672
    %v2829 = vpack.c.b16 %v2677, %v2673
    %v2830 = vpack.c.b16 %v2682, %v2678
    %v2831 = vpack.c.b16 %v2683, %v2679
    %v2832 = vpack.c.b16 %v2684, %v2680
    %v2833 = vpack.c.b16 %v2685, %v2681
    %v2834 = vpack.c.b16 %v2690, %v2686
    %v2835 = vpack.c.b16 %v2691, %v2687
    %v2836 = vpack.c.b16 %v2692, %v2688
    %v2837 = vpack.c.b16 %v2693, %v2689
    %v2838 = vpack.c.b16 %v2698, %v2694
    %v2839 = vpack.c.b16 %v2699, %v2695
    %v2840 = vpack.c.b16 %v2700, %v2696
    %v2841 = vpack.c.b16 %v2701, %v2697
    %v2842 = vpack.c.b16 %v2706, %v2702
    %v2843 = vpack.c.b16 %v2707, %v2703
    %v2844 = vpack.c.b16 %v2708, %v2704
    %v2845 = vpack.c.b16 %v2709, %v2705
    %v2846 = vpack.c.b16 %v2714, %v2710
    %v2847 = vpack.c.b16 %v2715, %v2711
    %v2848 = vpack.c.b16 %v2716, %v2712
    %v2849 = vpack.c.b16 %v2717, %v2713
    %v2850 = vpack.c.b16 %v2722, %v2718
    %v2851 = vpack.c.b16 %v2723, %v2719
    %v2852 = vpack.c.b16 %v2724, %v2720
    %v2853 = vpack.c.b16 %v2725, %v2721
    %v2854 = vpack.c.b16 %v2730, %v2726
    %v2855 = vpack.c.b16 %v2731, %v2727
    %v2856 = vpack.c.b16 %v2732, %v2728
    %v2857 = vpack.c.b16 %v2733, %v2729
    %v2858 = vpack.c.b16 %v2738, %v2734
    %v2859 = vpack.c.b16 %v2739, %v2735
    %v2860 = vpack.c.b16 %v2740, %v2736
    %v2861 = vpack.c.b16 %v2741, %v2737
    %v2862 = vpack.c.b16 %v2746, %v2742
    %v2863 = vpack.c.b16 %v2747, %v2743
    %v2864 = vpack.c.b16 %v2748, %v2744
    %v2865 = vpack.c.b16 %v2749, %v2745
    %v2866 = vpack.c.b16 %v2754, %v2750
    %v2867 = vpack.c.b16 %v2755, %v2751
    %v2868 = vpack.c.b16 %v2756, %v2752
    %v2869 = vpack.c.b16 %v2757, %v2753
    %v2870 = vpack.c.b16 %v2762, %v2758
    %v2871 = vpack.c.b16 %v2763, %v2759
    %v2872 = vpack.c.b16 %v2764, %v2760
    %v2873 = vpack.c.b16 %v2765, %v2761
    %v2874 = vpack.c.b16 %v2770, %v2766
    %v2875 = vpack.c.b16 %v2771, %v2767
    %v2876 = vpack.c.b16 %v2772, %v2768
    %v2877 = vpack.c.b16 %v2773, %v2769
    %v2878 = vpack.c.b16 %v2778, %v2774
    %v2879 = vpack.c.b16 %v2779, %v2775
    %v2880 = vpack.c.b16 %v2780, %v2776
    %v2881 = vpack.c.b16 %v2781, %v2777
    %v2882 = vpack.c.b16 %v2786, %v2782
    %v2883 = vpack.c.b16 %v2787, %v2783
    %v2884 = vpack.c.b16 %v2788, %v2784
    %v2885 = vpack.c.b16 %v2789, %v2785
    %2982 = vmatprep.subr.bf16.mxu0 %v2819
    %2983 = vmatpush1.bf16.msra.mxu0 %v2818
    %2984 = vmatprep.subr.bf16.mxu0 %v2815
    %2985 = vmatpush1.bf16.msra.mxu0 %v2814
    %2986 = vmatprep.subr.bf16.mxu0 %v2811
    %2987 = vmatpush1.bf16.msra.mxu0 %v2810
    %2988 = vmatprep.subr.bf16.mxu0 %v2807
    %2989 = vmatpush1.bf16.msra.mxu0 %v2806
    %2990 = vmatprep.subr.bf16.mxu0 %v2803
    %2991 = vmatpush1.bf16.msra.mxu0 %v2802
    %2992 = vmatprep.subr.bf16.mxu0 %v2799
    %2993 = vmatpush1.bf16.msra.mxu0 %v2798
    %2994 = vmatprep.subr.bf16.mxu0 %v2795
    %2995 = vmatpush1.bf16.msra.mxu0 %v2794
    %2996 = vmatprep.subr.bf16.mxu0 %v2791
    %2997 = vmatpush1.bf16.msra.mxu0 %v2790
    %2998 = vmatprep.subr.bf16.mxu0 %v2851
    %2999 = vmatpush2.bf16.msra.mxu0 %v2850
    %3000 = vmatprep.subr.bf16.mxu0 %v2847
    %3001 = vmatpush2.bf16.msra.mxu0 %v2846
    %3002 = vmatprep.subr.bf16.mxu0 %v2843
    %3003 = vmatpush2.bf16.msra.mxu0 %v2842
    %3004 = vmatprep.subr.bf16.mxu0 %v2839
    %3005 = vmatpush2.bf16.msra.mxu0 %v2838
    %3006 = vmatprep.subr.bf16.mxu0 %v2835
    %3007 = vmatpush2.bf16.msra.mxu0 %v2834
    %3008 = vmatprep.subr.bf16.mxu0 %v2831
    %3009 = vmatpush2.bf16.msra.mxu0 %v2830
    %3010 = vmatprep.subr.bf16.mxu0 %v2827
    %3011 = vmatpush2.bf16.msra.mxu0 %v2826
    %3012 = vmatprep.subr.bf16.mxu0 %v2823
    %3013 = vmatpush2.bf16.msra.mxu0 %v2822
    %3014 = vmatprep.mubr.bf16.mxu0 %v2404
    %3015 = vmatmul.mubr.bf16.gmra.mxu0 %v2403
    %v3016 = vpop.f32.mrf.mxu0
    %v3017 = vadd.f32 0.0, %v3016
    %v3018 = vpop.f32.mrf.mxu0
    %v3019 = vadd.f32 0.0, %v3018
    %v3020 = vpop.f32.mrf.mxu0
    %v3021 = vpop.f32.mrf.mxu0
    %3022 = vdwg.mxu0
    %3023 = vmatprep.subr.bf16.mxu0 %v2883
    %3024 = vmatpush1.bf16.msra.mxu0 %v2882
    %3025 = vmatprep.subr.bf16.mxu0 %v2879
    %3026 = vmatpush1.bf16.msra.mxu0 %v2878
    %3027 = vmatprep.subr.bf16.mxu0 %v2875
    %3028 = vmatpush1.bf16.msra.mxu0 %v2874
    %3029 = vmatprep.subr.bf16.mxu0 %v2871
    %3030 = vmatpush1.bf16.msra.mxu0 %v2870
    %3031 = vmatprep.subr.bf16.mxu0 %v2867
    %3032 = vmatpush1.bf16.msra.mxu0 %v2866
    %3033 = vmatprep.subr.bf16.mxu0 %v2863
    %3034 = vmatpush1.bf16.msra.mxu0 %v2862
    %3035 = vmatprep.subr.bf16.mxu0 %v2859
    %3036 = vmatpush1.bf16.msra.mxu0 %v2858
    %3037 = vmatprep.subr.bf16.mxu0 %v2855
    %3038 = vmatpush1.bf16.msra.mxu0 %v2854
    %3039 = vmatprep.subr.bf16.mxu0 0
    %3040 = vmatpush2.bf16.msra.mxu0 0
    %3041 = vmatprep.subr.bf16.mxu0 0
    %3042 = vmatpush2.bf16.msra.mxu0 0
    %3043 = vmatprep.subr.bf16.mxu0 0
    %3044 = vmatpush2.bf16.msra.mxu0 0
    %3045 = vmatprep.subr.bf16.mxu0 0
    %3046 = vmatpush2.bf16.msra.mxu0 0
    %3047 = vmatprep.subr.bf16.mxu0 0
    %3048 = vmatpush2.bf16.msra.mxu0 0
    %3049 = vmatprep.subr.bf16.mxu0 0
    %3050 = vmatpush2.bf16.msra.mxu0 0
    %3051 = vmatprep.subr.bf16.mxu0 0
    %3052 = vmatpush2.bf16.msra.mxu0 0
    %3053 = vmatprep.subr.bf16.mxu0 0
    %3054 = vmatpush2.bf16.msra.mxu0 0
    %3055 = vmatprep.mubr.bf16.mxu0 0
    %3056 = vmatmul.mubr.bf16.gmra.mxu0 %v2405
    %v3057 = vpop.f32.mrf.mxu0
    %v3058 = vadd.f32 %v3017, %v3057
    %v3059 = vpop.f32.mrf.mxu0
    %v3060 = vadd.f32 %v3019, %v3059
    %v3061 = vpop.f32.mrf.mxu0
    %v3062 = vpop.f32.mrf.mxu0
    %3063 = vdwg.mxu0
    %3064 = vmatprep.subr.bf16.mxu0 %v2821
    %3065 = vmatpush1.bf16.msra.mxu0 %v2820
    %3066 = vmatprep.subr.bf16.mxu0 %v2817
    %3067 = vmatpush1.bf16.msra.mxu0 %v2816
    %3068 = vmatprep.subr.bf16.mxu0 %v2813
    %3069 = vmatpush1.bf16.msra.mxu0 %v2812
    %3070 = vmatprep.subr.bf16.mxu0 %v2809
    %3071 = vmatpush1.bf16.msra.mxu0 %v2808
    %3072 = vmatprep.subr.bf16.mxu0 %v2805
    %3073 = vmatpush1.bf16.msra.mxu0 %v2804
    %3074 = vmatprep.subr.bf16.mxu0 %v2801
    %3075 = vmatpush1.bf16.msra.mxu0 %v2800
    %3076 = vmatprep.subr.bf16.mxu0 %v2797
    %3077 = vmatpush1.bf16.msra.mxu0 %v2796
    %3078 = vmatprep.subr.bf16.mxu0 %v2793
    %3079 = vmatpush1.bf16.msra.mxu0 %v2792
    %3080 = vmatprep.subr.bf16.mxu0 %v2853
    %3081 = vmatpush2.bf16.msra.mxu0 %v2852
    %3082 = vmatprep.subr.bf16.mxu0 %v2849
    %3083 = vmatpush2.bf16.msra.mxu0 %v2848
    %3084 = vmatprep.subr.bf16.mxu0 %v2845
    %3085 = vmatpush2.bf16.msra.mxu0 %v2844
    %3086 = vmatprep.subr.bf16.mxu0 %v2841
    %3087 = vmatpush2.bf16.msra.mxu0 %v2840
    %3088 = vmatprep.subr.bf16.mxu0 %v2837
    %3089 = vmatpush2.bf16.msra.mxu0 %v2836
    %3090 = vmatprep.subr.bf16.mxu0 %v2833
    %3091 = vmatpush2.bf16.msra.mxu0 %v2832
    %3092 = vmatprep.subr.bf16.mxu0 %v2829
    %3093 = vmatpush2.bf16.msra.mxu0 %v2828
    %3094 = vmatprep.subr.bf16.mxu0 %v2825
    %3095 = vmatpush2.bf16.msra.mxu0 %v2824
    %3096 = vmatprep.mubr.bf16.mxu0 %v2404
    %3097 = vmatmul.mubr.bf16.gmra.mxu0 %v2403
    %v3098 = vpop.f32.mrf.mxu0
    %v3099 = vadd.f32 0.0, %v3098
    %v3100 = vpop.f32.mrf.mxu0
    %v3101 = vadd.f32 0.0, %v3100
    %v3102 = vpop.f32.mrf.mxu0
    %v3103 = vpop.f32.mrf.mxu0
    %3104 = vdwg.mxu0
    %3105 = vmatprep.subr.bf16.mxu0 %v2885
    %3106 = vmatpush1.bf16.msra.mxu0 %v2884
    %3107 = vmatprep.subr.bf16.mxu0 %v2881
    %3108 = vmatpush1.bf16.msra.mxu0 %v2880
    %3109 = vmatprep.subr.bf16.mxu0 %v2877
    %3110 = vmatpush1.bf16.msra.mxu0 %v2876
    %3111 = vmatprep.subr.bf16.mxu0 %v2873
    %3112 = vmatpush1.bf16.msra.mxu0 %v2872
    %3113 = vmatprep.subr.bf16.mxu0 %v2869
    %3114 = vmatpush1.bf16.msra.mxu0 %v2868
    %3115 = vmatprep.subr.bf16.mxu0 %v2865
    %3116 = vmatpush1.bf16.msra.mxu0 %v2864
    %3117 = vmatprep.subr.bf16.mxu0 %v2861
    %3118 = vmatpush1.bf16.msra.mxu0 %v2860
    %3119 = vmatprep.subr.bf16.mxu0 %v2857
    %3120 = vmatpush1.bf16.msra.mxu0 %v2856
    %3121 = vmatprep.subr.bf16.mxu0 0
    %3122 = vmatpush2.bf16.msra.mxu0 0
    %3123 = vmatprep.subr.bf16.mxu0 0
    %3124 = vmatpush2.bf16.msra.mxu0 0
    %3125 = vmatprep.subr.bf16.mxu0 0
    %3126 = vmatpush2.bf16.msra.mxu0 0
    %3127 = vmatprep.subr.bf16.mxu0 0
    %3128 = vmatpush2.bf16.msra.mxu0 0
    %3129 = vmatprep.subr.bf16.mxu0 0
    %3130 = vmatpush2.bf16.msra.mxu0 0
    %3131 = vmatprep.subr.bf16.mxu0 0
    %3132 = vmatpush2.bf16.msra.mxu0 0
    %3133 = vmatprep.subr.bf16.mxu0 0
    %3134 = vmatpush2.bf16.msra.mxu0 0
    %3135 = vmatprep.subr.bf16.mxu0 0
    %3136 = vmatpush2.bf16.msra.mxu0 0
    %3137 = vmatprep.mubr.bf16.mxu0 0
    %3138 = vmatmul.mubr.bf16.gmra.mxu0 %v2405
    %v3139 = vpop.f32.mrf.mxu0
    %v3140 = vadd.f32 %v3099, %v3139
    %v3141 = vpop.f32.mrf.mxu0
    %v3142 = vadd.f32 %v3101, %v3141
    %v3143 = vpop.f32.mrf.mxu0
    %v3144 = vpop.f32.mrf.mxu0
    %3145 = vdwg.mxu0
    %v3150 = vcombine.low %v3058, %v3060
    %v3151 = vcombine.low %v3140, %v3142
    %v3153 = vunpack.c.l.s4 1983009808
    %v3154 = vunpack.c.0.s8 %v3153
    %v3155 = vlaneseq
    %v3156 = vshrl.u32 %v3155, 7
    %v3157 = vsub.s32 %v3154, %v3156
    %v3158 = vrot.slane %v3150, %v3157
    %v3160 = vunpack.c.l.s4 1983009808
    %v3161 = vunpack.c.0.s8 %v3160
    %v3162 = vlaneseq
    %v3163 = vshrl.u32 %v3162, 7
    %v3164 = vsub.s32 %v3161, %v3163
    %v3165 = vrot.slane %v3151, %v3164
    %v3166 = vcombine.low %v3158, %v3165
    %v3168 = vadd.f32 %v2381, %v3166
    %3169 = vst [vmem:[#allocation4] sm:$0xff] %v3168
    %s3170 = sshll.u32 %s1587, 4
    %3171 = dma.done %s150, %s3170
    %v3172 = vld [vmem:[#allocation4] sm:$0xff]
    %v3173 = vld [vmem:[#allocation3 + $0xc] sm:$0x3f]
    %v3175 = vcombine.high %v3173, %v3173
    %v3177 = vunpack.c.l.s4 1983009808
    %v3178 = vunpack.c.0.s8 %v3177
    %v3179 = vlaneseq
    %v3180 = vshrl.u32 %v3179, 7
    %v3181 = vsub.s32 %v3178, %v3180
    %v3182 = vrot.slane %v3173, %v3181
    %v3184 = vunpack.c.l.s4 1983009808
    %v3185 = vunpack.c.0.s8 %v3184
    %v3186 = vlaneseq
    %v3187 = vshrl.u32 %v3186, 7
    %v3188 = vsub.s32 %v3185, %v3187
    %v3189 = vrot.slane %v3175, %v3188
    %v3190 = vcombine.high %v3182, %v3182
    %v3194 = vpack.c.bf16 %v3182, %v3182
    %v3195 = vpack.c.bf16 %v3190, %v3190
    %v3196 = vpack.c.bf16 %v3189, %v3189
    %v3197 = vld [vmem:[#allocation5 + $0x600] sm:$0xff]
    %v3198 = vld [vmem:[#allocation5 + $0x608] sm:$0xff]
    %v3199 = vld [vmem:[#allocation5 + $0x610] sm:$0xff]
    %v3200 = vld [vmem:[#allocation5 + $0x618] sm:$0xff]
    %v3201 = vld [vmem:[#allocation5 + $0x620] sm:$0xff]
    %v3202 = vld [vmem:[#allocation5 + $0x628] sm:$0xff]
    %v3203 = vld [vmem:[#allocation5 + $0x630] sm:$0xff]
    %v3204 = vld [vmem:[#allocation5 + $0x638] sm:$0xff]
    %v3205 = vld [vmem:[#allocation5 + $0x640] sm:$0xff]
    %v3206 = vld [vmem:[#allocation5 + $0x648] sm:$0xff]
    %v3207 = vld [vmem:[#allocation5 + $0x650] sm:$0xff]
    %v3208 = vld [vmem:[#allocation5 + $0x658] sm:$0xff]
    %v3209 = vld [vmem:[#allocation5 + $0x660] sm:$0xff]
    %v3210 = vld [vmem:[#allocation5 + $0x668] sm:$0xff]
    %v3211 = vld [vmem:[#allocation5 + $0x670] sm:$0xff]
    %v3212 = vld [vmem:[#allocation5 + $0x678] sm:$0xff]
    %v3213 = vld [vmem:[#allocation5 + $0x680] sm:$0xff]
    %v3214 = vld [vmem:[#allocation5 + $0x688] sm:$0xff]
    %v3215 = vld [vmem:[#allocation5 + $0x690] sm:$0xff]
    %v3216 = vld [vmem:[#allocation5 + $0x698] sm:$0xff]
    %v3217 = vld [vmem:[#allocation5 + $0x6a0] sm:$0xff]
    %v3218 = vld [vmem:[#allocation5 + $0x6a8] sm:$0xff]
    %v3219 = vld [vmem:[#allocation5 + $0x6b0] sm:$0xff]
    %v3220 = vld [vmem:[#allocation5 + $0x6b8] sm:$0xff]
    %v3221 = vld [vmem:[#allocation5 + $0x6c0] sm:$0xff]
    %v3222 = vld [vmem:[#allocation5 + $0x6c8] sm:$0xff]
    %v3223 = vld [vmem:[#allocation5 + $0x6d0] sm:$0xff]
    %v3224 = vld [vmem:[#allocation5 + $0x6d8] sm:$0xff]
    %v3225 = vld [vmem:[#allocation5 + $0x6e0] sm:$0xff]
    %v3226 = vld [vmem:[#allocation5 + $0x6e8] sm:$0xff]
    %v3227 = vld [vmem:[#allocation5 + $0x6f0] sm:$0xff]
    %v3228 = vld [vmem:[#allocation5 + $0x6f8] sm:$0xff]
    %v3229 = vld [vmem:[#allocation5 + $0x700] sm:$0xff]
    %v3230 = vld [vmem:[#allocation5 + $0x708] sm:$0xff]
    %v3231 = vld [vmem:[#allocation5 + $0x710] sm:$0xff]
    %v3232 = vld [vmem:[#allocation5 + $0x718] sm:$0xff]
    %v3233 = vld [vmem:[#allocation5 + $0x720] sm:$0xff]
    %v3234 = vld [vmem:[#allocation5 + $0x728] sm:$0xff]
    %v3235 = vld [vmem:[#allocation5 + $0x730] sm:$0xff]
    %v3236 = vld [vmem:[#allocation5 + $0x738] sm:$0xff]
    %v3237 = vld [vmem:[#allocation5 + $0x740] sm:$0xff]
    %v3238 = vld [vmem:[#allocation5 + $0x748] sm:$0xff]
    %v3239 = vld [vmem:[#allocation5 + $0x750] sm:$0xff]
    %v3240 = vld [vmem:[#allocation5 + $0x758] sm:$0xff]
    %v3241 = vld [vmem:[#allocation5 + $0x760] sm:$0xff]
    %v3242 = vld [vmem:[#allocation5 + $0x768] sm:$0xff]
    %v3243 = vld [vmem:[#allocation5 + $0x770] sm:$0xff]
    %v3244 = vld [vmem:[#allocation5 + $0x778] sm:$0xff]
    %v3245 = vld [vmem:[#allocation5 + $0x780] sm:$0xff]
    %v3246 = vld [vmem:[#allocation5 + $0x788] sm:$0xff]
    %v3247 = vld [vmem:[#allocation5 + $0x790] sm:$0xff]
    %v3248 = vld [vmem:[#allocation5 + $0x798] sm:$0xff]
    %v3249 = vld [vmem:[#allocation5 + $0x7a0] sm:$0xff]
    %v3250 = vld [vmem:[#allocation5 + $0x7a8] sm:$0xff]
    %v3251 = vld [vmem:[#allocation5 + $0x7b0] sm:$0xff]
    %v3252 = vld [vmem:[#allocation5 + $0x7b8] sm:$0xff]
    %v3253 = vld [vmem:[#allocation5 + $0x7c0] sm:$0xff]
    %v3254 = vld [vmem:[#allocation5 + $0x7c8] sm:$0xff]
    %v3255 = vld [vmem:[#allocation5 + $0x7d0] sm:$0xff]
    %v3256 = vld [vmem:[#allocation5 + $0x7d8] sm:$0xff]
    %v3257 = vld [vmem:[#allocation5 + $0x7e0] sm:$0xff]
    %v3258 = vld [vmem:[#allocation5 + $0x7e8] sm:$0xff]
    %v3259 = vld [vmem:[#allocation5 + $0x7f0] sm:$0xff]
    %v3260 = vld [vmem:[#allocation5 + $0x7f8] sm:$0xff]
    %v3261 = vld [vmem:[#allocation5 + $0x800] sm:$0xff]
    %v3262 = vld [vmem:[#allocation5 + $0x808] sm:$0xff]
    %v3263 = vld [vmem:[#allocation5 + $0x810] sm:$0xff]
    %v3264 = vld [vmem:[#allocation5 + $0x818] sm:$0xff]
    %v3265 = vld [vmem:[#allocation5 + $0x820] sm:$0xff]
    %v3266 = vld [vmem:[#allocation5 + $0x828] sm:$0xff]
    %v3267 = vld [vmem:[#allocation5 + $0x830] sm:$0xff]
    %v3268 = vld [vmem:[#allocation5 + $0x838] sm:$0xff]
    %v3269 = vld [vmem:[#allocation5 + $0x840] sm:$0xff]
    %v3270 = vld [vmem:[#allocation5 + $0x848] sm:$0xff]
    %v3271 = vld [vmem:[#allocation5 + $0x850] sm:$0xff]
    %v3272 = vld [vmem:[#allocation5 + $0x858] sm:$0xff]
    %v3273 = vld [vmem:[#allocation5 + $0x860] sm:$0xff]
    %v3274 = vld [vmem:[#allocation5 + $0x868] sm:$0xff]
    %v3275 = vld [vmem:[#allocation5 + $0x870] sm:$0xff]
    %v3276 = vld [vmem:[#allocation5 + $0x878] sm:$0xff]
    %v3277 = vld [vmem:[#allocation5 + $0x880] sm:$0xff]
    %v3278 = vld [vmem:[#allocation5 + $0x888] sm:$0xff]
    %v3279 = vld [vmem:[#allocation5 + $0x890] sm:$0xff]
    %v3280 = vld [vmem:[#allocation5 + $0x898] sm:$0xff]
    %v3281 = vld [vmem:[#allocation5 + $0x8a0] sm:$0xff]
    %v3282 = vld [vmem:[#allocation5 + $0x8a8] sm:$0xff]
    %v3283 = vld [vmem:[#allocation5 + $0x8b0] sm:$0xff]
    %v3284 = vld [vmem:[#allocation5 + $0x8b8] sm:$0xff]
    %v3285 = vld [vmem:[#allocation5 + $0x8c0] sm:$0xff]
    %v3286 = vld [vmem:[#allocation5 + $0x8c8] sm:$0xff]
    %v3287 = vld [vmem:[#allocation5 + $0x8d0] sm:$0xff]
    %v3288 = vld [vmem:[#allocation5 + $0x8d8] sm:$0xff]
    %v3289 = vld [vmem:[#allocation5 + $0x8e0] sm:$0xff]
    %v3290 = vld [vmem:[#allocation5 + $0x8e8] sm:$0xff]
    %v3291 = vld [vmem:[#allocation5 + $0x8f0] sm:$0xff]
    %v3292 = vld [vmem:[#allocation5 + $0x8f8] sm:$0xff]
    %v3389 = vunpack.c.l.b16 %v3197
    %v3390 = vunpack.c.h.b16 %v3197
    %v3391 = vunpack.c.l.b16 %v3198
    %v3392 = vunpack.c.h.b16 %v3198
    %v3393 = vunpack.c.l.b16 %v3199
    %v3394 = vunpack.c.h.b16 %v3199
    %v3395 = vunpack.c.l.b16 %v3200
    %v3396 = vunpack.c.h.b16 %v3200
    %v3397 = vunpack.c.l.b16 %v3201
    %v3398 = vunpack.c.h.b16 %v3201
    %v3399 = vunpack.c.l.b16 %v3202
    %v3400 = vunpack.c.h.b16 %v3202
    %v3401 = vunpack.c.l.b16 %v3203
    %v3402 = vunpack.c.h.b16 %v3203
    %v3403 = vunpack.c.l.b16 %v3204
    %v3404 = vunpack.c.h.b16 %v3204
    %v3405 = vunpack.c.l.b16 %v3205
    %v3406 = vunpack.c.h.b16 %v3205
    %v3407 = vunpack.c.l.b16 %v3206
    %v3408 = vunpack.c.h.b16 %v3206
    %v3409 = vunpack.c.l.b16 %v3207
    %v3410 = vunpack.c.h.b16 %v3207
    %v3411 = vunpack.c.l.b16 %v3208
    %v3412 = vunpack.c.h.b16 %v3208
    %v3413 = vunpack.c.l.b16 %v3209
    %v3414 = vunpack.c.h.b16 %v3209
    %v3415 = vunpack.c.l.b16 %v3210
    %v3416 = vunpack.c.h.b16 %v3210
    %v3417 = vunpack.c.l.b16 %v3211
    %v3418 = vunpack.c.h.b16 %v3211
    %v3419 = vunpack.c.l.b16 %v3212
    %v3420 = vunpack.c.h.b16 %v3212
    %v3421 = vunpack.c.l.b16 %v3213
    %v3422 = vunpack.c.h.b16 %v3213
    %v3423 = vunpack.c.l.b16 %v3214
    %v3424 = vunpack.c.h.b16 %v3214
    %v3425 = vunpack.c.l.b16 %v3215
    %v3426 = vunpack.c.h.b16 %v3215
    %v3427 = vunpack.c.l.b16 %v3216
    %v3428 = vunpack.c.h.b16 %v3216
    %v3429 = vunpack.c.l.b16 %v3217
    %v3430 = vunpack.c.h.b16 %v3217
    %v3431 = vunpack.c.l.b16 %v3218
    %v3432 = vunpack.c.h.b16 %v3218
    %v3433 = vunpack.c.l.b16 %v3219
    %v3434 = vunpack.c.h.b16 %v3219
    %v3435 = vunpack.c.l.b16 %v3220
    %v3436 = vunpack.c.h.b16 %v3220
    %v3437 = vunpack.c.l.b16 %v3221
    %v3438 = vunpack.c.h.b16 %v3221
    %v3439 = vunpack.c.l.b16 %v3222
    %v3440 = vunpack.c.h.b16 %v3222
    %v3441 = vunpack.c.l.b16 %v3223
    %v3442 = vunpack.c.h.b16 %v3223
    %v3443 = vunpack.c.l.b16 %v3224
    %v3444 = vunpack.c.h.b16 %v3224
    %v3445 = vunpack.c.l.b16 %v3225
    %v3446 = vunpack.c.h.b16 %v3225
    %v3447 = vunpack.c.l.b16 %v3226
    %v3448 = vunpack.c.h.b16 %v3226
    %v3449 = vunpack.c.l.b16 %v3227
    %v3450 = vunpack.c.h.b16 %v3227
    %v3451 = vunpack.c.l.b16 %v3228
    %v3452 = vunpack.c.h.b16 %v3228
    %v3453 = vunpack.c.l.b16 %v3229
    %v3454 = vunpack.c.h.b16 %v3229
    %v3455 = vunpack.c.l.b16 %v3230
    %v3456 = vunpack.c.h.b16 %v3230
    %v3457 = vunpack.c.l.b16 %v3231
    %v3458 = vunpack.c.h.b16 %v3231
    %v3459 = vunpack.c.l.b16 %v3232
    %v3460 = vunpack.c.h.b16 %v3232
    %v3461 = vunpack.c.l.b16 %v3233
    %v3462 = vunpack.c.h.b16 %v3233
    %v3463 = vunpack.c.l.b16 %v3234
    %v3464 = vunpack.c.h.b16 %v3234
    %v3465 = vunpack.c.l.b16 %v3235
    %v3466 = vunpack.c.h.b16 %v3235
    %v3467 = vunpack.c.l.b16 %v3236
    %v3468 = vunpack.c.h.b16 %v3236
    %v3469 = vunpack.c.l.b16 %v3237
    %v3470 = vunpack.c.h.b16 %v3237
    %v3471 = vunpack.c.l.b16 %v3238
    %v3472 = vunpack.c.h.b16 %v3238
    %v3473 = vunpack.c.l.b16 %v3239
    %v3474 = vunpack.c.h.b16 %v3239
    %v3475 = vunpack.c.l.b16 %v3240
    %v3476 = vunpack.c.h.b16 %v3240
    %v3477 = vunpack.c.l.b16 %v3241
    %v3478 = vunpack.c.h.b16 %v3241
    %v3479 = vunpack.c.l.b16 %v3242
    %v3480 = vunpack.c.h.b16 %v3242
    %v3481 = vunpack.c.l.b16 %v3243
    %v3482 = vunpack.c.h.b16 %v3243
    %v3483 = vunpack.c.l.b16 %v3244
    %v3484 = vunpack.c.h.b16 %v3244
    %v3485 = vunpack.c.l.b16 %v3245
    %v3486 = vunpack.c.h.b16 %v3245
    %v3487 = vunpack.c.l.b16 %v3246
    %v3488 = vunpack.c.h.b16 %v3246
    %v3489 = vunpack.c.l.b16 %v3247
    %v3490 = vunpack.c.h.b16 %v3247
    %v3491 = vunpack.c.l.b16 %v3248
    %v3492 = vunpack.c.h.b16 %v3248
    %v3493 = vunpack.c.l.b16 %v3249
    %v3494 = vunpack.c.h.b16 %v3249
    %v3495 = vunpack.c.l.b16 %v3250
    %v3496 = vunpack.c.h.b16 %v3250
    %v3497 = vunpack.c.l.b16 %v3251
    %v3498 = vunpack.c.h.b16 %v3251
    %v3499 = vunpack.c.l.b16 %v3252
    %v3500 = vunpack.c.h.b16 %v3252
    %v3501 = vunpack.c.l.b16 %v3253
    %v3502 = vunpack.c.h.b16 %v3253
    %v3503 = vunpack.c.l.b16 %v3254
    %v3504 = vunpack.c.h.b16 %v3254
    %v3505 = vunpack.c.l.b16 %v3255
    %v3506 = vunpack.c.h.b16 %v3255
    %v3507 = vunpack.c.l.b16 %v3256
    %v3508 = vunpack.c.h.b16 %v3256
    %v3509 = vunpack.c.l.b16 %v3257
    %v3510 = vunpack.c.h.b16 %v3257
    %v3511 = vunpack.c.l.b16 %v3258
    %v3512 = vunpack.c.h.b16 %v3258
    %v3513 = vunpack.c.l.b16 %v3259
    %v3514 = vunpack.c.h.b16 %v3259
    %v3515 = vunpack.c.l.b16 %v3260
    %v3516 = vunpack.c.h.b16 %v3260
    %v3517 = vunpack.c.l.b16 %v3261
    %v3518 = vunpack.c.h.b16 %v3261
    %v3519 = vunpack.c.l.b16 %v3262
    %v3520 = vunpack.c.h.b16 %v3262
    %v3521 = vunpack.c.l.b16 %v3263
    %v3522 = vunpack.c.h.b16 %v3263
    %v3523 = vunpack.c.l.b16 %v3264
    %v3524 = vunpack.c.h.b16 %v3264
    %v3525 = vunpack.c.l.b16 %v3265
    %v3526 = vunpack.c.h.b16 %v3265
    %v3527 = vunpack.c.l.b16 %v3266
    %v3528 = vunpack.c.h.b16 %v3266
    %v3529 = vunpack.c.l.b16 %v3267
    %v3530 = vunpack.c.h.b16 %v3267
    %v3531 = vunpack.c.l.b16 %v3268
    %v3532 = vunpack.c.h.b16 %v3268
    %v3533 = vunpack.c.l.b16 %v3269
    %v3534 = vunpack.c.h.b16 %v3269
    %v3535 = vunpack.c.l.b16 %v3270
    %v3536 = vunpack.c.h.b16 %v3270
    %v3537 = vunpack.c.l.b16 %v3271
    %v3538 = vunpack.c.h.b16 %v3271
    %v3539 = vunpack.c.l.b16 %v3272
    %v3540 = vunpack.c.h.b16 %v3272
    %v3541 = vunpack.c.l.b16 %v3273
    %v3542 = vunpack.c.h.b16 %v3273
    %v3543 = vunpack.c.l.b16 %v3274
    %v3544 = vunpack.c.h.b16 %v3274
    %v3545 = vunpack.c.l.b16 %v3275
    %v3546 = vunpack.c.h.b16 %v3275
    %v3547 = vunpack.c.l.b16 %v3276
    %v3548 = vunpack.c.h.b16 %v3276
    %v3549 = vunpack.c.l.b16 %v3277
    %v3550 = vunpack.c.h.b16 %v3277
    %v3551 = vunpack.c.l.b16 %v3278
    %v3552 = vunpack.c.h.b16 %v3278
    %v3553 = vunpack.c.l.b16 %v3279
    %v3554 = vunpack.c.h.b16 %v3279
    %v3555 = vunpack.c.l.b16 %v3280
    %v3556 = vunpack.c.h.b16 %v3280
    %v3557 = vunpack.c.l.b16 %v3281
    %v3558 = vunpack.c.h.b16 %v3281
    %v3559 = vunpack.c.l.b16 %v3282
    %v3560 = vunpack.c.h.b16 %v3282
    %v3561 = vunpack.c.l.b16 %v3283
    %v3562 = vunpack.c.h.b16 %v3283
    %v3563 = vunpack.c.l.b16 %v3284
    %v3564 = vunpack.c.h.b16 %v3284
    %v3565 = vunpack.c.l.b16 %v3285
    %v3566 = vunpack.c.h.b16 %v3285
    %v3567 = vunpack.c.l.b16 %v3286
    %v3568 = vunpack.c.h.b16 %v3286
    %v3569 = vunpack.c.l.b16 %v3287
    %v3570 = vunpack.c.h.b16 %v3287
    %v3571 = vunpack.c.l.b16 %v3288
    %v3572 = vunpack.c.h.b16 %v3288
    %v3573 = vunpack.c.l.b16 %v3289
    %v3574 = vunpack.c.h.b16 %v3289
    %v3575 = vunpack.c.l.b16 %v3290
    %v3576 = vunpack.c.h.b16 %v3290
    %v3577 = vunpack.c.l.b16 %v3291
    %v3578 = vunpack.c.h.b16 %v3291
    %v3579 = vunpack.c.l.b16 %v3292
    %v3580 = vunpack.c.h.b16 %v3292
    %v3581 = vpack.c.b16 %v3393, %v3389
    %v3582 = vpack.c.b16 %v3394, %v3390
    %v3583 = vpack.c.b16 %v3395, %v3391
    %v3584 = vpack.c.b16 %v3396, %v3392
    %v3585 = vpack.c.b16 %v3401, %v3397
    %v3586 = vpack.c.b16 %v3402, %v3398
    %v3587 = vpack.c.b16 %v3403, %v3399
    %v3588 = vpack.c.b16 %v3404, %v3400
    %v3589 = vpack.c.b16 %v3409, %v3405
    %v3590 = vpack.c.b16 %v3410, %v3406
    %v3591 = vpack.c.b16 %v3411, %v3407
    %v3592 = vpack.c.b16 %v3412, %v3408
    %v3593 = vpack.c.b16 %v3417, %v3413
    %v3594 = vpack.c.b16 %v3418, %v3414
    %v3595 = vpack.c.b16 %v3419, %v3415
    %v3596 = vpack.c.b16 %v3420, %v3416
    %v3597 = vpack.c.b16 %v3425, %v3421
    %v3598 = vpack.c.b16 %v3426, %v3422
    %v3599 = vpack.c.b16 %v3427, %v3423
    %v3600 = vpack.c.b16 %v3428, %v3424
    %v3601 = vpack.c.b16 %v3433, %v3429
    %v3602 = vpack.c.b16 %v3434, %v3430
    %v3603 = vpack.c.b16 %v3435, %v3431
    %v3604 = vpack.c.b16 %v3436, %v3432
    %v3605 = vpack.c.b16 %v3441, %v3437
    %v3606 = vpack.c.b16 %v3442, %v3438
    %v3607 = vpack.c.b16 %v3443, %v3439
    %v3608 = vpack.c.b16 %v3444, %v3440
    %v3609 = vpack.c.b16 %v3449, %v3445
    %v3610 = vpack.c.b16 %v3450, %v3446
    %v3611 = vpack.c.b16 %v3451, %v3447
    %v3612 = vpack.c.b16 %v3452, %v3448
    %v3613 = vpack.c.b16 %v3457, %v3453
    %v3614 = vpack.c.b16 %v3458, %v3454
    %v3615 = vpack.c.b16 %v3459, %v3455
    %v3616 = vpack.c.b16 %v3460, %v3456
    %v3617 = vpack.c.b16 %v3465, %v3461
    %v3618 = vpack.c.b16 %v3466, %v3462
    %v3619 = vpack.c.b16 %v3467, %v3463
    %v3620 = vpack.c.b16 %v3468, %v3464
    %v3621 = vpack.c.b16 %v3473, %v3469
    %v3622 = vpack.c.b16 %v3474, %v3470
    %v3623 = vpack.c.b16 %v3475, %v3471
    %v3624 = vpack.c.b16 %v3476, %v3472
    %v3625 = vpack.c.b16 %v3481, %v3477
    %v3626 = vpack.c.b16 %v3482, %v3478
    %v3627 = vpack.c.b16 %v3483, %v3479
    %v3628 = vpack.c.b16 %v3484, %v3480
    %v3629 = vpack.c.b16 %v3489, %v3485
    %v3630 = vpack.c.b16 %v3490, %v3486
    %v3631 = vpack.c.b16 %v3491, %v3487
    %v3632 = vpack.c.b16 %v3492, %v3488
    %v3633 = vpack.c.b16 %v3497, %v3493
    %v3634 = vpack.c.b16 %v3498, %v3494
    %v3635 = vpack.c.b16 %v3499, %v3495
    %v3636 = vpack.c.b16 %v3500, %v3496
    %v3637 = vpack.c.b16 %v3505, %v3501
    %v3638 = vpack.c.b16 %v3506, %v3502
    %v3639 = vpack.c.b16 %v3507, %v3503
    %v3640 = vpack.c.b16 %v3508, %v3504
    %v3641 = vpack.c.b16 %v3513, %v3509
    %v3642 = vpack.c.b16 %v3514, %v3510
    %v3643 = vpack.c.b16 %v3515, %v3511
    %v3644 = vpack.c.b16 %v3516, %v3512
    %v3645 = vpack.c.b16 %v3521, %v3517
    %v3646 = vpack.c.b16 %v3522, %v3518
    %v3647 = vpack.c.b16 %v3523, %v3519
    %v3648 = vpack.c.b16 %v3524, %v3520
    %v3649 = vpack.c.b16 %v3529, %v3525
    %v3650 = vpack.c.b16 %v3530, %v3526
    %v3651 = vpack.c.b16 %v3531, %v3527
    %v3652 = vpack.c.b16 %v3532, %v3528
    %v3653 = vpack.c.b16 %v3537, %v3533
    %v3654 = vpack.c.b16 %v3538, %v3534
    %v3655 = vpack.c.b16 %v3539, %v3535
    %v3656 = vpack.c.b16 %v3540, %v3536
    %v3657 = vpack.c.b16 %v3545, %v3541
    %v3658 = vpack.c.b16 %v3546, %v3542
    %v3659 = vpack.c.b16 %v3547, %v3543
    %v3660 = vpack.c.b16 %v3548, %v3544
    %v3661 = vpack.c.b16 %v3553, %v3549
    %v3662 = vpack.c.b16 %v3554, %v3550
    %v3663 = vpack.c.b16 %v3555, %v3551
    %v3664 = vpack.c.b16 %v3556, %v3552
    %v3665 = vpack.c.b16 %v3561, %v3557
    %v3666 = vpack.c.b16 %v3562, %v3558
    %v3667 = vpack.c.b16 %v3563, %v3559
    %v3668 = vpack.c.b16 %v3564, %v3560
    %v3669 = vpack.c.b16 %v3569, %v3565
    %v3670 = vpack.c.b16 %v3570, %v3566
    %v3671 = vpack.c.b16 %v3571, %v3567
    %v3672 = vpack.c.b16 %v3572, %v3568
    %v3673 = vpack.c.b16 %v3577, %v3573
    %v3674 = vpack.c.b16 %v3578, %v3574
    %v3675 = vpack.c.b16 %v3579, %v3575
    %v3676 = vpack.c.b16 %v3580, %v3576
    %3773 = vmatprep.subr.bf16.mxu0 %v3610
    %3774 = vmatpush1.bf16.msra.mxu0 %v3609
    %3775 = vmatprep.subr.bf16.mxu0 %v3606
    %3776 = vmatpush1.bf16.msra.mxu0 %v3605
    %3777 = vmatprep.subr.bf16.mxu0 %v3602
    %3778 = vmatpush1.bf16.msra.mxu0 %v3601
    %3779 = vmatprep.subr.bf16.mxu0 %v3598
    %3780 = vmatpush1.bf16.msra.mxu0 %v3597
    %3781 = vmatprep.subr.bf16.mxu0 %v3594
    %3782 = vmatpush1.bf16.msra.mxu0 %v3593
    %3783 = vmatprep.subr.bf16.mxu0 %v3590
    %3784 = vmatpush1.bf16.msra.mxu0 %v3589
    %3785 = vmatprep.subr.bf16.mxu0 %v3586
    %3786 = vmatpush1.bf16.msra.mxu0 %v3585
    %3787 = vmatprep.subr.bf16.mxu0 %v3582
    %3788 = vmatpush1.bf16.msra.mxu0 %v3581
    %3789 = vmatprep.subr.bf16.mxu0 %v3642
    %3790 = vmatpush2.bf16.msra.mxu0 %v3641
    %3791 = vmatprep.subr.bf16.mxu0 %v3638
    %3792 = vmatpush2.bf16.msra.mxu0 %v3637
    %3793 = vmatprep.subr.bf16.mxu0 %v3634
    %3794 = vmatpush2.bf16.msra.mxu0 %v3633
    %3795 = vmatprep.subr.bf16.mxu0 %v3630
    %3796 = vmatpush2.bf16.msra.mxu0 %v3629
    %3797 = vmatprep.subr.bf16.mxu0 %v3626
    %3798 = vmatpush2.bf16.msra.mxu0 %v3625
    %3799 = vmatprep.subr.bf16.mxu0 %v3622
    %3800 = vmatpush2.bf16.msra.mxu0 %v3621
    %3801 = vmatprep.subr.bf16.mxu0 %v3618
    %3802 = vmatpush2.bf16.msra.mxu0 %v3617
    %3803 = vmatprep.subr.bf16.mxu0 %v3614
    %3804 = vmatpush2.bf16.msra.mxu0 %v3613
    %3805 = vmatprep.mubr.bf16.mxu0 %v3195
    %3806 = vmatmul.mubr.bf16.gmra.mxu0 %v3194
    %v3807 = vpop.f32.mrf.mxu0
    %v3808 = vadd.f32 0.0, %v3807
    %v3809 = vpop.f32.mrf.mxu0
    %v3810 = vadd.f32 0.0, %v3809
    %v3811 = vpop.f32.mrf.mxu0
    %v3812 = vpop.f32.mrf.mxu0
    %3813 = vdwg.mxu0
    %3814 = vmatprep.subr.bf16.mxu0 %v3674
    %3815 = vmatpush1.bf16.msra.mxu0 %v3673
    %3816 = vmatprep.subr.bf16.mxu0 %v3670
    %3817 = vmatpush1.bf16.msra.mxu0 %v3669
    %3818 = vmatprep.subr.bf16.mxu0 %v3666
    %3819 = vmatpush1.bf16.msra.mxu0 %v3665
    %3820 = vmatprep.subr.bf16.mxu0 %v3662
    %3821 = vmatpush1.bf16.msra.mxu0 %v3661
    %3822 = vmatprep.subr.bf16.mxu0 %v3658
    %3823 = vmatpush1.bf16.msra.mxu0 %v3657
    %3824 = vmatprep.subr.bf16.mxu0 %v3654
    %3825 = vmatpush1.bf16.msra.mxu0 %v3653
    %3826 = vmatprep.subr.bf16.mxu0 %v3650
    %3827 = vmatpush1.bf16.msra.mxu0 %v3649
    %3828 = vmatprep.subr.bf16.mxu0 %v3646
    %3829 = vmatpush1.bf16.msra.mxu0 %v3645
    %3830 = vmatprep.subr.bf16.mxu0 0
    %3831 = vmatpush2.bf16.msra.mxu0 0
    %3832 = vmatprep.subr.bf16.mxu0 0
    %3833 = vmatpush2.bf16.msra.mxu0 0
    %3834 = vmatprep.subr.bf16.mxu0 0
    %3835 = vmatpush2.bf16.msra.mxu0 0
    %3836 = vmatprep.subr.bf16.mxu0 0
    %3837 = vmatpush2.bf16.msra.mxu0 0
    %3838 = vmatprep.subr.bf16.mxu0 0
    %3839 = vmatpush2.bf16.msra.mxu0 0
    %3840 = vmatprep.subr.bf16.mxu0 0
    %3841 = vmatpush2.bf16.msra.mxu0 0
    %3842 = vmatprep.subr.bf16.mxu0 0
    %3843 = vmatpush2.bf16.msra.mxu0 0
    %3844 = vmatprep.subr.bf16.mxu0 0
    %3845 = vmatpush2.bf16.msra.mxu0 0
    %3846 = vmatprep.mubr.bf16.mxu0 0
    %3847 = vmatmul.mubr.bf16.gmra.mxu0 %v3196
    %v3848 = vpop.f32.mrf.mxu0
    %v3849 = vadd.f32 %v3808, %v3848
    %v3850 = vpop.f32.mrf.mxu0
    %v3851 = vadd.f32 %v3810, %v3850
    %v3852 = vpop.f32.mrf.mxu0
    %v3853 = vpop.f32.mrf.mxu0
    %3854 = vdwg.mxu0
    %3855 = vmatprep.subr.bf16.mxu0 %v3612
    %3856 = vmatpush1.bf16.msra.mxu0 %v3611
    %3857 = vmatprep.subr.bf16.mxu0 %v3608
    %3858 = vmatpush1.bf16.msra.mxu0 %v3607
    %3859 = vmatprep.subr.bf16.mxu0 %v3604
    %3860 = vmatpush1.bf16.msra.mxu0 %v3603
    %3861 = vmatprep.subr.bf16.mxu0 %v3600
    %3862 = vmatpush1.bf16.msra.mxu0 %v3599
    %3863 = vmatprep.subr.bf16.mxu0 %v3596
    %3864 = vmatpush1.bf16.msra.mxu0 %v3595
    %3865 = vmatprep.subr.bf16.mxu0 %v3592
    %3866 = vmatpush1.bf16.msra.mxu0 %v3591
    %3867 = vmatprep.subr.bf16.mxu0 %v3588
    %3868 = vmatpush1.bf16.msra.mxu0 %v3587
    %3869 = vmatprep.subr.bf16.mxu0 %v3584
    %3870 = vmatpush1.bf16.msra.mxu0 %v3583
    %3871 = vmatprep.subr.bf16.mxu0 %v3644
    %3872 = vmatpush2.bf16.msra.mxu0 %v3643
    %3873 = vmatprep.subr.bf16.mxu0 %v3640
    %3874 = vmatpush2.bf16.msra.mxu0 %v3639
    %3875 = vmatprep.subr.bf16.mxu0 %v3636
    %3876 = vmatpush2.bf16.msra.mxu0 %v3635
    %3877 = vmatprep.subr.bf16.mxu0 %v3632
    %3878 = vmatpush2.bf16.msra.mxu0 %v3631
    %3879 = vmatprep.subr.bf16.mxu0 %v3628
    %3880 = vmatpush2.bf16.msra.mxu0 %v3627
    %3881 = vmatprep.subr.bf16.mxu0 %v3624
    %3882 = vmatpush2.bf16.msra.mxu0 %v3623
    %3883 = vmatprep.subr.bf16.mxu0 %v3620
    %3884 = vmatpush2.bf16.msra.mxu0 %v3619
    %3885 = vmatprep.subr.bf16.mxu0 %v3616
    %3886 = vmatpush2.bf16.msra.mxu0 %v3615
    %3887 = vmatprep.mubr.bf16.mxu0 %v3195
    %3888 = vmatmul.mubr.bf16.gmra.mxu0 %v3194
    %v3889 = vpop.f32.mrf.mxu0
    %v3890 = vadd.f32 0.0, %v3889
    %v3891 = vpop.f32.mrf.mxu0
    %v3892 = vadd.f32 0.0, %v3891
    %v3893 = vpop.f32.mrf.mxu0
    %v3894 = vpop.f32.mrf.mxu0
    %3895 = vdwg.mxu0
    %3896 = vmatprep.subr.bf16.mxu0 %v3676
    %3897 = vmatpush1.bf16.msra.mxu0 %v3675
    %3898 = vmatprep.subr.bf16.mxu0 %v3672
    %3899 = vmatpush1.bf16.msra.mxu0 %v3671
    %3900 = vmatprep.subr.bf16.mxu0 %v3668
    %3901 = vmatpush1.bf16.msra.mxu0 %v3667
    %3902 = vmatprep.subr.bf16.mxu0 %v3664
    %3903 = vmatpush1.bf16.msra.mxu0 %v3663
    %3904 = vmatprep.subr.bf16.mxu0 %v3660
    %3905 = vmatpush1.bf16.msra.mxu0 %v3659
    %3906 = vmatprep.subr.bf16.mxu0 %v3656
    %3907 = vmatpush1.bf16.msra.mxu0 %v3655
    %3908 = vmatprep.subr.bf16.mxu0 %v3652
    %3909 = vmatpush1.bf16.msra.mxu0 %v3651
    %3910 = vmatprep.subr.bf16.mxu0 %v3648
    %3911 = vmatpush1.bf16.msra.mxu0 %v3647
    %3912 = vmatprep.subr.bf16.mxu0 0
    %3913 = vmatpush2.bf16.msra.mxu0 0
    %3914 = vmatprep.subr.bf16.mxu0 0
    %3915 = vmatpush2.bf16.msra.mxu0 0
    %3916 = vmatprep.subr.bf16.mxu0 0
    %3917 = vmatpush2.bf16.msra.mxu0 0
    %3918 = vmatprep.subr.bf16.mxu0 0
    %3919 = vmatpush2.bf16.msra.mxu0 0
    %3920 = vmatprep.subr.bf16.mxu0 0
    %3921 = vmatpush2.bf16.msra.mxu0 0
    %3922 = vmatprep.subr.bf16.mxu0 0
    %3923 = vmatpush2.bf16.msra.mxu0 0
    %3924 = vmatprep.subr.bf16.mxu0 0
    %3925 = vmatpush2.bf16.msra.mxu0 0
    %3926 = vmatprep.subr.bf16.mxu0 0
    %3927 = vmatpush2.bf16.msra.mxu0 0
    %3928 = vmatprep.mubr.bf16.mxu0 0
    %3929 = vmatmul.mubr.bf16.gmra.mxu0 %v3196
    %v3930 = vpop.f32.mrf.mxu0
    %v3931 = vadd.f32 %v3890, %v3930
    %v3932 = vpop.f32.mrf.mxu0
    %v3933 = vadd.f32 %v3892, %v3932
    %v3934 = vpop.f32.mrf.mxu0
    %v3935 = vpop.f32.mrf.mxu0
    %3936 = vdwg.mxu0
    %v3941 = vcombine.low %v3849, %v3851
    %v3942 = vcombine.low %v3931, %v3933
    %v3944 = vunpack.c.l.s4 1983009808
    %v3945 = vunpack.c.0.s8 %v3944
    %v3946 = vlaneseq
    %v3947 = vshrl.u32 %v3946, 7
    %v3948 = vsub.s32 %v3945, %v3947
    %v3949 = vrot.slane %v3941, %v3948
    %v3951 = vunpack.c.l.s4 1983009808
    %v3952 = vunpack.c.0.s8 %v3951
    %v3953 = vlaneseq
    %v3954 = vshrl.u32 %v3953, 7
    %v3955 = vsub.s32 %v3952, %v3954
    %v3956 = vrot.slane %v3942, %v3955
    %v3957 = vcombine.low %v3949, %v3956
    %v3959 = vadd.f32 %v3172, %v3957
    %3960 = vst [vmem:[#allocation4] sm:$0xff] %v3959
    %s3961 = sshll.u32 %s1587, 4
    %3962 = dma.done %s164, %s3961
    %v3963 = vld [vmem:[#allocation4] sm:$0xff]
    %v3964 = vld [vmem:[#allocation3 + $0x12] sm:$0x3f]
    %v3966 = vcombine.high %v3964, %v3964
    %v3968 = vunpack.c.l.s4 1983009808
    %v3969 = vunpack.c.0.s8 %v3968
    %v3970 = vlaneseq
    %v3971 = vshrl.u32 %v3970, 7
    %v3972 = vsub.s32 %v3969, %v3971
    %v3973 = vrot.slane %v3964, %v3972
    %v3975 = vunpack.c.l.s4 1983009808
    %v3976 = vunpack.c.0.s8 %v3975
    %v3977 = vlaneseq
    %v3978 = vshrl.u32 %v3977, 7
    %v3979 = vsub.s32 %v3976, %v3978
    %v3980 = vrot.slane %v3966, %v3979
    %v3981 = vcombine.high %v3973, %v3973
    %v3985 = vpack.c.bf16 %v3973, %v3973
    %v3986 = vpack.c.bf16 %v3981, %v3981
    %v3987 = vpack.c.bf16 %v3980, %v3980
    %v3988 = vld [vmem:[#allocation5 + $0x900] sm:$0xff]
    %v3989 = vld [vmem:[#allocation5 + $0x908] sm:$0xff]
    %v3990 = vld [vmem:[#allocation5 + $0x910] sm:$0xff]
    %v3991 = vld [vmem:[#allocation5 + $0x918] sm:$0xff]
    %v3992 = vld [vmem:[#allocation5 + $0x920] sm:$0xff]
    %v3993 = vld [vmem:[#allocation5 + $0x928] sm:$0xff]
    %v3994 = vld [vmem:[#allocation5 + $0x930] sm:$0xff]
    %v3995 = vld [vmem:[#allocation5 + $0x938] sm:$0xff]
    %v3996 = vld [vmem:[#allocation5 + $0x940] sm:$0xff]
    %v3997 = vld [vmem:[#allocation5 + $0x948] sm:$0xff]
    %v3998 = vld [vmem:[#allocation5 + $0x950] sm:$0xff]
    %v3999 = vld [vmem:[#allocation5 + $0x958] sm:$0xff]
    %v4000 = vld [vmem:[#allocation5 + $0x960] sm:$0xff]
    %v4001 = vld [vmem:[#allocation5 + $0x968] sm:$0xff]
    %v4002 = vld [vmem:[#allocation5 + $0x970] sm:$0xff]
    %v4003 = vld [vmem:[#allocation5 + $0x978] sm:$0xff]
    %v4004 = vld [vmem:[#allocation5 + $0x980] sm:$0xff]
    %v4005 = vld [vmem:[#allocation5 + $0x988] sm:$0xff]
    %v4006 = vld [vmem:[#allocation5 + $0x990] sm:$0xff]
    %v4007 = vld [vmem:[#allocation5 + $0x998] sm:$0xff]
    %v4008 = vld [vmem:[#allocation5 + $0x9a0] sm:$0xff]
    %v4009 = vld [vmem:[#allocation5 + $0x9a8] sm:$0xff]
    %v4010 = vld [vmem:[#allocation5 + $0x9b0] sm:$0xff]
    %v4011 = vld [vmem:[#allocation5 + $0x9b8] sm:$0xff]
    %v4012 = vld [vmem:[#allocation5 + $0x9c0] sm:$0xff]
    %v4013 = vld [vmem:[#allocation5 + $0x9c8] sm:$0xff]
    %v4014 = vld [vmem:[#allocation5 + $0x9d0] sm:$0xff]
    %v4015 = vld [vmem:[#allocation5 + $0x9d8] sm:$0xff]
    %v4016 = vld [vmem:[#allocation5 + $0x9e0] sm:$0xff]
    %v4017 = vld [vmem:[#allocation5 + $0x9e8] sm:$0xff]
    %v4018 = vld [vmem:[#allocation5 + $0x9f0] sm:$0xff]
    %v4019 = vld [vmem:[#allocation5 + $0x9f8] sm:$0xff]
    %v4020 = vld [vmem:[#allocation5 + $0xa00] sm:$0xff]
    %v4021 = vld [vmem:[#allocation5 + $0xa08] sm:$0xff]
    %v4022 = vld [vmem:[#allocation5 + $0xa10] sm:$0xff]
    %v4023 = vld [vmem:[#allocation5 + $0xa18] sm:$0xff]
    %v4024 = vld [vmem:[#allocation5 + $0xa20] sm:$0xff]
    %v4025 = vld [vmem:[#allocation5 + $0xa28] sm:$0xff]
    %v4026 = vld [vmem:[#allocation5 + $0xa30] sm:$0xff]
    %v4027 = vld [vmem:[#allocation5 + $0xa38] sm:$0xff]
    %v4028 = vld [vmem:[#allocation5 + $0xa40] sm:$0xff]
    %v4029 = vld [vmem:[#allocation5 + $0xa48] sm:$0xff]
    %v4030 = vld [vmem:[#allocation5 + $0xa50] sm:$0xff]
    %v4031 = vld [vmem:[#allocation5 + $0xa58] sm:$0xff]
    %v4032 = vld [vmem:[#allocation5 + $0xa60] sm:$0xff]
    %v4033 = vld [vmem:[#allocation5 + $0xa68] sm:$0xff]
    %v4034 = vld [vmem:[#allocation5 + $0xa70] sm:$0xff]
    %v4035 = vld [vmem:[#allocation5 + $0xa78] sm:$0xff]
    %v4036 = vld [vmem:[#allocation5 + $0xa80] sm:$0xff]
    %v4037 = vld [vmem:[#allocation5 + $0xa88] sm:$0xff]
    %v4038 = vld [vmem:[#allocation5 + $0xa90] sm:$0xff]
    %v4039 = vld [vmem:[#allocation5 + $0xa98] sm:$0xff]
    %v4040 = vld [vmem:[#allocation5 + $0xaa0] sm:$0xff]
    %v4041 = vld [vmem:[#allocation5 + $0xaa8] sm:$0xff]
    %v4042 = vld [vmem:[#allocation5 + $0xab0] sm:$0xff]
    %v4043 = vld [vmem:[#allocation5 + $0xab8] sm:$0xff]
    %v4044 = vld [vmem:[#allocation5 + $0xac0] sm:$0xff]
    %v4045 = vld [vmem:[#allocation5 + $0xac8] sm:$0xff]
    %v4046 = vld [vmem:[#allocation5 + $0xad0] sm:$0xff]
    %v4047 = vld [vmem:[#allocation5 + $0xad8] sm:$0xff]
    %v4048 = vld [vmem:[#allocation5 + $0xae0] sm:$0xff]
    %v4049 = vld [vmem:[#allocation5 + $0xae8] sm:$0xff]
    %v4050 = vld [vmem:[#allocation5 + $0xaf0] sm:$0xff]
    %v4051 = vld [vmem:[#allocation5 + $0xaf8] sm:$0xff]
    %v4052 = vld [vmem:[#allocation5 + $0xb00] sm:$0xff]
    %v4053 = vld [vmem:[#allocation5 + $0xb08] sm:$0xff]
    %v4054 = vld [vmem:[#allocation5 + $0xb10] sm:$0xff]
    %v4055 = vld [vmem:[#allocation5 + $0xb18] sm:$0xff]
    %v4056 = vld [vmem:[#allocation5 + $0xb20] sm:$0xff]
    %v4057 = vld [vmem:[#allocation5 + $0xb28] sm:$0xff]
    %v4058 = vld [vmem:[#allocation5 + $0xb30] sm:$0xff]
    %v4059 = vld [vmem:[#allocation5 + $0xb38] sm:$0xff]
    %v4060 = vld [vmem:[#allocation5 + $0xb40] sm:$0xff]
    %v4061 = vld [vmem:[#allocation5 + $0xb48] sm:$0xff]
    %v4062 = vld [vmem:[#allocation5 + $0xb50] sm:$0xff]
    %v4063 = vld [vmem:[#allocation5 + $0xb58] sm:$0xff]
    %v4064 = vld [vmem:[#allocation5 + $0xb60] sm:$0xff]
    %v4065 = vld [vmem:[#allocation5 + $0xb68] sm:$0xff]
    %v4066 = vld [vmem:[#allocation5 + $0xb70] sm:$0xff]
    %v4067 = vld [vmem:[#allocation5 + $0xb78] sm:$0xff]
    %v4068 = vld [vmem:[#allocation5 + $0xb80] sm:$0xff]
    %v4069 = vld [vmem:[#allocation5 + $0xb88] sm:$0xff]
    %v4070 = vld [vmem:[#allocation5 + $0xb90] sm:$0xff]
    %v4071 = vld [vmem:[#allocation5 + $0xb98] sm:$0xff]
    %v4072 = vld [vmem:[#allocation5 + $0xba0] sm:$0xff]
    %v4073 = vld [vmem:[#allocation5 + $0xba8] sm:$0xff]
    %v4074 = vld [vmem:[#allocation5 + $0xbb0] sm:$0xff]
    %v4075 = vld [vmem:[#allocation5 + $0xbb8] sm:$0xff]
    %v4076 = vld [vmem:[#allocation5 + $0xbc0] sm:$0xff]
    %v4077 = vld [vmem:[#allocation5 + $0xbc8] sm:$0xff]
    %v4078 = vld [vmem:[#allocation5 + $0xbd0] sm:$0xff]
    %v4079 = vld [vmem:[#allocation5 + $0xbd8] sm:$0xff]
    %v4080 = vld [vmem:[#allocation5 + $0xbe0] sm:$0xff]
    %v4081 = vld [vmem:[#allocation5 + $0xbe8] sm:$0xff]
    %v4082 = vld [vmem:[#allocation5 + $0xbf0] sm:$0xff]
    %v4083 = vld [vmem:[#allocation5 + $0xbf8] sm:$0xff]
    %v4180 = vunpack.c.l.b16 %v3988
    %v4181 = vunpack.c.h.b16 %v3988
    %v4182 = vunpack.c.l.b16 %v3989
    %v4183 = vunpack.c.h.b16 %v3989
    %v4184 = vunpack.c.l.b16 %v3990
    %v4185 = vunpack.c.h.b16 %v3990
    %v4186 = vunpack.c.l.b16 %v3991
    %v4187 = vunpack.c.h.b16 %v3991
    %v4188 = vunpack.c.l.b16 %v3992
    %v4189 = vunpack.c.h.b16 %v3992
    %v4190 = vunpack.c.l.b16 %v3993
    %v4191 = vunpack.c.h.b16 %v3993
    %v4192 = vunpack.c.l.b16 %v3994
    %v4193 = vunpack.c.h.b16 %v3994
    %v4194 = vunpack.c.l.b16 %v3995
    %v4195 = vunpack.c.h.b16 %v3995
    %v4196 = vunpack.c.l.b16 %v3996
    %v4197 = vunpack.c.h.b16 %v3996
    %v4198 = vunpack.c.l.b16 %v3997
    %v4199 = vunpack.c.h.b16 %v3997
    %v4200 = vunpack.c.l.b16 %v3998
    %v4201 = vunpack.c.h.b16 %v3998
    %v4202 = vunpack.c.l.b16 %v3999
    %v4203 = vunpack.c.h.b16 %v3999
    %v4204 = vunpack.c.l.b16 %v4000
    %v4205 = vunpack.c.h.b16 %v4000
    %v4206 = vunpack.c.l.b16 %v4001
    %v4207 = vunpack.c.h.b16 %v4001
    %v4208 = vunpack.c.l.b16 %v4002
    %v4209 = vunpack.c.h.b16 %v4002
    %v4210 = vunpack.c.l.b16 %v4003
    %v4211 = vunpack.c.h.b16 %v4003
    %v4212 = vunpack.c.l.b16 %v4004
    %v4213 = vunpack.c.h.b16 %v4004
    %v4214 = vunpack.c.l.b16 %v4005
    %v4215 = vunpack.c.h.b16 %v4005
    %v4216 = vunpack.c.l.b16 %v4006
    %v4217 = vunpack.c.h.b16 %v4006
    %v4218 = vunpack.c.l.b16 %v4007
    %v4219 = vunpack.c.h.b16 %v4007
    %v4220 = vunpack.c.l.b16 %v4008
    %v4221 = vunpack.c.h.b16 %v4008
    %v4222 = vunpack.c.l.b16 %v4009
    %v4223 = vunpack.c.h.b16 %v4009
    %v4224 = vunpack.c.l.b16 %v4010
    %v4225 = vunpack.c.h.b16 %v4010
    %v4226 = vunpack.c.l.b16 %v4011
    %v4227 = vunpack.c.h.b16 %v4011
    %v4228 = vunpack.c.l.b16 %v4012
    %v4229 = vunpack.c.h.b16 %v4012
    %v4230 = vunpack.c.l.b16 %v4013
    %v4231 = vunpack.c.h.b16 %v4013
    %v4232 = vunpack.c.l.b16 %v4014
    %v4233 = vunpack.c.h.b16 %v4014
    %v4234 = vunpack.c.l.b16 %v4015
    %v4235 = vunpack.c.h.b16 %v4015
    %v4236 = vunpack.c.l.b16 %v4016
    %v4237 = vunpack.c.h.b16 %v4016
    %v4238 = vunpack.c.l.b16 %v4017
    %v4239 = vunpack.c.h.b16 %v4017
    %v4240 = vunpack.c.l.b16 %v4018
    %v4241 = vunpack.c.h.b16 %v4018
    %v4242 = vunpack.c.l.b16 %v4019
    %v4243 = vunpack.c.h.b16 %v4019
    %v4244 = vunpack.c.l.b16 %v4020
    %v4245 = vunpack.c.h.b16 %v4020
    %v4246 = vunpack.c.l.b16 %v4021
    %v4247 = vunpack.c.h.b16 %v4021
    %v4248 = vunpack.c.l.b16 %v4022
    %v4249 = vunpack.c.h.b16 %v4022
    %v4250 = vunpack.c.l.b16 %v4023
    %v4251 = vunpack.c.h.b16 %v4023
    %v4252 = vunpack.c.l.b16 %v4024
    %v4253 = vunpack.c.h.b16 %v4024
    %v4254 = vunpack.c.l.b16 %v4025
    %v4255 = vunpack.c.h.b16 %v4025
    %v4256 = vunpack.c.l.b16 %v4026
    %v4257 = vunpack.c.h.b16 %v4026
    %v4258 = vunpack.c.l.b16 %v4027
    %v4259 = vunpack.c.h.b16 %v4027
    %v4260 = vunpack.c.l.b16 %v4028
    %v4261 = vunpack.c.h.b16 %v4028
    %v4262 = vunpack.c.l.b16 %v4029
    %v4263 = vunpack.c.h.b16 %v4029
    %v4264 = vunpack.c.l.b16 %v4030
    %v4265 = vunpack.c.h.b16 %v4030
    %v4266 = vunpack.c.l.b16 %v4031
    %v4267 = vunpack.c.h.b16 %v4031
    %v4268 = vunpack.c.l.b16 %v4032
    %v4269 = vunpack.c.h.b16 %v4032
    %v4270 = vunpack.c.l.b16 %v4033
    %v4271 = vunpack.c.h.b16 %v4033
    %v4272 = vunpack.c.l.b16 %v4034
    %v4273 = vunpack.c.h.b16 %v4034
    %v4274 = vunpack.c.l.b16 %v4035
    %v4275 = vunpack.c.h.b16 %v4035
    %v4276 = vunpack.c.l.b16 %v4036
    %v4277 = vunpack.c.h.b16 %v4036
    %v4278 = vunpack.c.l.b16 %v4037
    %v4279 = vunpack.c.h.b16 %v4037
    %v4280 = vunpack.c.l.b16 %v4038
    %v4281 = vunpack.c.h.b16 %v4038
    %v4282 = vunpack.c.l.b16 %v4039
    %v4283 = vunpack.c.h.b16 %v4039
    %v4284 = vunpack.c.l.b16 %v4040
    %v4285 = vunpack.c.h.b16 %v4040
    %v4286 = vunpack.c.l.b16 %v4041
    %v4287 = vunpack.c.h.b16 %v4041
    %v4288 = vunpack.c.l.b16 %v4042
    %v4289 = vunpack.c.h.b16 %v4042
    %v4290 = vunpack.c.l.b16 %v4043
    %v4291 = vunpack.c.h.b16 %v4043
    %v4292 = vunpack.c.l.b16 %v4044
    %v4293 = vunpack.c.h.b16 %v4044
    %v4294 = vunpack.c.l.b16 %v4045
    %v4295 = vunpack.c.h.b16 %v4045
    %v4296 = vunpack.c.l.b16 %v4046
    %v4297 = vunpack.c.h.b16 %v4046
    %v4298 = vunpack.c.l.b16 %v4047
    %v4299 = vunpack.c.h.b16 %v4047
    %v4300 = vunpack.c.l.b16 %v4048
    %v4301 = vunpack.c.h.b16 %v4048
    %v4302 = vunpack.c.l.b16 %v4049
    %v4303 = vunpack.c.h.b16 %v4049
    %v4304 = vunpack.c.l.b16 %v4050
    %v4305 = vunpack.c.h.b16 %v4050
    %v4306 = vunpack.c.l.b16 %v4051
    %v4307 = vunpack.c.h.b16 %v4051
    %v4308 = vunpack.c.l.b16 %v4052
    %v4309 = vunpack.c.h.b16 %v4052
    %v4310 = vunpack.c.l.b16 %v4053
    %v4311 = vunpack.c.h.b16 %v4053
    %v4312 = vunpack.c.l.b16 %v4054
    %v4313 = vunpack.c.h.b16 %v4054
    %v4314 = vunpack.c.l.b16 %v4055
    %v4315 = vunpack.c.h.b16 %v4055
    %v4316 = vunpack.c.l.b16 %v4056
    %v4317 = vunpack.c.h.b16 %v4056
    %v4318 = vunpack.c.l.b16 %v4057
    %v4319 = vunpack.c.h.b16 %v4057
    %v4320 = vunpack.c.l.b16 %v4058
    %v4321 = vunpack.c.h.b16 %v4058
    %v4322 = vunpack.c.l.b16 %v4059
    %v4323 = vunpack.c.h.b16 %v4059
    %v4324 = vunpack.c.l.b16 %v4060
    %v4325 = vunpack.c.h.b16 %v4060
    %v4326 = vunpack.c.l.b16 %v4061
    %v4327 = vunpack.c.h.b16 %v4061
    %v4328 = vunpack.c.l.b16 %v4062
    %v4329 = vunpack.c.h.b16 %v4062
    %v4330 = vunpack.c.l.b16 %v4063
    %v4331 = vunpack.c.h.b16 %v4063
    %v4332 = vunpack.c.l.b16 %v4064
    %v4333 = vunpack.c.h.b16 %v4064
    %v4334 = vunpack.c.l.b16 %v4065
    %v4335 = vunpack.c.h.b16 %v4065
    %v4336 = vunpack.c.l.b16 %v4066
    %v4337 = vunpack.c.h.b16 %v4066
    %v4338 = vunpack.c.l.b16 %v4067
    %v4339 = vunpack.c.h.b16 %v4067
    %v4340 = vunpack.c.l.b16 %v4068
    %v4341 = vunpack.c.h.b16 %v4068
    %v4342 = vunpack.c.l.b16 %v4069
    %v4343 = vunpack.c.h.b16 %v4069
    %v4344 = vunpack.c.l.b16 %v4070
    %v4345 = vunpack.c.h.b16 %v4070
    %v4346 = vunpack.c.l.b16 %v4071
    %v4347 = vunpack.c.h.b16 %v4071
    %v4348 = vunpack.c.l.b16 %v4072
    %v4349 = vunpack.c.h.b16 %v4072
    %v4350 = vunpack.c.l.b16 %v4073
    %v4351 = vunpack.c.h.b16 %v4073
    %v4352 = vunpack.c.l.b16 %v4074
    %v4353 = vunpack.c.h.b16 %v4074
    %v4354 = vunpack.c.l.b16 %v4075
    %v4355 = vunpack.c.h.b16 %v4075
    %v4356 = vunpack.c.l.b16 %v4076
    %v4357 = vunpack.c.h.b16 %v4076
    %v4358 = vunpack.c.l.b16 %v4077
    %v4359 = vunpack.c.h.b16 %v4077
    %v4360 = vunpack.c.l.b16 %v4078
    %v4361 = vunpack.c.h.b16 %v4078
    %v4362 = vunpack.c.l.b16 %v4079
    %v4363 = vunpack.c.h.b16 %v4079
    %v4364 = vunpack.c.l.b16 %v4080
    %v4365 = vunpack.c.h.b16 %v4080
    %v4366 = vunpack.c.l.b16 %v4081
    %v4367 = vunpack.c.h.b16 %v4081
    %v4368 = vunpack.c.l.b16 %v4082
    %v4369 = vunpack.c.h.b16 %v4082
    %v4370 = vunpack.c.l.b16 %v4083
    %v4371 = vunpack.c.h.b16 %v4083
    %v4372 = vpack.c.b16 %v4184, %v4180
    %v4373 = vpack.c.b16 %v4185, %v4181
    %v4374 = vpack.c.b16 %v4186, %v4182
    %v4375 = vpack.c.b16 %v4187, %v4183
    %v4376 = vpack.c.b16 %v4192, %v4188
    %v4377 = vpack.c.b16 %v4193, %v4189
    %v4378 = vpack.c.b16 %v4194, %v4190
    %v4379 = vpack.c.b16 %v4195, %v4191
    %v4380 = vpack.c.b16 %v4200, %v4196
    %v4381 = vpack.c.b16 %v4201, %v4197
    %v4382 = vpack.c.b16 %v4202, %v4198
    %v4383 = vpack.c.b16 %v4203, %v4199
    %v4384 = vpack.c.b16 %v4208, %v4204
    %v4385 = vpack.c.b16 %v4209, %v4205
    %v4386 = vpack.c.b16 %v4210, %v4206
    %v4387 = vpack.c.b16 %v4211, %v4207
    %v4388 = vpack.c.b16 %v4216, %v4212
    %v4389 = vpack.c.b16 %v4217, %v4213
    %v4390 = vpack.c.b16 %v4218, %v4214
    %v4391 = vpack.c.b16 %v4219, %v4215
    %v4392 = vpack.c.b16 %v4224, %v4220
    %v4393 = vpack.c.b16 %v4225, %v4221
    %v4394 = vpack.c.b16 %v4226, %v4222
    %v4395 = vpack.c.b16 %v4227, %v4223
    %v4396 = vpack.c.b16 %v4232, %v4228
    %v4397 = vpack.c.b16 %v4233, %v4229
    %v4398 = vpack.c.b16 %v4234, %v4230
    %v4399 = vpack.c.b16 %v4235, %v4231
    %v4400 = vpack.c.b16 %v4240, %v4236
    %v4401 = vpack.c.b16 %v4241, %v4237
    %v4402 = vpack.c.b16 %v4242, %v4238
    %v4403 = vpack.c.b16 %v4243, %v4239
    %v4404 = vpack.c.b16 %v4248, %v4244
    %v4405 = vpack.c.b16 %v4249, %v4245
    %v4406 = vpack.c.b16 %v4250, %v4246
    %v4407 = vpack.c.b16 %v4251, %v4247
    %v4408 = vpack.c.b16 %v4256, %v4252
    %v4409 = vpack.c.b16 %v4257, %v4253
    %v4410 = vpack.c.b16 %v4258, %v4254
    %v4411 = vpack.c.b16 %v4259, %v4255
    %v4412 = vpack.c.b16 %v4264, %v4260
    %v4413 = vpack.c.b16 %v4265, %v4261
    %v4414 = vpack.c.b16 %v4266, %v4262
    %v4415 = vpack.c.b16 %v4267, %v4263
    %v4416 = vpack.c.b16 %v4272, %v4268
    %v4417 = vpack.c.b16 %v4273, %v4269
    %v4418 = vpack.c.b16 %v4274, %v4270
    %v4419 = vpack.c.b16 %v4275, %v4271
    %v4420 = vpack.c.b16 %v4280, %v4276
    %v4421 = vpack.c.b16 %v4281, %v4277
    %v4422 = vpack.c.b16 %v4282, %v4278
    %v4423 = vpack.c.b16 %v4283, %v4279
    %v4424 = vpack.c.b16 %v4288, %v4284
    %v4425 = vpack.c.b16 %v4289, %v4285
    %v4426 = vpack.c.b16 %v4290, %v4286
    %v4427 = vpack.c.b16 %v4291, %v4287
    %v4428 = vpack.c.b16 %v4296, %v4292
    %v4429 = vpack.c.b16 %v4297, %v4293
    %v4430 = vpack.c.b16 %v4298, %v4294
    %v4431 = vpack.c.b16 %v4299, %v4295
    %v4432 = vpack.c.b16 %v4304, %v4300
    %v4433 = vpack.c.b16 %v4305, %v4301
    %v4434 = vpack.c.b16 %v4306, %v4302
    %v4435 = vpack.c.b16 %v4307, %v4303
    %v4436 = vpack.c.b16 %v4312, %v4308
    %v4437 = vpack.c.b16 %v4313, %v4309
    %v4438 = vpack.c.b16 %v4314, %v4310
    %v4439 = vpack.c.b16 %v4315, %v4311
    %v4440 = vpack.c.b16 %v4320, %v4316
    %v4441 = vpack.c.b16 %v4321, %v4317
    %v4442 = vpack.c.b16 %v4322, %v4318
    %v4443 = vpack.c.b16 %v4323, %v4319
    %v4444 = vpack.c.b16 %v4328, %v4324
    %v4445 = vpack.c.b16 %v4329, %v4325
    %v4446 = vpack.c.b16 %v4330, %v4326
    %v4447 = vpack.c.b16 %v4331, %v4327
    %v4448 = vpack.c.b16 %v4336, %v4332
    %v4449 = vpack.c.b16 %v4337, %v4333
    %v4450 = vpack.c.b16 %v4338, %v4334
    %v4451 = vpack.c.b16 %v4339, %v4335
    %v4452 = vpack.c.b16 %v4344, %v4340
    %v4453 = vpack.c.b16 %v4345, %v4341
    %v4454 = vpack.c.b16 %v4346, %v4342
    %v4455 = vpack.c.b16 %v4347, %v4343
    %v4456 = vpack.c.b16 %v4352, %v4348
    %v4457 = vpack.c.b16 %v4353, %v4349
    %v4458 = vpack.c.b16 %v4354, %v4350
    %v4459 = vpack.c.b16 %v4355, %v4351
    %v4460 = vpack.c.b16 %v4360, %v4356
    %v4461 = vpack.c.b16 %v4361, %v4357
    %v4462 = vpack.c.b16 %v4362, %v4358
    %v4463 = vpack.c.b16 %v4363, %v4359
    %v4464 = vpack.c.b16 %v4368, %v4364
    %v4465 = vpack.c.b16 %v4369, %v4365
    %v4466 = vpack.c.b16 %v4370, %v4366
    %v4467 = vpack.c.b16 %v4371, %v4367
    %4564 = vmatprep.subr.bf16.mxu0 %v4401
    %4565 = vmatpush1.bf16.msra.mxu0 %v4400
    %4566 = vmatprep.subr.bf16.mxu0 %v4397
    %4567 = vmatpush1.bf16.msra.mxu0 %v4396
    %4568 = vmatprep.subr.bf16.mxu0 %v4393
    %4569 = vmatpush1.bf16.msra.mxu0 %v4392
    %4570 = vmatprep.subr.bf16.mxu0 %v4389
    %4571 = vmatpush1.bf16.msra.mxu0 %v4388
    %4572 = vmatprep.subr.bf16.mxu0 %v4385
    %4573 = vmatpush1.bf16.msra.mxu0 %v4384
    %4574 = vmatprep.subr.bf16.mxu0 %v4381
    %4575 = vmatpush1.bf16.msra.mxu0 %v4380
    %4576 = vmatprep.subr.bf16.mxu0 %v4377
    %4577 = vmatpush1.bf16.msra.mxu0 %v4376
    %4578 = vmatprep.subr.bf16.mxu0 %v4373
    %4579 = vmatpush1.bf16.msra.mxu0 %v4372
    %4580 = vmatprep.subr.bf16.mxu0 %v4433
    %4581 = vmatpush2.bf16.msra.mxu0 %v4432
    %4582 = vmatprep.subr.bf16.mxu0 %v4429
    %4583 = vmatpush2.bf16.msra.mxu0 %v4428
    %4584 = vmatprep.subr.bf16.mxu0 %v4425
    %4585 = vmatpush2.bf16.msra.mxu0 %v4424
    %4586 = vmatprep.subr.bf16.mxu0 %v4421
    %4587 = vmatpush2.bf16.msra.mxu0 %v4420
    %4588 = vmatprep.subr.bf16.mxu0 %v4417
    %4589 = vmatpush2.bf16.msra.mxu0 %v4416
    %4590 = vmatprep.subr.bf16.mxu0 %v4413
    %4591 = vmatpush2.bf16.msra.mxu0 %v4412
    %4592 = vmatprep.subr.bf16.mxu0 %v4409
    %4593 = vmatpush2.bf16.msra.mxu0 %v4408
    %4594 = vmatprep.subr.bf16.mxu0 %v4405
    %4595 = vmatpush2.bf16.msra.mxu0 %v4404
    %4596 = vmatprep.mubr.bf16.mxu0 %v3986
    %4597 = vmatmul.mubr.bf16.gmra.mxu0 %v3985
    %v4598 = vpop.f32.mrf.mxu0
    %v4599 = vadd.f32 0.0, %v4598
    %v4600 = vpop.f32.mrf.mxu0
    %v4601 = vadd.f32 0.0, %v4600
    %v4602 = vpop.f32.mrf.mxu0
    %v4603 = vpop.f32.mrf.mxu0
    %4604 = vdwg.mxu0
    %4605 = vmatprep.subr.bf16.mxu0 %v4465
    %4606 = vmatpush1.bf16.msra.mxu0 %v4464
    %4607 = vmatprep.subr.bf16.mxu0 %v4461
    %4608 = vmatpush1.bf16.msra.mxu0 %v4460
    %4609 = vmatprep.subr.bf16.mxu0 %v4457
    %4610 = vmatpush1.bf16.msra.mxu0 %v4456
    %4611 = vmatprep.subr.bf16.mxu0 %v4453
    %4612 = vmatpush1.bf16.msra.mxu0 %v4452
    %4613 = vmatprep.subr.bf16.mxu0 %v4449
    %4614 = vmatpush1.bf16.msra.mxu0 %v4448
    %4615 = vmatprep.subr.bf16.mxu0 %v4445
    %4616 = vmatpush1.bf16.msra.mxu0 %v4444
    %4617 = vmatprep.subr.bf16.mxu0 %v4441
    %4618 = vmatpush1.bf16.msra.mxu0 %v4440
    %4619 = vmatprep.subr.bf16.mxu0 %v4437
    %4620 = vmatpush1.bf16.msra.mxu0 %v4436
    %4621 = vmatprep.subr.bf16.mxu0 0
    %4622 = vmatpush2.bf16.msra.mxu0 0
    %4623 = vmatprep.subr.bf16.mxu0 0
    %4624 = vmatpush2.bf16.msra.mxu0 0
    %4625 = vmatprep.subr.bf16.mxu0 0
    %4626 = vmatpush2.bf16.msra.mxu0 0
    %4627 = vmatprep.subr.bf16.mxu0 0
    %4628 = vmatpush2.bf16.msra.mxu0 0
    %4629 = vmatprep.subr.bf16.mxu0 0
    %4630 = vmatpush2.bf16.msra.mxu0 0
    %4631 = vmatprep.subr.bf16.mxu0 0
    %4632 = vmatpush2.bf16.msra.mxu0 0
    %4633 = vmatprep.subr.bf16.mxu0 0
    %4634 = vmatpush2.bf16.msra.mxu0 0
    %4635 = vmatprep.subr.bf16.mxu0 0
    %4636 = vmatpush2.bf16.msra.mxu0 0
    %4637 = vmatprep.mubr.bf16.mxu0 0
    %4638 = vmatmul.mubr.bf16.gmra.mxu0 %v3987
    %v4639 = vpop.f32.mrf.mxu0
    %v4640 = vadd.f32 %v4599, %v4639
    %v4641 = vpop.f32.mrf.mxu0
    %v4642 = vadd.f32 %v4601, %v4641
    %v4643 = vpop.f32.mrf.mxu0
    %v4644 = vpop.f32.mrf.mxu0
    %4645 = vdwg.mxu0
    %4646 = vmatprep.subr.bf16.mxu0 %v4403
    %4647 = vmatpush1.bf16.msra.mxu0 %v4402
    %4648 = vmatprep.subr.bf16.mxu0 %v4399
    %4649 = vmatpush1.bf16.msra.mxu0 %v4398
    %4650 = vmatprep.subr.bf16.mxu0 %v4395
    %4651 = vmatpush1.bf16.msra.mxu0 %v4394
    %4652 = vmatprep.subr.bf16.mxu0 %v4391
    %4653 = vmatpush1.bf16.msra.mxu0 %v4390
    %4654 = vmatprep.subr.bf16.mxu0 %v4387
    %4655 = vmatpush1.bf16.msra.mxu0 %v4386
    %4656 = vmatprep.subr.bf16.mxu0 %v4383
    %4657 = vmatpush1.bf16.msra.mxu0 %v4382
    %4658 = vmatprep.subr.bf16.mxu0 %v4379
    %4659 = vmatpush1.bf16.msra.mxu0 %v4378
    %4660 = vmatprep.subr.bf16.mxu0 %v4375
    %4661 = vmatpush1.bf16.msra.mxu0 %v4374
    %4662 = vmatprep.subr.bf16.mxu0 %v4435
    %4663 = vmatpush2.bf16.msra.mxu0 %v4434
    %4664 = vmatprep.subr.bf16.mxu0 %v4431
    %4665 = vmatpush2.bf16.msra.mxu0 %v4430
    %4666 = vmatprep.subr.bf16.mxu0 %v4427
    %4667 = vmatpush2.bf16.msra.mxu0 %v4426
    %4668 = vmatprep.subr.bf16.mxu0 %v4423
    %4669 = vmatpush2.bf16.msra.mxu0 %v4422
    %4670 = vmatprep.subr.bf16.mxu0 %v4419
    %4671 = vmatpush2.bf16.msra.mxu0 %v4418
    %4672 = vmatprep.subr.bf16.mxu0 %v4415
    %4673 = vmatpush2.bf16.msra.mxu0 %v4414
    %4674 = vmatprep.subr.bf16.mxu0 %v4411
    %4675 = vmatpush2.bf16.msra.mxu0 %v4410
    %4676 = vmatprep.subr.bf16.mxu0 %v4407
    %4677 = vmatpush2.bf16.msra.mxu0 %v4406
    %4678 = vmatprep.mubr.bf16.mxu0 %v3986
    %4679 = vmatmul.mubr.bf16.gmra.mxu0 %v3985
    %v4680 = vpop.f32.mrf.mxu0
    %v4681 = vadd.f32 0.0, %v4680
    %v4682 = vpop.f32.mrf.mxu0
    %v4683 = vadd.f32 0.0, %v4682
    %v4684 = vpop.f32.mrf.mxu0
    %v4685 = vpop.f32.mrf.mxu0
    %4686 = vdwg.mxu0
    %4687 = vmatprep.subr.bf16.mxu0 %v4467
    %4688 = vmatpush1.bf16.msra.mxu0 %v4466
    %4689 = vmatprep.subr.bf16.mxu0 %v4463
    %4690 = vmatpush1.bf16.msra.mxu0 %v4462
    %4691 = vmatprep.subr.bf16.mxu0 %v4459
    %4692 = vmatpush1.bf16.msra.mxu0 %v4458
    %4693 = vmatprep.subr.bf16.mxu0 %v4455
    %4694 = vmatpush1.bf16.msra.mxu0 %v4454
    %4695 = vmatprep.subr.bf16.mxu0 %v4451
    %4696 = vmatpush1.bf16.msra.mxu0 %v4450
    %4697 = vmatprep.subr.bf16.mxu0 %v4447
    %4698 = vmatpush1.bf16.msra.mxu0 %v4446
    %4699 = vmatprep.subr.bf16.mxu0 %v4443
    %4700 = vmatpush1.bf16.msra.mxu0 %v4442
    %4701 = vmatprep.subr.bf16.mxu0 %v4439
    %4702 = vmatpush1.bf16.msra.mxu0 %v4438
    %4703 = vmatprep.subr.bf16.mxu0 0
    %4704 = vmatpush2.bf16.msra.mxu0 0
    %4705 = vmatprep.subr.bf16.mxu0 0
    %4706 = vmatpush2.bf16.msra.mxu0 0
    %4707 = vmatprep.subr.bf16.mxu0 0
    %4708 = vmatpush2.bf16.msra.mxu0 0
    %4709 = vmatprep.subr.bf16.mxu0 0
    %4710 = vmatpush2.bf16.msra.mxu0 0
    %4711 = vmatprep.subr.bf16.mxu0 0
    %4712 = vmatpush2.bf16.msra.mxu0 0
    %4713 = vmatprep.subr.bf16.mxu0 0
    %4714 = vmatpush2.bf16.msra.mxu0 0
    %4715 = vmatprep.subr.bf16.mxu0 0
    %4716 = vmatpush2.bf16.msra.mxu0 0
    %4717 = vmatprep.subr.bf16.mxu0 0
    %4718 = vmatpush2.bf16.msra.mxu0 0
    %4719 = vmatprep.mubr.bf16.mxu0 0
    %4720 = vmatmul.mubr.bf16.gmra.mxu0 %v3987
    %v4721 = vpop.f32.mrf.mxu0
    %v4722 = vadd.f32 %v4681, %v4721
    %v4723 = vpop.f32.mrf.mxu0
    %v4724 = vadd.f32 %v4683, %v4723
    %v4725 = vpop.f32.mrf.mxu0
    %v4726 = vpop.f32.mrf.mxu0
    %4727 = vdwg.mxu0
    %v4732 = vcombine.low %v4640, %v4642
    %v4733 = vcombine.low %v4722, %v4724
    %v4735 = vunpack.c.l.s4 1983009808
    %v4736 = vunpack.c.0.s8 %v4735
    %v4737 = vlaneseq
    %v4738 = vshrl.u32 %v4737, 7
    %v4739 = vsub.s32 %v4736, %v4738
    %v4740 = vrot.slane %v4732, %v4739
    %v4742 = vunpack.c.l.s4 1983009808
    %v4743 = vunpack.c.0.s8 %v4742
    %v4744 = vlaneseq
    %v4745 = vshrl.u32 %v4744, 7
    %v4746 = vsub.s32 %v4743, %v4745
    %v4747 = vrot.slane %v4733, %v4746
    %v4748 = vcombine.low %v4740, %v4747
    %v4750 = vadd.f32 %v3963, %v4748
    %4751 = vst [vmem:[#allocation4] sm:$0xff] %v4750
    %s4752 = sshll.u32 %s1587, 4
    %4753 = dma.done %s178, %s4752
    %v4754 = vld [vmem:[#allocation4] sm:$0xff]
    %v4755 = vld [vmem:[#allocation3 + $0x18] sm:$0x3f]
    %v4757 = vcombine.high %v4755, %v4755
    %v4759 = vunpack.c.l.s4 1983009808
    %v4760 = vunpack.c.0.s8 %v4759
    %v4761 = vlaneseq
    %v4762 = vshrl.u32 %v4761, 7
    %v4763 = vsub.s32 %v4760, %v4762
    %v4764 = vrot.slane %v4755, %v4763
    %v4766 = vunpack.c.l.s4 1983009808
    %v4767 = vunpack.c.0.s8 %v4766
    %v4768 = vlaneseq
    %v4769 = vshrl.u32 %v4768, 7
    %v4770 = vsub.s32 %v4767, %v4769
    %v4771 = vrot.slane %v4757, %v4770
    %v4772 = vcombine.high %v4764, %v4764
    %v4776 = vpack.c.bf16 %v4764, %v4764
    %v4777 = vpack.c.bf16 %v4772, %v4772
    %v4778 = vpack.c.bf16 %v4771, %v4771
    %v4779 = vld [vmem:[#allocation5 + $0xc00] sm:$0xff]
    %v4780 = vld [vmem:[#allocation5 + $0xc08] sm:$0xff]
    %v4781 = vld [vmem:[#allocation5 + $0xc10] sm:$0xff]
    %v4782 = vld [vmem:[#allocation5 + $0xc18] sm:$0xff]
    %v4783 = vld [vmem:[#allocation5 + $0xc20] sm:$0xff]
    %v4784 = vld [vmem:[#allocation5 + $0xc28] sm:$0xff]
    %v4785 = vld [vmem:[#allocation5 + $0xc30] sm:$0xff]
    %v4786 = vld [vmem:[#allocation5 + $0xc38] sm:$0xff]
    %v4787 = vld [vmem:[#allocation5 + $0xc40] sm:$0xff]
    %v4788 = vld [vmem:[#allocation5 + $0xc48] sm:$0xff]
    %v4789 = vld [vmem:[#allocation5 + $0xc50] sm:$0xff]
    %v4790 = vld [vmem:[#allocation5 + $0xc58] sm:$0xff]
    %v4791 = vld [vmem:[#allocation5 + $0xc60] sm:$0xff]
    %v4792 = vld [vmem:[#allocation5 + $0xc68] sm:$0xff]
    %v4793 = vld [vmem:[#allocation5 + $0xc70] sm:$0xff]
    %v4794 = vld [vmem:[#allocation5 + $0xc78] sm:$0xff]
    %v4795 = vld [vmem:[#allocation5 + $0xc80] sm:$0xff]
    %v4796 = vld [vmem:[#allocation5 + $0xc88] sm:$0xff]
    %v4797 = vld [vmem:[#allocation5 + $0xc90] sm:$0xff]
    %v4798 = vld [vmem:[#allocation5 + $0xc98] sm:$0xff]
    %v4799 = vld [vmem:[#allocation5 + $0xca0] sm:$0xff]
    %v4800 = vld [vmem:[#allocation5 + $0xca8] sm:$0xff]
    %v4801 = vld [vmem:[#allocation5 + $0xcb0] sm:$0xff]
    %v4802 = vld [vmem:[#allocation5 + $0xcb8] sm:$0xff]
    %v4803 = vld [vmem:[#allocation5 + $0xcc0] sm:$0xff]
    %v4804 = vld [vmem:[#allocation5 + $0xcc8] sm:$0xff]
    %v4805 = vld [vmem:[#allocation5 + $0xcd0] sm:$0xff]
    %v4806 = vld [vmem:[#allocation5 + $0xcd8] sm:$0xff]
    %v4807 = vld [vmem:[#allocation5 + $0xce0] sm:$0xff]
    %v4808 = vld [vmem:[#allocation5 + $0xce8] sm:$0xff]
    %v4809 = vld [vmem:[#allocation5 + $0xcf0] sm:$0xff]
    %v4810 = vld [vmem:[#allocation5 + $0xcf8] sm:$0xff]
    %v4811 = vld [vmem:[#allocation5 + $0xd00] sm:$0xff]
    %v4812 = vld [vmem:[#allocation5 + $0xd08] sm:$0xff]
    %v4813 = vld [vmem:[#allocation5 + $0xd10] sm:$0xff]
    %v4814 = vld [vmem:[#allocation5 + $0xd18] sm:$0xff]
    %v4815 = vld [vmem:[#allocation5 + $0xd20] sm:$0xff]
    %v4816 = vld [vmem:[#allocation5 + $0xd28] sm:$0xff]
    %v4817 = vld [vmem:[#allocation5 + $0xd30] sm:$0xff]
    %v4818 = vld [vmem:[#allocation5 + $0xd38] sm:$0xff]
    %v4819 = vld [vmem:[#allocation5 + $0xd40] sm:$0xff]
    %v4820 = vld [vmem:[#allocation5 + $0xd48] sm:$0xff]
    %v4821 = vld [vmem:[#allocation5 + $0xd50] sm:$0xff]
    %v4822 = vld [vmem:[#allocation5 + $0xd58] sm:$0xff]
    %v4823 = vld [vmem:[#allocation5 + $0xd60] sm:$0xff]
    %v4824 = vld [vmem:[#allocation5 + $0xd68] sm:$0xff]
    %v4825 = vld [vmem:[#allocation5 + $0xd70] sm:$0xff]
    %v4826 = vld [vmem:[#allocation5 + $0xd78] sm:$0xff]
    %v4827 = vld [vmem:[#allocation5 + $0xd80] sm:$0xff]
    %v4828 = vld [vmem:[#allocation5 + $0xd88] sm:$0xff]
    %v4829 = vld [vmem:[#allocation5 + $0xd90] sm:$0xff]
    %v4830 = vld [vmem:[#allocation5 + $0xd98] sm:$0xff]
    %v4831 = vld [vmem:[#allocation5 + $0xda0] sm:$0xff]
    %v4832 = vld [vmem:[#allocation5 + $0xda8] sm:$0xff]
    %v4833 = vld [vmem:[#allocation5 + $0xdb0] sm:$0xff]
    %v4834 = vld [vmem:[#allocation5 + $0xdb8] sm:$0xff]
    %v4835 = vld [vmem:[#allocation5 + $0xdc0] sm:$0xff]
    %v4836 = vld [vmem:[#allocation5 + $0xdc8] sm:$0xff]
    %v4837 = vld [vmem:[#allocation5 + $0xdd0] sm:$0xff]
    %v4838 = vld [vmem:[#allocation5 + $0xdd8] sm:$0xff]
    %v4839 = vld [vmem:[#allocation5 + $0xde0] sm:$0xff]
    %v4840 = vld [vmem:[#allocation5 + $0xde8] sm:$0xff]
    %v4841 = vld [vmem:[#allocation5 + $0xdf0] sm:$0xff]
    %v4842 = vld [vmem:[#allocation5 + $0xdf8] sm:$0xff]
    %v4843 = vld [vmem:[#allocation5 + $0xe00] sm:$0xff]
    %v4844 = vld [vmem:[#allocation5 + $0xe08] sm:$0xff]
    %v4845 = vld [vmem:[#allocation5 + $0xe10] sm:$0xff]
    %v4846 = vld [vmem:[#allocation5 + $0xe18] sm:$0xff]
    %v4847 = vld [vmem:[#allocation5 + $0xe20] sm:$0xff]
    %v4848 = vld [vmem:[#allocation5 + $0xe28] sm:$0xff]
    %v4849 = vld [vmem:[#allocation5 + $0xe30] sm:$0xff]
    %v4850 = vld [vmem:[#allocation5 + $0xe38] sm:$0xff]
    %v4851 = vld [vmem:[#allocation5 + $0xe40] sm:$0xff]
    %v4852 = vld [vmem:[#allocation5 + $0xe48] sm:$0xff]
    %v4853 = vld [vmem:[#allocation5 + $0xe50] sm:$0xff]
    %v4854 = vld [vmem:[#allocation5 + $0xe58] sm:$0xff]
    %v4855 = vld [vmem:[#allocation5 + $0xe60] sm:$0xff]
    %v4856 = vld [vmem:[#allocation5 + $0xe68] sm:$0xff]
    %v4857 = vld [vmem:[#allocation5 + $0xe70] sm:$0xff]
    %v4858 = vld [vmem:[#allocation5 + $0xe78] sm:$0xff]
    %v4859 = vld [vmem:[#allocation5 + $0xe80] sm:$0xff]
    %v4860 = vld [vmem:[#allocation5 + $0xe88] sm:$0xff]
    %v4861 = vld [vmem:[#allocation5 + $0xe90] sm:$0xff]
    %v4862 = vld [vmem:[#allocation5 + $0xe98] sm:$0xff]
    %v4863 = vld [vmem:[#allocation5 + $0xea0] sm:$0xff]
    %v4864 = vld [vmem:[#allocation5 + $0xea8] sm:$0xff]
    %v4865 = vld [vmem:[#allocation5 + $0xeb0] sm:$0xff]
    %v4866 = vld [vmem:[#allocation5 + $0xeb8] sm:$0xff]
    %v4867 = vld [vmem:[#allocation5 + $0xec0] sm:$0xff]
    %v4868 = vld [vmem:[#allocation5 + $0xec8] sm:$0xff]
    %v4869 = vld [vmem:[#allocation5 + $0xed0] sm:$0xff]
    %v4870 = vld [vmem:[#allocation5 + $0xed8] sm:$0xff]
    %v4871 = vld [vmem:[#allocation5 + $0xee0] sm:$0xff]
    %v4872 = vld [vmem:[#allocation5 + $0xee8] sm:$0xff]
    %v4873 = vld [vmem:[#allocation5 + $0xef0] sm:$0xff]
    %v4874 = vld [vmem:[#allocation5 + $0xef8] sm:$0xff]
    %v4971 = vunpack.c.l.b16 %v4779
    %v4972 = vunpack.c.h.b16 %v4779
    %v4973 = vunpack.c.l.b16 %v4780
    %v4974 = vunpack.c.h.b16 %v4780
    %v4975 = vunpack.c.l.b16 %v4781
    %v4976 = vunpack.c.h.b16 %v4781
    %v4977 = vunpack.c.l.b16 %v4782
    %v4978 = vunpack.c.h.b16 %v4782
    %v4979 = vunpack.c.l.b16 %v4783
    %v4980 = vunpack.c.h.b16 %v4783
    %v4981 = vunpack.c.l.b16 %v4784
    %v4982 = vunpack.c.h.b16 %v4784
    %v4983 = vunpack.c.l.b16 %v4785
    %v4984 = vunpack.c.h.b16 %v4785
    %v4985 = vunpack.c.l.b16 %v4786
    %v4986 = vunpack.c.h.b16 %v4786
    %v4987 = vunpack.c.l.b16 %v4787
    %v4988 = vunpack.c.h.b16 %v4787
    %v4989 = vunpack.c.l.b16 %v4788
    %v4990 = vunpack.c.h.b16 %v4788
    %v4991 = vunpack.c.l.b16 %v4789
    %v4992 = vunpack.c.h.b16 %v4789
    %v4993 = vunpack.c.l.b16 %v4790
    %v4994 = vunpack.c.h.b16 %v4790
    %v4995 = vunpack.c.l.b16 %v4791
    %v4996 = vunpack.c.h.b16 %v4791
    %v4997 = vunpack.c.l.b16 %v4792
    %v4998 = vunpack.c.h.b16 %v4792
    %v4999 = vunpack.c.l.b16 %v4793
    %v5000 = vunpack.c.h.b16 %v4793
    %v5001 = vunpack.c.l.b16 %v4794
    %v5002 = vunpack.c.h.b16 %v4794
    %v5003 = vunpack.c.l.b16 %v4795
    %v5004 = vunpack.c.h.b16 %v4795
    %v5005 = vunpack.c.l.b16 %v4796
    %v5006 = vunpack.c.h.b16 %v4796
    %v5007 = vunpack.c.l.b16 %v4797
    %v5008 = vunpack.c.h.b16 %v4797
    %v5009 = vunpack.c.l.b16 %v4798
    %v5010 = vunpack.c.h.b16 %v4798
    %v5011 = vunpack.c.l.b16 %v4799
    %v5012 = vunpack.c.h.b16 %v4799
    %v5013 = vunpack.c.l.b16 %v4800
    %v5014 = vunpack.c.h.b16 %v4800
    %v5015 = vunpack.c.l.b16 %v4801
    %v5016 = vunpack.c.h.b16 %v4801
    %v5017 = vunpack.c.l.b16 %v4802
    %v5018 = vunpack.c.h.b16 %v4802
    %v5019 = vunpack.c.l.b16 %v4803
    %v5020 = vunpack.c.h.b16 %v4803
    %v5021 = vunpack.c.l.b16 %v4804
    %v5022 = vunpack.c.h.b16 %v4804
    %v5023 = vunpack.c.l.b16 %v4805
    %v5024 = vunpack.c.h.b16 %v4805
    %v5025 = vunpack.c.l.b16 %v4806
    %v5026 = vunpack.c.h.b16 %v4806
    %v5027 = vunpack.c.l.b16 %v4807
    %v5028 = vunpack.c.h.b16 %v4807
    %v5029 = vunpack.c.l.b16 %v4808
    %v5030 = vunpack.c.h.b16 %v4808
    %v5031 = vunpack.c.l.b16 %v4809
    %v5032 = vunpack.c.h.b16 %v4809
    %v5033 = vunpack.c.l.b16 %v4810
    %v5034 = vunpack.c.h.b16 %v4810
    %v5035 = vunpack.c.l.b16 %v4811
    %v5036 = vunpack.c.h.b16 %v4811
    %v5037 = vunpack.c.l.b16 %v4812
    %v5038 = vunpack.c.h.b16 %v4812
    %v5039 = vunpack.c.l.b16 %v4813
    %v5040 = vunpack.c.h.b16 %v4813
    %v5041 = vunpack.c.l.b16 %v4814
    %v5042 = vunpack.c.h.b16 %v4814
    %v5043 = vunpack.c.l.b16 %v4815
    %v5044 = vunpack.c.h.b16 %v4815
    %v5045 = vunpack.c.l.b16 %v4816
    %v5046 = vunpack.c.h.b16 %v4816
    %v5047 = vunpack.c.l.b16 %v4817
    %v5048 = vunpack.c.h.b16 %v4817
    %v5049 = vunpack.c.l.b16 %v4818
    %v5050 = vunpack.c.h.b16 %v4818
    %v5051 = vunpack.c.l.b16 %v4819
    %v5052 = vunpack.c.h.b16 %v4819
    %v5053 = vunpack.c.l.b16 %v4820
    %v5054 = vunpack.c.h.b16 %v4820
    %v5055 = vunpack.c.l.b16 %v4821
    %v5056 = vunpack.c.h.b16 %v4821
    %v5057 = vunpack.c.l.b16 %v4822
    %v5058 = vunpack.c.h.b16 %v4822
    %v5059 = vunpack.c.l.b16 %v4823
    %v5060 = vunpack.c.h.b16 %v4823
    %v5061 = vunpack.c.l.b16 %v4824
    %v5062 = vunpack.c.h.b16 %v4824
    %v5063 = vunpack.c.l.b16 %v4825
    %v5064 = vunpack.c.h.b16 %v4825
    %v5065 = vunpack.c.l.b16 %v4826
    %v5066 = vunpack.c.h.b16 %v4826
    %v5067 = vunpack.c.l.b16 %v4827
    %v5068 = vunpack.c.h.b16 %v4827
    %v5069 = vunpack.c.l.b16 %v4828
    %v5070 = vunpack.c.h.b16 %v4828
    %v5071 = vunpack.c.l.b16 %v4829
    %v5072 = vunpack.c.h.b16 %v4829
    %v5073 = vunpack.c.l.b16 %v4830
    %v5074 = vunpack.c.h.b16 %v4830
    %v5075 = vunpack.c.l.b16 %v4831
    %v5076 = vunpack.c.h.b16 %v4831
    %v5077 = vunpack.c.l.b16 %v4832
    %v5078 = vunpack.c.h.b16 %v4832
    %v5079 = vunpack.c.l.b16 %v4833
    %v5080 = vunpack.c.h.b16 %v4833
    %v5081 = vunpack.c.l.b16 %v4834
    %v5082 = vunpack.c.h.b16 %v4834
    %v5083 = vunpack.c.l.b16 %v4835
    %v5084 = vunpack.c.h.b16 %v4835
    %v5085 = vunpack.c.l.b16 %v4836
    %v5086 = vunpack.c.h.b16 %v4836
    %v5087 = vunpack.c.l.b16 %v4837
    %v5088 = vunpack.c.h.b16 %v4837
    %v5089 = vunpack.c.l.b16 %v4838
    %v5090 = vunpack.c.h.b16 %v4838
    %v5091 = vunpack.c.l.b16 %v4839
    %v5092 = vunpack.c.h.b16 %v4839
    %v5093 = vunpack.c.l.b16 %v4840
    %v5094 = vunpack.c.h.b16 %v4840
    %v5095 = vunpack.c.l.b16 %v4841
    %v5096 = vunpack.c.h.b16 %v4841
    %v5097 = vunpack.c.l.b16 %v4842
    %v5098 = vunpack.c.h.b16 %v4842
    %v5099 = vunpack.c.l.b16 %v4843
    %v5100 = vunpack.c.h.b16 %v4843
    %v5101 = vunpack.c.l.b16 %v4844
    %v5102 = vunpack.c.h.b16 %v4844
    %v5103 = vunpack.c.l.b16 %v4845
    %v5104 = vunpack.c.h.b16 %v4845
    %v5105 = vunpack.c.l.b16 %v4846
    %v5106 = vunpack.c.h.b16 %v4846
    %v5107 = vunpack.c.l.b16 %v4847
    %v5108 = vunpack.c.h.b16 %v4847
    %v5109 = vunpack.c.l.b16 %v4848
    %v5110 = vunpack.c.h.b16 %v4848
    %v5111 = vunpack.c.l.b16 %v4849
    %v5112 = vunpack.c.h.b16 %v4849
    %v5113 = vunpack.c.l.b16 %v4850
    %v5114 = vunpack.c.h.b16 %v4850
    %v5115 = vunpack.c.l.b16 %v4851
    %v5116 = vunpack.c.h.b16 %v4851
    %v5117 = vunpack.c.l.b16 %v4852
    %v5118 = vunpack.c.h.b16 %v4852
    %v5119 = vunpack.c.l.b16 %v4853
    %v5120 = vunpack.c.h.b16 %v4853
    %v5121 = vunpack.c.l.b16 %v4854
    %v5122 = vunpack.c.h.b16 %v4854
    %v5123 = vunpack.c.l.b16 %v4855
    %v5124 = vunpack.c.h.b16 %v4855
    %v5125 = vunpack.c.l.b16 %v4856
    %v5126 = vunpack.c.h.b16 %v4856
    %v5127 = vunpack.c.l.b16 %v4857
    %v5128 = vunpack.c.h.b16 %v4857
    %v5129 = vunpack.c.l.b16 %v4858
    %v5130 = vunpack.c.h.b16 %v4858
    %v5131 = vunpack.c.l.b16 %v4859
    %v5132 = vunpack.c.h.b16 %v4859
    %v5133 = vunpack.c.l.b16 %v4860
    %v5134 = vunpack.c.h.b16 %v4860
    %v5135 = vunpack.c.l.b16 %v4861
    %v5136 = vunpack.c.h.b16 %v4861
    %v5137 = vunpack.c.l.b16 %v4862
    %v5138 = vunpack.c.h.b16 %v4862
    %v5139 = vunpack.c.l.b16 %v4863
    %v5140 = vunpack.c.h.b16 %v4863
    %v5141 = vunpack.c.l.b16 %v4864
    %v5142 = vunpack.c.h.b16 %v4864
    %v5143 = vunpack.c.l.b16 %v4865
    %v5144 = vunpack.c.h.b16 %v4865
    %v5145 = vunpack.c.l.b16 %v4866
    %v5146 = vunpack.c.h.b16 %v4866
    %v5147 = vunpack.c.l.b16 %v4867
    %v5148 = vunpack.c.h.b16 %v4867
    %v5149 = vunpack.c.l.b16 %v4868
    %v5150 = vunpack.c.h.b16 %v4868
    %v5151 = vunpack.c.l.b16 %v4869
    %v5152 = vunpack.c.h.b16 %v4869
    %v5153 = vunpack.c.l.b16 %v4870
    %v5154 = vunpack.c.h.b16 %v4870
    %v5155 = vunpack.c.l.b16 %v4871
    %v5156 = vunpack.c.h.b16 %v4871
    %v5157 = vunpack.c.l.b16 %v4872
    %v5158 = vunpack.c.h.b16 %v4872
    %v5159 = vunpack.c.l.b16 %v4873
    %v5160 = vunpack.c.h.b16 %v4873
    %v5161 = vunpack.c.l.b16 %v4874
    %v5162 = vunpack.c.h.b16 %v4874
    %v5163 = vpack.c.b16 %v4975, %v4971
    %v5164 = vpack.c.b16 %v4976, %v4972
    %v5165 = vpack.c.b16 %v4977, %v4973
    %v5166 = vpack.c.b16 %v4978, %v4974
    %v5167 = vpack.c.b16 %v4983, %v4979
    %v5168 = vpack.c.b16 %v4984, %v4980
    %v5169 = vpack.c.b16 %v4985, %v4981
    %v5170 = vpack.c.b16 %v4986, %v4982
    %v5171 = vpack.c.b16 %v4991, %v4987
    %v5172 = vpack.c.b16 %v4992, %v4988
    %v5173 = vpack.c.b16 %v4993, %v4989
    %v5174 = vpack.c.b16 %v4994, %v4990
    %v5175 = vpack.c.b16 %v4999, %v4995
    %v5176 = vpack.c.b16 %v5000, %v4996
    %v5177 = vpack.c.b16 %v5001, %v4997
    %v5178 = vpack.c.b16 %v5002, %v4998
    %v5179 = vpack.c.b16 %v5007, %v5003
    %v5180 = vpack.c.b16 %v5008, %v5004
    %v5181 = vpack.c.b16 %v5009, %v5005
    %v5182 = vpack.c.b16 %v5010, %v5006
    %v5183 = vpack.c.b16 %v5015, %v5011
    %v5184 = vpack.c.b16 %v5016, %v5012
    %v5185 = vpack.c.b16 %v5017, %v5013
    %v5186 = vpack.c.b16 %v5018, %v5014
    %v5187 = vpack.c.b16 %v5023, %v5019
    %v5188 = vpack.c.b16 %v5024, %v5020
    %v5189 = vpack.c.b16 %v5025, %v5021
    %v5190 = vpack.c.b16 %v5026, %v5022
    %v5191 = vpack.c.b16 %v5031, %v5027
    %v5192 = vpack.c.b16 %v5032, %v5028
    %v5193 = vpack.c.b16 %v5033, %v5029
    %v5194 = vpack.c.b16 %v5034, %v5030
    %v5195 = vpack.c.b16 %v5039, %v5035
    %v5196 = vpack.c.b16 %v5040, %v5036
    %v5197 = vpack.c.b16 %v5041, %v5037
    %v5198 = vpack.c.b16 %v5042, %v5038
    %v5199 = vpack.c.b16 %v5047, %v5043
    %v5200 = vpack.c.b16 %v5048, %v5044
    %v5201 = vpack.c.b16 %v5049, %v5045
    %v5202 = vpack.c.b16 %v5050, %v5046
    %v5203 = vpack.c.b16 %v5055, %v5051
    %v5204 = vpack.c.b16 %v5056, %v5052
    %v5205 = vpack.c.b16 %v5057, %v5053
    %v5206 = vpack.c.b16 %v5058, %v5054
    %v5207 = vpack.c.b16 %v5063, %v5059
    %v5208 = vpack.c.b16 %v5064, %v5060
    %v5209 = vpack.c.b16 %v5065, %v5061
    %v5210 = vpack.c.b16 %v5066, %v5062
    %v5211 = vpack.c.b16 %v5071, %v5067
    %v5212 = vpack.c.b16 %v5072, %v5068
    %v5213 = vpack.c.b16 %v5073, %v5069
    %v5214 = vpack.c.b16 %v5074, %v5070
    %v5215 = vpack.c.b16 %v5079, %v5075
    %v5216 = vpack.c.b16 %v5080, %v5076
    %v5217 = vpack.c.b16 %v5081, %v5077
    %v5218 = vpack.c.b16 %v5082, %v5078
    %v5219 = vpack.c.b16 %v5087, %v5083
    %v5220 = vpack.c.b16 %v5088, %v5084
    %v5221 = vpack.c.b16 %v5089, %v5085
    %v5222 = vpack.c.b16 %v5090, %v5086
    %v5223 = vpack.c.b16 %v5095, %v5091
    %v5224 = vpack.c.b16 %v5096, %v5092
    %v5225 = vpack.c.b16 %v5097, %v5093
    %v5226 = vpack.c.b16 %v5098, %v5094
    %v5227 = vpack.c.b16 %v5103, %v5099
    %v5228 = vpack.c.b16 %v5104, %v5100
    %v5229 = vpack.c.b16 %v5105, %v5101
    %v5230 = vpack.c.b16 %v5106, %v5102
    %v5231 = vpack.c.b16 %v5111, %v5107
    %v5232 = vpack.c.b16 %v5112, %v5108
    %v5233 = vpack.c.b16 %v5113, %v5109
    %v5234 = vpack.c.b16 %v5114, %v5110
    %v5235 = vpack.c.b16 %v5119, %v5115
    %v5236 = vpack.c.b16 %v5120, %v5116
    %v5237 = vpack.c.b16 %v5121, %v5117
    %v5238 = vpack.c.b16 %v5122, %v5118
    %v5239 = vpack.c.b16 %v5127, %v5123
    %v5240 = vpack.c.b16 %v5128, %v5124
    %v5241 = vpack.c.b16 %v5129, %v5125
    %v5242 = vpack.c.b16 %v5130, %v5126
    %v5243 = vpack.c.b16 %v5135, %v5131
    %v5244 = vpack.c.b16 %v5136, %v5132
    %v5245 = vpack.c.b16 %v5137, %v5133
    %v5246 = vpack.c.b16 %v5138, %v5134
    %v5247 = vpack.c.b16 %v5143, %v5139
    %v5248 = vpack.c.b16 %v5144, %v5140
    %v5249 = vpack.c.b16 %v5145, %v5141
    %v5250 = vpack.c.b16 %v5146, %v5142
    %v5251 = vpack.c.b16 %v5151, %v5147
    %v5252 = vpack.c.b16 %v5152, %v5148
    %v5253 = vpack.c.b16 %v5153, %v5149
    %v5254 = vpack.c.b16 %v5154, %v5150
    %v5255 = vpack.c.b16 %v5159, %v5155
    %v5256 = vpack.c.b16 %v5160, %v5156
    %v5257 = vpack.c.b16 %v5161, %v5157
    %v5258 = vpack.c.b16 %v5162, %v5158
    %5355 = vmatprep.subr.bf16.mxu0 %v5192
    %5356 = vmatpush1.bf16.msra.mxu0 %v5191
    %5357 = vmatprep.subr.bf16.mxu0 %v5188
    %5358 = vmatpush1.bf16.msra.mxu0 %v5187
    %5359 = vmatprep.subr.bf16.mxu0 %v5184
    %5360 = vmatpush1.bf16.msra.mxu0 %v5183
    %5361 = vmatprep.subr.bf16.mxu0 %v5180
    %5362 = vmatpush1.bf16.msra.mxu0 %v5179
    %5363 = vmatprep.subr.bf16.mxu0 %v5176
    %5364 = vmatpush1.bf16.msra.mxu0 %v5175
    %5365 = vmatprep.subr.bf16.mxu0 %v5172
    %5366 = vmatpush1.bf16.msra.mxu0 %v5171
    %5367 = vmatprep.subr.bf16.mxu0 %v5168
    %5368 = vmatpush1.bf16.msra.mxu0 %v5167
    %5369 = vmatprep.subr.bf16.mxu0 %v5164
    %5370 = vmatpush1.bf16.msra.mxu0 %v5163
    %5371 = vmatprep.subr.bf16.mxu0 %v5224
    %5372 = vmatpush2.bf16.msra.mxu0 %v5223
    %5373 = vmatprep.subr.bf16.mxu0 %v5220
    %5374 = vmatpush2.bf16.msra.mxu0 %v5219
    %5375 = vmatprep.subr.bf16.mxu0 %v5216
    %5376 = vmatpush2.bf16.msra.mxu0 %v5215
    %5377 = vmatprep.subr.bf16.mxu0 %v5212
    %5378 = vmatpush2.bf16.msra.mxu0 %v5211
    %5379 = vmatprep.subr.bf16.mxu0 %v5208
    %5380 = vmatpush2.bf16.msra.mxu0 %v5207
    %5381 = vmatprep.subr.bf16.mxu0 %v5204
    %5382 = vmatpush2.bf16.msra.mxu0 %v5203
    %5383 = vmatprep.subr.bf16.mxu0 %v5200
    %5384 = vmatpush2.bf16.msra.mxu0 %v5199
    %5385 = vmatprep.subr.bf16.mxu0 %v5196
    %5386 = vmatpush2.bf16.msra.mxu0 %v5195
    %5387 = vmatprep.mubr.bf16.mxu0 %v4777
    %5388 = vmatmul.mubr.bf16.gmra.mxu0 %v4776
    %v5389 = vpop.f32.mrf.mxu0
    %v5390 = vadd.f32 0.0, %v5389
    %v5391 = vpop.f32.mrf.mxu0
    %v5392 = vadd.f32 0.0, %v5391
    %v5393 = vpop.f32.mrf.mxu0
    %v5394 = vpop.f32.mrf.mxu0
    %5395 = vdwg.mxu0
    %5396 = vmatprep.subr.bf16.mxu0 %v5256
    %5397 = vmatpush1.bf16.msra.mxu0 %v5255
    %5398 = vmatprep.subr.bf16.mxu0 %v5252
    %5399 = vmatpush1.bf16.msra.mxu0 %v5251
    %5400 = vmatprep.subr.bf16.mxu0 %v5248
    %5401 = vmatpush1.bf16.msra.mxu0 %v5247
    %5402 = vmatprep.subr.bf16.mxu0 %v5244
    %5403 = vmatpush1.bf16.msra.mxu0 %v5243
    %5404 = vmatprep.subr.bf16.mxu0 %v5240
    %5405 = vmatpush1.bf16.msra.mxu0 %v5239
    %5406 = vmatprep.subr.bf16.mxu0 %v5236
    %5407 = vmatpush1.bf16.msra.mxu0 %v5235
    %5408 = vmatprep.subr.bf16.mxu0 %v5232
    %5409 = vmatpush1.bf16.msra.mxu0 %v5231
    %5410 = vmatprep.subr.bf16.mxu0 %v5228
    %5411 = vmatpush1.bf16.msra.mxu0 %v5227
    %5412 = vmatprep.subr.bf16.mxu0 0
    %5413 = vmatpush2.bf16.msra.mxu0 0
    %5414 = vmatprep.subr.bf16.mxu0 0
    %5415 = vmatpush2.bf16.msra.mxu0 0
    %5416 = vmatprep.subr.bf16.mxu0 0
    %5417 = vmatpush2.bf16.msra.mxu0 0
    %5418 = vmatprep.subr.bf16.mxu0 0
    %5419 = vmatpush2.bf16.msra.mxu0 0
    %5420 = vmatprep.subr.bf16.mxu0 0
    %5421 = vmatpush2.bf16.msra.mxu0 0
    %5422 = vmatprep.subr.bf16.mxu0 0
    %5423 = vmatpush2.bf16.msra.mxu0 0
    %5424 = vmatprep.subr.bf16.mxu0 0
    %5425 = vmatpush2.bf16.msra.mxu0 0
    %5426 = vmatprep.subr.bf16.mxu0 0
    %5427 = vmatpush2.bf16.msra.mxu0 0
    %5428 = vmatprep.mubr.bf16.mxu0 0
    %5429 = vmatmul.mubr.bf16.gmra.mxu0 %v4778
    %v5430 = vpop.f32.mrf.mxu0
    %v5431 = vadd.f32 %v5390, %v5430
    %v5432 = vpop.f32.mrf.mxu0
    %v5433 = vadd.f32 %v5392, %v5432
    %v5434 = vpop.f32.mrf.mxu0
    %v5435 = vpop.f32.mrf.mxu0
    %5436 = vdwg.mxu0
    %5437 = vmatprep.subr.bf16.mxu0 %v5194
    %5438 = vmatpush1.bf16.msra.mxu0 %v5193
    %5439 = vmatprep.subr.bf16.mxu0 %v5190
    %5440 = vmatpush1.bf16.msra.mxu0 %v5189
    %5441 = vmatprep.subr.bf16.mxu0 %v5186
    %5442 = vmatpush1.bf16.msra.mxu0 %v5185
    %5443 = vmatprep.subr.bf16.mxu0 %v5182
    %5444 = vmatpush1.bf16.msra.mxu0 %v5181
    %5445 = vmatprep.subr.bf16.mxu0 %v5178
    %5446 = vmatpush1.bf16.msra.mxu0 %v5177
    %5447 = vmatprep.subr.bf16.mxu0 %v5174
    %5448 = vmatpush1.bf16.msra.mxu0 %v5173
    %5449 = vmatprep.subr.bf16.mxu0 %v5170
    %5450 = vmatpush1.bf16.msra.mxu0 %v5169
    %5451 = vmatprep.subr.bf16.mxu0 %v5166
    %5452 = vmatpush1.bf16.msra.mxu0 %v5165
    %5453 = vmatprep.subr.bf16.mxu0 %v5226
    %5454 = vmatpush2.bf16.msra.mxu0 %v5225
    %5455 = vmatprep.subr.bf16.mxu0 %v5222
    %5456 = vmatpush2.bf16.msra.mxu0 %v5221
    %5457 = vmatprep.subr.bf16.mxu0 %v5218
    %5458 = vmatpush2.bf16.msra.mxu0 %v5217
    %5459 = vmatprep.subr.bf16.mxu0 %v5214
    %5460 = vmatpush2.bf16.msra.mxu0 %v5213
    %5461 = vmatprep.subr.bf16.mxu0 %v5210
    %5462 = vmatpush2.bf16.msra.mxu0 %v5209
    %5463 = vmatprep.subr.bf16.mxu0 %v5206
    %5464 = vmatpush2.bf16.msra.mxu0 %v5205
    %5465 = vmatprep.subr.bf16.mxu0 %v5202
    %5466 = vmatpush2.bf16.msra.mxu0 %v5201
    %5467 = vmatprep.subr.bf16.mxu0 %v5198
    %5468 = vmatpush2.bf16.msra.mxu0 %v5197
    %5469 = vmatprep.mubr.bf16.mxu0 %v4777
    %5470 = vmatmul.mubr.bf16.gmra.mxu0 %v4776
    %v5471 = vpop.f32.mrf.mxu0
    %v5472 = vadd.f32 0.0, %v5471
    %v5473 = vpop.f32.mrf.mxu0
    %v5474 = vadd.f32 0.0, %v5473
    %v5475 = vpop.f32.mrf.mxu0
    %v5476 = vpop.f32.mrf.mxu0
    %5477 = vdwg.mxu0
    %5478 = vmatprep.subr.bf16.mxu0 %v5258
    %5479 = vmatpush1.bf16.msra.mxu0 %v5257
    %5480 = vmatprep.subr.bf16.mxu0 %v5254
    %5481 = vmatpush1.bf16.msra.mxu0 %v5253
    %5482 = vmatprep.subr.bf16.mxu0 %v5250
    %5483 = vmatpush1.bf16.msra.mxu0 %v5249
    %5484 = vmatprep.subr.bf16.mxu0 %v5246
    %5485 = vmatpush1.bf16.msra.mxu0 %v5245
    %5486 = vmatprep.subr.bf16.mxu0 %v5242
    %5487 = vmatpush1.bf16.msra.mxu0 %v5241
    %5488 = vmatprep.subr.bf16.mxu0 %v5238
    %5489 = vmatpush1.bf16.msra.mxu0 %v5237
    %5490 = vmatprep.subr.bf16.mxu0 %v5234
    %5491 = vmatpush1.bf16.msra.mxu0 %v5233
    %5492 = vmatprep.subr.bf16.mxu0 %v5230
    %5493 = vmatpush1.bf16.msra.mxu0 %v5229
    %5494 = vmatprep.subr.bf16.mxu0 0
    %5495 = vmatpush2.bf16.msra.mxu0 0
    %5496 = vmatprep.subr.bf16.mxu0 0
    %5497 = vmatpush2.bf16.msra.mxu0 0
    %5498 = vmatprep.subr.bf16.mxu0 0
    %5499 = vmatpush2.bf16.msra.mxu0 0
    %5500 = vmatprep.subr.bf16.mxu0 0
    %5501 = vmatpush2.bf16.msra.mxu0 0
    %5502 = vmatprep.subr.bf16.mxu0 0
    %5503 = vmatpush2.bf16.msra.mxu0 0
    %5504 = vmatprep.subr.bf16.mxu0 0
    %5505 = vmatpush2.bf16.msra.mxu0 0
    %5506 = vmatprep.subr.bf16.mxu0 0
    %5507 = vmatpush2.bf16.msra.mxu0 0
    %5508 = vmatprep.subr.bf16.mxu0 0
    %5509 = vmatpush2.bf16.msra.mxu0 0
    %5510 = vmatprep.mubr.bf16.mxu0 0
    %5511 = vmatmul.mubr.bf16.gmra.mxu0 %v4778
    %v5512 = vpop.f32.mrf.mxu0
    %v5513 = vadd.f32 %v5472, %v5512
    %v5514 = vpop.f32.mrf.mxu0
    %v5515 = vadd.f32 %v5474, %v5514
    %v5516 = vpop.f32.mrf.mxu0
    %v5517 = vpop.f32.mrf.mxu0
    %5518 = vdwg.mxu0
    %v5523 = vcombine.low %v5431, %v5433
    %v5524 = vcombine.low %v5513, %v5515
    %v5526 = vunpack.c.l.s4 1983009808
    %v5527 = vunpack.c.0.s8 %v5526
    %v5528 = vlaneseq
    %v5529 = vshrl.u32 %v5528, 7
    %v5530 = vsub.s32 %v5527, %v5529
    %v5531 = vrot.slane %v5523, %v5530
    %v5533 = vunpack.c.l.s4 1983009808
    %v5534 = vunpack.c.0.s8 %v5533
    %v5535 = vlaneseq
    %v5536 = vshrl.u32 %v5535, 7
    %v5537 = vsub.s32 %v5534, %v5536
    %v5538 = vrot.slane %v5524, %v5537
    %v5539 = vcombine.low %v5531, %v5538
    %v5541 = vadd.f32 %v4754, %v5539
    %5542 = vst [vmem:[#allocation4] sm:$0xff] %v5541
    %s5543 = sshll.u32 %s1587, 4
    %5544 = dma.done %s192, %s5543
    %v5545 = vld [vmem:[#allocation4] sm:$0xff]
    %v5546 = vld [vmem:[#allocation3 + $0x1e] sm:$0x3f]
    %v5548 = vcombine.high %v5546, %v5546
    %v5550 = vunpack.c.l.s4 1983009808
    %v5551 = vunpack.c.0.s8 %v5550
    %v5552 = vlaneseq
    %v5553 = vshrl.u32 %v5552, 7
    %v5554 = vsub.s32 %v5551, %v5553
    %v5555 = vrot.slane %v5546, %v5554
    %v5557 = vunpack.c.l.s4 1983009808
    %v5558 = vunpack.c.0.s8 %v5557
    %v5559 = vlaneseq
    %v5560 = vshrl.u32 %v5559, 7
    %v5561 = vsub.s32 %v5558, %v5560
    %v5562 = vrot.slane %v5548, %v5561
    %v5563 = vcombine.high %v5555, %v5555
    %v5567 = vpack.c.bf16 %v5555, %v5555
    %v5568 = vpack.c.bf16 %v5563, %v5563
    %v5569 = vpack.c.bf16 %v5562, %v5562
    %v5570 = vld [vmem:[#allocation5 + $0xf00] sm:$0xff]
    %v5571 = vld [vmem:[#allocation5 + $0xf08] sm:$0xff]
    %v5572 = vld [vmem:[#allocation5 + $0xf10] sm:$0xff]
    %v5573 = vld [vmem:[#allocation5 + $0xf18] sm:$0xff]
    %v5574 = vld [vmem:[#allocation5 + $0xf20] sm:$0xff]
    %v5575 = vld [vmem:[#allocation5 + $0xf28] sm:$0xff]
    %v5576 = vld [vmem:[#allocation5 + $0xf30] sm:$0xff]
    %v5577 = vld [vmem:[#allocation5 + $0xf38] sm:$0xff]
    %v5578 = vld [vmem:[#allocation5 + $0xf40] sm:$0xff]
    %v5579 = vld [vmem:[#allocation5 + $0xf48] sm:$0xff]
    %v5580 = vld [vmem:[#allocation5 + $0xf50] sm:$0xff]
    %v5581 = vld [vmem:[#allocation5 + $0xf58] sm:$0xff]
    %v5582 = vld [vmem:[#allocation5 + $0xf60] sm:$0xff]
    %v5583 = vld [vmem:[#allocation5 + $0xf68] sm:$0xff]
    %v5584 = vld [vmem:[#allocation5 + $0xf70] sm:$0xff]
    %v5585 = vld [vmem:[#allocation5 + $0xf78] sm:$0xff]
    %v5586 = vld [vmem:[#allocation5 + $0xf80] sm:$0xff]
    %v5587 = vld [vmem:[#allocation5 + $0xf88] sm:$0xff]
    %v5588 = vld [vmem:[#allocation5 + $0xf90] sm:$0xff]
    %v5589 = vld [vmem:[#allocation5 + $0xf98] sm:$0xff]
    %v5590 = vld [vmem:[#allocation5 + $0xfa0] sm:$0xff]
    %v5591 = vld [vmem:[#allocation5 + $0xfa8] sm:$0xff]
    %v5592 = vld [vmem:[#allocation5 + $0xfb0] sm:$0xff]
    %v5593 = vld [vmem:[#allocation5 + $0xfb8] sm:$0xff]
    %v5594 = vld [vmem:[#allocation5 + $0xfc0] sm:$0xff]
    %v5595 = vld [vmem:[#allocation5 + $0xfc8] sm:$0xff]
    %v5596 = vld [vmem:[#allocation5 + $0xfd0] sm:$0xff]
    %v5597 = vld [vmem:[#allocation5 + $0xfd8] sm:$0xff]
    %v5598 = vld [vmem:[#allocation5 + $0xfe0] sm:$0xff]
    %v5599 = vld [vmem:[#allocation5 + $0xfe8] sm:$0xff]
    %v5600 = vld [vmem:[#allocation5 + $0xff0] sm:$0xff]
    %v5601 = vld [vmem:[#allocation5 + $0xff8] sm:$0xff]
    %v5602 = vld [vmem:[#allocation5 + $0x1000] sm:$0xff]
    %v5603 = vld [vmem:[#allocation5 + $0x1008] sm:$0xff]
    %v5604 = vld [vmem:[#allocation5 + $0x1010] sm:$0xff]
    %v5605 = vld [vmem:[#allocation5 + $0x1018] sm:$0xff]
    %v5606 = vld [vmem:[#allocation5 + $0x1020] sm:$0xff]
    %v5607 = vld [vmem:[#allocation5 + $0x1028] sm:$0xff]
    %v5608 = vld [vmem:[#allocation5 + $0x1030] sm:$0xff]
    %v5609 = vld [vmem:[#allocation5 + $0x1038] sm:$0xff]
    %v5610 = vld [vmem:[#allocation5 + $0x1040] sm:$0xff]
    %v5611 = vld [vmem:[#allocation5 + $0x1048] sm:$0xff]
    %v5612 = vld [vmem:[#allocation5 + $0x1050] sm:$0xff]
    %v5613 = vld [vmem:[#allocation5 + $0x1058] sm:$0xff]
    %v5614 = vld [vmem:[#allocation5 + $0x1060] sm:$0xff]
    %v5615 = vld [vmem:[#allocation5 + $0x1068] sm:$0xff]
    %v5616 = vld [vmem:[#allocation5 + $0x1070] sm:$0xff]
    %v5617 = vld [vmem:[#allocation5 + $0x1078] sm:$0xff]
    %v5618 = vld [vmem:[#allocation5 + $0x1080] sm:$0xff]
    %v5619 = vld [vmem:[#allocation5 + $0x1088] sm:$0xff]
    %v5620 = vld [vmem:[#allocation5 + $0x1090] sm:$0xff]
    %v5621 = vld [vmem:[#allocation5 + $0x1098] sm:$0xff]
    %v5622 = vld [vmem:[#allocation5 + $0x10a0] sm:$0xff]
    %v5623 = vld [vmem:[#allocation5 + $0x10a8] sm:$0xff]
    %v5624 = vld [vmem:[#allocation5 + $0x10b0] sm:$0xff]
    %v5625 = vld [vmem:[#allocation5 + $0x10b8] sm:$0xff]
    %v5626 = vld [vmem:[#allocation5 + $0x10c0] sm:$0xff]
    %v5627 = vld [vmem:[#allocation5 + $0x10c8] sm:$0xff]
    %v5628 = vld [vmem:[#allocation5 + $0x10d0] sm:$0xff]
    %v5629 = vld [vmem:[#allocation5 + $0x10d8] sm:$0xff]
    %v5630 = vld [vmem:[#allocation5 + $0x10e0] sm:$0xff]
    %v5631 = vld [vmem:[#allocation5 + $0x10e8] sm:$0xff]
    %v5632 = vld [vmem:[#allocation5 + $0x10f0] sm:$0xff]
    %v5633 = vld [vmem:[#allocation5 + $0x10f8] sm:$0xff]
    %v5634 = vld [vmem:[#allocation5 + $0x1100] sm:$0xff]
    %v5635 = vld [vmem:[#allocation5 + $0x1108] sm:$0xff]
    %v5636 = vld [vmem:[#allocation5 + $0x1110] sm:$0xff]
    %v5637 = vld [vmem:[#allocation5 + $0x1118] sm:$0xff]
    %v5638 = vld [vmem:[#allocation5 + $0x1120] sm:$0xff]
    %v5639 = vld [vmem:[#allocation5 + $0x1128] sm:$0xff]
    %v5640 = vld [vmem:[#allocation5 + $0x1130] sm:$0xff]
    %v5641 = vld [vmem:[#allocation5 + $0x1138] sm:$0xff]
    %v5642 = vld [vmem:[#allocation5 + $0x1140] sm:$0xff]
    %v5643 = vld [vmem:[#allocation5 + $0x1148] sm:$0xff]
    %v5644 = vld [vmem:[#allocation5 + $0x1150] sm:$0xff]
    %v5645 = vld [vmem:[#allocation5 + $0x1158] sm:$0xff]
    %v5646 = vld [vmem:[#allocation5 + $0x1160] sm:$0xff]
    %v5647 = vld [vmem:[#allocation5 + $0x1168] sm:$0xff]
    %v5648 = vld [vmem:[#allocation5 + $0x1170] sm:$0xff]
    %v5649 = vld [vmem:[#allocation5 + $0x1178] sm:$0xff]
    %v5650 = vld [vmem:[#allocation5 + $0x1180] sm:$0xff]
    %v5651 = vld [vmem:[#allocation5 + $0x1188] sm:$0xff]
    %v5652 = vld [vmem:[#allocation5 + $0x1190] sm:$0xff]
    %v5653 = vld [vmem:[#allocation5 + $0x1198] sm:$0xff]
    %v5654 = vld [vmem:[#allocation5 + $0x11a0] sm:$0xff]
    %v5655 = vld [vmem:[#allocation5 + $0x11a8] sm:$0xff]
    %v5656 = vld [vmem:[#allocation5 + $0x11b0] sm:$0xff]
    %v5657 = vld [vmem:[#allocation5 + $0x11b8] sm:$0xff]
    %v5658 = vld [vmem:[#allocation5 + $0x11c0] sm:$0xff]
    %v5659 = vld [vmem:[#allocation5 + $0x11c8] sm:$0xff]
    %v5660 = vld [vmem:[#allocation5 + $0x11d0] sm:$0xff]
    %v5661 = vld [vmem:[#allocation5 + $0x11d8] sm:$0xff]
    %v5662 = vld [vmem:[#allocation5 + $0x11e0] sm:$0xff]
    %v5663 = vld [vmem:[#allocation5 + $0x11e8] sm:$0xff]
    %v5664 = vld [vmem:[#allocation5 + $0x11f0] sm:$0xff]
    %v5665 = vld [vmem:[#allocation5 + $0x11f8] sm:$0xff]
    %v5762 = vunpack.c.l.b16 %v5570
    %v5763 = vunpack.c.h.b16 %v5570
    %v5764 = vunpack.c.l.b16 %v5571
    %v5765 = vunpack.c.h.b16 %v5571
    %v5766 = vunpack.c.l.b16 %v5572
    %v5767 = vunpack.c.h.b16 %v5572
    %v5768 = vunpack.c.l.b16 %v5573
    %v5769 = vunpack.c.h.b16 %v5573
    %v5770 = vunpack.c.l.b16 %v5574
    %v5771 = vunpack.c.h.b16 %v5574
    %v5772 = vunpack.c.l.b16 %v5575
    %v5773 = vunpack.c.h.b16 %v5575
    %v5774 = vunpack.c.l.b16 %v5576
    %v5775 = vunpack.c.h.b16 %v5576
    %v5776 = vunpack.c.l.b16 %v5577
    %v5777 = vunpack.c.h.b16 %v5577
    %v5778 = vunpack.c.l.b16 %v5578
    %v5779 = vunpack.c.h.b16 %v5578
    %v5780 = vunpack.c.l.b16 %v5579
    %v5781 = vunpack.c.h.b16 %v5579
    %v5782 = vunpack.c.l.b16 %v5580
    %v5783 = vunpack.c.h.b16 %v5580
    %v5784 = vunpack.c.l.b16 %v5581
    %v5785 = vunpack.c.h.b16 %v5581
    %v5786 = vunpack.c.l.b16 %v5582
    %v5787 = vunpack.c.h.b16 %v5582
    %v5788 = vunpack.c.l.b16 %v5583
    %v5789 = vunpack.c.h.b16 %v5583
    %v5790 = vunpack.c.l.b16 %v5584
    %v5791 = vunpack.c.h.b16 %v5584
    %v5792 = vunpack.c.l.b16 %v5585
    %v5793 = vunpack.c.h.b16 %v5585
    %v5794 = vunpack.c.l.b16 %v5586
    %v5795 = vunpack.c.h.b16 %v5586
    %v5796 = vunpack.c.l.b16 %v5587
    %v5797 = vunpack.c.h.b16 %v5587
    %v5798 = vunpack.c.l.b16 %v5588
    %v5799 = vunpack.c.h.b16 %v5588
    %v5800 = vunpack.c.l.b16 %v5589
    %v5801 = vunpack.c.h.b16 %v5589
    %v5802 = vunpack.c.l.b16 %v5590
    %v5803 = vunpack.c.h.b16 %v5590
    %v5804 = vunpack.c.l.b16 %v5591
    %v5805 = vunpack.c.h.b16 %v5591
    %v5806 = vunpack.c.l.b16 %v5592
    %v5807 = vunpack.c.h.b16 %v5592
    %v5808 = vunpack.c.l.b16 %v5593
    %v5809 = vunpack.c.h.b16 %v5593
    %v5810 = vunpack.c.l.b16 %v5594
    %v5811 = vunpack.c.h.b16 %v5594
    %v5812 = vunpack.c.l.b16 %v5595
    %v5813 = vunpack.c.h.b16 %v5595
    %v5814 = vunpack.c.l.b16 %v5596
    %v5815 = vunpack.c.h.b16 %v5596
    %v5816 = vunpack.c.l.b16 %v5597
    %v5817 = vunpack.c.h.b16 %v5597
    %v5818 = vunpack.c.l.b16 %v5598
    %v5819 = vunpack.c.h.b16 %v5598
    %v5820 = vunpack.c.l.b16 %v5599
    %v5821 = vunpack.c.h.b16 %v5599
    %v5822 = vunpack.c.l.b16 %v5600
    %v5823 = vunpack.c.h.b16 %v5600
    %v5824 = vunpack.c.l.b16 %v5601
    %v5825 = vunpack.c.h.b16 %v5601
    %v5826 = vunpack.c.l.b16 %v5602
    %v5827 = vunpack.c.h.b16 %v5602
    %v5828 = vunpack.c.l.b16 %v5603
    %v5829 = vunpack.c.h.b16 %v5603
    %v5830 = vunpack.c.l.b16 %v5604
    %v5831 = vunpack.c.h.b16 %v5604
    %v5832 = vunpack.c.l.b16 %v5605
    %v5833 = vunpack.c.h.b16 %v5605
    %v5834 = vunpack.c.l.b16 %v5606
    %v5835 = vunpack.c.h.b16 %v5606
    %v5836 = vunpack.c.l.b16 %v5607
    %v5837 = vunpack.c.h.b16 %v5607
    %v5838 = vunpack.c.l.b16 %v5608
    %v5839 = vunpack.c.h.b16 %v5608
    %v5840 = vunpack.c.l.b16 %v5609
    %v5841 = vunpack.c.h.b16 %v5609
    %v5842 = vunpack.c.l.b16 %v5610
    %v5843 = vunpack.c.h.b16 %v5610
    %v5844 = vunpack.c.l.b16 %v5611
    %v5845 = vunpack.c.h.b16 %v5611
    %v5846 = vunpack.c.l.b16 %v5612
    %v5847 = vunpack.c.h.b16 %v5612
    %v5848 = vunpack.c.l.b16 %v5613
    %v5849 = vunpack.c.h.b16 %v5613
    %v5850 = vunpack.c.l.b16 %v5614
    %v5851 = vunpack.c.h.b16 %v5614
    %v5852 = vunpack.c.l.b16 %v5615
    %v5853 = vunpack.c.h.b16 %v5615
    %v5854 = vunpack.c.l.b16 %v5616
    %v5855 = vunpack.c.h.b16 %v5616
    %v5856 = vunpack.c.l.b16 %v5617
    %v5857 = vunpack.c.h.b16 %v5617
    %v5858 = vunpack.c.l.b16 %v5618
    %v5859 = vunpack.c.h.b16 %v5618
    %v5860 = vunpack.c.l.b16 %v5619
    %v5861 = vunpack.c.h.b16 %v5619
    %v5862 = vunpack.c.l.b16 %v5620
    %v5863 = vunpack.c.h.b16 %v5620
    %v5864 = vunpack.c.l.b16 %v5621
    %v5865 = vunpack.c.h.b16 %v5621
    %v5866 = vunpack.c.l.b16 %v5622
    %v5867 = vunpack.c.h.b16 %v5622
    %v5868 = vunpack.c.l.b16 %v5623
    %v5869 = vunpack.c.h.b16 %v5623
    %v5870 = vunpack.c.l.b16 %v5624
    %v5871 = vunpack.c.h.b16 %v5624
    %v5872 = vunpack.c.l.b16 %v5625
    %v5873 = vunpack.c.h.b16 %v5625
    %v5874 = vunpack.c.l.b16 %v5626
    %v5875 = vunpack.c.h.b16 %v5626
    %v5876 = vunpack.c.l.b16 %v5627
    %v5877 = vunpack.c.h.b16 %v5627
    %v5878 = vunpack.c.l.b16 %v5628
    %v5879 = vunpack.c.h.b16 %v5628
    %v5880 = vunpack.c.l.b16 %v5629
    %v5881 = vunpack.c.h.b16 %v5629
    %v5882 = vunpack.c.l.b16 %v5630
    %v5883 = vunpack.c.h.b16 %v5630
    %v5884 = vunpack.c.l.b16 %v5631
    %v5885 = vunpack.c.h.b16 %v5631
    %v5886 = vunpack.c.l.b16 %v5632
    %v5887 = vunpack.c.h.b16 %v5632
    %v5888 = vunpack.c.l.b16 %v5633
    %v5889 = vunpack.c.h.b16 %v5633
    %v5890 = vunpack.c.l.b16 %v5634
    %v5891 = vunpack.c.h.b16 %v5634
    %v5892 = vunpack.c.l.b16 %v5635
    %v5893 = vunpack.c.h.b16 %v5635
    %v5894 = vunpack.c.l.b16 %v5636
    %v5895 = vunpack.c.h.b16 %v5636
    %v5896 = vunpack.c.l.b16 %v5637
    %v5897 = vunpack.c.h.b16 %v5637
    %v5898 = vunpack.c.l.b16 %v5638
    %v5899 = vunpack.c.h.b16 %v5638
    %v5900 = vunpack.c.l.b16 %v5639
    %v5901 = vunpack.c.h.b16 %v5639
    %v5902 = vunpack.c.l.b16 %v5640
    %v5903 = vunpack.c.h.b16 %v5640
    %v5904 = vunpack.c.l.b16 %v5641
    %v5905 = vunpack.c.h.b16 %v5641
    %v5906 = vunpack.c.l.b16 %v5642
    %v5907 = vunpack.c.h.b16 %v5642
    %v5908 = vunpack.c.l.b16 %v5643
    %v5909 = vunpack.c.h.b16 %v5643
    %v5910 = vunpack.c.l.b16 %v5644
    %v5911 = vunpack.c.h.b16 %v5644
    %v5912 = vunpack.c.l.b16 %v5645
    %v5913 = vunpack.c.h.b16 %v5645
    %v5914 = vunpack.c.l.b16 %v5646
    %v5915 = vunpack.c.h.b16 %v5646
    %v5916 = vunpack.c.l.b16 %v5647
    %v5917 = vunpack.c.h.b16 %v5647
    %v5918 = vunpack.c.l.b16 %v5648
    %v5919 = vunpack.c.h.b16 %v5648
    %v5920 = vunpack.c.l.b16 %v5649
    %v5921 = vunpack.c.h.b16 %v5649
    %v5922 = vunpack.c.l.b16 %v5650
    %v5923 = vunpack.c.h.b16 %v5650
    %v5924 = vunpack.c.l.b16 %v5651
    %v5925 = vunpack.c.h.b16 %v5651
    %v5926 = vunpack.c.l.b16 %v5652
    %v5927 = vunpack.c.h.b16 %v5652
    %v5928 = vunpack.c.l.b16 %v5653
    %v5929 = vunpack.c.h.b16 %v5653
    %v5930 = vunpack.c.l.b16 %v5654
    %v5931 = vunpack.c.h.b16 %v5654
    %v5932 = vunpack.c.l.b16 %v5655
    %v5933 = vunpack.c.h.b16 %v5655
    %v5934 = vunpack.c.l.b16 %v5656
    %v5935 = vunpack.c.h.b16 %v5656
    %v5936 = vunpack.c.l.b16 %v5657
    %v5937 = vunpack.c.h.b16 %v5657
    %v5938 = vunpack.c.l.b16 %v5658
    %v5939 = vunpack.c.h.b16 %v5658
    %v5940 = vunpack.c.l.b16 %v5659
    %v5941 = vunpack.c.h.b16 %v5659
    %v5942 = vunpack.c.l.b16 %v5660
    %v5943 = vunpack.c.h.b16 %v5660
    %v5944 = vunpack.c.l.b16 %v5661
    %v5945 = vunpack.c.h.b16 %v5661
    %v5946 = vunpack.c.l.b16 %v5662
    %v5947 = vunpack.c.h.b16 %v5662
    %v5948 = vunpack.c.l.b16 %v5663
    %v5949 = vunpack.c.h.b16 %v5663
    %v5950 = vunpack.c.l.b16 %v5664
    %v5951 = vunpack.c.h.b16 %v5664
    %v5952 = vunpack.c.l.b16 %v5665
    %v5953 = vunpack.c.h.b16 %v5665
    %v5954 = vpack.c.b16 %v5766, %v5762
    %v5955 = vpack.c.b16 %v5767, %v5763
    %v5956 = vpack.c.b16 %v5768, %v5764
    %v5957 = vpack.c.b16 %v5769, %v5765
    %v5958 = vpack.c.b16 %v5774, %v5770
    %v5959 = vpack.c.b16 %v5775, %v5771
    %v5960 = vpack.c.b16 %v5776, %v5772
    %v5961 = vpack.c.b16 %v5777, %v5773
    %v5962 = vpack.c.b16 %v5782, %v5778
    %v5963 = vpack.c.b16 %v5783, %v5779
    %v5964 = vpack.c.b16 %v5784, %v5780
    %v5965 = vpack.c.b16 %v5785, %v5781
    %v5966 = vpack.c.b16 %v5790, %v5786
    %v5967 = vpack.c.b16 %v5791, %v5787
    %v5968 = vpack.c.b16 %v5792, %v5788
    %v5969 = vpack.c.b16 %v5793, %v5789
    %v5970 = vpack.c.b16 %v5798, %v5794
    %v5971 = vpack.c.b16 %v5799, %v5795
    %v5972 = vpack.c.b16 %v5800, %v5796
    %v5973 = vpack.c.b16 %v5801, %v5797
    %v5974 = vpack.c.b16 %v5806, %v5802
    %v5975 = vpack.c.b16 %v5807, %v5803
    %v5976 = vpack.c.b16 %v5808, %v5804
    %v5977 = vpack.c.b16 %v5809, %v5805
    %v5978 = vpack.c.b16 %v5814, %v5810
    %v5979 = vpack.c.b16 %v5815, %v5811
    %v5980 = vpack.c.b16 %v5816, %v5812
    %v5981 = vpack.c.b16 %v5817, %v5813
    %v5982 = vpack.c.b16 %v5822, %v5818
    %v5983 = vpack.c.b16 %v5823, %v5819
    %v5984 = vpack.c.b16 %v5824, %v5820
    %v5985 = vpack.c.b16 %v5825, %v5821
    %v5986 = vpack.c.b16 %v5830, %v5826
    %v5987 = vpack.c.b16 %v5831, %v5827
    %v5988 = vpack.c.b16 %v5832, %v5828
    %v5989 = vpack.c.b16 %v5833, %v5829
    %v5990 = vpack.c.b16 %v5838, %v5834
    %v5991 = vpack.c.b16 %v5839, %v5835
    %v5992 = vpack.c.b16 %v5840, %v5836
    %v5993 = vpack.c.b16 %v5841, %v5837
    %v5994 = vpack.c.b16 %v5846, %v5842
    %v5995 = vpack.c.b16 %v5847, %v5843
    %v5996 = vpack.c.b16 %v5848, %v5844
    %v5997 = vpack.c.b16 %v5849, %v5845
    %v5998 = vpack.c.b16 %v5854, %v5850
    %v5999 = vpack.c.b16 %v5855, %v5851
    %v6000 = vpack.c.b16 %v5856, %v5852
    %v6001 = vpack.c.b16 %v5857, %v5853
    %v6002 = vpack.c.b16 %v5862, %v5858
    %v6003 = vpack.c.b16 %v5863, %v5859
    %v6004 = vpack.c.b16 %v5864, %v5860
    %v6005 = vpack.c.b16 %v5865, %v5861
    %v6006 = vpack.c.b16 %v5870, %v5866
    %v6007 = vpack.c.b16 %v5871, %v5867
    %v6008 = vpack.c.b16 %v5872, %v5868
    %v6009 = vpack.c.b16 %v5873, %v5869
    %v6010 = vpack.c.b16 %v5878, %v5874
    %v6011 = vpack.c.b16 %v5879, %v5875
    %v6012 = vpack.c.b16 %v5880, %v5876
    %v6013 = vpack.c.b16 %v5881, %v5877
    %v6014 = vpack.c.b16 %v5886, %v5882
    %v6015 = vpack.c.b16 %v5887, %v5883
    %v6016 = vpack.c.b16 %v5888, %v5884
    %v6017 = vpack.c.b16 %v5889, %v5885
    %v6018 = vpack.c.b16 %v5894, %v5890
    %v6019 = vpack.c.b16 %v5895, %v5891
    %v6020 = vpack.c.b16 %v5896, %v5892
    %v6021 = vpack.c.b16 %v5897, %v5893
    %v6022 = vpack.c.b16 %v5902, %v5898
    %v6023 = vpack.c.b16 %v5903, %v5899
    %v6024 = vpack.c.b16 %v5904, %v5900
    %v6025 = vpack.c.b16 %v5905, %v5901
    %v6026 = vpack.c.b16 %v5910, %v5906
    %v6027 = vpack.c.b16 %v5911, %v5907
    %v6028 = vpack.c.b16 %v5912, %v5908
    %v6029 = vpack.c.b16 %v5913, %v5909
    %v6030 = vpack.c.b16 %v5918, %v5914
    %v6031 = vpack.c.b16 %v5919, %v5915
    %v6032 = vpack.c.b16 %v5920, %v5916
    %v6033 = vpack.c.b16 %v5921, %v5917
    %v6034 = vpack.c.b16 %v5926, %v5922
    %v6035 = vpack.c.b16 %v5927, %v5923
    %v6036 = vpack.c.b16 %v5928, %v5924
    %v6037 = vpack.c.b16 %v5929, %v5925
    %v6038 = vpack.c.b16 %v5934, %v5930
    %v6039 = vpack.c.b16 %v5935, %v5931
    %v6040 = vpack.c.b16 %v5936, %v5932
    %v6041 = vpack.c.b16 %v5937, %v5933
    %v6042 = vpack.c.b16 %v5942, %v5938
    %v6043 = vpack.c.b16 %v5943, %v5939
    %v6044 = vpack.c.b16 %v5944, %v5940
    %v6045 = vpack.c.b16 %v5945, %v5941
    %v6046 = vpack.c.b16 %v5950, %v5946
    %v6047 = vpack.c.b16 %v5951, %v5947
    %v6048 = vpack.c.b16 %v5952, %v5948
    %v6049 = vpack.c.b16 %v5953, %v5949
    %6146 = vmatprep.subr.bf16.mxu0 %v5983
    %6147 = vmatpush1.bf16.msra.mxu0 %v5982
    %6148 = vmatprep.subr.bf16.mxu0 %v5979
    %6149 = vmatpush1.bf16.msra.mxu0 %v5978
    %6150 = vmatprep.subr.bf16.mxu0 %v5975
    %6151 = vmatpush1.bf16.msra.mxu0 %v5974
    %6152 = vmatprep.subr.bf16.mxu0 %v5971
    %6153 = vmatpush1.bf16.msra.mxu0 %v5970
    %6154 = vmatprep.subr.bf16.mxu0 %v5967
    %6155 = vmatpush1.bf16.msra.mxu0 %v5966
    %6156 = vmatprep.subr.bf16.mxu0 %v5963
    %6157 = vmatpush1.bf16.msra.mxu0 %v5962
    %6158 = vmatprep.subr.bf16.mxu0 %v5959
    %6159 = vmatpush1.bf16.msra.mxu0 %v5958
    %6160 = vmatprep.subr.bf16.mxu0 %v5955
    %6161 = vmatpush1.bf16.msra.mxu0 %v5954
    %6162 = vmatprep.subr.bf16.mxu0 %v6015
    %6163 = vmatpush2.bf16.msra.mxu0 %v6014
    %6164 = vmatprep.subr.bf16.mxu0 %v6011
    %6165 = vmatpush2.bf16.msra.mxu0 %v6010
    %6166 = vmatprep.subr.bf16.mxu0 %v6007
    %6167 = vmatpush2.bf16.msra.mxu0 %v6006
    %6168 = vmatprep.subr.bf16.mxu0 %v6003
    %6169 = vmatpush2.bf16.msra.mxu0 %v6002
    %6170 = vmatprep.subr.bf16.mxu0 %v5999
    %6171 = vmatpush2.bf16.msra.mxu0 %v5998
    %6172 = vmatprep.subr.bf16.mxu0 %v5995
    %6173 = vmatpush2.bf16.msra.mxu0 %v5994
    %6174 = vmatprep.subr.bf16.mxu0 %v5991
    %6175 = vmatpush2.bf16.msra.mxu0 %v5990
    %6176 = vmatprep.subr.bf16.mxu0 %v5987
    %6177 = vmatpush2.bf16.msra.mxu0 %v5986
    %6178 = vmatprep.mubr.bf16.mxu0 %v5568
    %6179 = vmatmul.mubr.bf16.gmra.mxu0 %v5567
    %v6180 = vpop.f32.mrf.mxu0
    %v6181 = vadd.f32 0.0, %v6180
    %v6182 = vpop.f32.mrf.mxu0
    %v6183 = vadd.f32 0.0, %v6182
    %v6184 = vpop.f32.mrf.mxu0
    %v6185 = vpop.f32.mrf.mxu0
    %6186 = vdwg.mxu0
    %6187 = vmatprep.subr.bf16.mxu0 %v6047
    %6188 = vmatpush1.bf16.msra.mxu0 %v6046
    %6189 = vmatprep.subr.bf16.mxu0 %v6043
    %6190 = vmatpush1.bf16.msra.mxu0 %v6042
    %6191 = vmatprep.subr.bf16.mxu0 %v6039
    %6192 = vmatpush1.bf16.msra.mxu0 %v6038
    %6193 = vmatprep.subr.bf16.mxu0 %v6035
    %6194 = vmatpush1.bf16.msra.mxu0 %v6034
    %6195 = vmatprep.subr.bf16.mxu0 %v6031
    %6196 = vmatpush1.bf16.msra.mxu0 %v6030
    %6197 = vmatprep.subr.bf16.mxu0 %v6027
    %6198 = vmatpush1.bf16.msra.mxu0 %v6026
    %6199 = vmatprep.subr.bf16.mxu0 %v6023
    %6200 = vmatpush1.bf16.msra.mxu0 %v6022
    %6201 = vmatprep.subr.bf16.mxu0 %v6019
    %6202 = vmatpush1.bf16.msra.mxu0 %v6018
    %6203 = vmatprep.subr.bf16.mxu0 0
    %6204 = vmatpush2.bf16.msra.mxu0 0
    %6205 = vmatprep.subr.bf16.mxu0 0
    %6206 = vmatpush2.bf16.msra.mxu0 0
    %6207 = vmatprep.subr.bf16.mxu0 0
    %6208 = vmatpush2.bf16.msra.mxu0 0
    %6209 = vmatprep.subr.bf16.mxu0 0
    %6210 = vmatpush2.bf16.msra.mxu0 0
    %6211 = vmatprep.subr.bf16.mxu0 0
    %6212 = vmatpush2.bf16.msra.mxu0 0
    %6213 = vmatprep.subr.bf16.mxu0 0
    %6214 = vmatpush2.bf16.msra.mxu0 0
    %6215 = vmatprep.subr.bf16.mxu0 0
    %6216 = vmatpush2.bf16.msra.mxu0 0
    %6217 = vmatprep.subr.bf16.mxu0 0
    %6218 = vmatpush2.bf16.msra.mxu0 0
    %6219 = vmatprep.mubr.bf16.mxu0 0
    %6220 = vmatmul.mubr.bf16.gmra.mxu0 %v5569
    %v6221 = vpop.f32.mrf.mxu0
    %v6222 = vadd.f32 %v6181, %v6221
    %v6223 = vpop.f32.mrf.mxu0
    %v6224 = vadd.f32 %v6183, %v6223
    %v6225 = vpop.f32.mrf.mxu0
    %v6226 = vpop.f32.mrf.mxu0
    %6227 = vdwg.mxu0
    %6228 = vmatprep.subr.bf16.mxu0 %v5985
    %6229 = vmatpush1.bf16.msra.mxu0 %v5984
    %6230 = vmatprep.subr.bf16.mxu0 %v5981
    %6231 = vmatpush1.bf16.msra.mxu0 %v5980
    %6232 = vmatprep.subr.bf16.mxu0 %v5977
    %6233 = vmatpush1.bf16.msra.mxu0 %v5976
    %6234 = vmatprep.subr.bf16.mxu0 %v5973
    %6235 = vmatpush1.bf16.msra.mxu0 %v5972
    %6236 = vmatprep.subr.bf16.mxu0 %v5969
    %6237 = vmatpush1.bf16.msra.mxu0 %v5968
    %6238 = vmatprep.subr.bf16.mxu0 %v5965
    %6239 = vmatpush1.bf16.msra.mxu0 %v5964
    %6240 = vmatprep.subr.bf16.mxu0 %v5961
    %6241 = vmatpush1.bf16.msra.mxu0 %v5960
    %6242 = vmatprep.subr.bf16.mxu0 %v5957
    %6243 = vmatpush1.bf16.msra.mxu0 %v5956
    %6244 = vmatprep.subr.bf16.mxu0 %v6017
    %6245 = vmatpush2.bf16.msra.mxu0 %v6016
    %6246 = vmatprep.subr.bf16.mxu0 %v6013
    %6247 = vmatpush2.bf16.msra.mxu0 %v6012
    %6248 = vmatprep.subr.bf16.mxu0 %v6009
    %6249 = vmatpush2.bf16.msra.mxu0 %v6008
    %6250 = vmatprep.subr.bf16.mxu0 %v6005
    %6251 = vmatpush2.bf16.msra.mxu0 %v6004
    %6252 = vmatprep.subr.bf16.mxu0 %v6001
    %6253 = vmatpush2.bf16.msra.mxu0 %v6000
    %6254 = vmatprep.subr.bf16.mxu0 %v5997
    %6255 = vmatpush2.bf16.msra.mxu0 %v5996
    %6256 = vmatprep.subr.bf16.mxu0 %v5993
    %6257 = vmatpush2.bf16.msra.mxu0 %v5992
    %6258 = vmatprep.subr.bf16.mxu0 %v5989
    %6259 = vmatpush2.bf16.msra.mxu0 %v5988
    %6260 = vmatprep.mubr.bf16.mxu0 %v5568
    %6261 = vmatmul.mubr.bf16.gmra.mxu0 %v5567
    %v6262 = vpop.f32.mrf.mxu0
    %v6263 = vadd.f32 0.0, %v6262
    %v6264 = vpop.f32.mrf.mxu0
    %v6265 = vadd.f32 0.0, %v6264
    %v6266 = vpop.f32.mrf.mxu0
    %v6267 = vpop.f32.mrf.mxu0
    %6268 = vdwg.mxu0
    %6269 = vmatprep.subr.bf16.mxu0 %v6049
    %6270 = vmatpush1.bf16.msra.mxu0 %v6048
    %6271 = vmatprep.subr.bf16.mxu0 %v6045
    %6272 = vmatpush1.bf16.msra.mxu0 %v6044
    %6273 = vmatprep.subr.bf16.mxu0 %v6041
    %6274 = vmatpush1.bf16.msra.mxu0 %v6040
    %6275 = vmatprep.subr.bf16.mxu0 %v6037
    %6276 = vmatpush1.bf16.msra.mxu0 %v6036
    %6277 = vmatprep.subr.bf16.mxu0 %v6033
    %6278 = vmatpush1.bf16.msra.mxu0 %v6032
    %6279 = vmatprep.subr.bf16.mxu0 %v6029
    %6280 = vmatpush1.bf16.msra.mxu0 %v6028
    %6281 = vmatprep.subr.bf16.mxu0 %v6025
    %6282 = vmatpush1.bf16.msra.mxu0 %v6024
    %6283 = vmatprep.subr.bf16.mxu0 %v6021
    %6284 = vmatpush1.bf16.msra.mxu0 %v6020
    %6285 = vmatprep.subr.bf16.mxu0 0
    %6286 = vmatpush2.bf16.msra.mxu0 0
    %6287 = vmatprep.subr.bf16.mxu0 0
    %6288 = vmatpush2.bf16.msra.mxu0 0
    %6289 = vmatprep.subr.bf16.mxu0 0
    %6290 = vmatpush2.bf16.msra.mxu0 0
    %6291 = vmatprep.subr.bf16.mxu0 0
    %6292 = vmatpush2.bf16.msra.mxu0 0
    %6293 = vmatprep.subr.bf16.mxu0 0
    %6294 = vmatpush2.bf16.msra.mxu0 0
    %6295 = vmatprep.subr.bf16.mxu0 0
    %6296 = vmatpush2.bf16.msra.mxu0 0
    %6297 = vmatprep.subr.bf16.mxu0 0
    %6298 = vmatpush2.bf16.msra.mxu0 0
    %6299 = vmatprep.subr.bf16.mxu0 0
    %6300 = vmatpush2.bf16.msra.mxu0 0
    %6301 = vmatprep.mubr.bf16.mxu0 0
    %6302 = vmatmul.mubr.bf16.gmra.mxu0 %v5569
    %v6303 = vpop.f32.mrf.mxu0
    %v6304 = vadd.f32 %v6263, %v6303
    %v6305 = vpop.f32.mrf.mxu0
    %v6306 = vadd.f32 %v6265, %v6305
    %v6307 = vpop.f32.mrf.mxu0
    %v6308 = vpop.f32.mrf.mxu0
    %6309 = vdwg.mxu0
    %v6314 = vcombine.low %v6222, %v6224
    %v6315 = vcombine.low %v6304, %v6306
    %v6317 = vunpack.c.l.s4 1983009808
    %v6318 = vunpack.c.0.s8 %v6317
    %v6319 = vlaneseq
    %v6320 = vshrl.u32 %v6319, 7
    %v6321 = vsub.s32 %v6318, %v6320
    %v6322 = vrot.slane %v6314, %v6321
    %v6324 = vunpack.c.l.s4 1983009808
    %v6325 = vunpack.c.0.s8 %v6324
    %v6326 = vlaneseq
    %v6327 = vshrl.u32 %v6326, 7
    %v6328 = vsub.s32 %v6325, %v6327
    %v6329 = vrot.slane %v6315, %v6328
    %v6330 = vcombine.low %v6322, %v6329
    %v6332 = vadd.f32 %v5545, %v6330
    %6333 = vst [vmem:[#allocation4] sm:$0xff] %v6332
    %v6334 = vld [vmem:[#allocation4] sm:$0xff]
    %v6335 = vmax.f32 %v6334, 0.0
    %v6337 = vcombine.high %v6335, %v6335
    %v6339 = vunpack.c.l.s4 1983009808
    %v6340 = vunpack.c.0.s8 %v6339
    %v6341 = vlaneseq
    %v6342 = vshrl.u32 %v6341, 7
    %v6343 = vsub.s32 %v6340, %v6342
    %v6344 = vrot.slane %v6335, %v6343
    %v6346 = vunpack.c.l.s4 1983009808
    %v6347 = vunpack.c.0.s8 %v6346
    %v6348 = vlaneseq
    %v6349 = vshrl.u32 %v6348, 7
    %v6350 = vsub.s32 %v6347, %v6349
    %v6351 = vrot.slane %v6337, %v6350
    %v6352 = vcombine.high %v6344, %v6344
    %v6353 = vcombine.high %v6351, %v6351
    %v6358 = vpack.c.bf16 %v6344, %v6344
    %v6359 = vpack.c.bf16 %v6352, %v6352
    %v6360 = vpack.c.bf16 %v6351, %v6351
    %v6361 = vpack.c.bf16 %v6353, %v6353
    %v6362 = vld [vmem:[%s9] sm:$0xf]
    %v6363 = vld [vmem:[%s9 + $0x4] sm:$0xf]
    %v6364 = vld [vmem:[%s9 + $0x8] sm:$0xf]
    %v6365 = vld [vmem:[%s9 + $0xc] sm:$0xf]
    %v6366 = vld [vmem:[%s9 + $0x10] sm:$0xf]
    %v6367 = vld [vmem:[%s9 + $0x14] sm:$0xf]
    %v6368 = vld [vmem:[%s9 + $0x18] sm:$0xf]
    %v6369 = vld [vmem:[%s9 + $0x1c] sm:$0xf]
    %v6370 = vld [vmem:[%s9 + $0x20] sm:$0xf]
    %v6371 = vld [vmem:[%s9 + $0x24] sm:$0xf]
    %v6372 = vld [vmem:[%s9 + $0x28] sm:$0xf]
    %v6373 = vld [vmem:[%s9 + $0x2c] sm:$0xf]
    %v6374 = vld [vmem:[%s9 + $0x30] sm:$0xf]
    %v6375 = vld [vmem:[%s9 + $0x34] sm:$0xf]
    %v6376 = vld [vmem:[%s9 + $0x38] sm:$0xf]
    %v6377 = vld [vmem:[%s9 + $0x3c] sm:$0xf]
    %v6378 = vld [vmem:[%s9 + $0x40] sm:$0xf]
    %v6379 = vld [vmem:[%s9 + $0x44] sm:$0xf]
    %v6380 = vld [vmem:[%s9 + $0x48] sm:$0xf]
    %v6381 = vld [vmem:[%s9 + $0x4c] sm:$0xf]
    %v6382 = vld [vmem:[%s9 + $0x50] sm:$0xf]
    %v6383 = vld [vmem:[%s9 + $0x54] sm:$0xf]
    %v6384 = vld [vmem:[%s9 + $0x58] sm:$0xf]
    %v6385 = vld [vmem:[%s9 + $0x5c] sm:$0xf]
    %v6386 = vld [vmem:[%s9 + $0x60] sm:$0xf]
    %v6387 = vld [vmem:[%s9 + $0x64] sm:$0xf]
    %v6388 = vld [vmem:[%s9 + $0x68] sm:$0xf]
    %v6389 = vld [vmem:[%s9 + $0x6c] sm:$0xf]
    %v6390 = vld [vmem:[%s9 + $0x70] sm:$0xf]
    %v6391 = vld [vmem:[%s9 + $0x74] sm:$0xf]
    %v6392 = vld [vmem:[%s9 + $0x78] sm:$0xf]
    %v6393 = vld [vmem:[%s9 + $0x7c] sm:$0xf]
    %v6394 = vld [vmem:[%s9 + $0x80] sm:$0xf]
    %v6395 = vld [vmem:[%s9 + $0x84] sm:$0xf]
    %v6396 = vld [vmem:[%s9 + $0x88] sm:$0xf]
    %v6397 = vld [vmem:[%s9 + $0x8c] sm:$0xf]
    %v6398 = vld [vmem:[%s9 + $0x90] sm:$0xf]
    %v6399 = vld [vmem:[%s9 + $0x94] sm:$0xf]
    %v6400 = vld [vmem:[%s9 + $0x98] sm:$0xf]
    %v6401 = vld [vmem:[%s9 + $0x9c] sm:$0xf]
    %v6402 = vld [vmem:[%s9 + $0xa0] sm:$0xf]
    %v6403 = vld [vmem:[%s9 + $0xa4] sm:$0xf]
    %v6404 = vld [vmem:[%s9 + $0xa8] sm:$0xf]
    %v6405 = vld [vmem:[%s9 + $0xac] sm:$0xf]
    %v6406 = vld [vmem:[%s9 + $0xb0] sm:$0xf]
    %v6407 = vld [vmem:[%s9 + $0xb4] sm:$0xf]
    %v6408 = vld [vmem:[%s9 + $0xb8] sm:$0xf]
    %v6409 = vld [vmem:[%s9 + $0xbc] sm:$0xf]
    %v6410 = vld [vmem:[%s9 + $0xc0] sm:$0xf]
    %v6411 = vld [vmem:[%s9 + $0xc4] sm:$0xf]
    %v6412 = vld [vmem:[%s9 + $0xc8] sm:$0xf]
    %v6413 = vld [vmem:[%s9 + $0xcc] sm:$0xf]
    %v6414 = vld [vmem:[%s9 + $0xd0] sm:$0xf]
    %v6415 = vld [vmem:[%s9 + $0xd4] sm:$0xf]
    %v6416 = vld [vmem:[%s9 + $0xd8] sm:$0xf]
    %v6417 = vld [vmem:[%s9 + $0xdc] sm:$0xf]
    %v6418 = vld [vmem:[%s9 + $0xe0] sm:$0xf]
    %v6419 = vld [vmem:[%s9 + $0xe4] sm:$0xf]
    %v6420 = vld [vmem:[%s9 + $0xe8] sm:$0xf]
    %v6421 = vld [vmem:[%s9 + $0xec] sm:$0xf]
    %v6422 = vld [vmem:[%s9 + $0xf0] sm:$0xf]
    %v6423 = vld [vmem:[%s9 + $0xf4] sm:$0xf]
    %v6424 = vld [vmem:[%s9 + $0xf8] sm:$0xf]
    %v6425 = vld [vmem:[%s9 + $0xfc] sm:$0xf]
    %v6426 = vld [vmem:[#allocation18] sm:$0x1]
    %v6428 = vlaneseq
    %v6429 = vshrl.u32 %v6428, 7
    %v6430 = vsub.s32 0, %v6429
    %v6431 = vrot.slane %v6426, %v6430
    %v6497 = vunpack.c.l.b16 %v6362
    %v6498 = vunpack.c.l.b16 %v6363
    %v6499 = vunpack.c.l.b16 %v6364
    %v6500 = vunpack.c.l.b16 %v6365
    %v6501 = vunpack.c.l.b16 %v6366
    %v6502 = vunpack.c.l.b16 %v6367
    %v6503 = vunpack.c.l.b16 %v6368
    %v6504 = vunpack.c.l.b16 %v6369
    %v6505 = vunpack.c.l.b16 %v6370
    %v6506 = vunpack.c.l.b16 %v6371
    %v6507 = vunpack.c.l.b16 %v6372
    %v6508 = vunpack.c.l.b16 %v6373
    %v6509 = vunpack.c.l.b16 %v6374
    %v6510 = vunpack.c.l.b16 %v6375
    %v6511 = vunpack.c.l.b16 %v6376
    %v6512 = vunpack.c.l.b16 %v6377
    %v6513 = vunpack.c.l.b16 %v6378
    %v6514 = vunpack.c.l.b16 %v6379
    %v6515 = vunpack.c.l.b16 %v6380
    %v6516 = vunpack.c.l.b16 %v6381
    %v6517 = vunpack.c.l.b16 %v6382
    %v6518 = vunpack.c.l.b16 %v6383
    %v6519 = vunpack.c.l.b16 %v6384
    %v6520 = vunpack.c.l.b16 %v6385
    %v6521 = vunpack.c.l.b16 %v6386
    %v6522 = vunpack.c.l.b16 %v6387
    %v6523 = vunpack.c.l.b16 %v6388
    %v6524 = vunpack.c.l.b16 %v6389
    %v6525 = vunpack.c.l.b16 %v6390
    %v6526 = vunpack.c.l.b16 %v6391
    %v6527 = vunpack.c.l.b16 %v6392
    %v6528 = vunpack.c.l.b16 %v6393
    %v6529 = vunpack.c.l.b16 %v6394
    %v6530 = vunpack.c.l.b16 %v6395
    %v6531 = vunpack.c.l.b16 %v6396
    %v6532 = vunpack.c.l.b16 %v6397
    %v6533 = vunpack.c.l.b16 %v6398
    %v6534 = vunpack.c.l.b16 %v6399
    %v6535 = vunpack.c.l.b16 %v6400
    %v6536 = vunpack.c.l.b16 %v6401
    %v6537 = vunpack.c.l.b16 %v6402
    %v6538 = vunpack.c.l.b16 %v6403
    %v6539 = vunpack.c.l.b16 %v6404
    %v6540 = vunpack.c.l.b16 %v6405
    %v6541 = vunpack.c.l.b16 %v6406
    %v6542 = vunpack.c.l.b16 %v6407
    %v6543 = vunpack.c.l.b16 %v6408
    %v6544 = vunpack.c.l.b16 %v6409
    %v6545 = vunpack.c.l.b16 %v6410
    %v6546 = vunpack.c.l.b16 %v6411
    %v6547 = vunpack.c.l.b16 %v6412
    %v6548 = vunpack.c.l.b16 %v6413
    %v6549 = vunpack.c.l.b16 %v6414
    %v6550 = vunpack.c.l.b16 %v6415
    %v6551 = vunpack.c.l.b16 %v6416
    %v6552 = vunpack.c.l.b16 %v6417
    %v6553 = vunpack.c.l.b16 %v6418
    %v6554 = vunpack.c.l.b16 %v6419
    %v6555 = vunpack.c.l.b16 %v6420
    %v6556 = vunpack.c.l.b16 %v6421
    %v6557 = vunpack.c.l.b16 %v6422
    %v6558 = vunpack.c.l.b16 %v6423
    %v6559 = vunpack.c.l.b16 %v6424
    %v6560 = vunpack.c.l.b16 %v6425
    %v6561 = vpack.c.b16 %v6498, %v6497
    %v6562 = vpack.c.b16 %v6500, %v6499
    %v6563 = vpack.c.b16 %v6502, %v6501
    %v6564 = vpack.c.b16 %v6504, %v6503
    %v6565 = vpack.c.b16 %v6506, %v6505
    %v6566 = vpack.c.b16 %v6508, %v6507
    %v6567 = vpack.c.b16 %v6510, %v6509
    %v6568 = vpack.c.b16 %v6512, %v6511
    %v6569 = vpack.c.b16 %v6514, %v6513
    %v6570 = vpack.c.b16 %v6516, %v6515
    %v6571 = vpack.c.b16 %v6518, %v6517
    %v6572 = vpack.c.b16 %v6520, %v6519
    %v6573 = vpack.c.b16 %v6522, %v6521
    %v6574 = vpack.c.b16 %v6524, %v6523
    %v6575 = vpack.c.b16 %v6526, %v6525
    %v6576 = vpack.c.b16 %v6528, %v6527
    %v6577 = vpack.c.b16 %v6530, %v6529
    %v6578 = vpack.c.b16 %v6532, %v6531
    %v6579 = vpack.c.b16 %v6534, %v6533
    %v6580 = vpack.c.b16 %v6536, %v6535
    %v6581 = vpack.c.b16 %v6538, %v6537
    %v6582 = vpack.c.b16 %v6540, %v6539
    %v6583 = vpack.c.b16 %v6542, %v6541
    %v6584 = vpack.c.b16 %v6544, %v6543
    %v6585 = vpack.c.b16 %v6546, %v6545
    %v6586 = vpack.c.b16 %v6548, %v6547
    %v6587 = vpack.c.b16 %v6550, %v6549
    %v6588 = vpack.c.b16 %v6552, %v6551
    %v6589 = vpack.c.b16 %v6554, %v6553
    %v6590 = vpack.c.b16 %v6556, %v6555
    %v6591 = vpack.c.b16 %v6558, %v6557
    %v6592 = vpack.c.b16 %v6560, %v6559
    %6625 = vmatprep.subr.bf16.mxu0 0
    %6626 = vmatpush1.bf16.msra.mxu0 %v6568
    %6627 = vmatprep.subr.bf16.mxu0 0
    %6628 = vmatpush1.bf16.msra.mxu0 %v6567
    %6629 = vmatprep.subr.bf16.mxu0 0
    %6630 = vmatpush1.bf16.msra.mxu0 %v6566
    %6631 = vmatprep.subr.bf16.mxu0 0
    %6632 = vmatpush1.bf16.msra.mxu0 %v6565
    %6633 = vmatprep.subr.bf16.mxu0 0
    %6634 = vmatpush1.bf16.msra.mxu0 %v6564
    %6635 = vmatprep.subr.bf16.mxu0 0
    %6636 = vmatpush1.bf16.msra.mxu0 %v6563
    %6637 = vmatprep.subr.bf16.mxu0 0
    %6638 = vmatpush1.bf16.msra.mxu0 %v6562
    %6639 = vmatprep.subr.bf16.mxu0 0
    %6640 = vmatpush1.bf16.msra.mxu0 %v6561
    %6641 = vmatprep.subr.bf16.mxu0 0
    %6642 = vmatpush2.bf16.msra.mxu0 %v6576
    %6643 = vmatprep.subr.bf16.mxu0 0
    %6644 = vmatpush2.bf16.msra.mxu0 %v6575
    %6645 = vmatprep.subr.bf16.mxu0 0
    %6646 = vmatpush2.bf16.msra.mxu0 %v6574
    %6647 = vmatprep.subr.bf16.mxu0 0
    %6648 = vmatpush2.bf16.msra.mxu0 %v6573
    %6649 = vmatprep.subr.bf16.mxu0 0
    %6650 = vmatpush2.bf16.msra.mxu0 %v6572
    %6651 = vmatprep.subr.bf16.mxu0 0
    %6652 = vmatpush2.bf16.msra.mxu0 %v6571
    %6653 = vmatprep.subr.bf16.mxu0 0
    %6654 = vmatpush2.bf16.msra.mxu0 %v6570
    %6655 = vmatprep.subr.bf16.mxu0 0
    %6656 = vmatpush2.bf16.msra.mxu0 %v6569
    %6657 = vmatprep.mubr.bf16.mxu0 %v6359
    %6658 = vmatmul.mubr.bf16.gmra.mxu0 %v6358
    %v6659 = vpop.f32.mrf.mxu0
    %v6660 = vadd.f32 %v6431, %v6659
    %v6661 = vpop.f32.mrf.mxu0
    %v6662 = vpop.f32.mrf.mxu0
    %v6663 = vpop.f32.mrf.mxu0
    %6664 = vdwg.mxu0
    %6665 = vmatprep.subr.bf16.mxu0 0
    %6666 = vmatpush1.bf16.msra.mxu0 %v6584
    %6667 = vmatprep.subr.bf16.mxu0 0
    %6668 = vmatpush1.bf16.msra.mxu0 %v6583
    %6669 = vmatprep.subr.bf16.mxu0 0
    %6670 = vmatpush1.bf16.msra.mxu0 %v6582
    %6671 = vmatprep.subr.bf16.mxu0 0
    %6672 = vmatpush1.bf16.msra.mxu0 %v6581
    %6673 = vmatprep.subr.bf16.mxu0 0
    %6674 = vmatpush1.bf16.msra.mxu0 %v6580
    %6675 = vmatprep.subr.bf16.mxu0 0
    %6676 = vmatpush1.bf16.msra.mxu0 %v6579
    %6677 = vmatprep.subr.bf16.mxu0 0
    %6678 = vmatpush1.bf16.msra.mxu0 %v6578
    %6679 = vmatprep.subr.bf16.mxu0 0
    %6680 = vmatpush1.bf16.msra.mxu0 %v6577
    %6681 = vmatprep.subr.bf16.mxu0 0
    %6682 = vmatpush2.bf16.msra.mxu0 %v6592
    %6683 = vmatprep.subr.bf16.mxu0 0
    %6684 = vmatpush2.bf16.msra.mxu0 %v6591
    %6685 = vmatprep.subr.bf16.mxu0 0
    %6686 = vmatpush2.bf16.msra.mxu0 %v6590
    %6687 = vmatprep.subr.bf16.mxu0 0
    %6688 = vmatpush2.bf16.msra.mxu0 %v6589
    %6689 = vmatprep.subr.bf16.mxu0 0
    %6690 = vmatpush2.bf16.msra.mxu0 %v6588
    %6691 = vmatprep.subr.bf16.mxu0 0
    %6692 = vmatpush2.bf16.msra.mxu0 %v6587
    %6693 = vmatprep.subr.bf16.mxu0 0
    %6694 = vmatpush2.bf16.msra.mxu0 %v6586
    %6695 = vmatprep.subr.bf16.mxu0 0
    %6696 = vmatpush2.bf16.msra.mxu0 %v6585
    %6697 = vmatprep.mubr.bf16.mxu0 %v6361
    %6698 = vmatmul.mubr.bf16.gmra.mxu0 %v6360
    %v6699 = vpop.f32.mrf.mxu0
    %v6700 = vadd.f32 %v6660, %v6699
    %v6701 = vpop.f32.mrf.mxu0
    %v6702 = vpop.f32.mrf.mxu0
    %v6703 = vpop.f32.mrf.mxu0
    %6704 = vdwg.mxu0
    %vm6705 = vcmask 41984
    %v6706 = vsel %vm6705, %v6700, 0.0
    %6707 = vadd.xlane.f32.xlu0 %v6706
    %v6708 = vpop.xlane.xlu0 %6707
    %v6709 = vrot.slane %v6708, 4
    %v6710 = vadd.f32 %v6708, %v6709
    %v6711 = vrot.slane %v6710, 2
    %v6712 = vadd.f32 %v6710, %v6711
    %v6713 = vrot.slane %v6712, 1
    %v6714 = vadd.f32 %v6712, %v6713
    %s6715 = vtos %v6714
    %v6716 = vrcp.pop 12.0
    %s6717 = vtos %v6716
    %s6718 = smul.f32 %s6715, %s6717
    %6720 = vset.pattern.permute.xlu0 6
    %6721 = vperm.xlu0 %6720, %v6700
    %v6722 = vpop.permute.xlu0 %6721
    %v6724 = vadd.f32 %v6722, %v6700
    %v6725 = vstv %s6718
    %v6726 = vsub.f32 %v6724, %v6725
    %6727 = vst.msk [vmem:[#allocation19] sm:$0x3] %vm6705, %v6726
    // Predicated region
    $region94: #{dueling_forward.1} parent=1 // pred_check
      _
    $region95: #{dueling_forward.1} parent=1 // pred_check_branch
      %6729 = sbr.rel (0) target = $region97
    $region96: #{dueling_forward.1} parent=1 // pred_region
      %s6731 = ssub.s32 32, 32
      %6732 = vsyncadd [#allocation9], %s6731
      %s6734 = sshll.u32 [#allocation19], 4
      %s6735 = int_to_ptr.vmem [resolvable:$true] %s6734
      %6737 = dma.vmem_to_hbm [thread:$0]  %s6735, 32, %s11, [#allocation9]
    $region97: #{dueling_forward.1} parent=1 // pred_fallthru
      _
    // Predicated region
    $region98: #{dueling_forward.1} parent=1 // pred_check
      _
    $region99: #{dueling_forward.1} parent=1 // pred_check_branch
      %6739 = sbr.rel (0) target = $region101
    $region100: #{dueling_forward.1} parent=1 // pred_region
      %6740 = dma.done [#allocation9], 32
    $region101: #{dueling_forward.1} parent=1 // pred_fallthru
      _
    %6741 = vsyncpa [#allocation8], 1
    %6742 = vsyncpa [#allocation11], 1
    %6743 = vsyncpa [#allocation14], 1
    %6744 = vsyncpa [#allocation17], 1
    %6745 = vsyncpa [#allocation9], 1
  %6746 = vsyncmov [#allocation6]
  %s6747 = vpop.sfrf %6746
  %p6748 = scmp.eq.s32.totalorder %s6747, 0
  %p6749 = pneg %p6748
  %6751 = shalt.err (%p6749)
  %s6752 = scalar_lea.sflag [#allocation6], 1
  %6753 = vsyncmov %s6752
  %s6754 = vpop.sfrf %6753
  %p6755 = scmp.eq.s32.totalorder %s6754, 0
  %p6756 = pneg %p6755
  %6758 = shalt.err (%p6756)
  %s6759 = scalar_lea.sflag [#allocation6], 2
  %6760 = vsyncmov %s6759
  %s6761 = vpop.sfrf %6760
  %p6762 = scmp.eq.s32.totalorder %s6761, 0
  %p6763 = pneg %p6762
  %6765 = shalt.err (%p6763)
  %s6766 = scalar_lea.sflag [#allocation6], 3
  %6767 = vsyncmov %s6766
  %s6768 = vpop.sfrf %6767
  %p6769 = scmp.eq.s32.totalorder %s6768, 0
  %p6770 = pneg %p6769
  %6772 = shalt.err (%p6770)
  %s6773 = scalar_lea.sflag [#allocation6], 4
  %6774 = vsyncmov %s6773
  %s6775 = vpop.sfrf %6774
  %p6776 = scmp.eq.s32.totalorder %s6775, 0
  %p6777 = pneg %p6776
  %6779 = shalt.err (%p6777)
  %s6780 = scalar_lea.sflag [#allocation6], 5
  %6781 = vsyncmov %s6780
  %s6782 = vpop.sfrf %6781
  %p6783 = scmp.eq.s32.totalorder %s6782, 0
  %p6784 = pneg %p6783
  %6786 = shalt.err (%p6784)

</llo_original>
